<compile_context>
chip_gen: v6e
topology: v6e:2x2x1
jax: 0.10.0
libtpu: 0.0.40
codegen_flags: <defaults>
</compile_context>

<pallas_src>
import functools

import jax
import jax.numpy as jnp
from jax.experimental import pallas as pl
from jax.experimental.pallas import tpu as pltpu


# ------------------------------- fused kernel --------------------------------


def _dqn_fused_kernel(x_ref, w1_ref, b1_ref, w2_ref, b2_ref, w3_ref, b3_ref,
                      fc1w_ref, fc1b_ref, fc2w_ref, fc2b_ref, out_ref):
    f32, bf16 = jnp.float32, jnp.bfloat16

    tb, h1, _, cdep = x_ref.shape     # (TB, H/4, W/4, 16*cin): space-to-depth input tile
    o1 = h1 - 1                       # conv1 out spatial (8x8/s4 == 2x2/s1 on s2d input)
    o2 = (o1 - 4) // 2 + 1            # conv2: 4x4 / stride 2
    o3 = o2 - 2                       # conv3: 3x3 / stride 1
    c1 = w1_ref.shape[-1]             # 32
    c2 = w2_ref.shape[-1]             # 64
    c3 = w3_ref.shape[-1]             # 64

    # ---- conv1: K-pack the 4 s2d taps -> ONE (TB*o1*o1, 4*16*cin) matmul ----------
    lhs1 = jnp.concatenate(
        [x_ref[:, i:i + o1, j:j + o1, :] for i in (0, 1) for j in (0, 1)], axis=-1)
    lhs1 = lhs1.reshape(tb * o1 * o1, 4 * cdep)
    a1 = jnp.dot(lhs1, w1_ref[...], preferred_element_type=f32) + b1_ref[...]
    x1 = jnp.maximum(a1, 0.0).astype(bf16).reshape(tb, o1, o1, c1)

    # ---- conv2 (4x4 / stride 2): parity-split x1 with adjacent-group reshapes only
    # ---- (never a strided slice), build the 16-tap im2col, ONE K=512 matmul --------
    ru = 2 * (o2 + 1)                                     # rows/cols actually consumed
    x1c = x1[:, :ru, :ru, :].reshape(tb * ru, o2 + 1, 2, c1)
    par = {}
    for q in (0, 1):                                      # column parity
        colq = x1c[:, :, q, :].reshape(tb, o2 + 1, 2, o2 + 1, c1)
        for p in (0, 1):                                  # row parity
            par[(p, q)] = colq[:, :, p, :, :]             # [b,R,C,c] == x1[b,2R+p,2C+q,c]
    wins2 = [par[(i % 2, j % 2)][:, i // 2:i // 2 + o2, j // 2:j // 2 + o2, :]
             for i in range(4) for j in range(4)]
    lhs2 = jnp.concatenate(wins2, axis=-1).reshape(tb * o2 * o2, 16 * c1)
    a2 = jnp.dot(lhs2, w2_ref[...], preferred_element_type=f32) + b2_ref[...]
    x2 = jnp.maximum(a2, 0.0).astype(bf16).reshape(tb, o2, o2, c2)

    # ---- conv3 (3x3 / stride 1): K-pack the 9 taps -> ONE K=576 matmul -------------
    wins3 = [x2[:, i:i + o3, j:j + o3, :] for i in range(3) for j in range(3)]
    lhs3 = jnp.concatenate(wins3, axis=-1).reshape(tb * o3 * o3, 9 * c2)
    a3 = jnp.dot(lhs3, w3_ref[...], preferred_element_type=f32) + b3_ref[...]
    x3 = jnp.maximum(a3, 0.0).astype(bf16).reshape(tb, o3 * o3 * c3)

    # ---- fc1 (+ReLU) and fc2 (padded to 128 lanes -> lane-dense store) -------------
    h = jnp.maximum(jnp.dot(x3, fc1w_ref[...], preferred_element_type=f32)
                    + fc1b_ref[...], 0.0)
    out_ref[...] = jnp.dot(h.astype(bf16), fc2w_ref[...],
                           preferred_element_type=f32) + fc2b_ref[...]


# ------------------------------ host-side glue -------------------------------


def _space_to_depth_nchw(x_nchw, s):
    """NCHW -> NHWC fused with space-to-depth(s): one XLA transpose, no expansion."""
    n, c, h, w = x_nchw.shape
    x = x_nchw.reshape(n, c, h // s, s, w // s, s)
    x = jnp.transpose(x, (0, 2, 4, 3, 5, 1))                   # (n, h/s, w/s, s, s, c)
    return x.reshape(n, h // s, w // s, s * s * c)


def _round_up(v, m):
    return ((v + m - 1) // m) * m


def _vmem_budget_bytes():
    """Scoped-VMEM budget derived from the chip (64 MiB v7x vs 128 MiB v5e/v6e)."""
    try:
        cap = int(pltpu.get_tpu_info().vmem_capacity_bytes)
    except Exception:
        cap = 64 * 1024 * 1024
    return min(max(cap - 16 * 1024 * 1024, 32 * 1024 * 1024), 100 * 1024 * 1024)


def _pick_batch_tile(n, h1, wb, cdep, o1, o2, o3, vmem_budget):
    """Largest batch tile (multiple of 8, <=128) whose working set fits the budget."""
    per_sample = (2 * 2 * h1 * wb * cdep            # double-buffered bf16 input tile
                  + 2 * o1 * o1 * 4 * cdep          # conv1 K-packed im2col (bf16)
                  + o1 * o1 * 32 * 8                # conv1 f32 acc + x1 + parity copies
                  + o2 * o2 * 512 * 3               # conv2 im2col + acc / x2
                  + o3 * o3 * 640 * 4)              # conv3 im2col + features + fc temps
    cap = max(8, (vmem_budget // 2) // max(per_sample, 1))
    cap = (cap // 8) * 8
    n8 = _round_up(max(n, 1), 8)
    tb = max(8, min(128, cap, n8))
    if tb == n8 and n8 > 8:
        # Keep >=2 grid steps so megacore / v7x's second TensorCore gets work.
        tb = max(8, _round_up(n8 // 2, 8))
    return tb


@functools.partial(jax.jit, static_argnames=("n_actions",))
def dqn_forward(params, x_nchw, *, n_actions):
    n, cin, hh, ww = x_nchw.shape
    assert hh == ww, "square spatial input expected"
    assert hh % 4 == 0, "spatial dims must be divisible by conv1 stride"
    assert hh >= 36, "conv stack (8/4 -> 4/2 -> 3/1) needs spatial >= 36"

    x = x_nchw.astype(jnp.bfloat16)                            # bf16 input stream

    h1 = hh // 4
    o1 = h1 - 1
    o2 = (o1 - 4) // 2 + 1
    o3 = o2 - 2
    cdep = 16 * cin
    n_out_pad = params["fc2_w"].shape[-1]                      # 128 (lane-dense padded)

    vmem_budget = _vmem_budget_bytes()
    tb = _pick_batch_tile(n, h1, h1, cdep, o1, o2, o3, vmem_budget)
    npad = _round_up(n, tb)
    if npad != n:
        x = jnp.concatenate(
            [x, jnp.zeros((npad - n, cin, hh, ww), jnp.bfloat16)], axis=0)

    xs = _space_to_depth_nchw(x, 4)                            # (npad, h1, h1, 16*cin) bf16
    wb = xs.shape[2]

    weight_args = (params["w1"], params["b1"], params["w2"], params["b2"],
                   params["w3"], params["b3"], params["fc1_w"], params["fc1_b"],
                   params["fc2_w"], params["fc2_b"])

    def _const_spec(a):
        nd = a.ndim
        return pl.BlockSpec(a.shape, lambda b, _nd=nd: (0,) * _nd)

    in_specs = [pl.BlockSpec((tb, h1, wb, cdep), lambda b: (b, 0, 0, 0))]
    in_specs += [_const_spec(a) for a in weight_args]

    flops = 2 * npad * (
        o1 * o1 * 32 * (4 * cdep)
        + o2 * o2 * 64 * (16 * 32)
        + o3 * o3 * 64 * (9 * 64)
        + 512 * (64 * o3 * o3)
        + n_out_pad * 512)
    bytes_accessed = (int(xs.size) * xs.dtype.itemsize
                      + sum(int(a.size) * a.dtype.itemsize for a in weight_args)
                      + npad * n_out_pad * 4)

    q = pl.pallas_call(
        _dqn_fused_kernel,
        out_shape=jax.ShapeDtypeStruct((npad, n_out_pad), jnp.float32),
        grid=(npad // tb,),
        in_specs=in_specs,
        out_specs=pl.BlockSpec((tb, n_out_pad), lambda b: (b, 0)),
        compiler_params=pltpu.CompilerParams(
            dimension_semantics=("parallel",),
            vmem_limit_bytes=vmem_budget),
        cost_estimate=pl.CostEstimate(flops=flops, transcendentals=0,
                                      bytes_accessed=bytes_accessed),
    )(xs, *weight_args)
    return q[:n, :n_actions]


# ------------------------- parameter init & packing --------------------------


def init_params(key, in_channels, n_actions, spatial):
    """PyTorch-layout (OIHW conv / (out,in) Linear) float32 parameters."""
    ks = jax.random.split(key, 10)
    scale = 0.05

    def nrm(k, shape):
        return scale * jax.random.normal(k, shape, dtype=jnp.float32)

    o1 = (spatial - 8) // 4 + 1
    o2 = (o1 - 4) // 2 + 1
    o3 = (o2 - 3) // 1 + 1
    conv_out = 64 * o3 * o3
    return {
        "conv1_w": nrm(ks[0], (32, in_channels, 8, 8)),
        "conv1_b": nrm(ks[1], (32,)),
        "conv2_w": nrm(ks[2], (64, 32, 4, 4)),
        "conv2_b": nrm(ks[3], (64,)),
        "conv3_w": nrm(ks[4], (64, 64, 3, 3)),
        "conv3_b": nrm(ks[5], (64,)),
        "fc1_w": nrm(ks[6], (512, conv_out)),
        "fc1_b": nrm(ks[7], (512,)),
        "fc2_w": nrm(ks[8], (n_actions, 512)),
        "fc2_b": nrm(ks[9], (n_actions,)),
    }


def pack_params(tp, spatial, lane_pad=128):
    """One-time offline repack of PyTorch-layout params into the kernel layout."""
    wdt = jnp.bfloat16
    o1 = (spatial - 8) // 4 + 1
    o2 = (o1 - 4) // 2 + 1
    o3 = (o2 - 3) // 1 + 1

    # conv1: fold its 8x8/stride-4 kernel through space-to-depth(4), K-pack the 4 taps.
    w1 = jnp.transpose(tp["conv1_w"], (2, 3, 1, 0))            # (8, 8, cin, 32)
    cin = w1.shape[2]
    w1 = w1.reshape(2, 4, 2, 4, cin, 32)                       # (I, di, J, dj, cin, 32)
    w1 = jnp.transpose(w1, (0, 2, 1, 3, 4, 5))                 # (I, J, di, dj, cin, 32)
    w1p = w1.reshape(4 * 16 * cin, 32).astype(wdt)

    # conv2 / conv3: HWIO with all taps K-packed in (ky, kx) order.
    w2p = jnp.transpose(tp["conv2_w"], (2, 3, 1, 0)).reshape(16 * 32, 64).astype(wdt)
    w3p = jnp.transpose(tp["conv3_w"], (2, 3, 1, 0)).reshape(9 * 64, 64).astype(wdt)

    # fc1: permute rows so the kernel's NHWC-ordered flatten matches torch's NCHW flatten.
    fc1 = jnp.transpose(tp["fc1_w"])                           # (64*o3*o3, 512)
    yy, xx, cc = jnp.meshgrid(jnp.arange(o3), jnp.arange(o3), jnp.arange(64),
                              indexing="ij")
    perm = (cc * o3 * o3 + yy * o3 + xx).reshape(-1)
    fc1p = fc1[perm, :].astype(wdt)

    n_actions = tp["fc2_w"].shape[0]
    fc2 = jnp.zeros((512, lane_pad), jnp.float32).at[:, :n_actions].set(
        jnp.transpose(tp["fc2_w"]))
    fc2b = jnp.zeros((1, lane_pad), jnp.float32).at[:, :n_actions].set(tp["fc2_b"])

    return {
        "w1": w1p, "b1": tp["conv1_b"].reshape(1, -1).astype(jnp.float32),
        "w2": w2p, "b2": tp["conv2_b"].reshape(1, -1).astype(jnp.float32),
        "w3": w3p, "b3": tp["conv3_b"].reshape(1, -1).astype(jnp.float32),
        "fc1_w": fc1p, "fc1_b": tp["fc1_b"].reshape(1, -1).astype(jnp.float32),
        "fc2_w": fc2.astype(wdt), "fc2_b": fc2b,
    }


# ------------------------ pure-JAX reference (validation) --------------------


def reference_forward(torch_params, x_nchw):
    """XLA reference mirroring the kernel's bf16-weight / f32-accumulate numerics."""
    wdt = jnp.bfloat16
    dn = ("NHWC", "HWIO", "NHWC")

    def conv(x, w_oihw, b, stride):
        w = jnp.transpose(w_oihw, (2, 3, 1, 0)).astype(wdt)    # HWIO
        y = jax.lax.conv_general_dilated(
            x.astype(wdt), w, (stride, stride), "VALID",
            dimension_numbers=dn, preferred_element_type=jnp.float32)
        return jnp.maximum(y + b, 0.0)

    x = jnp.transpose(x_nchw, (0, 2, 3, 1)).astype(jnp.float32)
    x = conv(x, torch_params["conv1_w"], torch_params["conv1_b"], 4)
    x = conv(x, torch_params["conv2_w"], torch_params["conv2_b"], 2)
    x = conv(x, torch_params["conv3_w"], torch_params["conv3_b"], 1)
    n = x.shape[0]
    flat = jnp.transpose(x, (0, 3, 1, 2)).reshape(n, -1)       # PyTorch .view(N, -1)
    h = jnp.maximum(
        jnp.dot(flat.astype(wdt), torch_params["fc1_w"].T.astype(wdt),
                preferred_element_type=jnp.float32) + torch_params["fc1_b"], 0.0)
    return (jnp.dot(h.astype(wdt), torch_params["fc2_w"].T.astype(wdt),
                    preferred_element_type=jnp.float32) + torch_params["fc2_b"])


# ----------------------------------- main -------------------------------------


if __name__ == "__main__":
    # Small but conv-stack-consistent shapes: 36 -> 8 -> 3 -> 1 spatially.
    batch, channels, spatial, n_actions = 2, 4, 36, 6
    key = jax.random.PRNGKey(0)
    kp, kx = jax.random.split(key)

    torch_params = init_params(kp, channels, n_actions, spatial)
    params = pack_params(torch_params, spatial)
    x = jax.random.normal(kx, (batch, channels, spatial, spatial), dtype=jnp.float32)

    q = dqn_forward(params, x, n_actions=n_actions)
    jax.block_until_ready(q)
    assert q.shape == (batch, n_actions), q.shape

    q_ref = reference_forward(torch_params, x)
    max_err = float(jnp.max(jnp.abs(q - q_ref)))
    assert max_err < 5e-2, f"mismatch vs reference: {max_err}"

    print("KERNEL_OK")
</pallas_src>

<mosaic_0001>
module attributes {stable_mosaic.version = 11 : i64} {
  func.func @_dqn_fused_kernel(%arg0: i32, %arg1: memref<8x9x9x64xbf16, #tpu.memory_space<vmem>>, %arg2: memref<256x32xbf16, #tpu.memory_space<vmem>>, %arg3: memref<1x32xf32, #tpu.memory_space<vmem>>, %arg4: memref<512x64xbf16, #tpu.memory_space<vmem>>, %arg5: memref<1x64xf32, #tpu.memory_space<vmem>>, %arg6: memref<576x64xbf16, #tpu.memory_space<vmem>>, %arg7: memref<1x64xf32, #tpu.memory_space<vmem>>, %arg8: memref<64x512xbf16, #tpu.memory_space<vmem>>, %arg9: memref<1x512xf32, #tpu.memory_space<vmem>>, %arg10: memref<512x128xbf16, #tpu.memory_space<vmem>>, %arg11: memref<1x128xf32, #tpu.memory_space<vmem>>, %arg12: memref<8x128xf32, #tpu.memory_space<vmem>>) attributes {dimension_semantics = [#tpu.dimension_semantics<parallel>], iteration_bounds = array<i64: 1>, scalar_prefetch = 0 : i64, scratch_operands = 0 : i64, tpu.core_type = #tpu.core_type<tc>, window_params = [{transform_indices = @transform_0, window_bounds = array<i64: 8, 9, 9, 64>}, {pipeline_mode = #tpu.pipeline_mode<synchronous>, transform_indices = @transform_1, window_bounds = array<i64: 256, 32>}, {pipeline_mode = #tpu.pipeline_mode<synchronous>, transform_indices = @transform_2, window_bounds = array<i64: 1, 32>}, {pipeline_mode = #tpu.pipeline_mode<synchronous>, transform_indices = @transform_3, window_bounds = array<i64: 512, 64>}, {pipeline_mode = #tpu.pipeline_mode<synchronous>, transform_indices = @transform_4, window_bounds = array<i64: 1, 64>}, {pipeline_mode = #tpu.pipeline_mode<synchronous>, transform_indices = @transform_5, window_bounds = array<i64: 576, 64>}, {pipeline_mode = #tpu.pipeline_mode<synchronous>, transform_indices = @transform_6, window_bounds = array<i64: 1, 64>}, {pipeline_mode = #tpu.pipeline_mode<synchronous>, transform_indices = @transform_7, window_bounds = array<i64: 64, 512>}, {pipeline_mode = #tpu.pipeline_mode<synchronous>, transform_indices = @transform_8, window_bounds = array<i64: 1, 512>}, {pipeline_mode = #tpu.pipeline_mode<synchronous>, transform_indices = @transform_9, window_bounds = array<i64: 512, 128>}, {pipeline_mode = #tpu.pipeline_mode<synchronous>, transform_indices = @transform_10, window_bounds = array<i64: 1, 128>}, {transform_indices = @transform_11, window_bounds = array<i64: 8, 128>}]} {
    %c0 = arith.constant 0 : index
    %c0_0 = arith.constant 0 : index
    %c0_1 = arith.constant 0 : index
    %c0_2 = arith.constant 0 : index
    %0 = vector.load %arg1[%c0, %c0_0, %c0_1, %c0_2] : memref<8x9x9x64xbf16, #tpu.memory_space<vmem>>, vector<8x8x8x64xbf16>
    %c0_3 = arith.constant 0 : index
    %c0_4 = arith.constant 0 : index
    %c1 = arith.constant 1 : index
    %c0_5 = arith.constant 0 : index
    %1 = vector.load %arg1[%c0_3, %c0_4, %c1, %c0_5] : memref<8x9x9x64xbf16, #tpu.memory_space<vmem>>, vector<8x8x8x64xbf16>
    %c0_6 = arith.constant 0 : index
    %c1_7 = arith.constant 1 : index
    %c0_8 = arith.constant 0 : index
    %c0_9 = arith.constant 0 : index
    %2 = vector.load %arg1[%c0_6, %c1_7, %c0_8, %c0_9] : memref<8x9x9x64xbf16, #tpu.memory_space<vmem>>, vector<8x8x8x64xbf16>
    %c0_10 = arith.constant 0 : index
    %c1_11 = arith.constant 1 : index
    %c1_12 = arith.constant 1 : index
    %c0_13 = arith.constant 0 : index
    %3 = vector.load %arg1[%c0_10, %c1_11, %c1_12, %c0_13] : memref<8x9x9x64xbf16, #tpu.memory_space<vmem>>, vector<8x8x8x64xbf16>
    %4 = tpu.concatenate %0, %1, %2, %3 in 3 : vector<8x8x8x64xbf16>, vector<8x8x8x64xbf16>, vector<8x8x8x64xbf16>, vector<8x8x8x64xbf16> -> vector<8x8x8x256xbf16>
    %5 = vector.shape_cast %4 : vector<8x8x8x256xbf16> to vector<512x256xbf16>
    %c0_14 = arith.constant 0 : index
    %c0_15 = arith.constant 0 : index
    %6 = vector.load %arg2[%c0_14, %c0_15] : memref<256x32xbf16, #tpu.memory_space<vmem>>, vector<256x32xbf16>
    %cst = arith.constant dense<0.000000e+00> : vector<512x32xf32>
    %7 = tpu.matmul %5, %6, %cst {dimension_numbers = #tpu.dot_dimension_numbers<[1], [0], [0], [1], [0, 0, 1, 1], [], []>} : vector<512x256xbf16>, vector<256x32xbf16>, vector<512x32xf32> -> vector<512x32xf32>
    %c0_16 = arith.constant 0 : index
    %c0_17 = arith.constant 0 : index
    %8 = vector.load %arg3[%c0_16, %c0_17] : memref<1x32xf32, #tpu.memory_space<vmem>>, vector<1x32xf32>
    %9 = vector.broadcast %8 : vector<1x32xf32> to vector<512x32xf32>
    %10 = arith.addf %7, %9 : vector<512x32xf32>
    %cst_18 = arith.constant 0.000000e+00 : f32
    %11 = vector.broadcast %cst_18 : f32 to vector<512x32xf32>
    %12 = arith.maximumf %10, %11 : vector<512x32xf32>
    %13 = arith.truncf %12 : vector<512x32xf32> to vector<512x32xbf16>
    %14 = vector.shape_cast %13 : vector<512x32xbf16> to vector<8x8x8x32xbf16>
    %15 = vector.shape_cast %14 : vector<8x8x8x32xbf16> to vector<64x4x2x32xbf16>
    %16 = vector.extract_strided_slice %15 {offsets = [0, 0, 0, 0], sizes = [64, 4, 1, 32], strides = [1, 1, 1, 1]} : vector<64x4x2x32xbf16> to vector<64x4x1x32xbf16>
    %17 = vector.shape_cast %16 : vector<64x4x1x32xbf16> to vector<64x4x32xbf16>
    %18 = vector.shape_cast %17 : vector<64x4x32xbf16> to vector<8x4x2x4x32xbf16>
    %19 = vector.extract_strided_slice %18 {offsets = [0, 0, 0, 0, 0], sizes = [8, 4, 1, 4, 32], strides = [1, 1, 1, 1, 1]} : vector<8x4x2x4x32xbf16> to vector<8x4x1x4x32xbf16>
    %20 = vector.shape_cast %19 : vector<8x4x1x4x32xbf16> to vector<8x4x4x32xbf16>
    %21 = vector.extract_strided_slice %18 {offsets = [0, 0, 1, 0, 0], sizes = [8, 4, 1, 4, 32], strides = [1, 1, 1, 1, 1]} : vector<8x4x2x4x32xbf16> to vector<8x4x1x4x32xbf16>
    %22 = vector.shape_cast %21 : vector<8x4x1x4x32xbf16> to vector<8x4x4x32xbf16>
    %23 = vector.extract_strided_slice %15 {offsets = [0, 0, 1, 0], sizes = [64, 4, 1, 32], strides = [1, 1, 1, 1]} : vector<64x4x2x32xbf16> to vector<64x4x1x32xbf16>
    %24 = vector.shape_cast %23 : vector<64x4x1x32xbf16> to vector<64x4x32xbf16>
    %25 = vector.shape_cast %24 : vector<64x4x32xbf16> to vector<8x4x2x4x32xbf16>
    %26 = vector.extract_strided_slice %25 {offsets = [0, 0, 0, 0, 0], sizes = [8, 4, 1, 4, 32], strides = [1, 1, 1, 1, 1]} : vector<8x4x2x4x32xbf16> to vector<8x4x1x4x32xbf16>
    %27 = vector.shape_cast %26 : vector<8x4x1x4x32xbf16> to vector<8x4x4x32xbf16>
    %28 = vector.extract_strided_slice %25 {offsets = [0, 0, 1, 0, 0], sizes = [8, 4, 1, 4, 32], strides = [1, 1, 1, 1, 1]} : vector<8x4x2x4x32xbf16> to vector<8x4x1x4x32xbf16>
    %29 = vector.shape_cast %28 : vector<8x4x1x4x32xbf16> to vector<8x4x4x32xbf16>
    %30 = vector.extract_strided_slice %20 {offsets = [0, 0, 0, 0], sizes = [8, 3, 3, 32], strides = [1, 1, 1, 1]} : vector<8x4x4x32xbf16> to vector<8x3x3x32xbf16>
    %31 = vector.extract_strided_slice %27 {offsets = [0, 0, 0, 0], sizes = [8, 3, 3, 32], strides = [1, 1, 1, 1]} : vector<8x4x4x32xbf16> to vector<8x3x3x32xbf16>
    %32 = vector.extract_strided_slice %20 {offsets = [0, 0, 1, 0], sizes = [8, 3, 3, 32], strides = [1, 1, 1, 1]} : vector<8x4x4x32xbf16> to vector<8x3x3x32xbf16>
    %33 = vector.extract_strided_slice %27 {offsets = [0, 0, 1, 0], sizes = [8, 3, 3, 32], strides = [1, 1, 1, 1]} : vector<8x4x4x32xbf16> to vector<8x3x3x32xbf16>
    %34 = vector.extract_strided_slice %22 {offsets = [0, 0, 0, 0], sizes = [8, 3, 3, 32], strides = [1, 1, 1, 1]} : vector<8x4x4x32xbf16> to vector<8x3x3x32xbf16>
    %35 = vector.extract_strided_slice %29 {offsets = [0, 0, 0, 0], sizes = [8, 3, 3, 32], strides = [1, 1, 1, 1]} : vector<8x4x4x32xbf16> to vector<8x3x3x32xbf16>
    %36 = vector.extract_strided_slice %22 {offsets = [0, 0, 1, 0], sizes = [8, 3, 3, 32], strides = [1, 1, 1, 1]} : vector<8x4x4x32xbf16> to vector<8x3x3x32xbf16>
    %37 = vector.extract_strided_slice %29 {offsets = [0, 0, 1, 0], sizes = [8, 3, 3, 32], strides = [1, 1, 1, 1]} : vector<8x4x4x32xbf16> to vector<8x3x3x32xbf16>
    %38 = vector.extract_strided_slice %20 {offsets = [0, 1, 0, 0], sizes = [8, 3, 3, 32], strides = [1, 1, 1, 1]} : vector<8x4x4x32xbf16> to vector<8x3x3x32xbf16>
    %39 = vector.extract_strided_slice %27 {offsets = [0, 1, 0, 0], sizes = [8, 3, 3, 32], strides = [1, 1, 1, 1]} : vector<8x4x4x32xbf16> to vector<8x3x3x32xbf16>
    %40 = vector.extract_strided_slice %20 {offsets = [0, 1, 1, 0], sizes = [8, 3, 3, 32], strides = [1, 1, 1, 1]} : vector<8x4x4x32xbf16> to vector<8x3x3x32xbf16>
    %41 = vector.extract_strided_slice %27 {offsets = [0, 1, 1, 0], sizes = [8, 3, 3, 32], strides = [1, 1, 1, 1]} : vector<8x4x4x32xbf16> to vector<8x3x3x32xbf16>
    %42 = vector.extract_strided_slice %22 {offsets = [0, 1, 0, 0], sizes = [8, 3, 3, 32], strides = [1, 1, 1, 1]} : vector<8x4x4x32xbf16> to vector<8x3x3x32xbf16>
    %43 = vector.extract_strided_slice %29 {offsets = [0, 1, 0, 0], sizes = [8, 3, 3, 32], strides = [1, 1, 1, 1]} : vector<8x4x4x32xbf16> to vector<8x3x3x32xbf16>
    %44 = vector.extract_strided_slice %22 {offsets = [0, 1, 1, 0], sizes = [8, 3, 3, 32], strides = [1, 1, 1, 1]} : vector<8x4x4x32xbf16> to vector<8x3x3x32xbf16>
    %45 = vector.extract_strided_slice %29 {offsets = [0, 1, 1, 0], sizes = [8, 3, 3, 32], strides = [1, 1, 1, 1]} : vector<8x4x4x32xbf16> to vector<8x3x3x32xbf16>
    %46 = tpu.concatenate %30, %31, %32, %33, %34, %35, %36, %37, %38, %39, %40, %41, %42, %43, %44, %45 in 3 : vector<8x3x3x32xbf16>, vector<8x3x3x32xbf16>, vector<8x3x3x32xbf16>, vector<8x3x3x32xbf16>, vector<8x3x3x32xbf16>, vector<8x3x3x32xbf16>, vector<8x3x3x32xbf16>, vector<8x3x3x32xbf16>, vector<8x3x3x32xbf16>, vector<8x3x3x32xbf16>, vector<8x3x3x32xbf16>, vector<8x3x3x32xbf16>, vector<8x3x3x32xbf16>, vector<8x3x3x32xbf16>, vector<8x3x3x32xbf16>, vector<8x3x3x32xbf16> -> vector<8x3x3x512xbf16>
    %47 = vector.shape_cast %46 : vector<8x3x3x512xbf16> to vector<72x512xbf16>
    %c0_19 = arith.constant 0 : index
    %c0_20 = arith.constant 0 : index
    %48 = vector.load %arg4[%c0_19, %c0_20] : memref<512x64xbf16, #tpu.memory_space<vmem>>, vector<512x64xbf16>
    %cst_21 = arith.constant dense<0.000000e+00> : vector<72x64xf32>
    %49 = tpu.matmul %47, %48, %cst_21 {dimension_numbers = #tpu.dot_dimension_numbers<[1], [0], [0], [1], [0, 0, 1, 1], [], []>} : vector<72x512xbf16>, vector<512x64xbf16>, vector<72x64xf32> -> vector<72x64xf32>
    %c0_22 = arith.constant 0 : index
    %c0_23 = arith.constant 0 : index
    %50 = vector.load %arg5[%c0_22, %c0_23] : memref<1x64xf32, #tpu.memory_space<vmem>>, vector<1x64xf32>
    %51 = vector.broadcast %50 : vector<1x64xf32> to vector<72x64xf32>
    %52 = arith.addf %49, %51 : vector<72x64xf32>
    %cst_24 = arith.constant 0.000000e+00 : f32
    %53 = vector.broadcast %cst_24 : f32 to vector<72x64xf32>
    %54 = arith.maximumf %52, %53 : vector<72x64xf32>
    %55 = arith.truncf %54 : vector<72x64xf32> to vector<72x64xbf16>
    %56 = vector.shape_cast %55 : vector<72x64xbf16> to vector<8x3x3x64xbf16>
    %57 = vector.extract_strided_slice %56 {offsets = [0, 0, 0, 0], sizes = [8, 1, 1, 64], strides = [1, 1, 1, 1]} : vector<8x3x3x64xbf16> to vector<8x1x1x64xbf16>
    %58 = vector.extract_strided_slice %56 {offsets = [0, 0, 1, 0], sizes = [8, 1, 1, 64], strides = [1, 1, 1, 1]} : vector<8x3x3x64xbf16> to vector<8x1x1x64xbf16>
    %59 = vector.extract_strided_slice %56 {offsets = [0, 0, 2, 0], sizes = [8, 1, 1, 64], strides = [1, 1, 1, 1]} : vector<8x3x3x64xbf16> to vector<8x1x1x64xbf16>
    %60 = vector.extract_strided_slice %56 {offsets = [0, 1, 0, 0], sizes = [8, 1, 1, 64], strides = [1, 1, 1, 1]} : vector<8x3x3x64xbf16> to vector<8x1x1x64xbf16>
    %61 = vector.extract_strided_slice %56 {offsets = [0, 1, 1, 0], sizes = [8, 1, 1, 64], strides = [1, 1, 1, 1]} : vector<8x3x3x64xbf16> to vector<8x1x1x64xbf16>
    %62 = vector.extract_strided_slice %56 {offsets = [0, 1, 2, 0], sizes = [8, 1, 1, 64], strides = [1, 1, 1, 1]} : vector<8x3x3x64xbf16> to vector<8x1x1x64xbf16>
    %63 = vector.extract_strided_slice %56 {offsets = [0, 2, 0, 0], sizes = [8, 1, 1, 64], strides = [1, 1, 1, 1]} : vector<8x3x3x64xbf16> to vector<8x1x1x64xbf16>
    %64 = vector.extract_strided_slice %56 {offsets = [0, 2, 1, 0], sizes = [8, 1, 1, 64], strides = [1, 1, 1, 1]} : vector<8x3x3x64xbf16> to vector<8x1x1x64xbf16>
    %65 = vector.extract_strided_slice %56 {offsets = [0, 2, 2, 0], sizes = [8, 1, 1, 64], strides = [1, 1, 1, 1]} : vector<8x3x3x64xbf16> to vector<8x1x1x64xbf16>
    %66 = tpu.concatenate %57, %58, %59, %60, %61, %62, %63, %64, %65 in 3 : vector<8x1x1x64xbf16>, vector<8x1x1x64xbf16>, vector<8x1x1x64xbf16>, vector<8x1x1x64xbf16>, vector<8x1x1x64xbf16>, vector<8x1x1x64xbf16>, vector<8x1x1x64xbf16>, vector<8x1x1x64xbf16>, vector<8x1x1x64xbf16> -> vector<8x1x1x576xbf16>
    %67 = vector.shape_cast %66 : vector<8x1x1x576xbf16> to vector<8x576xbf16>
    %c0_25 = arith.constant 0 : index
    %c0_26 = arith.constant 0 : index
    %68 = vector.load %arg6[%c0_25, %c0_26] : memref<576x64xbf16, #tpu.memory_space<vmem>>, vector<576x64xbf16>
    %cst_27 = arith.constant dense<0.000000e+00> : vector<8x64xf32>
    %69 = tpu.matmul %67, %68, %cst_27 {dimension_numbers = #tpu.dot_dimension_numbers<[1], [0], [0], [1], [0, 0, 1, 1], [], []>} : vector<8x576xbf16>, vector<576x64xbf16>, vector<8x64xf32> -> vector<8x64xf32>
    %c0_28 = arith.constant 0 : index
    %c0_29 = arith.constant 0 : index
    %70 = vector.load %arg7[%c0_28, %c0_29] : memref<1x64xf32, #tpu.memory_space<vmem>>, vector<1x64xf32>
    %71 = vector.broadcast %70 : vector<1x64xf32> to vector<8x64xf32>
    %72 = arith.addf %69, %71 : vector<8x64xf32>
    %cst_30 = arith.constant 0.000000e+00 : f32
    %73 = vector.broadcast %cst_30 : f32 to vector<8x64xf32>
    %74 = arith.maximumf %72, %73 : vector<8x64xf32>
    %75 = arith.truncf %74 : vector<8x64xf32> to vector<8x64xbf16>
    %c0_31 = arith.constant 0 : index
    %c0_32 = arith.constant 0 : index
    %76 = vector.load %arg8[%c0_31, %c0_32] : memref<64x512xbf16, #tpu.memory_space<vmem>>, vector<64x512xbf16>
    %cst_33 = arith.constant dense<0.000000e+00> : vector<8x512xf32>
    %77 = tpu.matmul %75, %76, %cst_33 {dimension_numbers = #tpu.dot_dimension_numbers<[1], [0], [0], [1], [0, 0, 1, 1], [], []>} : vector<8x64xbf16>, vector<64x512xbf16>, vector<8x512xf32> -> vector<8x512xf32>
    %c0_34 = arith.constant 0 : index
    %c0_35 = arith.constant 0 : index
    %78 = vector.load %arg9[%c0_34, %c0_35] : memref<1x512xf32, #tpu.memory_space<vmem>>, vector<1x512xf32>
    %79 = vector.broadcast %78 : vector<1x512xf32> to vector<8x512xf32>
    %80 = arith.addf %77, %79 : vector<8x512xf32>
    %cst_36 = arith.constant 0.000000e+00 : f32
    %81 = vector.broadcast %cst_36 : f32 to vector<8x512xf32>
    %82 = arith.maximumf %80, %81 : vector<8x512xf32>
    %83 = arith.truncf %82 : vector<8x512xf32> to vector<8x512xbf16>
    %c0_37 = arith.constant 0 : index
    %c0_38 = arith.constant 0 : index
    %84 = vector.load %arg10[%c0_37, %c0_38] : memref<512x128xbf16, #tpu.memory_space<vmem>>, vector<512x128xbf16>
    %cst_39 = arith.constant dense<0.000000e+00> : vector<8x128xf32>
    %85 = tpu.matmul %83, %84, %cst_39 {dimension_numbers = #tpu.dot_dimension_numbers<[1], [0], [0], [1], [0, 0, 1, 1], [], []>} : vector<8x512xbf16>, vector<512x128xbf16>, vector<8x128xf32> -> vector<8x128xf32>
    %c0_40 = arith.constant 0 : index
    %c0_41 = arith.constant 0 : index
    %86 = vector.load %arg11[%c0_40, %c0_41] : memref<1x128xf32, #tpu.memory_space<vmem>>, vector<1x128xf32>
    %87 = vector.broadcast %86 : vector<1x128xf32> to vector<8x128xf32>
    %88 = arith.addf %85, %87 : vector<8x128xf32>
    %c0_42 = arith.constant 0 : index
    %c0_43 = arith.constant 0 : index
    %89 = vector.load %arg12[%c0_42, %c0_43] : memref<8x128xf32, #tpu.memory_space<vmem>>, vector<8x128xf32>
    tpu.vector_store %arg12[%c0_42, %c0_43], %88 {strides = array<i32>} : memref<8x128xf32, #tpu.memory_space<vmem>>, vector<8x128xf32>,
    return
  }
  func.func @transform_0(%arg0: i32) -> (i32, i32, i32, i32) {
    %c0_i32 = arith.constant 0 : i32
    %c0_i32_0 = arith.constant 0 : i32
    %c0_i32_1 = arith.constant 0 : i32
    %c0_i32_2 = arith.constant 0 : i32
    return %arg0, %c0_i32, %c0_i32_0, %c0_i32_1 : i32, i32, i32, i32
  }
  func.func @transform_1(%arg0: i32) -> (i32, i32) {
    %c0_i32 = arith.constant 0 : i32
    %c0_i32_0 = arith.constant 0 : i32
    %c0_i32_1 = arith.constant 0 : i32
    return %c0_i32, %c0_i32_0 : i32, i32
  }
  func.func @transform_2(%arg0: i32) -> (i32, i32) {
    %c0_i32 = arith.constant 0 : i32
    %c0_i32_0 = arith.constant 0 : i32
    %c0_i32_1 = arith.constant 0 : i32
    return %c0_i32, %c0_i32_0 : i32, i32
  }
  func.func @transform_3(%arg0: i32) -> (i32, i32) {
    %c0_i32 = arith.constant 0 : i32
    %c0_i32_0 = arith.constant 0 : i32
    %c0_i32_1 = arith.constant 0 : i32
    return %c0_i32, %c0_i32_0 : i32, i32
  }
  func.func @transform_4(%arg0: i32) -> (i32, i32) {
    %c0_i32 = arith.constant 0 : i32
    %c0_i32_0 = arith.constant 0 : i32
    %c0_i32_1 = arith.constant 0 : i32
    return %c0_i32, %c0_i32_0 : i32, i32
  }
  func.func @transform_5(%arg0: i32) -> (i32, i32) {
    %c0_i32 = arith.constant 0 : i32
    %c0_i32_0 = arith.constant 0 : i32
    %c0_i32_1 = arith.constant 0 : i32
    return %c0_i32, %c0_i32_0 : i32, i32
  }
  func.func @transform_6(%arg0: i32) -> (i32, i32) {
    %c0_i32 = arith.constant 0 : i32
    %c0_i32_0 = arith.constant 0 : i32
    %c0_i32_1 = arith.constant 0 : i32
    return %c0_i32, %c0_i32_0 : i32, i32
  }
  func.func @transform_7(%arg0: i32) -> (i32, i32) {
    %c0_i32 = arith.constant 0 : i32
    %c0_i32_0 = arith.constant 0 : i32
    %c0_i32_1 = arith.constant 0 : i32
    return %c0_i32, %c0_i32_0 : i32, i32
  }
  func.func @transform_8(%arg0: i32) -> (i32, i32) {
    %c0_i32 = arith.constant 0 : i32
    %c0_i32_0 = arith.constant 0 : i32
    %c0_i32_1 = arith.constant 0 : i32
    return %c0_i32, %c0_i32_0 : i32, i32
  }
  func.func @transform_9(%arg0: i32) -> (i32, i32) {
    %c0_i32 = arith.constant 0 : i32
    %c0_i32_0 = arith.constant 0 : i32
    %c0_i32_1 = arith.constant 0 : i32
    return %c0_i32, %c0_i32_0 : i32, i32
  }
  func.func @transform_10(%arg0: i32) -> (i32, i32) {
    %c0_i32 = arith.constant 0 : i32
    %c0_i32_0 = arith.constant 0 : i32
    %c0_i32_1 = arith.constant 0 : i32
    return %c0_i32, %c0_i32_0 : i32, i32
  }
  func.func @transform_11(%arg0: i32) -> (i32, i32) {
    %c0_i32 = arith.constant 0 : i32
    %c0_i32_0 = arith.constant 0 : i32
    return %arg0, %c0_i32 : i32, i32
  }
}

</mosaic_0001>

<llo_original>
// kernel: dqn_forward.1
$region0: #{dqn_forward.1}
  #allocation0 [shape = 'u32[]', space=smem, size = 0x4, offset = 0x4, fixed_abs, tag = 'smem constant byte address 0x4 - core index']
  #allocation1 [shape = 'u32[144,128]{1,0:T(1,128)}', space=vmem, size = 0x12000, scoped, tag = 'internal scratch']
  %s0 = inlined_call_operand.vmem [shape: bf16[8,9,9,64], index: 0, kind: input, shape index: {}]
  %s1 = inlined_call_operand.vmem [shape: bf16[256,32], index: 1, kind: input, shape index: {}]
  %s2 = inlined_call_operand.vmem [shape: f32[1,32], index: 2, kind: input, shape index: {}]
  %s3 = inlined_call_operand.vmem [shape: bf16[512,64], index: 3, kind: input, shape index: {}]
  %s4 = inlined_call_operand.vmem [shape: f32[1,64], index: 4, kind: input, shape index: {}]
  %s5 = inlined_call_operand.vmem [shape: bf16[576,64], index: 5, kind: input, shape index: {}]
  %s6 = inlined_call_operand.vmem [shape: f32[1,64], index: 6, kind: input, shape index: {}]
  %s7 = inlined_call_operand.vmem [shape: bf16[64,512], index: 7, kind: input, shape index: {}]
  %s8 = inlined_call_operand.vmem [shape: f32[1,512], index: 8, kind: input, shape index: {}]
  %s9 = inlined_call_operand.vmem [shape: bf16[512,128], index: 9, kind: input, shape index: {}]
  %s10 = inlined_call_operand.vmem [shape: f32[1,128], index: 10, kind: input, shape index: {}]
  %s11 = inlined_call_operand.vmem [shape: f32[8,128], index: 11, kind: output, shape index: {}]
  %s12 = sld [smem:[#allocation0]]
  $region54: #{dqn_forward.1} parent=0
    _
  %s14 = ssub.s32 1, %s12
  %s15 = scalar_select 0, %s14, %s12
  // Predicated region
  $region2: #{dqn_forward.1} parent=0 // pred_check
    _
  $region3: #{dqn_forward.1} parent=0 // pred_check_branch
    %17 = sbr.rel (0) target = $region5
  $region4: #{dqn_forward.1} parent=0 // pred_region
    _
  $region5: #{dqn_forward.1} parent=0 // pred_fallthru
    _
  // Predicated region
  $region6: #{dqn_forward.1} parent=0 // pred_check
    _
  $region7: #{dqn_forward.1} parent=0 // pred_check_branch
    %19 = sbr.rel (0) target = $region9
  $region8: #{dqn_forward.1} parent=0 // pred_region
    _
  $region9: #{dqn_forward.1} parent=0 // pred_fallthru
    _
  // Predicated region
  $region10: #{dqn_forward.1} parent=0 // pred_check
    _
  $region11: #{dqn_forward.1} parent=0 // pred_check_branch
    %21 = sbr.rel (0) target = $region13
  $region12: #{dqn_forward.1} parent=0 // pred_region
    _
  $region13: #{dqn_forward.1} parent=0 // pred_fallthru
    _
  // Predicated region
  $region14: #{dqn_forward.1} parent=0 // pred_check
    _
  $region15: #{dqn_forward.1} parent=0 // pred_check_branch
    %23 = sbr.rel (0) target = $region17
  $region16: #{dqn_forward.1} parent=0 // pred_region
    _
  $region17: #{dqn_forward.1} parent=0 // pred_fallthru
    _
  // Predicated region
  $region18: #{dqn_forward.1} parent=0 // pred_check
    _
  $region19: #{dqn_forward.1} parent=0 // pred_check_branch
    %25 = sbr.rel (0) target = $region21
  $region20: #{dqn_forward.1} parent=0 // pred_region
    _
  $region21: #{dqn_forward.1} parent=0 // pred_fallthru
    _
  // Predicated region
  $region22: #{dqn_forward.1} parent=0 // pred_check
    _
  $region23: #{dqn_forward.1} parent=0 // pred_check_branch
    %27 = sbr.rel (0) target = $region25
  $region24: #{dqn_forward.1} parent=0 // pred_region
    _
  $region25: #{dqn_forward.1} parent=0 // pred_fallthru
    _
  // Predicated region
  $region26: #{dqn_forward.1} parent=0 // pred_check
    _
  $region27: #{dqn_forward.1} parent=0 // pred_check_branch
    %29 = sbr.rel (0) target = $region29
  $region28: #{dqn_forward.1} parent=0 // pred_region
    _
  $region29: #{dqn_forward.1} parent=0 // pred_fallthru
    _
  // Predicated region
  $region30: #{dqn_forward.1} parent=0 // pred_check
    _
  $region31: #{dqn_forward.1} parent=0 // pred_check_branch
    %31 = sbr.rel (0) target = $region33
  $region32: #{dqn_forward.1} parent=0 // pred_region
    _
  $region33: #{dqn_forward.1} parent=0 // pred_fallthru
    _
  // Predicated region
  $region34: #{dqn_forward.1} parent=0 // pred_check
    _
  $region35: #{dqn_forward.1} parent=0 // pred_check_branch
    %33 = sbr.rel (0) target = $region37
  $region36: #{dqn_forward.1} parent=0 // pred_region
    _
  $region37: #{dqn_forward.1} parent=0 // pred_fallthru
    _
  // Predicated region
  $region38: #{dqn_forward.1} parent=0 // pred_check
    _
  $region39: #{dqn_forward.1} parent=0 // pred_check_branch
    %35 = sbr.rel (0) target = $region41
  $region40: #{dqn_forward.1} parent=0 // pred_region
    _
  $region41: #{dqn_forward.1} parent=0 // pred_fallthru
    _
  // Predicated region
  $region42: #{dqn_forward.1} parent=0 // pred_check
    _
  $region43: #{dqn_forward.1} parent=0 // pred_check_branch
    %37 = sbr.rel (0) target = $region45
  $region44: #{dqn_forward.1} parent=0 // pred_region
    _
  $region45: #{dqn_forward.1} parent=0 // pred_fallthru
    _
  %v39 = vld [vmem:[%s0] sm:$0xf]
  %v40 = vld [vmem:[%s0 + $0x8] sm:$0xf]
  %v41 = vld [vmem:[%s0 + $0x10] sm:$0xf]
  %v42 = vld [vmem:[%s0 + $0x18] sm:$0xf]
  %v43 = vld [vmem:[%s0 + $0x20] sm:$0xf]
  %v44 = vld [vmem:[%s0 + $0x28] sm:$0xf]
  %v45 = vld [vmem:[%s0 + $0x30] sm:$0xf]
  %v46 = vld [vmem:[%s0 + $0x38] sm:$0xf]
  %v47 = vld [vmem:[%s0 + $0x48] sm:$0xf]
  %v48 = vld [vmem:[%s0 + $0x50] sm:$0xf]
  %v49 = vld [vmem:[%s0 + $0x58] sm:$0xf]
  %v50 = vld [vmem:[%s0 + $0x60] sm:$0xf]
  %v51 = vld [vmem:[%s0 + $0x68] sm:$0xf]
  %v52 = vld [vmem:[%s0 + $0x70] sm:$0xf]
  %v53 = vld [vmem:[%s0 + $0x78] sm:$0xf]
  %v54 = vld [vmem:[%s0 + $0x80] sm:$0xf]
  %v55 = vld [vmem:[%s0 + $0x90] sm:$0xf]
  %v56 = vld [vmem:[%s0 + $0x98] sm:$0xf]
  %v57 = vld [vmem:[%s0 + $0xa0] sm:$0xf]
  %v58 = vld [vmem:[%s0 + $0xa8] sm:$0xf]
  %v59 = vld [vmem:[%s0 + $0xb0] sm:$0xf]
  %v60 = vld [vmem:[%s0 + $0xb8] sm:$0xf]
  %v61 = vld [vmem:[%s0 + $0xc0] sm:$0xf]
  %v62 = vld [vmem:[%s0 + $0xc8] sm:$0xf]
  %v63 = vld [vmem:[%s0 + $0xd8] sm:$0xf]
  %v64 = vld [vmem:[%s0 + $0xe0] sm:$0xf]
  %v65 = vld [vmem:[%s0 + $0xe8] sm:$0xf]
  %v66 = vld [vmem:[%s0 + $0xf0] sm:$0xf]
  %v67 = vld [vmem:[%s0 + $0xf8] sm:$0xf]
  %v68 = vld [vmem:[%s0 + $0x100] sm:$0xf]
  %v69 = vld [vmem:[%s0 + $0x108] sm:$0xf]
  %v70 = vld [vmem:[%s0 + $0x110] sm:$0xf]
  %v71 = vld [vmem:[%s0 + $0x120] sm:$0xf]
  %v72 = vld [vmem:[%s0 + $0x128] sm:$0xf]
  %v73 = vld [vmem:[%s0 + $0x130] sm:$0xf]
  %v74 = vld [vmem:[%s0 + $0x138] sm:$0xf]
  %v75 = vld [vmem:[%s0 + $0x140] sm:$0xf]
  %v76 = vld [vmem:[%s0 + $0x148] sm:$0xf]
  %v77 = vld [vmem:[%s0 + $0x150] sm:$0xf]
  %v78 = vld [vmem:[%s0 + $0x158] sm:$0xf]
  %v79 = vld [vmem:[%s0 + $0x168] sm:$0xf]
  %v80 = vld [vmem:[%s0 + $0x170] sm:$0xf]
  %v81 = vld [vmem:[%s0 + $0x178] sm:$0xf]
  %v82 = vld [vmem:[%s0 + $0x180] sm:$0xf]
  %v83 = vld [vmem:[%s0 + $0x188] sm:$0xf]
  %v84 = vld [vmem:[%s0 + $0x190] sm:$0xf]
  %v85 = vld [vmem:[%s0 + $0x198] sm:$0xf]
  %v86 = vld [vmem:[%s0 + $0x1a0] sm:$0xf]
  %v87 = vld [vmem:[%s0 + $0x1b0] sm:$0xf]
  %v88 = vld [vmem:[%s0 + $0x1b8] sm:$0xf]
  %v89 = vld [vmem:[%s0 + $0x1c0] sm:$0xf]
  %v90 = vld [vmem:[%s0 + $0x1c8] sm:$0xf]
  %v91 = vld [vmem:[%s0 + $0x1d0] sm:$0xf]
  %v92 = vld [vmem:[%s0 + $0x1d8] sm:$0xf]
  %v93 = vld [vmem:[%s0 + $0x1e0] sm:$0xf]
  %v94 = vld [vmem:[%s0 + $0x1e8] sm:$0xf]
  %v95 = vld [vmem:[%s0 + $0x1f8] sm:$0xf]
  %v96 = vld [vmem:[%s0 + $0x200] sm:$0xf]
  %v97 = vld [vmem:[%s0 + $0x208] sm:$0xf]
  %v98 = vld [vmem:[%s0 + $0x210] sm:$0xf]
  %v99 = vld [vmem:[%s0 + $0x218] sm:$0xf]
  %v100 = vld [vmem:[%s0 + $0x220] sm:$0xf]
  %v101 = vld [vmem:[%s0 + $0x228] sm:$0xf]
  %v102 = vld [vmem:[%s0 + $0x230] sm:$0xf]
  %v103 = vld [vmem:[%s0 + $0x4] sm:$0x1]
  %v104 = vld [vmem:[%s0 + $0xc] sm:$0x1]
  %v105 = vld [vmem:[%s0 + $0x14] sm:$0x1]
  %v106 = vld [vmem:[%s0 + $0x1c] sm:$0x1]
  %v107 = vld [vmem:[%s0 + $0x24] sm:$0x1]
  %v108 = vld [vmem:[%s0 + $0x2c] sm:$0x1]
  %v109 = vld [vmem:[%s0 + $0x34] sm:$0x1]
  %v110 = vld [vmem:[%s0 + $0x3c] sm:$0x1]
  %v111 = vld [vmem:[%s0 + $0x4c] sm:$0x1]
  %v112 = vld [vmem:[%s0 + $0x54] sm:$0x1]
  %v113 = vld [vmem:[%s0 + $0x5c] sm:$0x1]
  %v114 = vld [vmem:[%s0 + $0x64] sm:$0x1]
  %v115 = vld [vmem:[%s0 + $0x6c] sm:$0x1]
  %v116 = vld [vmem:[%s0 + $0x74] sm:$0x1]
  %v117 = vld [vmem:[%s0 + $0x7c] sm:$0x1]
  %v118 = vld [vmem:[%s0 + $0x84] sm:$0x1]
  %v119 = vld [vmem:[%s0 + $0x94] sm:$0x1]
  %v120 = vld [vmem:[%s0 + $0x9c] sm:$0x1]
  %v121 = vld [vmem:[%s0 + $0xa4] sm:$0x1]
  %v122 = vld [vmem:[%s0 + $0xac] sm:$0x1]
  %v123 = vld [vmem:[%s0 + $0xb4] sm:$0x1]
  %v124 = vld [vmem:[%s0 + $0xbc] sm:$0x1]
  %v125 = vld [vmem:[%s0 + $0xc4] sm:$0x1]
  %v126 = vld [vmem:[%s0 + $0xcc] sm:$0x1]
  %v127 = vld [vmem:[%s0 + $0xdc] sm:$0x1]
  %v128 = vld [vmem:[%s0 + $0xe4] sm:$0x1]
  %v129 = vld [vmem:[%s0 + $0xec] sm:$0x1]
  %v130 = vld [vmem:[%s0 + $0xf4] sm:$0x1]
  %v131 = vld [vmem:[%s0 + $0xfc] sm:$0x1]
  %v132 = vld [vmem:[%s0 + $0x104] sm:$0x1]
  %v133 = vld [vmem:[%s0 + $0x10c] sm:$0x1]
  %v134 = vld [vmem:[%s0 + $0x114] sm:$0x1]
  %v135 = vld [vmem:[%s0 + $0x124] sm:$0x1]
  %v136 = vld [vmem:[%s0 + $0x12c] sm:$0x1]
  %v137 = vld [vmem:[%s0 + $0x134] sm:$0x1]
  %v138 = vld [vmem:[%s0 + $0x13c] sm:$0x1]
  %v139 = vld [vmem:[%s0 + $0x144] sm:$0x1]
  %v140 = vld [vmem:[%s0 + $0x14c] sm:$0x1]
  %v141 = vld [vmem:[%s0 + $0x154] sm:$0x1]
  %v142 = vld [vmem:[%s0 + $0x15c] sm:$0x1]
  %v143 = vld [vmem:[%s0 + $0x16c] sm:$0x1]
  %v144 = vld [vmem:[%s0 + $0x174] sm:$0x1]
  %v145 = vld [vmem:[%s0 + $0x17c] sm:$0x1]
  %v146 = vld [vmem:[%s0 + $0x184] sm:$0x1]
  %v147 = vld [vmem:[%s0 + $0x18c] sm:$0x1]
  %v148 = vld [vmem:[%s0 + $0x194] sm:$0x1]
  %v149 = vld [vmem:[%s0 + $0x19c] sm:$0x1]
  %v150 = vld [vmem:[%s0 + $0x1a4] sm:$0x1]
  %v151 = vld [vmem:[%s0 + $0x1b4] sm:$0x1]
  %v152 = vld [vmem:[%s0 + $0x1bc] sm:$0x1]
  %v153 = vld [vmem:[%s0 + $0x1c4] sm:$0x1]
  %v154 = vld [vmem:[%s0 + $0x1cc] sm:$0x1]
  %v155 = vld [vmem:[%s0 + $0x1d4] sm:$0x1]
  %v156 = vld [vmem:[%s0 + $0x1dc] sm:$0x1]
  %v157 = vld [vmem:[%s0 + $0x1e4] sm:$0x1]
  %v158 = vld [vmem:[%s0 + $0x1ec] sm:$0x1]
  %v159 = vld [vmem:[%s0 + $0x1fc] sm:$0x1]
  %v160 = vld [vmem:[%s0 + $0x204] sm:$0x1]
  %v161 = vld [vmem:[%s0 + $0x20c] sm:$0x1]
  %v162 = vld [vmem:[%s0 + $0x214] sm:$0x1]
  %v163 = vld [vmem:[%s0 + $0x21c] sm:$0x1]
  %v164 = vld [vmem:[%s0 + $0x224] sm:$0x1]
  %v165 = vld [vmem:[%s0 + $0x22c] sm:$0x1]
  %v166 = vld [vmem:[%s0 + $0x234] sm:$0x1]
  %s167 = scalar_lea.vmem %s0, 8
  %v168 = vld [vmem:[%s167] sm:$0xf]
  %v169 = vld [vmem:[%s167 + $0x8] sm:$0xf]
  %v170 = vld [vmem:[%s167 + $0x10] sm:$0xf]
  %v171 = vld [vmem:[%s167 + $0x18] sm:$0xf]
  %v172 = vld [vmem:[%s167 + $0x20] sm:$0xf]
  %v173 = vld [vmem:[%s167 + $0x28] sm:$0xf]
  %v174 = vld [vmem:[%s167 + $0x30] sm:$0xf]
  %v175 = vld [vmem:[%s167 + $0x38] sm:$0xf]
  %v176 = vld [vmem:[%s167 + $0x48] sm:$0xf]
  %v177 = vld [vmem:[%s167 + $0x50] sm:$0xf]
  %v178 = vld [vmem:[%s167 + $0x58] sm:$0xf]
  %v179 = vld [vmem:[%s167 + $0x60] sm:$0xf]
  %v180 = vld [vmem:[%s167 + $0x68] sm:$0xf]
  %v181 = vld [vmem:[%s167 + $0x70] sm:$0xf]
  %v182 = vld [vmem:[%s167 + $0x78] sm:$0xf]
  %v183 = vld [vmem:[%s167 + $0x80] sm:$0xf]
  %v184 = vld [vmem:[%s167 + $0x90] sm:$0xf]
  %v185 = vld [vmem:[%s167 + $0x98] sm:$0xf]
  %v186 = vld [vmem:[%s167 + $0xa0] sm:$0xf]
  %v187 = vld [vmem:[%s167 + $0xa8] sm:$0xf]
  %v188 = vld [vmem:[%s167 + $0xb0] sm:$0xf]
  %v189 = vld [vmem:[%s167 + $0xb8] sm:$0xf]
  %v190 = vld [vmem:[%s167 + $0xc0] sm:$0xf]
  %v191 = vld [vmem:[%s167 + $0xc8] sm:$0xf]
  %v192 = vld [vmem:[%s167 + $0xd8] sm:$0xf]
  %v193 = vld [vmem:[%s167 + $0xe0] sm:$0xf]
  %v194 = vld [vmem:[%s167 + $0xe8] sm:$0xf]
  %v195 = vld [vmem:[%s167 + $0xf0] sm:$0xf]
  %v196 = vld [vmem:[%s167 + $0xf8] sm:$0xf]
  %v197 = vld [vmem:[%s167 + $0x100] sm:$0xf]
  %v198 = vld [vmem:[%s167 + $0x108] sm:$0xf]
  %v199 = vld [vmem:[%s167 + $0x110] sm:$0xf]
  %v200 = vld [vmem:[%s167 + $0x120] sm:$0xf]
  %v201 = vld [vmem:[%s167 + $0x128] sm:$0xf]
  %v202 = vld [vmem:[%s167 + $0x130] sm:$0xf]
  %v203 = vld [vmem:[%s167 + $0x138] sm:$0xf]
  %v204 = vld [vmem:[%s167 + $0x140] sm:$0xf]
  %v205 = vld [vmem:[%s167 + $0x148] sm:$0xf]
  %v206 = vld [vmem:[%s167 + $0x150] sm:$0xf]
  %v207 = vld [vmem:[%s167 + $0x158] sm:$0xf]
  %v208 = vld [vmem:[%s167 + $0x168] sm:$0xf]
  %v209 = vld [vmem:[%s167 + $0x170] sm:$0xf]
  %v210 = vld [vmem:[%s167 + $0x178] sm:$0xf]
  %v211 = vld [vmem:[%s167 + $0x180] sm:$0xf]
  %v212 = vld [vmem:[%s167 + $0x188] sm:$0xf]
  %v213 = vld [vmem:[%s167 + $0x190] sm:$0xf]
  %v214 = vld [vmem:[%s167 + $0x198] sm:$0xf]
  %v215 = vld [vmem:[%s167 + $0x1a0] sm:$0xf]
  %v216 = vld [vmem:[%s167 + $0x1b0] sm:$0xf]
  %v217 = vld [vmem:[%s167 + $0x1b8] sm:$0xf]
  %v218 = vld [vmem:[%s167 + $0x1c0] sm:$0xf]
  %v219 = vld [vmem:[%s167 + $0x1c8] sm:$0xf]
  %v220 = vld [vmem:[%s167 + $0x1d0] sm:$0xf]
  %v221 = vld [vmem:[%s167 + $0x1d8] sm:$0xf]
  %v222 = vld [vmem:[%s167 + $0x1e0] sm:$0xf]
  %v223 = vld [vmem:[%s167 + $0x1e8] sm:$0xf]
  %v224 = vld [vmem:[%s167 + $0x1f8] sm:$0xf]
  %v225 = vld [vmem:[%s167 + $0x200] sm:$0xf]
  %v226 = vld [vmem:[%s167 + $0x208] sm:$0xf]
  %v227 = vld [vmem:[%s167 + $0x210] sm:$0xf]
  %v228 = vld [vmem:[%s167 + $0x218] sm:$0xf]
  %v229 = vld [vmem:[%s167 + $0x220] sm:$0xf]
  %v230 = vld [vmem:[%s167 + $0x228] sm:$0xf]
  %v231 = vld [vmem:[%s167 + $0x230] sm:$0xf]
  %v232 = vld [vmem:[%s167 + $0x4] sm:$0x1]
  %v233 = vld [vmem:[%s167 + $0xc] sm:$0x1]
  %v234 = vld [vmem:[%s167 + $0x14] sm:$0x1]
  %v235 = vld [vmem:[%s167 + $0x1c] sm:$0x1]
  %v236 = vld [vmem:[%s167 + $0x24] sm:$0x1]
  %v237 = vld [vmem:[%s167 + $0x2c] sm:$0x1]
  %v238 = vld [vmem:[%s167 + $0x34] sm:$0x1]
  %v239 = vld [vmem:[%s167 + $0x3c] sm:$0x1]
  %v240 = vld [vmem:[%s167 + $0x4c] sm:$0x1]
  %v241 = vld [vmem:[%s167 + $0x54] sm:$0x1]
  %v242 = vld [vmem:[%s167 + $0x5c] sm:$0x1]
  %v243 = vld [vmem:[%s167 + $0x64] sm:$0x1]
  %v244 = vld [vmem:[%s167 + $0x6c] sm:$0x1]
  %v245 = vld [vmem:[%s167 + $0x74] sm:$0x1]
  %v246 = vld [vmem:[%s167 + $0x7c] sm:$0x1]
  %v247 = vld [vmem:[%s167 + $0x84] sm:$0x1]
  %v248 = vld [vmem:[%s167 + $0x94] sm:$0x1]
  %v249 = vld [vmem:[%s167 + $0x9c] sm:$0x1]
  %v250 = vld [vmem:[%s167 + $0xa4] sm:$0x1]
  %v251 = vld [vmem:[%s167 + $0xac] sm:$0x1]
  %v252 = vld [vmem:[%s167 + $0xb4] sm:$0x1]
  %v253 = vld [vmem:[%s167 + $0xbc] sm:$0x1]
  %v254 = vld [vmem:[%s167 + $0xc4] sm:$0x1]
  %v255 = vld [vmem:[%s167 + $0xcc] sm:$0x1]
  %v256 = vld [vmem:[%s167 + $0xdc] sm:$0x1]
  %v257 = vld [vmem:[%s167 + $0xe4] sm:$0x1]
  %v258 = vld [vmem:[%s167 + $0xec] sm:$0x1]
  %v259 = vld [vmem:[%s167 + $0xf4] sm:$0x1]
  %v260 = vld [vmem:[%s167 + $0xfc] sm:$0x1]
  %v261 = vld [vmem:[%s167 + $0x104] sm:$0x1]
  %v262 = vld [vmem:[%s167 + $0x10c] sm:$0x1]
  %v263 = vld [vmem:[%s167 + $0x114] sm:$0x1]
  %v264 = vld [vmem:[%s167 + $0x124] sm:$0x1]
  %v265 = vld [vmem:[%s167 + $0x12c] sm:$0x1]
  %v266 = vld [vmem:[%s167 + $0x134] sm:$0x1]
  %v267 = vld [vmem:[%s167 + $0x13c] sm:$0x1]
  %v268 = vld [vmem:[%s167 + $0x144] sm:$0x1]
  %v269 = vld [vmem:[%s167 + $0x14c] sm:$0x1]
  %v270 = vld [vmem:[%s167 + $0x154] sm:$0x1]
  %v271 = vld [vmem:[%s167 + $0x15c] sm:$0x1]
  %v272 = vld [vmem:[%s167 + $0x16c] sm:$0x1]
  %v273 = vld [vmem:[%s167 + $0x174] sm:$0x1]
  %v274 = vld [vmem:[%s167 + $0x17c] sm:$0x1]
  %v275 = vld [vmem:[%s167 + $0x184] sm:$0x1]
  %v276 = vld [vmem:[%s167 + $0x18c] sm:$0x1]
  %v277 = vld [vmem:[%s167 + $0x194] sm:$0x1]
  %v278 = vld [vmem:[%s167 + $0x19c] sm:$0x1]
  %v279 = vld [vmem:[%s167 + $0x1a4] sm:$0x1]
  %v280 = vld [vmem:[%s167 + $0x1b4] sm:$0x1]
  %v281 = vld [vmem:[%s167 + $0x1bc] sm:$0x1]
  %v282 = vld [vmem:[%s167 + $0x1c4] sm:$0x1]
  %v283 = vld [vmem:[%s167 + $0x1cc] sm:$0x1]
  %v284 = vld [vmem:[%s167 + $0x1d4] sm:$0x1]
  %v285 = vld [vmem:[%s167 + $0x1dc] sm:$0x1]
  %v286 = vld [vmem:[%s167 + $0x1e4] sm:$0x1]
  %v287 = vld [vmem:[%s167 + $0x1ec] sm:$0x1]
  %v288 = vld [vmem:[%s167 + $0x1fc] sm:$0x1]
  %v289 = vld [vmem:[%s167 + $0x204] sm:$0x1]
  %v290 = vld [vmem:[%s167 + $0x20c] sm:$0x1]
  %v291 = vld [vmem:[%s167 + $0x214] sm:$0x1]
  %v292 = vld [vmem:[%s167 + $0x21c] sm:$0x1]
  %v293 = vld [vmem:[%s167 + $0x224] sm:$0x1]
  %v294 = vld [vmem:[%s167 + $0x22c] sm:$0x1]
  %v295 = vld [vmem:[%s167 + $0x234] sm:$0x1]
  %v424 = vunpack.c.l.b16 %v39
  %v425 = vunpack.c.l.b16 %v103
  %v426 = vunpack.c.l.b16 %v40
  %v427 = vunpack.c.l.b16 %v104
  %v428 = vunpack.c.l.b16 %v41
  %v429 = vunpack.c.l.b16 %v105
  %v430 = vunpack.c.l.b16 %v42
  %v431 = vunpack.c.l.b16 %v106
  %v432 = vunpack.c.l.b16 %v43
  %v433 = vunpack.c.l.b16 %v107
  %v434 = vunpack.c.l.b16 %v44
  %v435 = vunpack.c.l.b16 %v108
  %v436 = vunpack.c.l.b16 %v45
  %v437 = vunpack.c.l.b16 %v109
  %v438 = vunpack.c.l.b16 %v46
  %v439 = vunpack.c.l.b16 %v110
  %v440 = vunpack.c.l.b16 %v47
  %v441 = vunpack.c.l.b16 %v111
  %v442 = vunpack.c.l.b16 %v48
  %v443 = vunpack.c.l.b16 %v112
  %v444 = vunpack.c.l.b16 %v49
  %v445 = vunpack.c.l.b16 %v113
  %v446 = vunpack.c.l.b16 %v50
  %v447 = vunpack.c.l.b16 %v114
  %v448 = vunpack.c.l.b16 %v51
  %v449 = vunpack.c.l.b16 %v115
  %v450 = vunpack.c.l.b16 %v52
  %v451 = vunpack.c.l.b16 %v116
  %v452 = vunpack.c.l.b16 %v53
  %v453 = vunpack.c.l.b16 %v117
  %v454 = vunpack.c.l.b16 %v54
  %v455 = vunpack.c.l.b16 %v118
  %v456 = vunpack.c.l.b16 %v55
  %v457 = vunpack.c.l.b16 %v119
  %v458 = vunpack.c.l.b16 %v56
  %v459 = vunpack.c.l.b16 %v120
  %v460 = vunpack.c.l.b16 %v57
  %v461 = vunpack.c.l.b16 %v121
  %v462 = vunpack.c.l.b16 %v58
  %v463 = vunpack.c.l.b16 %v122
  %v464 = vunpack.c.l.b16 %v59
  %v465 = vunpack.c.l.b16 %v123
  %v466 = vunpack.c.l.b16 %v60
  %v467 = vunpack.c.l.b16 %v124
  %v468 = vunpack.c.l.b16 %v61
  %v469 = vunpack.c.l.b16 %v125
  %v470 = vunpack.c.l.b16 %v62
  %v471 = vunpack.c.l.b16 %v126
  %v472 = vunpack.c.l.b16 %v63
  %v473 = vunpack.c.l.b16 %v127
  %v474 = vunpack.c.l.b16 %v64
  %v475 = vunpack.c.l.b16 %v128
  %v476 = vunpack.c.l.b16 %v65
  %v477 = vunpack.c.l.b16 %v129
  %v478 = vunpack.c.l.b16 %v66
  %v479 = vunpack.c.l.b16 %v130
  %v480 = vunpack.c.l.b16 %v67
  %v481 = vunpack.c.l.b16 %v131
  %v482 = vunpack.c.l.b16 %v68
  %v483 = vunpack.c.l.b16 %v132
  %v484 = vunpack.c.l.b16 %v69
  %v485 = vunpack.c.l.b16 %v133
  %v486 = vunpack.c.l.b16 %v70
  %v487 = vunpack.c.l.b16 %v134
  %v488 = vunpack.c.l.b16 %v71
  %v489 = vunpack.c.l.b16 %v135
  %v490 = vunpack.c.l.b16 %v72
  %v491 = vunpack.c.l.b16 %v136
  %v492 = vunpack.c.l.b16 %v73
  %v493 = vunpack.c.l.b16 %v137
  %v494 = vunpack.c.l.b16 %v74
  %v495 = vunpack.c.l.b16 %v138
  %v496 = vunpack.c.l.b16 %v75
  %v497 = vunpack.c.l.b16 %v139
  %v498 = vunpack.c.l.b16 %v76
  %v499 = vunpack.c.l.b16 %v140
  %v500 = vunpack.c.l.b16 %v77
  %v501 = vunpack.c.l.b16 %v141
  %v502 = vunpack.c.l.b16 %v78
  %v503 = vunpack.c.l.b16 %v142
  %v504 = vunpack.c.l.b16 %v79
  %v505 = vunpack.c.l.b16 %v143
  %v506 = vunpack.c.l.b16 %v80
  %v507 = vunpack.c.l.b16 %v144
  %v508 = vunpack.c.l.b16 %v81
  %v509 = vunpack.c.l.b16 %v145
  %v510 = vunpack.c.l.b16 %v82
  %v511 = vunpack.c.l.b16 %v146
  %v512 = vunpack.c.l.b16 %v83
  %v513 = vunpack.c.l.b16 %v147
  %v514 = vunpack.c.l.b16 %v84
  %v515 = vunpack.c.l.b16 %v148
  %v516 = vunpack.c.l.b16 %v85
  %v517 = vunpack.c.l.b16 %v149
  %v518 = vunpack.c.l.b16 %v86
  %v519 = vunpack.c.l.b16 %v150
  %v520 = vunpack.c.l.b16 %v87
  %v521 = vunpack.c.l.b16 %v151
  %v522 = vunpack.c.l.b16 %v88
  %v523 = vunpack.c.l.b16 %v152
  %v524 = vunpack.c.l.b16 %v89
  %v525 = vunpack.c.l.b16 %v153
  %v526 = vunpack.c.l.b16 %v90
  %v527 = vunpack.c.l.b16 %v154
  %v528 = vunpack.c.l.b16 %v91
  %v529 = vunpack.c.l.b16 %v155
  %v530 = vunpack.c.l.b16 %v92
  %v531 = vunpack.c.l.b16 %v156
  %v532 = vunpack.c.l.b16 %v93
  %v533 = vunpack.c.l.b16 %v157
  %v534 = vunpack.c.l.b16 %v94
  %v535 = vunpack.c.l.b16 %v158
  %v536 = vunpack.c.l.b16 %v95
  %v537 = vunpack.c.l.b16 %v159
  %v538 = vunpack.c.l.b16 %v96
  %v539 = vunpack.c.l.b16 %v160
  %v540 = vunpack.c.l.b16 %v97
  %v541 = vunpack.c.l.b16 %v161
  %v542 = vunpack.c.l.b16 %v98
  %v543 = vunpack.c.l.b16 %v162
  %v544 = vunpack.c.l.b16 %v99
  %v545 = vunpack.c.l.b16 %v163
  %v546 = vunpack.c.l.b16 %v100
  %v547 = vunpack.c.l.b16 %v164
  %v548 = vunpack.c.l.b16 %v101
  %v549 = vunpack.c.l.b16 %v165
  %v550 = vunpack.c.l.b16 %v102
  %v551 = vunpack.c.l.b16 %v166
  %v552 = vpack.c.b16 %v425, %v424
  %v553 = vpack.c.b16 %v427, %v426
  %v554 = vpack.c.b16 %v429, %v428
  %v555 = vpack.c.b16 %v431, %v430
  %v556 = vpack.c.b16 %v433, %v432
  %v557 = vpack.c.b16 %v435, %v434
  %v558 = vpack.c.b16 %v437, %v436
  %v559 = vpack.c.b16 %v439, %v438
  %v560 = vpack.c.b16 %v441, %v440
  %v561 = vpack.c.b16 %v443, %v442
  %v562 = vpack.c.b16 %v445, %v444
  %v563 = vpack.c.b16 %v447, %v446
  %v564 = vpack.c.b16 %v449, %v448
  %v565 = vpack.c.b16 %v451, %v450
  %v566 = vpack.c.b16 %v453, %v452
  %v567 = vpack.c.b16 %v455, %v454
  %v568 = vpack.c.b16 %v457, %v456
  %v569 = vpack.c.b16 %v459, %v458
  %v570 = vpack.c.b16 %v461, %v460
  %v571 = vpack.c.b16 %v463, %v462
  %v572 = vpack.c.b16 %v465, %v464
  %v573 = vpack.c.b16 %v467, %v466
  %v574 = vpack.c.b16 %v469, %v468
  %v575 = vpack.c.b16 %v471, %v470
  %v576 = vpack.c.b16 %v473, %v472
  %v577 = vpack.c.b16 %v475, %v474
  %v578 = vpack.c.b16 %v477, %v476
  %v579 = vpack.c.b16 %v479, %v478
  %v580 = vpack.c.b16 %v481, %v480
  %v581 = vpack.c.b16 %v483, %v482
  %v582 = vpack.c.b16 %v485, %v484
  %v583 = vpack.c.b16 %v487, %v486
  %v584 = vpack.c.b16 %v489, %v488
  %v585 = vpack.c.b16 %v491, %v490
  %v586 = vpack.c.b16 %v493, %v492
  %v587 = vpack.c.b16 %v495, %v494
  %v588 = vpack.c.b16 %v497, %v496
  %v589 = vpack.c.b16 %v499, %v498
  %v590 = vpack.c.b16 %v501, %v500
  %v591 = vpack.c.b16 %v503, %v502
  %v592 = vpack.c.b16 %v505, %v504
  %v593 = vpack.c.b16 %v507, %v506
  %v594 = vpack.c.b16 %v509, %v508
  %v595 = vpack.c.b16 %v511, %v510
  %v596 = vpack.c.b16 %v513, %v512
  %v597 = vpack.c.b16 %v515, %v514
  %v598 = vpack.c.b16 %v517, %v516
  %v599 = vpack.c.b16 %v519, %v518
  %v600 = vpack.c.b16 %v521, %v520
  %v601 = vpack.c.b16 %v523, %v522
  %v602 = vpack.c.b16 %v525, %v524
  %v603 = vpack.c.b16 %v527, %v526
  %v604 = vpack.c.b16 %v529, %v528
  %v605 = vpack.c.b16 %v531, %v530
  %v606 = vpack.c.b16 %v533, %v532
  %v607 = vpack.c.b16 %v535, %v534
  %v608 = vpack.c.b16 %v537, %v536
  %v609 = vpack.c.b16 %v539, %v538
  %v610 = vpack.c.b16 %v541, %v540
  %v611 = vpack.c.b16 %v543, %v542
  %v612 = vpack.c.b16 %v545, %v544
  %v613 = vpack.c.b16 %v547, %v546
  %v614 = vpack.c.b16 %v549, %v548
  %v615 = vpack.c.b16 %v551, %v550
  %v617 = vshrl.u32 %v552, 16
  %v619 = vshll.u32 %v552, 16
  %v621 = vrot.slane %v619, 1
  %v622 = vor.u32 %v617, %v621
  %v624 = vshrl.u32 %v553, 16
  %v626 = vshll.u32 %v553, 16
  %v628 = vrot.slane %v626, 1
  %v629 = vor.u32 %v624, %v628
  %v631 = vshrl.u32 %v554, 16
  %v633 = vshll.u32 %v554, 16
  %v635 = vrot.slane %v633, 1
  %v636 = vor.u32 %v631, %v635
  %v638 = vshrl.u32 %v555, 16
  %v640 = vshll.u32 %v555, 16
  %v642 = vrot.slane %v640, 1
  %v643 = vor.u32 %v638, %v642
  %v645 = vshrl.u32 %v556, 16
  %v647 = vshll.u32 %v556, 16
  %v649 = vrot.slane %v647, 1
  %v650 = vor.u32 %v645, %v649
  %v652 = vshrl.u32 %v557, 16
  %v654 = vshll.u32 %v557, 16
  %v656 = vrot.slane %v654, 1
  %v657 = vor.u32 %v652, %v656
  %v659 = vshrl.u32 %v558, 16
  %v661 = vshll.u32 %v558, 16
  %v663 = vrot.slane %v661, 1
  %v664 = vor.u32 %v659, %v663
  %v666 = vshrl.u32 %v559, 16
  %v668 = vshll.u32 %v559, 16
  %v670 = vrot.slane %v668, 1
  %v671 = vor.u32 %v666, %v670
  %v673 = vshrl.u32 %v560, 16
  %v675 = vshll.u32 %v560, 16
  %v677 = vrot.slane %v675, 1
  %v678 = vor.u32 %v673, %v677
  %v680 = vshrl.u32 %v561, 16
  %v682 = vshll.u32 %v561, 16
  %v684 = vrot.slane %v682, 1
  %v685 = vor.u32 %v680, %v684
  %v687 = vshrl.u32 %v562, 16
  %v689 = vshll.u32 %v562, 16
  %v691 = vrot.slane %v689, 1
  %v692 = vor.u32 %v687, %v691
  %v694 = vshrl.u32 %v563, 16
  %v696 = vshll.u32 %v563, 16
  %v698 = vrot.slane %v696, 1
  %v699 = vor.u32 %v694, %v698
  %v701 = vshrl.u32 %v564, 16
  %v703 = vshll.u32 %v564, 16
  %v705 = vrot.slane %v703, 1
  %v706 = vor.u32 %v701, %v705
  %v708 = vshrl.u32 %v565, 16
  %v710 = vshll.u32 %v565, 16
  %v712 = vrot.slane %v710, 1
  %v713 = vor.u32 %v708, %v712
  %v715 = vshrl.u32 %v566, 16
  %v717 = vshll.u32 %v566, 16
  %v719 = vrot.slane %v717, 1
  %v720 = vor.u32 %v715, %v719
  %v722 = vshrl.u32 %v567, 16
  %v724 = vshll.u32 %v567, 16
  %v726 = vrot.slane %v724, 1
  %v727 = vor.u32 %v722, %v726
  %v729 = vshrl.u32 %v568, 16
  %v731 = vshll.u32 %v568, 16
  %v733 = vrot.slane %v731, 1
  %v734 = vor.u32 %v729, %v733
  %v736 = vshrl.u32 %v569, 16
  %v738 = vshll.u32 %v569, 16
  %v740 = vrot.slane %v738, 1
  %v741 = vor.u32 %v736, %v740
  %v743 = vshrl.u32 %v570, 16
  %v745 = vshll.u32 %v570, 16
  %v747 = vrot.slane %v745, 1
  %v748 = vor.u32 %v743, %v747
  %v750 = vshrl.u32 %v571, 16
  %v752 = vshll.u32 %v571, 16
  %v754 = vrot.slane %v752, 1
  %v755 = vor.u32 %v750, %v754
  %v757 = vshrl.u32 %v572, 16
  %v759 = vshll.u32 %v572, 16
  %v761 = vrot.slane %v759, 1
  %v762 = vor.u32 %v757, %v761
  %v764 = vshrl.u32 %v573, 16
  %v766 = vshll.u32 %v573, 16
  %v768 = vrot.slane %v766, 1
  %v769 = vor.u32 %v764, %v768
  %v771 = vshrl.u32 %v574, 16
  %v773 = vshll.u32 %v574, 16
  %v775 = vrot.slane %v773, 1
  %v776 = vor.u32 %v771, %v775
  %v778 = vshrl.u32 %v575, 16
  %v780 = vshll.u32 %v575, 16
  %v782 = vrot.slane %v780, 1
  %v783 = vor.u32 %v778, %v782
  %v785 = vshrl.u32 %v576, 16
  %v787 = vshll.u32 %v576, 16
  %v789 = vrot.slane %v787, 1
  %v790 = vor.u32 %v785, %v789
  %v792 = vshrl.u32 %v577, 16
  %v794 = vshll.u32 %v577, 16
  %v796 = vrot.slane %v794, 1
  %v797 = vor.u32 %v792, %v796
  %v799 = vshrl.u32 %v578, 16
  %v801 = vshll.u32 %v578, 16
  %v803 = vrot.slane %v801, 1
  %v804 = vor.u32 %v799, %v803
  %v806 = vshrl.u32 %v579, 16
  %v808 = vshll.u32 %v579, 16
  %v810 = vrot.slane %v808, 1
  %v811 = vor.u32 %v806, %v810
  %v813 = vshrl.u32 %v580, 16
  %v815 = vshll.u32 %v580, 16
  %v817 = vrot.slane %v815, 1
  %v818 = vor.u32 %v813, %v817
  %v820 = vshrl.u32 %v581, 16
  %v822 = vshll.u32 %v581, 16
  %v824 = vrot.slane %v822, 1
  %v825 = vor.u32 %v820, %v824
  %v827 = vshrl.u32 %v582, 16
  %v829 = vshll.u32 %v582, 16
  %v831 = vrot.slane %v829, 1
  %v832 = vor.u32 %v827, %v831
  %v834 = vshrl.u32 %v583, 16
  %v836 = vshll.u32 %v583, 16
  %v838 = vrot.slane %v836, 1
  %v839 = vor.u32 %v834, %v838
  %v841 = vshrl.u32 %v584, 16
  %v843 = vshll.u32 %v584, 16
  %v845 = vrot.slane %v843, 1
  %v846 = vor.u32 %v841, %v845
  %v848 = vshrl.u32 %v585, 16
  %v850 = vshll.u32 %v585, 16
  %v852 = vrot.slane %v850, 1
  %v853 = vor.u32 %v848, %v852
  %v855 = vshrl.u32 %v586, 16
  %v857 = vshll.u32 %v586, 16
  %v859 = vrot.slane %v857, 1
  %v860 = vor.u32 %v855, %v859
  %v862 = vshrl.u32 %v587, 16
  %v864 = vshll.u32 %v587, 16
  %v866 = vrot.slane %v864, 1
  %v867 = vor.u32 %v862, %v866
  %v869 = vshrl.u32 %v588, 16
  %v871 = vshll.u32 %v588, 16
  %v873 = vrot.slane %v871, 1
  %v874 = vor.u32 %v869, %v873
  %v876 = vshrl.u32 %v589, 16
  %v878 = vshll.u32 %v589, 16
  %v880 = vrot.slane %v878, 1
  %v881 = vor.u32 %v876, %v880
  %v883 = vshrl.u32 %v590, 16
  %v885 = vshll.u32 %v590, 16
  %v887 = vrot.slane %v885, 1
  %v888 = vor.u32 %v883, %v887
  %v890 = vshrl.u32 %v591, 16
  %v892 = vshll.u32 %v591, 16
  %v894 = vrot.slane %v892, 1
  %v895 = vor.u32 %v890, %v894
  %v897 = vshrl.u32 %v592, 16
  %v899 = vshll.u32 %v592, 16
  %v901 = vrot.slane %v899, 1
  %v902 = vor.u32 %v897, %v901
  %v904 = vshrl.u32 %v593, 16
  %v906 = vshll.u32 %v593, 16
  %v908 = vrot.slane %v906, 1
  %v909 = vor.u32 %v904, %v908
  %v911 = vshrl.u32 %v594, 16
  %v913 = vshll.u32 %v594, 16
  %v915 = vrot.slane %v913, 1
  %v916 = vor.u32 %v911, %v915
  %v918 = vshrl.u32 %v595, 16
  %v920 = vshll.u32 %v595, 16
  %v922 = vrot.slane %v920, 1
  %v923 = vor.u32 %v918, %v922
  %v925 = vshrl.u32 %v596, 16
  %v927 = vshll.u32 %v596, 16
  %v929 = vrot.slane %v927, 1
  %v930 = vor.u32 %v925, %v929
  %v932 = vshrl.u32 %v597, 16
  %v934 = vshll.u32 %v597, 16
  %v936 = vrot.slane %v934, 1
  %v937 = vor.u32 %v932, %v936
  %v939 = vshrl.u32 %v598, 16
  %v941 = vshll.u32 %v598, 16
  %v943 = vrot.slane %v941, 1
  %v944 = vor.u32 %v939, %v943
  %v946 = vshrl.u32 %v599, 16
  %v948 = vshll.u32 %v599, 16
  %v950 = vrot.slane %v948, 1
  %v951 = vor.u32 %v946, %v950
  %v953 = vshrl.u32 %v600, 16
  %v955 = vshll.u32 %v600, 16
  %v957 = vrot.slane %v955, 1
  %v958 = vor.u32 %v953, %v957
  %v960 = vshrl.u32 %v601, 16
  %v962 = vshll.u32 %v601, 16
  %v964 = vrot.slane %v962, 1
  %v965 = vor.u32 %v960, %v964
  %v967 = vshrl.u32 %v602, 16
  %v969 = vshll.u32 %v602, 16
  %v971 = vrot.slane %v969, 1
  %v972 = vor.u32 %v967, %v971
  %v974 = vshrl.u32 %v603, 16
  %v976 = vshll.u32 %v603, 16
  %v978 = vrot.slane %v976, 1
  %v979 = vor.u32 %v974, %v978
  %v981 = vshrl.u32 %v604, 16
  %v983 = vshll.u32 %v604, 16
  %v985 = vrot.slane %v983, 1
  %v986 = vor.u32 %v981, %v985
  %v988 = vshrl.u32 %v605, 16
  %v990 = vshll.u32 %v605, 16
  %v992 = vrot.slane %v990, 1
  %v993 = vor.u32 %v988, %v992
  %v995 = vshrl.u32 %v606, 16
  %v997 = vshll.u32 %v606, 16
  %v999 = vrot.slane %v997, 1
  %v1000 = vor.u32 %v995, %v999
  %v1002 = vshrl.u32 %v607, 16
  %v1004 = vshll.u32 %v607, 16
  %v1006 = vrot.slane %v1004, 1
  %v1007 = vor.u32 %v1002, %v1006
  %v1009 = vshrl.u32 %v608, 16
  %v1011 = vshll.u32 %v608, 16
  %v1013 = vrot.slane %v1011, 1
  %v1014 = vor.u32 %v1009, %v1013
  %v1016 = vshrl.u32 %v609, 16
  %v1018 = vshll.u32 %v609, 16
  %v1020 = vrot.slane %v1018, 1
  %v1021 = vor.u32 %v1016, %v1020
  %v1023 = vshrl.u32 %v610, 16
  %v1025 = vshll.u32 %v610, 16
  %v1027 = vrot.slane %v1025, 1
  %v1028 = vor.u32 %v1023, %v1027
  %v1030 = vshrl.u32 %v611, 16
  %v1032 = vshll.u32 %v611, 16
  %v1034 = vrot.slane %v1032, 1
  %v1035 = vor.u32 %v1030, %v1034
  %v1037 = vshrl.u32 %v612, 16
  %v1039 = vshll.u32 %v612, 16
  %v1041 = vrot.slane %v1039, 1
  %v1042 = vor.u32 %v1037, %v1041
  %v1044 = vshrl.u32 %v613, 16
  %v1046 = vshll.u32 %v613, 16
  %v1048 = vrot.slane %v1046, 1
  %v1049 = vor.u32 %v1044, %v1048
  %v1051 = vshrl.u32 %v614, 16
  %v1053 = vshll.u32 %v614, 16
  %v1055 = vrot.slane %v1053, 1
  %v1056 = vor.u32 %v1051, %v1055
  %v1058 = vshrl.u32 %v615, 16
  %v1060 = vshll.u32 %v615, 16
  %v1062 = vrot.slane %v1060, 1
  %v1063 = vor.u32 %v1058, %v1062
  %1064 = vrot.lane.b32.xlu0 %v622, 64
  %v1065 = vpop.permute.xlu0 %1064
  %1066 = vrot.lane.b32.xlu0 %v629, 64
  %v1067 = vpop.permute.xlu0 %1066
  %1068 = vrot.lane.b32.xlu0 %v636, 64
  %v1069 = vpop.permute.xlu0 %1068
  %1070 = vrot.lane.b32.xlu0 %v643, 64
  %v1071 = vpop.permute.xlu0 %1070
  %1072 = vrot.lane.b32.xlu0 %v650, 64
  %v1073 = vpop.permute.xlu0 %1072
  %1074 = vrot.lane.b32.xlu0 %v657, 64
  %v1075 = vpop.permute.xlu0 %1074
  %1076 = vrot.lane.b32.xlu0 %v664, 64
  %v1077 = vpop.permute.xlu0 %1076
  %1078 = vrot.lane.b32.xlu0 %v671, 64
  %v1079 = vpop.permute.xlu0 %1078
  %1080 = vrot.lane.b32.xlu0 %v678, 64
  %v1081 = vpop.permute.xlu0 %1080
  %1082 = vrot.lane.b32.xlu0 %v685, 64
  %v1083 = vpop.permute.xlu0 %1082
  %1084 = vrot.lane.b32.xlu0 %v692, 64
  %v1085 = vpop.permute.xlu0 %1084
  %1086 = vrot.lane.b32.xlu0 %v699, 64
  %v1087 = vpop.permute.xlu0 %1086
  %1088 = vrot.lane.b32.xlu0 %v706, 64
  %v1089 = vpop.permute.xlu0 %1088
  %1090 = vrot.lane.b32.xlu0 %v713, 64
  %v1091 = vpop.permute.xlu0 %1090
  %1092 = vrot.lane.b32.xlu0 %v720, 64
  %v1093 = vpop.permute.xlu0 %1092
  %1094 = vrot.lane.b32.xlu0 %v727, 64
  %v1095 = vpop.permute.xlu0 %1094
  %1096 = vrot.lane.b32.xlu0 %v734, 64
  %v1097 = vpop.permute.xlu0 %1096
  %1098 = vrot.lane.b32.xlu0 %v741, 64
  %v1099 = vpop.permute.xlu0 %1098
  %1100 = vrot.lane.b32.xlu0 %v748, 64
  %v1101 = vpop.permute.xlu0 %1100
  %1102 = vrot.lane.b32.xlu0 %v755, 64
  %v1103 = vpop.permute.xlu0 %1102
  %1104 = vrot.lane.b32.xlu0 %v762, 64
  %v1105 = vpop.permute.xlu0 %1104
  %1106 = vrot.lane.b32.xlu0 %v769, 64
  %v1107 = vpop.permute.xlu0 %1106
  %1108 = vrot.lane.b32.xlu0 %v776, 64
  %v1109 = vpop.permute.xlu0 %1108
  %1110 = vrot.lane.b32.xlu0 %v783, 64
  %v1111 = vpop.permute.xlu0 %1110
  %1112 = vrot.lane.b32.xlu0 %v790, 64
  %v1113 = vpop.permute.xlu0 %1112
  %1114 = vrot.lane.b32.xlu0 %v797, 64
  %v1115 = vpop.permute.xlu0 %1114
  %1116 = vrot.lane.b32.xlu0 %v804, 64
  %v1117 = vpop.permute.xlu0 %1116
  %1118 = vrot.lane.b32.xlu0 %v811, 64
  %v1119 = vpop.permute.xlu0 %1118
  %1120 = vrot.lane.b32.xlu0 %v818, 64
  %v1121 = vpop.permute.xlu0 %1120
  %1122 = vrot.lane.b32.xlu0 %v825, 64
  %v1123 = vpop.permute.xlu0 %1122
  %1124 = vrot.lane.b32.xlu0 %v832, 64
  %v1125 = vpop.permute.xlu0 %1124
  %1126 = vrot.lane.b32.xlu0 %v839, 64
  %v1127 = vpop.permute.xlu0 %1126
  %1128 = vrot.lane.b32.xlu0 %v846, 64
  %v1129 = vpop.permute.xlu0 %1128
  %1130 = vrot.lane.b32.xlu0 %v853, 64
  %v1131 = vpop.permute.xlu0 %1130
  %1132 = vrot.lane.b32.xlu0 %v860, 64
  %v1133 = vpop.permute.xlu0 %1132
  %1134 = vrot.lane.b32.xlu0 %v867, 64
  %v1135 = vpop.permute.xlu0 %1134
  %1136 = vrot.lane.b32.xlu0 %v874, 64
  %v1137 = vpop.permute.xlu0 %1136
  %1138 = vrot.lane.b32.xlu0 %v881, 64
  %v1139 = vpop.permute.xlu0 %1138
  %1140 = vrot.lane.b32.xlu0 %v888, 64
  %v1141 = vpop.permute.xlu0 %1140
  %1142 = vrot.lane.b32.xlu0 %v895, 64
  %v1143 = vpop.permute.xlu0 %1142
  %1144 = vrot.lane.b32.xlu0 %v902, 64
  %v1145 = vpop.permute.xlu0 %1144
  %1146 = vrot.lane.b32.xlu0 %v909, 64
  %v1147 = vpop.permute.xlu0 %1146
  %1148 = vrot.lane.b32.xlu0 %v916, 64
  %v1149 = vpop.permute.xlu0 %1148
  %1150 = vrot.lane.b32.xlu0 %v923, 64
  %v1151 = vpop.permute.xlu0 %1150
  %1152 = vrot.lane.b32.xlu0 %v930, 64
  %v1153 = vpop.permute.xlu0 %1152
  %1154 = vrot.lane.b32.xlu0 %v937, 64
  %v1155 = vpop.permute.xlu0 %1154
  %1156 = vrot.lane.b32.xlu0 %v944, 64
  %v1157 = vpop.permute.xlu0 %1156
  %1158 = vrot.lane.b32.xlu0 %v951, 64
  %v1159 = vpop.permute.xlu0 %1158
  %1160 = vrot.lane.b32.xlu0 %v958, 64
  %v1161 = vpop.permute.xlu0 %1160
  %1162 = vrot.lane.b32.xlu0 %v965, 64
  %v1163 = vpop.permute.xlu0 %1162
  %1164 = vrot.lane.b32.xlu0 %v972, 64
  %v1165 = vpop.permute.xlu0 %1164
  %1166 = vrot.lane.b32.xlu0 %v979, 64
  %v1167 = vpop.permute.xlu0 %1166
  %1168 = vrot.lane.b32.xlu0 %v986, 64
  %v1169 = vpop.permute.xlu0 %1168
  %1170 = vrot.lane.b32.xlu0 %v993, 64
  %v1171 = vpop.permute.xlu0 %1170
  %1172 = vrot.lane.b32.xlu0 %v1000, 64
  %v1173 = vpop.permute.xlu0 %1172
  %1174 = vrot.lane.b32.xlu0 %v1007, 64
  %v1175 = vpop.permute.xlu0 %1174
  %1176 = vrot.lane.b32.xlu0 %v1014, 64
  %v1177 = vpop.permute.xlu0 %1176
  %1178 = vrot.lane.b32.xlu0 %v1021, 64
  %v1179 = vpop.permute.xlu0 %1178
  %1180 = vrot.lane.b32.xlu0 %v1028, 64
  %v1181 = vpop.permute.xlu0 %1180
  %1182 = vrot.lane.b32.xlu0 %v1035, 64
  %v1183 = vpop.permute.xlu0 %1182
  %1184 = vrot.lane.b32.xlu0 %v1042, 64
  %v1185 = vpop.permute.xlu0 %1184
  %1186 = vrot.lane.b32.xlu0 %v1049, 64
  %v1187 = vpop.permute.xlu0 %1186
  %1188 = vrot.lane.b32.xlu0 %v1056, 64
  %v1189 = vpop.permute.xlu0 %1188
  %1190 = vrot.lane.b32.xlu0 %v1063, 64
  %v1191 = vpop.permute.xlu0 %1190
  %v1320 = vunpack.c.l.b16 %v168
  %v1321 = vunpack.c.l.b16 %v232
  %v1322 = vunpack.c.l.b16 %v169
  %v1323 = vunpack.c.l.b16 %v233
  %v1324 = vunpack.c.l.b16 %v170
  %v1325 = vunpack.c.l.b16 %v234
  %v1326 = vunpack.c.l.b16 %v171
  %v1327 = vunpack.c.l.b16 %v235
  %v1328 = vunpack.c.l.b16 %v172
  %v1329 = vunpack.c.l.b16 %v236
  %v1330 = vunpack.c.l.b16 %v173
  %v1331 = vunpack.c.l.b16 %v237
  %v1332 = vunpack.c.l.b16 %v174
  %v1333 = vunpack.c.l.b16 %v238
  %v1334 = vunpack.c.l.b16 %v175
  %v1335 = vunpack.c.l.b16 %v239
  %v1336 = vunpack.c.l.b16 %v176
  %v1337 = vunpack.c.l.b16 %v240
  %v1338 = vunpack.c.l.b16 %v177
  %v1339 = vunpack.c.l.b16 %v241
  %v1340 = vunpack.c.l.b16 %v178
  %v1341 = vunpack.c.l.b16 %v242
  %v1342 = vunpack.c.l.b16 %v179
  %v1343 = vunpack.c.l.b16 %v243
  %v1344 = vunpack.c.l.b16 %v180
  %v1345 = vunpack.c.l.b16 %v244
  %v1346 = vunpack.c.l.b16 %v181
  %v1347 = vunpack.c.l.b16 %v245
  %v1348 = vunpack.c.l.b16 %v182
  %v1349 = vunpack.c.l.b16 %v246
  %v1350 = vunpack.c.l.b16 %v183
  %v1351 = vunpack.c.l.b16 %v247
  %v1352 = vunpack.c.l.b16 %v184
  %v1353 = vunpack.c.l.b16 %v248
  %v1354 = vunpack.c.l.b16 %v185
  %v1355 = vunpack.c.l.b16 %v249
  %v1356 = vunpack.c.l.b16 %v186
  %v1357 = vunpack.c.l.b16 %v250
  %v1358 = vunpack.c.l.b16 %v187
  %v1359 = vunpack.c.l.b16 %v251
  %v1360 = vunpack.c.l.b16 %v188
  %v1361 = vunpack.c.l.b16 %v252
  %v1362 = vunpack.c.l.b16 %v189
  %v1363 = vunpack.c.l.b16 %v253
  %v1364 = vunpack.c.l.b16 %v190
  %v1365 = vunpack.c.l.b16 %v254
  %v1366 = vunpack.c.l.b16 %v191
  %v1367 = vunpack.c.l.b16 %v255
  %v1368 = vunpack.c.l.b16 %v192
  %v1369 = vunpack.c.l.b16 %v256
  %v1370 = vunpack.c.l.b16 %v193
  %v1371 = vunpack.c.l.b16 %v257
  %v1372 = vunpack.c.l.b16 %v194
  %v1373 = vunpack.c.l.b16 %v258
  %v1374 = vunpack.c.l.b16 %v195
  %v1375 = vunpack.c.l.b16 %v259
  %v1376 = vunpack.c.l.b16 %v196
  %v1377 = vunpack.c.l.b16 %v260
  %v1378 = vunpack.c.l.b16 %v197
  %v1379 = vunpack.c.l.b16 %v261
  %v1380 = vunpack.c.l.b16 %v198
  %v1381 = vunpack.c.l.b16 %v262
  %v1382 = vunpack.c.l.b16 %v199
  %v1383 = vunpack.c.l.b16 %v263
  %v1384 = vunpack.c.l.b16 %v200
  %v1385 = vunpack.c.l.b16 %v264
  %v1386 = vunpack.c.l.b16 %v201
  %v1387 = vunpack.c.l.b16 %v265
  %v1388 = vunpack.c.l.b16 %v202
  %v1389 = vunpack.c.l.b16 %v266
  %v1390 = vunpack.c.l.b16 %v203
  %v1391 = vunpack.c.l.b16 %v267
  %v1392 = vunpack.c.l.b16 %v204
  %v1393 = vunpack.c.l.b16 %v268
  %v1394 = vunpack.c.l.b16 %v205
  %v1395 = vunpack.c.l.b16 %v269
  %v1396 = vunpack.c.l.b16 %v206
  %v1397 = vunpack.c.l.b16 %v270
  %v1398 = vunpack.c.l.b16 %v207
  %v1399 = vunpack.c.l.b16 %v271
  %v1400 = vunpack.c.l.b16 %v208
  %v1401 = vunpack.c.l.b16 %v272
  %v1402 = vunpack.c.l.b16 %v209
  %v1403 = vunpack.c.l.b16 %v273
  %v1404 = vunpack.c.l.b16 %v210
  %v1405 = vunpack.c.l.b16 %v274
  %v1406 = vunpack.c.l.b16 %v211
  %v1407 = vunpack.c.l.b16 %v275
  %v1408 = vunpack.c.l.b16 %v212
  %v1409 = vunpack.c.l.b16 %v276
  %v1410 = vunpack.c.l.b16 %v213
  %v1411 = vunpack.c.l.b16 %v277
  %v1412 = vunpack.c.l.b16 %v214
  %v1413 = vunpack.c.l.b16 %v278
  %v1414 = vunpack.c.l.b16 %v215
  %v1415 = vunpack.c.l.b16 %v279
  %v1416 = vunpack.c.l.b16 %v216
  %v1417 = vunpack.c.l.b16 %v280
  %v1418 = vunpack.c.l.b16 %v217
  %v1419 = vunpack.c.l.b16 %v281
  %v1420 = vunpack.c.l.b16 %v218
  %v1421 = vunpack.c.l.b16 %v282
  %v1422 = vunpack.c.l.b16 %v219
  %v1423 = vunpack.c.l.b16 %v283
  %v1424 = vunpack.c.l.b16 %v220
  %v1425 = vunpack.c.l.b16 %v284
  %v1426 = vunpack.c.l.b16 %v221
  %v1427 = vunpack.c.l.b16 %v285
  %v1428 = vunpack.c.l.b16 %v222
  %v1429 = vunpack.c.l.b16 %v286
  %v1430 = vunpack.c.l.b16 %v223
  %v1431 = vunpack.c.l.b16 %v287
  %v1432 = vunpack.c.l.b16 %v224
  %v1433 = vunpack.c.l.b16 %v288
  %v1434 = vunpack.c.l.b16 %v225
  %v1435 = vunpack.c.l.b16 %v289
  %v1436 = vunpack.c.l.b16 %v226
  %v1437 = vunpack.c.l.b16 %v290
  %v1438 = vunpack.c.l.b16 %v227
  %v1439 = vunpack.c.l.b16 %v291
  %v1440 = vunpack.c.l.b16 %v228
  %v1441 = vunpack.c.l.b16 %v292
  %v1442 = vunpack.c.l.b16 %v229
  %v1443 = vunpack.c.l.b16 %v293
  %v1444 = vunpack.c.l.b16 %v230
  %v1445 = vunpack.c.l.b16 %v294
  %v1446 = vunpack.c.l.b16 %v231
  %v1447 = vunpack.c.l.b16 %v295
  %v1448 = vpack.c.b16 %v1321, %v1320
  %v1449 = vpack.c.b16 %v1323, %v1322
  %v1450 = vpack.c.b16 %v1325, %v1324
  %v1451 = vpack.c.b16 %v1327, %v1326
  %v1452 = vpack.c.b16 %v1329, %v1328
  %v1453 = vpack.c.b16 %v1331, %v1330
  %v1454 = vpack.c.b16 %v1333, %v1332
  %v1455 = vpack.c.b16 %v1335, %v1334
  %v1456 = vpack.c.b16 %v1337, %v1336
  %v1457 = vpack.c.b16 %v1339, %v1338
  %v1458 = vpack.c.b16 %v1341, %v1340
  %v1459 = vpack.c.b16 %v1343, %v1342
  %v1460 = vpack.c.b16 %v1345, %v1344
  %v1461 = vpack.c.b16 %v1347, %v1346
  %v1462 = vpack.c.b16 %v1349, %v1348
  %v1463 = vpack.c.b16 %v1351, %v1350
  %v1464 = vpack.c.b16 %v1353, %v1352
  %v1465 = vpack.c.b16 %v1355, %v1354
  %v1466 = vpack.c.b16 %v1357, %v1356
  %v1467 = vpack.c.b16 %v1359, %v1358
  %v1468 = vpack.c.b16 %v1361, %v1360
  %v1469 = vpack.c.b16 %v1363, %v1362
  %v1470 = vpack.c.b16 %v1365, %v1364
  %v1471 = vpack.c.b16 %v1367, %v1366
  %v1472 = vpack.c.b16 %v1369, %v1368
  %v1473 = vpack.c.b16 %v1371, %v1370
  %v1474 = vpack.c.b16 %v1373, %v1372
  %v1475 = vpack.c.b16 %v1375, %v1374
  %v1476 = vpack.c.b16 %v1377, %v1376
  %v1477 = vpack.c.b16 %v1379, %v1378
  %v1478 = vpack.c.b16 %v1381, %v1380
  %v1479 = vpack.c.b16 %v1383, %v1382
  %v1480 = vpack.c.b16 %v1385, %v1384
  %v1481 = vpack.c.b16 %v1387, %v1386
  %v1482 = vpack.c.b16 %v1389, %v1388
  %v1483 = vpack.c.b16 %v1391, %v1390
  %v1484 = vpack.c.b16 %v1393, %v1392
  %v1485 = vpack.c.b16 %v1395, %v1394
  %v1486 = vpack.c.b16 %v1397, %v1396
  %v1487 = vpack.c.b16 %v1399, %v1398
  %v1488 = vpack.c.b16 %v1401, %v1400
  %v1489 = vpack.c.b16 %v1403, %v1402
  %v1490 = vpack.c.b16 %v1405, %v1404
  %v1491 = vpack.c.b16 %v1407, %v1406
  %v1492 = vpack.c.b16 %v1409, %v1408
  %v1493 = vpack.c.b16 %v1411, %v1410
  %v1494 = vpack.c.b16 %v1413, %v1412
  %v1495 = vpack.c.b16 %v1415, %v1414
  %v1496 = vpack.c.b16 %v1417, %v1416
  %v1497 = vpack.c.b16 %v1419, %v1418
  %v1498 = vpack.c.b16 %v1421, %v1420
  %v1499 = vpack.c.b16 %v1423, %v1422
  %v1500 = vpack.c.b16 %v1425, %v1424
  %v1501 = vpack.c.b16 %v1427, %v1426
  %v1502 = vpack.c.b16 %v1429, %v1428
  %v1503 = vpack.c.b16 %v1431, %v1430
  %v1504 = vpack.c.b16 %v1433, %v1432
  %v1505 = vpack.c.b16 %v1435, %v1434
  %v1506 = vpack.c.b16 %v1437, %v1436
  %v1507 = vpack.c.b16 %v1439, %v1438
  %v1508 = vpack.c.b16 %v1441, %v1440
  %v1509 = vpack.c.b16 %v1443, %v1442
  %v1510 = vpack.c.b16 %v1445, %v1444
  %v1511 = vpack.c.b16 %v1447, %v1446
  %v1513 = vshrl.u32 %v1448, 16
  %v1515 = vshll.u32 %v1448, 16
  %v1517 = vrot.slane %v1515, 1
  %v1518 = vor.u32 %v1513, %v1517
  %v1520 = vshrl.u32 %v1449, 16
  %v1522 = vshll.u32 %v1449, 16
  %v1524 = vrot.slane %v1522, 1
  %v1525 = vor.u32 %v1520, %v1524
  %v1527 = vshrl.u32 %v1450, 16
  %v1529 = vshll.u32 %v1450, 16
  %v1531 = vrot.slane %v1529, 1
  %v1532 = vor.u32 %v1527, %v1531
  %v1534 = vshrl.u32 %v1451, 16
  %v1536 = vshll.u32 %v1451, 16
  %v1538 = vrot.slane %v1536, 1
  %v1539 = vor.u32 %v1534, %v1538
  %v1541 = vshrl.u32 %v1452, 16
  %v1543 = vshll.u32 %v1452, 16
  %v1545 = vrot.slane %v1543, 1
  %v1546 = vor.u32 %v1541, %v1545
  %v1548 = vshrl.u32 %v1453, 16
  %v1550 = vshll.u32 %v1453, 16
  %v1552 = vrot.slane %v1550, 1
  %v1553 = vor.u32 %v1548, %v1552
  %v1555 = vshrl.u32 %v1454, 16
  %v1557 = vshll.u32 %v1454, 16
  %v1559 = vrot.slane %v1557, 1
  %v1560 = vor.u32 %v1555, %v1559
  %v1562 = vshrl.u32 %v1455, 16
  %v1564 = vshll.u32 %v1455, 16
  %v1566 = vrot.slane %v1564, 1
  %v1567 = vor.u32 %v1562, %v1566
  %v1569 = vshrl.u32 %v1456, 16
  %v1571 = vshll.u32 %v1456, 16
  %v1573 = vrot.slane %v1571, 1
  %v1574 = vor.u32 %v1569, %v1573
  %v1576 = vshrl.u32 %v1457, 16
  %v1578 = vshll.u32 %v1457, 16
  %v1580 = vrot.slane %v1578, 1
  %v1581 = vor.u32 %v1576, %v1580
  %v1583 = vshrl.u32 %v1458, 16
  %v1585 = vshll.u32 %v1458, 16
  %v1587 = vrot.slane %v1585, 1
  %v1588 = vor.u32 %v1583, %v1587
  %v1590 = vshrl.u32 %v1459, 16
  %v1592 = vshll.u32 %v1459, 16
  %v1594 = vrot.slane %v1592, 1
  %v1595 = vor.u32 %v1590, %v1594
  %v1597 = vshrl.u32 %v1460, 16
  %v1599 = vshll.u32 %v1460, 16
  %v1601 = vrot.slane %v1599, 1
  %v1602 = vor.u32 %v1597, %v1601
  %v1604 = vshrl.u32 %v1461, 16
  %v1606 = vshll.u32 %v1461, 16
  %v1608 = vrot.slane %v1606, 1
  %v1609 = vor.u32 %v1604, %v1608
  %v1611 = vshrl.u32 %v1462, 16
  %v1613 = vshll.u32 %v1462, 16
  %v1615 = vrot.slane %v1613, 1
  %v1616 = vor.u32 %v1611, %v1615
  %v1618 = vshrl.u32 %v1463, 16
  %v1620 = vshll.u32 %v1463, 16
  %v1622 = vrot.slane %v1620, 1
  %v1623 = vor.u32 %v1618, %v1622
  %v1625 = vshrl.u32 %v1464, 16
  %v1627 = vshll.u32 %v1464, 16
  %v1629 = vrot.slane %v1627, 1
  %v1630 = vor.u32 %v1625, %v1629
  %v1632 = vshrl.u32 %v1465, 16
  %v1634 = vshll.u32 %v1465, 16
  %v1636 = vrot.slane %v1634, 1
  %v1637 = vor.u32 %v1632, %v1636
  %v1639 = vshrl.u32 %v1466, 16
  %v1641 = vshll.u32 %v1466, 16
  %v1643 = vrot.slane %v1641, 1
  %v1644 = vor.u32 %v1639, %v1643
  %v1646 = vshrl.u32 %v1467, 16
  %v1648 = vshll.u32 %v1467, 16
  %v1650 = vrot.slane %v1648, 1
  %v1651 = vor.u32 %v1646, %v1650
  %v1653 = vshrl.u32 %v1468, 16
  %v1655 = vshll.u32 %v1468, 16
  %v1657 = vrot.slane %v1655, 1
  %v1658 = vor.u32 %v1653, %v1657
  %v1660 = vshrl.u32 %v1469, 16
  %v1662 = vshll.u32 %v1469, 16
  %v1664 = vrot.slane %v1662, 1
  %v1665 = vor.u32 %v1660, %v1664
  %v1667 = vshrl.u32 %v1470, 16
  %v1669 = vshll.u32 %v1470, 16
  %v1671 = vrot.slane %v1669, 1
  %v1672 = vor.u32 %v1667, %v1671
  %v1674 = vshrl.u32 %v1471, 16
  %v1676 = vshll.u32 %v1471, 16
  %v1678 = vrot.slane %v1676, 1
  %v1679 = vor.u32 %v1674, %v1678
  %v1681 = vshrl.u32 %v1472, 16
  %v1683 = vshll.u32 %v1472, 16
  %v1685 = vrot.slane %v1683, 1
  %v1686 = vor.u32 %v1681, %v1685
  %v1688 = vshrl.u32 %v1473, 16
  %v1690 = vshll.u32 %v1473, 16
  %v1692 = vrot.slane %v1690, 1
  %v1693 = vor.u32 %v1688, %v1692
  %v1695 = vshrl.u32 %v1474, 16
  %v1697 = vshll.u32 %v1474, 16
  %v1699 = vrot.slane %v1697, 1
  %v1700 = vor.u32 %v1695, %v1699
  %v1702 = vshrl.u32 %v1475, 16
  %v1704 = vshll.u32 %v1475, 16
  %v1706 = vrot.slane %v1704, 1
  %v1707 = vor.u32 %v1702, %v1706
  %v1709 = vshrl.u32 %v1476, 16
  %v1711 = vshll.u32 %v1476, 16
  %v1713 = vrot.slane %v1711, 1
  %v1714 = vor.u32 %v1709, %v1713
  %v1716 = vshrl.u32 %v1477, 16
  %v1718 = vshll.u32 %v1477, 16
  %v1720 = vrot.slane %v1718, 1
  %v1721 = vor.u32 %v1716, %v1720
  %v1723 = vshrl.u32 %v1478, 16
  %v1725 = vshll.u32 %v1478, 16
  %v1727 = vrot.slane %v1725, 1
  %v1728 = vor.u32 %v1723, %v1727
  %v1730 = vshrl.u32 %v1479, 16
  %v1732 = vshll.u32 %v1479, 16
  %v1734 = vrot.slane %v1732, 1
  %v1735 = vor.u32 %v1730, %v1734
  %v1737 = vshrl.u32 %v1480, 16
  %v1739 = vshll.u32 %v1480, 16
  %v1741 = vrot.slane %v1739, 1
  %v1742 = vor.u32 %v1737, %v1741
  %v1744 = vshrl.u32 %v1481, 16
  %v1746 = vshll.u32 %v1481, 16
  %v1748 = vrot.slane %v1746, 1
  %v1749 = vor.u32 %v1744, %v1748
  %v1751 = vshrl.u32 %v1482, 16
  %v1753 = vshll.u32 %v1482, 16
  %v1755 = vrot.slane %v1753, 1
  %v1756 = vor.u32 %v1751, %v1755
  %v1758 = vshrl.u32 %v1483, 16
  %v1760 = vshll.u32 %v1483, 16
  %v1762 = vrot.slane %v1760, 1
  %v1763 = vor.u32 %v1758, %v1762
  %v1765 = vshrl.u32 %v1484, 16
  %v1767 = vshll.u32 %v1484, 16
  %v1769 = vrot.slane %v1767, 1
  %v1770 = vor.u32 %v1765, %v1769
  %v1772 = vshrl.u32 %v1485, 16
  %v1774 = vshll.u32 %v1485, 16
  %v1776 = vrot.slane %v1774, 1
  %v1777 = vor.u32 %v1772, %v1776
  %v1779 = vshrl.u32 %v1486, 16
  %v1781 = vshll.u32 %v1486, 16
  %v1783 = vrot.slane %v1781, 1
  %v1784 = vor.u32 %v1779, %v1783
  %v1786 = vshrl.u32 %v1487, 16
  %v1788 = vshll.u32 %v1487, 16
  %v1790 = vrot.slane %v1788, 1
  %v1791 = vor.u32 %v1786, %v1790
  %v1793 = vshrl.u32 %v1488, 16
  %v1795 = vshll.u32 %v1488, 16
  %v1797 = vrot.slane %v1795, 1
  %v1798 = vor.u32 %v1793, %v1797
  %v1800 = vshrl.u32 %v1489, 16
  %v1802 = vshll.u32 %v1489, 16
  %v1804 = vrot.slane %v1802, 1
  %v1805 = vor.u32 %v1800, %v1804
  %v1807 = vshrl.u32 %v1490, 16
  %v1809 = vshll.u32 %v1490, 16
  %v1811 = vrot.slane %v1809, 1
  %v1812 = vor.u32 %v1807, %v1811
  %v1814 = vshrl.u32 %v1491, 16
  %v1816 = vshll.u32 %v1491, 16
  %v1818 = vrot.slane %v1816, 1
  %v1819 = vor.u32 %v1814, %v1818
  %v1821 = vshrl.u32 %v1492, 16
  %v1823 = vshll.u32 %v1492, 16
  %v1825 = vrot.slane %v1823, 1
  %v1826 = vor.u32 %v1821, %v1825
  %v1828 = vshrl.u32 %v1493, 16
  %v1830 = vshll.u32 %v1493, 16
  %v1832 = vrot.slane %v1830, 1
  %v1833 = vor.u32 %v1828, %v1832
  %v1835 = vshrl.u32 %v1494, 16
  %v1837 = vshll.u32 %v1494, 16
  %v1839 = vrot.slane %v1837, 1
  %v1840 = vor.u32 %v1835, %v1839
  %v1842 = vshrl.u32 %v1495, 16
  %v1844 = vshll.u32 %v1495, 16
  %v1846 = vrot.slane %v1844, 1
  %v1847 = vor.u32 %v1842, %v1846
  %v1849 = vshrl.u32 %v1496, 16
  %v1851 = vshll.u32 %v1496, 16
  %v1853 = vrot.slane %v1851, 1
  %v1854 = vor.u32 %v1849, %v1853
  %v1856 = vshrl.u32 %v1497, 16
  %v1858 = vshll.u32 %v1497, 16
  %v1860 = vrot.slane %v1858, 1
  %v1861 = vor.u32 %v1856, %v1860
  %v1863 = vshrl.u32 %v1498, 16
  %v1865 = vshll.u32 %v1498, 16
  %v1867 = vrot.slane %v1865, 1
  %v1868 = vor.u32 %v1863, %v1867
  %v1870 = vshrl.u32 %v1499, 16
  %v1872 = vshll.u32 %v1499, 16
  %v1874 = vrot.slane %v1872, 1
  %v1875 = vor.u32 %v1870, %v1874
  %v1877 = vshrl.u32 %v1500, 16
  %v1879 = vshll.u32 %v1500, 16
  %v1881 = vrot.slane %v1879, 1
  %v1882 = vor.u32 %v1877, %v1881
  %v1884 = vshrl.u32 %v1501, 16
  %v1886 = vshll.u32 %v1501, 16
  %v1888 = vrot.slane %v1886, 1
  %v1889 = vor.u32 %v1884, %v1888
  %v1891 = vshrl.u32 %v1502, 16
  %v1893 = vshll.u32 %v1502, 16
  %v1895 = vrot.slane %v1893, 1
  %v1896 = vor.u32 %v1891, %v1895
  %v1898 = vshrl.u32 %v1503, 16
  %v1900 = vshll.u32 %v1503, 16
  %v1902 = vrot.slane %v1900, 1
  %v1903 = vor.u32 %v1898, %v1902
  %v1905 = vshrl.u32 %v1504, 16
  %v1907 = vshll.u32 %v1504, 16
  %v1909 = vrot.slane %v1907, 1
  %v1910 = vor.u32 %v1905, %v1909
  %v1912 = vshrl.u32 %v1505, 16
  %v1914 = vshll.u32 %v1505, 16
  %v1916 = vrot.slane %v1914, 1
  %v1917 = vor.u32 %v1912, %v1916
  %v1919 = vshrl.u32 %v1506, 16
  %v1921 = vshll.u32 %v1506, 16
  %v1923 = vrot.slane %v1921, 1
  %v1924 = vor.u32 %v1919, %v1923
  %v1926 = vshrl.u32 %v1507, 16
  %v1928 = vshll.u32 %v1507, 16
  %v1930 = vrot.slane %v1928, 1
  %v1931 = vor.u32 %v1926, %v1930
  %v1933 = vshrl.u32 %v1508, 16
  %v1935 = vshll.u32 %v1508, 16
  %v1937 = vrot.slane %v1935, 1
  %v1938 = vor.u32 %v1933, %v1937
  %v1940 = vshrl.u32 %v1509, 16
  %v1942 = vshll.u32 %v1509, 16
  %v1944 = vrot.slane %v1942, 1
  %v1945 = vor.u32 %v1940, %v1944
  %v1947 = vshrl.u32 %v1510, 16
  %v1949 = vshll.u32 %v1510, 16
  %v1951 = vrot.slane %v1949, 1
  %v1952 = vor.u32 %v1947, %v1951
  %v1954 = vshrl.u32 %v1511, 16
  %v1956 = vshll.u32 %v1511, 16
  %v1958 = vrot.slane %v1956, 1
  %v1959 = vor.u32 %v1954, %v1958
  %1960 = vrot.lane.b32.xlu0 %v1518, 64
  %v1961 = vpop.permute.xlu0 %1960
  %1962 = vrot.lane.b32.xlu0 %v1525, 64
  %v1963 = vpop.permute.xlu0 %1962
  %1964 = vrot.lane.b32.xlu0 %v1532, 64
  %v1965 = vpop.permute.xlu0 %1964
  %1966 = vrot.lane.b32.xlu0 %v1539, 64
  %v1967 = vpop.permute.xlu0 %1966
  %1968 = vrot.lane.b32.xlu0 %v1546, 64
  %v1969 = vpop.permute.xlu0 %1968
  %1970 = vrot.lane.b32.xlu0 %v1553, 64
  %v1971 = vpop.permute.xlu0 %1970
  %1972 = vrot.lane.b32.xlu0 %v1560, 64
  %v1973 = vpop.permute.xlu0 %1972
  %1974 = vrot.lane.b32.xlu0 %v1567, 64
  %v1975 = vpop.permute.xlu0 %1974
  %1976 = vrot.lane.b32.xlu0 %v1574, 64
  %v1977 = vpop.permute.xlu0 %1976
  %1978 = vrot.lane.b32.xlu0 %v1581, 64
  %v1979 = vpop.permute.xlu0 %1978
  %1980 = vrot.lane.b32.xlu0 %v1588, 64
  %v1981 = vpop.permute.xlu0 %1980
  %1982 = vrot.lane.b32.xlu0 %v1595, 64
  %v1983 = vpop.permute.xlu0 %1982
  %1984 = vrot.lane.b32.xlu0 %v1602, 64
  %v1985 = vpop.permute.xlu0 %1984
  %1986 = vrot.lane.b32.xlu0 %v1609, 64
  %v1987 = vpop.permute.xlu0 %1986
  %1988 = vrot.lane.b32.xlu0 %v1616, 64
  %v1989 = vpop.permute.xlu0 %1988
  %1990 = vrot.lane.b32.xlu0 %v1623, 64
  %v1991 = vpop.permute.xlu0 %1990
  %1992 = vrot.lane.b32.xlu0 %v1630, 64
  %v1993 = vpop.permute.xlu0 %1992
  %1994 = vrot.lane.b32.xlu0 %v1637, 64
  %v1995 = vpop.permute.xlu0 %1994
  %1996 = vrot.lane.b32.xlu0 %v1644, 64
  %v1997 = vpop.permute.xlu0 %1996
  %1998 = vrot.lane.b32.xlu0 %v1651, 64
  %v1999 = vpop.permute.xlu0 %1998
  %2000 = vrot.lane.b32.xlu0 %v1658, 64
  %v2001 = vpop.permute.xlu0 %2000
  %2002 = vrot.lane.b32.xlu0 %v1665, 64
  %v2003 = vpop.permute.xlu0 %2002
  %2004 = vrot.lane.b32.xlu0 %v1672, 64
  %v2005 = vpop.permute.xlu0 %2004
  %2006 = vrot.lane.b32.xlu0 %v1679, 64
  %v2007 = vpop.permute.xlu0 %2006
  %2008 = vrot.lane.b32.xlu0 %v1686, 64
  %v2009 = vpop.permute.xlu0 %2008
  %2010 = vrot.lane.b32.xlu0 %v1693, 64
  %v2011 = vpop.permute.xlu0 %2010
  %2012 = vrot.lane.b32.xlu0 %v1700, 64
  %v2013 = vpop.permute.xlu0 %2012
  %2014 = vrot.lane.b32.xlu0 %v1707, 64
  %v2015 = vpop.permute.xlu0 %2014
  %2016 = vrot.lane.b32.xlu0 %v1714, 64
  %v2017 = vpop.permute.xlu0 %2016
  %2018 = vrot.lane.b32.xlu0 %v1721, 64
  %v2019 = vpop.permute.xlu0 %2018
  %2020 = vrot.lane.b32.xlu0 %v1728, 64
  %v2021 = vpop.permute.xlu0 %2020
  %2022 = vrot.lane.b32.xlu0 %v1735, 64
  %v2023 = vpop.permute.xlu0 %2022
  %2024 = vrot.lane.b32.xlu0 %v1742, 64
  %v2025 = vpop.permute.xlu0 %2024
  %2026 = vrot.lane.b32.xlu0 %v1749, 64
  %v2027 = vpop.permute.xlu0 %2026
  %2028 = vrot.lane.b32.xlu0 %v1756, 64
  %v2029 = vpop.permute.xlu0 %2028
  %2030 = vrot.lane.b32.xlu0 %v1763, 64
  %v2031 = vpop.permute.xlu0 %2030
  %2032 = vrot.lane.b32.xlu0 %v1770, 64
  %v2033 = vpop.permute.xlu0 %2032
  %2034 = vrot.lane.b32.xlu0 %v1777, 64
  %v2035 = vpop.permute.xlu0 %2034
  %2036 = vrot.lane.b32.xlu0 %v1784, 64
  %v2037 = vpop.permute.xlu0 %2036
  %2038 = vrot.lane.b32.xlu0 %v1791, 64
  %v2039 = vpop.permute.xlu0 %2038
  %2040 = vrot.lane.b32.xlu0 %v1798, 64
  %v2041 = vpop.permute.xlu0 %2040
  %2042 = vrot.lane.b32.xlu0 %v1805, 64
  %v2043 = vpop.permute.xlu0 %2042
  %2044 = vrot.lane.b32.xlu0 %v1812, 64
  %v2045 = vpop.permute.xlu0 %2044
  %2046 = vrot.lane.b32.xlu0 %v1819, 64
  %v2047 = vpop.permute.xlu0 %2046
  %2048 = vrot.lane.b32.xlu0 %v1826, 64
  %v2049 = vpop.permute.xlu0 %2048
  %2050 = vrot.lane.b32.xlu0 %v1833, 64
  %v2051 = vpop.permute.xlu0 %2050
  %2052 = vrot.lane.b32.xlu0 %v1840, 64
  %v2053 = vpop.permute.xlu0 %2052
  %2054 = vrot.lane.b32.xlu0 %v1847, 64
  %v2055 = vpop.permute.xlu0 %2054
  %2056 = vrot.lane.b32.xlu0 %v1854, 64
  %v2057 = vpop.permute.xlu0 %2056
  %2058 = vrot.lane.b32.xlu0 %v1861, 64
  %v2059 = vpop.permute.xlu0 %2058
  %2060 = vrot.lane.b32.xlu0 %v1868, 64
  %v2061 = vpop.permute.xlu0 %2060
  %2062 = vrot.lane.b32.xlu0 %v1875, 64
  %v2063 = vpop.permute.xlu0 %2062
  %2064 = vrot.lane.b32.xlu0 %v1882, 64
  %v2065 = vpop.permute.xlu0 %2064
  %2066 = vrot.lane.b32.xlu0 %v1889, 64
  %v2067 = vpop.permute.xlu0 %2066
  %2068 = vrot.lane.b32.xlu0 %v1896, 64
  %v2069 = vpop.permute.xlu0 %2068
  %2070 = vrot.lane.b32.xlu0 %v1903, 64
  %v2071 = vpop.permute.xlu0 %2070
  %2072 = vrot.lane.b32.xlu0 %v1910, 64
  %v2073 = vpop.permute.xlu0 %2072
  %2074 = vrot.lane.b32.xlu0 %v1917, 64
  %v2075 = vpop.permute.xlu0 %2074
  %2076 = vrot.lane.b32.xlu0 %v1924, 64
  %v2077 = vpop.permute.xlu0 %2076
  %2078 = vrot.lane.b32.xlu0 %v1931, 64
  %v2079 = vpop.permute.xlu0 %2078
  %2080 = vrot.lane.b32.xlu0 %v1938, 64
  %v2081 = vpop.permute.xlu0 %2080
  %2082 = vrot.lane.b32.xlu0 %v1945, 64
  %v2083 = vpop.permute.xlu0 %2082
  %2084 = vrot.lane.b32.xlu0 %v1952, 64
  %v2085 = vpop.permute.xlu0 %2084
  %2086 = vrot.lane.b32.xlu0 %v1959, 64
  %v2087 = vpop.permute.xlu0 %2086
  %vm2088 = vcmask 523264
  %v2091 = vsel %vm2088, %v39, %v1065
  %v2094 = vsel %vm2088, %v40, %v1067
  %v2097 = vsel %vm2088, %v41, %v1069
  %v2100 = vsel %vm2088, %v42, %v1071
  %v2103 = vsel %vm2088, %v43, %v1073
  %v2106 = vsel %vm2088, %v44, %v1075
  %v2109 = vsel %vm2088, %v45, %v1077
  %v2112 = vsel %vm2088, %v46, %v1079
  %v2115 = vsel %vm2088, %v47, %v1081
  %v2118 = vsel %vm2088, %v48, %v1083
  %v2121 = vsel %vm2088, %v49, %v1085
  %v2124 = vsel %vm2088, %v50, %v1087
  %v2127 = vsel %vm2088, %v51, %v1089
  %v2130 = vsel %vm2088, %v52, %v1091
  %v2133 = vsel %vm2088, %v53, %v1093
  %v2136 = vsel %vm2088, %v54, %v1095
  %v2139 = vsel %vm2088, %v55, %v1097
  %v2142 = vsel %vm2088, %v56, %v1099
  %v2145 = vsel %vm2088, %v57, %v1101
  %v2148 = vsel %vm2088, %v58, %v1103
  %v2151 = vsel %vm2088, %v59, %v1105
  %v2154 = vsel %vm2088, %v60, %v1107
  %v2157 = vsel %vm2088, %v61, %v1109
  %v2160 = vsel %vm2088, %v62, %v1111
  %v2163 = vsel %vm2088, %v63, %v1113
  %v2166 = vsel %vm2088, %v64, %v1115
  %v2169 = vsel %vm2088, %v65, %v1117
  %v2172 = vsel %vm2088, %v66, %v1119
  %v2175 = vsel %vm2088, %v67, %v1121
  %v2178 = vsel %vm2088, %v68, %v1123
  %v2181 = vsel %vm2088, %v69, %v1125
  %v2184 = vsel %vm2088, %v70, %v1127
  %v2187 = vsel %vm2088, %v71, %v1129
  %v2190 = vsel %vm2088, %v72, %v1131
  %v2193 = vsel %vm2088, %v73, %v1133
  %v2196 = vsel %vm2088, %v74, %v1135
  %v2199 = vsel %vm2088, %v75, %v1137
  %v2202 = vsel %vm2088, %v76, %v1139
  %v2205 = vsel %vm2088, %v77, %v1141
  %v2208 = vsel %vm2088, %v78, %v1143
  %v2211 = vsel %vm2088, %v79, %v1145
  %v2214 = vsel %vm2088, %v80, %v1147
  %v2217 = vsel %vm2088, %v81, %v1149
  %v2220 = vsel %vm2088, %v82, %v1151
  %v2223 = vsel %vm2088, %v83, %v1153
  %v2226 = vsel %vm2088, %v84, %v1155
  %v2229 = vsel %vm2088, %v85, %v1157
  %v2232 = vsel %vm2088, %v86, %v1159
  %v2235 = vsel %vm2088, %v87, %v1161
  %v2238 = vsel %vm2088, %v88, %v1163
  %v2241 = vsel %vm2088, %v89, %v1165
  %v2244 = vsel %vm2088, %v90, %v1167
  %v2247 = vsel %vm2088, %v91, %v1169
  %v2250 = vsel %vm2088, %v92, %v1171
  %v2253 = vsel %vm2088, %v93, %v1173
  %v2256 = vsel %vm2088, %v94, %v1175
  %v2259 = vsel %vm2088, %v95, %v1177
  %v2262 = vsel %vm2088, %v96, %v1179
  %v2265 = vsel %vm2088, %v97, %v1181
  %v2268 = vsel %vm2088, %v98, %v1183
  %v2271 = vsel %vm2088, %v99, %v1185
  %v2274 = vsel %vm2088, %v100, %v1187
  %v2277 = vsel %vm2088, %v101, %v1189
  %v2280 = vsel %vm2088, %v102, %v1191
  %v2283 = vsel %vm2088, %v168, %v1961
  %v2286 = vsel %vm2088, %v169, %v1963
  %v2289 = vsel %vm2088, %v170, %v1965
  %v2292 = vsel %vm2088, %v171, %v1967
  %v2295 = vsel %vm2088, %v172, %v1969
  %v2298 = vsel %vm2088, %v173, %v1971
  %v2301 = vsel %vm2088, %v174, %v1973
  %v2304 = vsel %vm2088, %v175, %v1975
  %v2307 = vsel %vm2088, %v176, %v1977
  %v2310 = vsel %vm2088, %v177, %v1979
  %v2313 = vsel %vm2088, %v178, %v1981
  %v2316 = vsel %vm2088, %v179, %v1983
  %v2319 = vsel %vm2088, %v180, %v1985
  %v2322 = vsel %vm2088, %v181, %v1987
  %v2325 = vsel %vm2088, %v182, %v1989
  %v2328 = vsel %vm2088, %v183, %v1991
  %v2331 = vsel %vm2088, %v184, %v1993
  %v2334 = vsel %vm2088, %v185, %v1995
  %v2337 = vsel %vm2088, %v186, %v1997
  %v2340 = vsel %vm2088, %v187, %v1999
  %v2343 = vsel %vm2088, %v188, %v2001
  %v2346 = vsel %vm2088, %v189, %v2003
  %v2349 = vsel %vm2088, %v190, %v2005
  %v2352 = vsel %vm2088, %v191, %v2007
  %v2355 = vsel %vm2088, %v192, %v2009
  %v2358 = vsel %vm2088, %v193, %v2011
  %v2361 = vsel %vm2088, %v194, %v2013
  %v2364 = vsel %vm2088, %v195, %v2015
  %v2367 = vsel %vm2088, %v196, %v2017
  %v2370 = vsel %vm2088, %v197, %v2019
  %v2373 = vsel %vm2088, %v198, %v2021
  %v2376 = vsel %vm2088, %v199, %v2023
  %v2379 = vsel %vm2088, %v200, %v2025
  %v2382 = vsel %vm2088, %v201, %v2027
  %v2385 = vsel %vm2088, %v202, %v2029
  %v2388 = vsel %vm2088, %v203, %v2031
  %v2391 = vsel %vm2088, %v204, %v2033
  %v2394 = vsel %vm2088, %v205, %v2035
  %v2397 = vsel %vm2088, %v206, %v2037
  %v2400 = vsel %vm2088, %v207, %v2039
  %v2403 = vsel %vm2088, %v208, %v2041
  %v2406 = vsel %vm2088, %v209, %v2043
  %v2409 = vsel %vm2088, %v210, %v2045
  %v2412 = vsel %vm2088, %v211, %v2047
  %v2415 = vsel %vm2088, %v212, %v2049
  %v2418 = vsel %vm2088, %v213, %v2051
  %v2421 = vsel %vm2088, %v214, %v2053
  %v2424 = vsel %vm2088, %v215, %v2055
  %v2427 = vsel %vm2088, %v216, %v2057
  %v2430 = vsel %vm2088, %v217, %v2059
  %v2433 = vsel %vm2088, %v218, %v2061
  %v2436 = vsel %vm2088, %v219, %v2063
  %v2439 = vsel %vm2088, %v220, %v2065
  %v2442 = vsel %vm2088, %v221, %v2067
  %v2445 = vsel %vm2088, %v222, %v2069
  %v2448 = vsel %vm2088, %v223, %v2071
  %v2451 = vsel %vm2088, %v224, %v2073
  %v2454 = vsel %vm2088, %v225, %v2075
  %v2457 = vsel %vm2088, %v226, %v2077
  %v2460 = vsel %vm2088, %v227, %v2079
  %v2463 = vsel %vm2088, %v228, %v2081
  %v2466 = vsel %vm2088, %v229, %v2083
  %v2469 = vsel %vm2088, %v230, %v2085
  %v2472 = vsel %vm2088, %v231, %v2087
  %v2601 = vunpack.c.l.b16 %v2091
  %v2602 = vunpack.c.l.b16 %v2283
  %v2603 = vunpack.c.l.b16 %v2094
  %v2604 = vunpack.c.l.b16 %v2286
  %v2605 = vunpack.c.l.b16 %v2097
  %v2606 = vunpack.c.l.b16 %v2289
  %v2607 = vunpack.c.l.b16 %v2100
  %v2608 = vunpack.c.l.b16 %v2292
  %v2609 = vunpack.c.l.b16 %v2103
  %v2610 = vunpack.c.l.b16 %v2295
  %v2611 = vunpack.c.l.b16 %v2106
  %v2612 = vunpack.c.l.b16 %v2298
  %v2613 = vunpack.c.l.b16 %v2109
  %v2614 = vunpack.c.l.b16 %v2301
  %v2615 = vunpack.c.l.b16 %v2112
  %v2616 = vunpack.c.l.b16 %v2304
  %v2617 = vunpack.c.l.b16 %v2115
  %v2618 = vunpack.c.l.b16 %v2307
  %v2619 = vunpack.c.l.b16 %v2118
  %v2620 = vunpack.c.l.b16 %v2310
  %v2621 = vunpack.c.l.b16 %v2121
  %v2622 = vunpack.c.l.b16 %v2313
  %v2623 = vunpack.c.l.b16 %v2124
  %v2624 = vunpack.c.l.b16 %v2316
  %v2625 = vunpack.c.l.b16 %v2127
  %v2626 = vunpack.c.l.b16 %v2319
  %v2627 = vunpack.c.l.b16 %v2130
  %v2628 = vunpack.c.l.b16 %v2322
  %v2629 = vunpack.c.l.b16 %v2133
  %v2630 = vunpack.c.l.b16 %v2325
  %v2631 = vunpack.c.l.b16 %v2136
  %v2632 = vunpack.c.l.b16 %v2328
  %v2633 = vunpack.c.l.b16 %v2139
  %v2634 = vunpack.c.l.b16 %v2331
  %v2635 = vunpack.c.l.b16 %v2142
  %v2636 = vunpack.c.l.b16 %v2334
  %v2637 = vunpack.c.l.b16 %v2145
  %v2638 = vunpack.c.l.b16 %v2337
  %v2639 = vunpack.c.l.b16 %v2148
  %v2640 = vunpack.c.l.b16 %v2340
  %v2641 = vunpack.c.l.b16 %v2151
  %v2642 = vunpack.c.l.b16 %v2343
  %v2643 = vunpack.c.l.b16 %v2154
  %v2644 = vunpack.c.l.b16 %v2346
  %v2645 = vunpack.c.l.b16 %v2157
  %v2646 = vunpack.c.l.b16 %v2349
  %v2647 = vunpack.c.l.b16 %v2160
  %v2648 = vunpack.c.l.b16 %v2352
  %v2649 = vunpack.c.l.b16 %v2163
  %v2650 = vunpack.c.l.b16 %v2355
  %v2651 = vunpack.c.l.b16 %v2166
  %v2652 = vunpack.c.l.b16 %v2358
  %v2653 = vunpack.c.l.b16 %v2169
  %v2654 = vunpack.c.l.b16 %v2361
  %v2655 = vunpack.c.l.b16 %v2172
  %v2656 = vunpack.c.l.b16 %v2364
  %v2657 = vunpack.c.l.b16 %v2175
  %v2658 = vunpack.c.l.b16 %v2367
  %v2659 = vunpack.c.l.b16 %v2178
  %v2660 = vunpack.c.l.b16 %v2370
  %v2661 = vunpack.c.l.b16 %v2181
  %v2662 = vunpack.c.l.b16 %v2373
  %v2663 = vunpack.c.l.b16 %v2184
  %v2664 = vunpack.c.l.b16 %v2376
  %v2665 = vunpack.c.l.b16 %v2187
  %v2666 = vunpack.c.l.b16 %v2379
  %v2667 = vunpack.c.l.b16 %v2190
  %v2668 = vunpack.c.l.b16 %v2382
  %v2669 = vunpack.c.l.b16 %v2193
  %v2670 = vunpack.c.l.b16 %v2385
  %v2671 = vunpack.c.l.b16 %v2196
  %v2672 = vunpack.c.l.b16 %v2388
  %v2673 = vunpack.c.l.b16 %v2199
  %v2674 = vunpack.c.l.b16 %v2391
  %v2675 = vunpack.c.l.b16 %v2202
  %v2676 = vunpack.c.l.b16 %v2394
  %v2677 = vunpack.c.l.b16 %v2205
  %v2678 = vunpack.c.l.b16 %v2397
  %v2679 = vunpack.c.l.b16 %v2208
  %v2680 = vunpack.c.l.b16 %v2400
  %v2681 = vunpack.c.l.b16 %v2211
  %v2682 = vunpack.c.l.b16 %v2403
  %v2683 = vunpack.c.l.b16 %v2214
  %v2684 = vunpack.c.l.b16 %v2406
  %v2685 = vunpack.c.l.b16 %v2217
  %v2686 = vunpack.c.l.b16 %v2409
  %v2687 = vunpack.c.l.b16 %v2220
  %v2688 = vunpack.c.l.b16 %v2412
  %v2689 = vunpack.c.l.b16 %v2223
  %v2690 = vunpack.c.l.b16 %v2415
  %v2691 = vunpack.c.l.b16 %v2226
  %v2692 = vunpack.c.l.b16 %v2418
  %v2693 = vunpack.c.l.b16 %v2229
  %v2694 = vunpack.c.l.b16 %v2421
  %v2695 = vunpack.c.l.b16 %v2232
  %v2696 = vunpack.c.l.b16 %v2424
  %v2697 = vunpack.c.l.b16 %v2235
  %v2698 = vunpack.c.l.b16 %v2427
  %v2699 = vunpack.c.l.b16 %v2238
  %v2700 = vunpack.c.l.b16 %v2430
  %v2701 = vunpack.c.l.b16 %v2241
  %v2702 = vunpack.c.l.b16 %v2433
  %v2703 = vunpack.c.l.b16 %v2244
  %v2704 = vunpack.c.l.b16 %v2436
  %v2705 = vunpack.c.l.b16 %v2247
  %v2706 = vunpack.c.l.b16 %v2439
  %v2707 = vunpack.c.l.b16 %v2250
  %v2708 = vunpack.c.l.b16 %v2442
  %v2709 = vunpack.c.l.b16 %v2253
  %v2710 = vunpack.c.l.b16 %v2445
  %v2711 = vunpack.c.l.b16 %v2256
  %v2712 = vunpack.c.l.b16 %v2448
  %v2713 = vunpack.c.l.b16 %v2259
  %v2714 = vunpack.c.l.b16 %v2451
  %v2715 = vunpack.c.l.b16 %v2262
  %v2716 = vunpack.c.l.b16 %v2454
  %v2717 = vunpack.c.l.b16 %v2265
  %v2718 = vunpack.c.l.b16 %v2457
  %v2719 = vunpack.c.l.b16 %v2268
  %v2720 = vunpack.c.l.b16 %v2460
  %v2721 = vunpack.c.l.b16 %v2271
  %v2722 = vunpack.c.l.b16 %v2463
  %v2723 = vunpack.c.l.b16 %v2274
  %v2724 = vunpack.c.l.b16 %v2466
  %v2725 = vunpack.c.l.b16 %v2277
  %v2726 = vunpack.c.l.b16 %v2469
  %v2727 = vunpack.c.l.b16 %v2280
  %v2728 = vunpack.c.l.b16 %v2472
  %v2729 = vld [vmem:[%s1] sm:$0xf]
  %v2730 = vld [vmem:[%s1 + $0x4] sm:$0xf]
  %v2731 = vld [vmem:[%s1 + $0x8] sm:$0xf]
  %v2732 = vld [vmem:[%s1 + $0xc] sm:$0xf]
  %v2733 = vld [vmem:[%s1 + $0x10] sm:$0xf]
  %v2734 = vld [vmem:[%s1 + $0x14] sm:$0xf]
  %v2735 = vld [vmem:[%s1 + $0x18] sm:$0xf]
  %v2736 = vld [vmem:[%s1 + $0x1c] sm:$0xf]
  %v2737 = vld [vmem:[%s1 + $0x20] sm:$0xf]
  %v2738 = vld [vmem:[%s1 + $0x24] sm:$0xf]
  %v2739 = vld [vmem:[%s1 + $0x28] sm:$0xf]
  %v2740 = vld [vmem:[%s1 + $0x2c] sm:$0xf]
  %v2741 = vld [vmem:[%s1 + $0x30] sm:$0xf]
  %v2742 = vld [vmem:[%s1 + $0x34] sm:$0xf]
  %v2743 = vld [vmem:[%s1 + $0x38] sm:$0xf]
  %v2744 = vld [vmem:[%s1 + $0x3c] sm:$0xf]
  %v2745 = vld [vmem:[%s1 + $0x40] sm:$0xf]
  %v2746 = vld [vmem:[%s1 + $0x44] sm:$0xf]
  %v2747 = vld [vmem:[%s1 + $0x48] sm:$0xf]
  %v2748 = vld [vmem:[%s1 + $0x4c] sm:$0xf]
  %v2749 = vld [vmem:[%s1 + $0x50] sm:$0xf]
  %v2750 = vld [vmem:[%s1 + $0x54] sm:$0xf]
  %v2751 = vld [vmem:[%s1 + $0x58] sm:$0xf]
  %v2752 = vld [vmem:[%s1 + $0x5c] sm:$0xf]
  %v2753 = vld [vmem:[%s1 + $0x60] sm:$0xf]
  %v2754 = vld [vmem:[%s1 + $0x64] sm:$0xf]
  %v2755 = vld [vmem:[%s1 + $0x68] sm:$0xf]
  %v2756 = vld [vmem:[%s1 + $0x6c] sm:$0xf]
  %v2757 = vld [vmem:[%s1 + $0x70] sm:$0xf]
  %v2758 = vld [vmem:[%s1 + $0x74] sm:$0xf]
  %v2759 = vld [vmem:[%s1 + $0x78] sm:$0xf]
  %v2760 = vld [vmem:[%s1 + $0x7c] sm:$0xf]
  %v2761 = vld [vmem:[%s2] sm:$0x1]
  %v2763 = vlaneseq
  %v2764 = vshrl.u32 %v2763, 7
  %v2765 = vsub.s32 0, %v2764
  %v2766 = vrot.slane %v2761, %v2765
  %v2768 = vpack.c.b16 %v2603, %v2601
  %v2769 = vpack.c.b16 %v2604, %v2602
  %v2770 = vpack.c.b16 %v2607, %v2605
  %v2771 = vpack.c.b16 %v2608, %v2606
  %v2772 = vpack.c.b16 %v2611, %v2609
  %v2773 = vpack.c.b16 %v2612, %v2610
  %v2774 = vpack.c.b16 %v2615, %v2613
  %v2775 = vpack.c.b16 %v2616, %v2614
  %v2776 = vpack.c.b16 %v2619, %v2617
  %v2777 = vpack.c.b16 %v2620, %v2618
  %v2778 = vpack.c.b16 %v2623, %v2621
  %v2779 = vpack.c.b16 %v2624, %v2622
  %v2780 = vpack.c.b16 %v2627, %v2625
  %v2781 = vpack.c.b16 %v2628, %v2626
  %v2782 = vpack.c.b16 %v2631, %v2629
  %v2783 = vpack.c.b16 %v2632, %v2630
  %v2784 = vpack.c.b16 %v2635, %v2633
  %v2785 = vpack.c.b16 %v2636, %v2634
  %v2786 = vpack.c.b16 %v2639, %v2637
  %v2787 = vpack.c.b16 %v2640, %v2638
  %v2788 = vpack.c.b16 %v2643, %v2641
  %v2789 = vpack.c.b16 %v2644, %v2642
  %v2790 = vpack.c.b16 %v2647, %v2645
  %v2791 = vpack.c.b16 %v2648, %v2646
  %v2792 = vpack.c.b16 %v2651, %v2649
  %v2793 = vpack.c.b16 %v2652, %v2650
  %v2794 = vpack.c.b16 %v2655, %v2653
  %v2795 = vpack.c.b16 %v2656, %v2654
  %v2796 = vpack.c.b16 %v2659, %v2657
  %v2797 = vpack.c.b16 %v2660, %v2658
  %v2798 = vpack.c.b16 %v2663, %v2661
  %v2799 = vpack.c.b16 %v2664, %v2662
  %v2800 = vpack.c.b16 %v2667, %v2665
  %v2801 = vpack.c.b16 %v2668, %v2666
  %v2802 = vpack.c.b16 %v2671, %v2669
  %v2803 = vpack.c.b16 %v2672, %v2670
  %v2804 = vpack.c.b16 %v2675, %v2673
  %v2805 = vpack.c.b16 %v2676, %v2674
  %v2806 = vpack.c.b16 %v2679, %v2677
  %v2807 = vpack.c.b16 %v2680, %v2678
  %v2808 = vpack.c.b16 %v2683, %v2681
  %v2809 = vpack.c.b16 %v2684, %v2682
  %v2810 = vpack.c.b16 %v2687, %v2685
  %v2811 = vpack.c.b16 %v2688, %v2686
  %v2812 = vpack.c.b16 %v2691, %v2689
  %v2813 = vpack.c.b16 %v2692, %v2690
  %v2814 = vpack.c.b16 %v2695, %v2693
  %v2815 = vpack.c.b16 %v2696, %v2694
  %v2816 = vpack.c.b16 %v2699, %v2697
  %v2817 = vpack.c.b16 %v2700, %v2698
  %v2818 = vpack.c.b16 %v2703, %v2701
  %v2819 = vpack.c.b16 %v2704, %v2702
  %v2820 = vpack.c.b16 %v2707, %v2705
  %v2821 = vpack.c.b16 %v2708, %v2706
  %v2822 = vpack.c.b16 %v2711, %v2709
  %v2823 = vpack.c.b16 %v2712, %v2710
  %v2824 = vpack.c.b16 %v2715, %v2713
  %v2825 = vpack.c.b16 %v2716, %v2714
  %v2826 = vpack.c.b16 %v2719, %v2717
  %v2827 = vpack.c.b16 %v2720, %v2718
  %v2828 = vpack.c.b16 %v2723, %v2721
  %v2829 = vpack.c.b16 %v2724, %v2722
  %v2830 = vpack.c.b16 %v2727, %v2725
  %v2831 = vpack.c.b16 %v2728, %v2726
  %v2928 = vunpack.c.l.b16 %v2729
  %v2929 = vunpack.c.l.b16 %v2730
  %v2930 = vunpack.c.l.b16 %v2731
  %v2931 = vunpack.c.l.b16 %v2732
  %v2932 = vunpack.c.l.b16 %v2733
  %v2933 = vunpack.c.l.b16 %v2734
  %v2934 = vunpack.c.l.b16 %v2735
  %v2935 = vunpack.c.l.b16 %v2736
  %v2936 = vunpack.c.l.b16 %v2737
  %v2937 = vunpack.c.l.b16 %v2738
  %v2938 = vunpack.c.l.b16 %v2739
  %v2939 = vunpack.c.l.b16 %v2740
  %v2940 = vunpack.c.l.b16 %v2741
  %v2941 = vunpack.c.l.b16 %v2742
  %v2942 = vunpack.c.l.b16 %v2743
  %v2943 = vunpack.c.l.b16 %v2744
  %v2944 = vunpack.c.l.b16 %v2745
  %v2945 = vunpack.c.l.b16 %v2746
  %v2946 = vunpack.c.l.b16 %v2747
  %v2947 = vunpack.c.l.b16 %v2748
  %v2948 = vunpack.c.l.b16 %v2749
  %v2949 = vunpack.c.l.b16 %v2750
  %v2950 = vunpack.c.l.b16 %v2751
  %v2951 = vunpack.c.l.b16 %v2752
  %v2952 = vunpack.c.l.b16 %v2753
  %v2953 = vunpack.c.l.b16 %v2754
  %v2954 = vunpack.c.l.b16 %v2755
  %v2955 = vunpack.c.l.b16 %v2756
  %v2956 = vunpack.c.l.b16 %v2757
  %v2957 = vunpack.c.l.b16 %v2758
  %v2958 = vunpack.c.l.b16 %v2759
  %v2959 = vunpack.c.l.b16 %v2760
  %v2960 = vpack.c.b16 %v2929, %v2928
  %v2961 = vpack.c.b16 %v2931, %v2930
  %v2962 = vpack.c.b16 %v2933, %v2932
  %v2963 = vpack.c.b16 %v2935, %v2934
  %v2964 = vpack.c.b16 %v2937, %v2936
  %v2965 = vpack.c.b16 %v2939, %v2938
  %v2966 = vpack.c.b16 %v2941, %v2940
  %v2967 = vpack.c.b16 %v2943, %v2942
  %v2968 = vpack.c.b16 %v2945, %v2944
  %v2969 = vpack.c.b16 %v2947, %v2946
  %v2970 = vpack.c.b16 %v2949, %v2948
  %v2971 = vpack.c.b16 %v2951, %v2950
  %v2972 = vpack.c.b16 %v2953, %v2952
  %v2973 = vpack.c.b16 %v2955, %v2954
  %v2974 = vpack.c.b16 %v2957, %v2956
  %v2975 = vpack.c.b16 %v2959, %v2958
  %2992 = vmatprep.subr.bf16.mxu0 0
  %2993 = vmatpush1.bf16.msra.mxu0 %v2967
  %2994 = vmatprep.subr.bf16.mxu0 0
  %2995 = vmatpush1.bf16.msra.mxu0 %v2966
  %2996 = vmatprep.subr.bf16.mxu0 0
  %2997 = vmatpush1.bf16.msra.mxu0 %v2965
  %2998 = vmatprep.subr.bf16.mxu0 0
  %2999 = vmatpush1.bf16.msra.mxu0 %v2964
  %3000 = vmatprep.subr.bf16.mxu0 0
  %3001 = vmatpush1.bf16.msra.mxu0 %v2963
  %3002 = vmatprep.subr.bf16.mxu0 0
  %3003 = vmatpush1.bf16.msra.mxu0 %v2962
  %3004 = vmatprep.subr.bf16.mxu0 0
  %3005 = vmatpush1.bf16.msra.mxu0 %v2961
  %3006 = vmatprep.subr.bf16.mxu0 0
  %3007 = vmatpush1.bf16.msra.mxu0 %v2960
  %3008 = vmatprep.subr.bf16.mxu0 0
  %3009 = vmatpush2.bf16.msra.mxu0 %v2975
  %3010 = vmatprep.subr.bf16.mxu0 0
  %3011 = vmatpush2.bf16.msra.mxu0 %v2974
  %3012 = vmatprep.subr.bf16.mxu0 0
  %3013 = vmatpush2.bf16.msra.mxu0 %v2973
  %3014 = vmatprep.subr.bf16.mxu0 0
  %3015 = vmatpush2.bf16.msra.mxu0 %v2972
  %3016 = vmatprep.subr.bf16.mxu0 0
  %3017 = vmatpush2.bf16.msra.mxu0 %v2971
  %3018 = vmatprep.subr.bf16.mxu0 0
  %3019 = vmatpush2.bf16.msra.mxu0 %v2970
  %3020 = vmatprep.subr.bf16.mxu0 0
  %3021 = vmatpush2.bf16.msra.mxu0 %v2969
  %3022 = vmatprep.subr.bf16.mxu0 0
  %3023 = vmatpush2.bf16.msra.mxu0 %v2968
  %3024 = vmatprep.mubr.bf16.mxu0 %v2769
  %3025 = vmatmul.mubr.bf16.gmra.mxu0 %v2768
  %v3026 = vpop.f32.mrf.mxu0
  %v3027 = vadd.f32 %v2766, %v3026
  %v3028 = vpop.f32.mrf.mxu0
  %v3029 = vpop.f32.mrf.mxu0
  %v3030 = vadd.f32 %v2766, %v3029
  %v3031 = vpop.f32.mrf.mxu0
  %3032 = vmatprep.mubr.bf16.mxu0 %v2771
  %3033 = vmatmul.mubr.bf16.gmra.mxu0 %v2770
  %v3034 = vpop.f32.mrf.mxu0
  %v3035 = vadd.f32 %v2766, %v3034
  %v3036 = vpop.f32.mrf.mxu0
  %v3037 = vpop.f32.mrf.mxu0
  %v3038 = vadd.f32 %v2766, %v3037
  %v3039 = vpop.f32.mrf.mxu0
  %3040 = vmatprep.mubr.bf16.mxu0 %v2773
  %3041 = vmatmul.mubr.bf16.gmra.mxu0 %v2772
  %v3042 = vpop.f32.mrf.mxu0
  %v3043 = vadd.f32 %v2766, %v3042
  %v3044 = vpop.f32.mrf.mxu0
  %v3045 = vpop.f32.mrf.mxu0
  %v3046 = vadd.f32 %v2766, %v3045
  %v3047 = vpop.f32.mrf.mxu0
  %3048 = vmatprep.mubr.bf16.mxu0 %v2775
  %3049 = vmatmul.mubr.bf16.gmra.mxu0 %v2774
  %v3050 = vpop.f32.mrf.mxu0
  %v3051 = vadd.f32 %v2766, %v3050
  %v3052 = vpop.f32.mrf.mxu0
  %v3053 = vpop.f32.mrf.mxu0
  %v3054 = vadd.f32 %v2766, %v3053
  %v3055 = vpop.f32.mrf.mxu0
  %3056 = vmatprep.mubr.bf16.mxu0 %v2777
  %3057 = vmatmul.mubr.bf16.gmra.mxu0 %v2776
  %v3058 = vpop.f32.mrf.mxu0
  %v3059 = vadd.f32 %v2766, %v3058
  %v3060 = vpop.f32.mrf.mxu0
  %v3061 = vpop.f32.mrf.mxu0
  %v3062 = vadd.f32 %v2766, %v3061
  %v3063 = vpop.f32.mrf.mxu0
  %3064 = vmatprep.mubr.bf16.mxu0 %v2779
  %3065 = vmatmul.mubr.bf16.gmra.mxu0 %v2778
  %v3066 = vpop.f32.mrf.mxu0
  %v3067 = vadd.f32 %v2766, %v3066
  %v3068 = vpop.f32.mrf.mxu0
  %v3069 = vpop.f32.mrf.mxu0
  %v3070 = vadd.f32 %v2766, %v3069
  %v3071 = vpop.f32.mrf.mxu0
  %3072 = vmatprep.mubr.bf16.mxu0 %v2781
  %3073 = vmatmul.mubr.bf16.gmra.mxu0 %v2780
  %v3074 = vpop.f32.mrf.mxu0
  %v3075 = vadd.f32 %v2766, %v3074
  %v3076 = vpop.f32.mrf.mxu0
  %v3077 = vpop.f32.mrf.mxu0
  %v3078 = vadd.f32 %v2766, %v3077
  %v3079 = vpop.f32.mrf.mxu0
  %3080 = vmatprep.mubr.bf16.mxu0 %v2783
  %3081 = vmatmul.mubr.bf16.gmra.mxu0 %v2782
  %v3082 = vpop.f32.mrf.mxu0
  %v3083 = vadd.f32 %v2766, %v3082
  %v3084 = vpop.f32.mrf.mxu0
  %v3085 = vpop.f32.mrf.mxu0
  %v3086 = vadd.f32 %v2766, %v3085
  %v3087 = vpop.f32.mrf.mxu0
  %3088 = vmatprep.mubr.bf16.mxu0 %v2785
  %3089 = vmatmul.mubr.bf16.gmra.mxu0 %v2784
  %v3090 = vpop.f32.mrf.mxu0
  %v3091 = vadd.f32 %v2766, %v3090
  %v3092 = vpop.f32.mrf.mxu0
  %v3093 = vpop.f32.mrf.mxu0
  %v3094 = vadd.f32 %v2766, %v3093
  %v3095 = vpop.f32.mrf.mxu0
  %3096 = vmatprep.mubr.bf16.mxu0 %v2787
  %3097 = vmatmul.mubr.bf16.gmra.mxu0 %v2786
  %v3098 = vpop.f32.mrf.mxu0
  %v3099 = vadd.f32 %v2766, %v3098
  %v3100 = vpop.f32.mrf.mxu0
  %v3101 = vpop.f32.mrf.mxu0
  %v3102 = vadd.f32 %v2766, %v3101
  %v3103 = vpop.f32.mrf.mxu0
  %3104 = vmatprep.mubr.bf16.mxu0 %v2789
  %3105 = vmatmul.mubr.bf16.gmra.mxu0 %v2788
  %v3106 = vpop.f32.mrf.mxu0
  %v3107 = vadd.f32 %v2766, %v3106
  %v3108 = vpop.f32.mrf.mxu0
  %v3109 = vpop.f32.mrf.mxu0
  %v3110 = vadd.f32 %v2766, %v3109
  %v3111 = vpop.f32.mrf.mxu0
  %3112 = vmatprep.mubr.bf16.mxu0 %v2791
  %3113 = vmatmul.mubr.bf16.gmra.mxu0 %v2790
  %v3114 = vpop.f32.mrf.mxu0
  %v3115 = vadd.f32 %v2766, %v3114
  %v3116 = vpop.f32.mrf.mxu0
  %v3117 = vpop.f32.mrf.mxu0
  %v3118 = vadd.f32 %v2766, %v3117
  %v3119 = vpop.f32.mrf.mxu0
  %3120 = vmatprep.mubr.bf16.mxu0 %v2793
  %3121 = vmatmul.mubr.bf16.gmra.mxu0 %v2792
  %v3122 = vpop.f32.mrf.mxu0
  %v3123 = vadd.f32 %v2766, %v3122
  %v3124 = vpop.f32.mrf.mxu0
  %v3125 = vpop.f32.mrf.mxu0
  %v3126 = vadd.f32 %v2766, %v3125
  %v3127 = vpop.f32.mrf.mxu0
  %3128 = vmatprep.mubr.bf16.mxu0 %v2795
  %3129 = vmatmul.mubr.bf16.gmra.mxu0 %v2794
  %v3130 = vpop.f32.mrf.mxu0
  %v3131 = vadd.f32 %v2766, %v3130
  %v3132 = vpop.f32.mrf.mxu0
  %v3133 = vpop.f32.mrf.mxu0
  %v3134 = vadd.f32 %v2766, %v3133
  %v3135 = vpop.f32.mrf.mxu0
  %3136 = vmatprep.mubr.bf16.mxu0 %v2797
  %3137 = vmatmul.mubr.bf16.gmra.mxu0 %v2796
  %v3138 = vpop.f32.mrf.mxu0
  %v3139 = vadd.f32 %v2766, %v3138
  %v3140 = vpop.f32.mrf.mxu0
  %v3141 = vpop.f32.mrf.mxu0
  %v3142 = vadd.f32 %v2766, %v3141
  %v3143 = vpop.f32.mrf.mxu0
  %3144 = vmatprep.mubr.bf16.mxu0 %v2799
  %3145 = vmatmul.mubr.bf16.gmra.mxu0 %v2798
  %v3146 = vpop.f32.mrf.mxu0
  %v3147 = vadd.f32 %v2766, %v3146
  %v3148 = vpop.f32.mrf.mxu0
  %v3149 = vpop.f32.mrf.mxu0
  %v3150 = vadd.f32 %v2766, %v3149
  %v3151 = vpop.f32.mrf.mxu0
  %3152 = vmatprep.mubr.bf16.mxu0 %v2801
  %3153 = vmatmul.mubr.bf16.gmra.mxu0 %v2800
  %v3154 = vpop.f32.mrf.mxu0
  %v3155 = vadd.f32 %v2766, %v3154
  %v3156 = vpop.f32.mrf.mxu0
  %v3157 = vpop.f32.mrf.mxu0
  %v3158 = vadd.f32 %v2766, %v3157
  %v3159 = vpop.f32.mrf.mxu0
  %3160 = vmatprep.mubr.bf16.mxu0 %v2803
  %3161 = vmatmul.mubr.bf16.gmra.mxu0 %v2802
  %v3162 = vpop.f32.mrf.mxu0
  %v3163 = vadd.f32 %v2766, %v3162
  %v3164 = vpop.f32.mrf.mxu0
  %v3165 = vpop.f32.mrf.mxu0
  %v3166 = vadd.f32 %v2766, %v3165
  %v3167 = vpop.f32.mrf.mxu0
  %3168 = vmatprep.mubr.bf16.mxu0 %v2805
  %3169 = vmatmul.mubr.bf16.gmra.mxu0 %v2804
  %v3170 = vpop.f32.mrf.mxu0
  %v3171 = vadd.f32 %v2766, %v3170
  %v3172 = vpop.f32.mrf.mxu0
  %v3173 = vpop.f32.mrf.mxu0
  %v3174 = vadd.f32 %v2766, %v3173
  %v3175 = vpop.f32.mrf.mxu0
  %3176 = vmatprep.mubr.bf16.mxu0 %v2807
  %3177 = vmatmul.mubr.bf16.gmra.mxu0 %v2806
  %v3178 = vpop.f32.mrf.mxu0
  %v3179 = vadd.f32 %v2766, %v3178
  %v3180 = vpop.f32.mrf.mxu0
  %v3181 = vpop.f32.mrf.mxu0
  %v3182 = vadd.f32 %v2766, %v3181
  %v3183 = vpop.f32.mrf.mxu0
  %3184 = vmatprep.mubr.bf16.mxu0 %v2809
  %3185 = vmatmul.mubr.bf16.gmra.mxu0 %v2808
  %v3186 = vpop.f32.mrf.mxu0
  %v3187 = vadd.f32 %v2766, %v3186
  %v3188 = vpop.f32.mrf.mxu0
  %v3189 = vpop.f32.mrf.mxu0
  %v3190 = vadd.f32 %v2766, %v3189
  %v3191 = vpop.f32.mrf.mxu0
  %3192 = vmatprep.mubr.bf16.mxu0 %v2811
  %3193 = vmatmul.mubr.bf16.gmra.mxu0 %v2810
  %v3194 = vpop.f32.mrf.mxu0
  %v3195 = vadd.f32 %v2766, %v3194
  %v3196 = vpop.f32.mrf.mxu0
  %v3197 = vpop.f32.mrf.mxu0
  %v3198 = vadd.f32 %v2766, %v3197
  %v3199 = vpop.f32.mrf.mxu0
  %3200 = vmatprep.mubr.bf16.mxu0 %v2813
  %3201 = vmatmul.mubr.bf16.gmra.mxu0 %v2812
  %v3202 = vpop.f32.mrf.mxu0
  %v3203 = vadd.f32 %v2766, %v3202
  %v3204 = vpop.f32.mrf.mxu0
  %v3205 = vpop.f32.mrf.mxu0
  %v3206 = vadd.f32 %v2766, %v3205
  %v3207 = vpop.f32.mrf.mxu0
  %3208 = vmatprep.mubr.bf16.mxu0 %v2815
  %3209 = vmatmul.mubr.bf16.gmra.mxu0 %v2814
  %v3210 = vpop.f32.mrf.mxu0
  %v3211 = vadd.f32 %v2766, %v3210
  %v3212 = vpop.f32.mrf.mxu0
  %v3213 = vpop.f32.mrf.mxu0
  %v3214 = vadd.f32 %v2766, %v3213
  %v3215 = vpop.f32.mrf.mxu0
  %3216 = vmatprep.mubr.bf16.mxu0 %v2817
  %3217 = vmatmul.mubr.bf16.gmra.mxu0 %v2816
  %v3218 = vpop.f32.mrf.mxu0
  %v3219 = vadd.f32 %v2766, %v3218
  %v3220 = vpop.f32.mrf.mxu0
  %v3221 = vpop.f32.mrf.mxu0
  %v3222 = vadd.f32 %v2766, %v3221
  %v3223 = vpop.f32.mrf.mxu0
  %3224 = vmatprep.mubr.bf16.mxu0 %v2819
  %3225 = vmatmul.mubr.bf16.gmra.mxu0 %v2818
  %v3226 = vpop.f32.mrf.mxu0
  %v3227 = vadd.f32 %v2766, %v3226
  %v3228 = vpop.f32.mrf.mxu0
  %v3229 = vpop.f32.mrf.mxu0
  %v3230 = vadd.f32 %v2766, %v3229
  %v3231 = vpop.f32.mrf.mxu0
  %3232 = vmatprep.mubr.bf16.mxu0 %v2821
  %3233 = vmatmul.mubr.bf16.gmra.mxu0 %v2820
  %v3234 = vpop.f32.mrf.mxu0
  %v3235 = vadd.f32 %v2766, %v3234
  %v3236 = vpop.f32.mrf.mxu0
  %v3237 = vpop.f32.mrf.mxu0
  %v3238 = vadd.f32 %v2766, %v3237
  %v3239 = vpop.f32.mrf.mxu0
  %3240 = vmatprep.mubr.bf16.mxu0 %v2823
  %3241 = vmatmul.mubr.bf16.gmra.mxu0 %v2822
  %v3242 = vpop.f32.mrf.mxu0
  %v3243 = vadd.f32 %v2766, %v3242
  %v3244 = vpop.f32.mrf.mxu0
  %v3245 = vpop.f32.mrf.mxu0
  %v3246 = vadd.f32 %v2766, %v3245
  %v3247 = vpop.f32.mrf.mxu0
  %3248 = vmatprep.mubr.bf16.mxu0 %v2825
  %3249 = vmatmul.mubr.bf16.gmra.mxu0 %v2824
  %v3250 = vpop.f32.mrf.mxu0
  %v3251 = vadd.f32 %v2766, %v3250
  %v3252 = vpop.f32.mrf.mxu0
  %v3253 = vpop.f32.mrf.mxu0
  %v3254 = vadd.f32 %v2766, %v3253
  %v3255 = vpop.f32.mrf.mxu0
  %3256 = vmatprep.mubr.bf16.mxu0 %v2827
  %3257 = vmatmul.mubr.bf16.gmra.mxu0 %v2826
  %v3258 = vpop.f32.mrf.mxu0
  %v3259 = vadd.f32 %v2766, %v3258
  %v3260 = vpop.f32.mrf.mxu0
  %v3261 = vpop.f32.mrf.mxu0
  %v3262 = vadd.f32 %v2766, %v3261
  %v3263 = vpop.f32.mrf.mxu0
  %3264 = vmatprep.mubr.bf16.mxu0 %v2829
  %3265 = vmatmul.mubr.bf16.gmra.mxu0 %v2828
  %v3266 = vpop.f32.mrf.mxu0
  %v3267 = vadd.f32 %v2766, %v3266
  %v3268 = vpop.f32.mrf.mxu0
  %v3269 = vpop.f32.mrf.mxu0
  %v3270 = vadd.f32 %v2766, %v3269
  %v3271 = vpop.f32.mrf.mxu0
  %3272 = vmatprep.mubr.bf16.mxu0 %v2831
  %3273 = vmatmul.mubr.bf16.gmra.mxu0 %v2830
  %v3274 = vpop.f32.mrf.mxu0
  %v3275 = vadd.f32 %v2766, %v3274
  %v3276 = vpop.f32.mrf.mxu0
  %v3277 = vpop.f32.mrf.mxu0
  %v3278 = vadd.f32 %v2766, %v3277
  %v3279 = vpop.f32.mrf.mxu0
  %3280 = vdwg.mxu0
  %v3281 = vmax.f32 %v3027, 0.0
  %v3282 = vmax.f32 %v3030, 0.0
  %v3283 = vmax.f32 %v3035, 0.0
  %v3284 = vmax.f32 %v3038, 0.0
  %v3285 = vmax.f32 %v3043, 0.0
  %v3286 = vmax.f32 %v3046, 0.0
  %v3287 = vmax.f32 %v3051, 0.0
  %v3288 = vmax.f32 %v3054, 0.0
  %v3289 = vmax.f32 %v3059, 0.0
  %v3290 = vmax.f32 %v3062, 0.0
  %v3291 = vmax.f32 %v3067, 0.0
  %v3292 = vmax.f32 %v3070, 0.0
  %v3293 = vmax.f32 %v3075, 0.0
  %v3294 = vmax.f32 %v3078, 0.0
  %v3295 = vmax.f32 %v3083, 0.0
  %v3296 = vmax.f32 %v3086, 0.0
  %v3297 = vmax.f32 %v3091, 0.0
  %v3298 = vmax.f32 %v3094, 0.0
  %v3299 = vmax.f32 %v3099, 0.0
  %v3300 = vmax.f32 %v3102, 0.0
  %v3301 = vmax.f32 %v3107, 0.0
  %v3302 = vmax.f32 %v3110, 0.0
  %v3303 = vmax.f32 %v3115, 0.0
  %v3304 = vmax.f32 %v3118, 0.0
  %v3305 = vmax.f32 %v3123, 0.0
  %v3306 = vmax.f32 %v3126, 0.0
  %v3307 = vmax.f32 %v3131, 0.0
  %v3308 = vmax.f32 %v3134, 0.0
  %v3309 = vmax.f32 %v3139, 0.0
  %v3310 = vmax.f32 %v3142, 0.0
  %v3311 = vmax.f32 %v3147, 0.0
  %v3312 = vmax.f32 %v3150, 0.0
  %v3313 = vmax.f32 %v3155, 0.0
  %v3314 = vmax.f32 %v3158, 0.0
  %v3315 = vmax.f32 %v3163, 0.0
  %v3316 = vmax.f32 %v3166, 0.0
  %v3317 = vmax.f32 %v3171, 0.0
  %v3318 = vmax.f32 %v3174, 0.0
  %v3319 = vmax.f32 %v3179, 0.0
  %v3320 = vmax.f32 %v3182, 0.0
  %v3321 = vmax.f32 %v3187, 0.0
  %v3322 = vmax.f32 %v3190, 0.0
  %v3323 = vmax.f32 %v3195, 0.0
  %v3324 = vmax.f32 %v3198, 0.0
  %v3325 = vmax.f32 %v3203, 0.0
  %v3326 = vmax.f32 %v3206, 0.0
  %v3327 = vmax.f32 %v3211, 0.0
  %v3328 = vmax.f32 %v3214, 0.0
  %v3329 = vmax.f32 %v3219, 0.0
  %v3330 = vmax.f32 %v3222, 0.0
  %v3331 = vmax.f32 %v3227, 0.0
  %v3332 = vmax.f32 %v3230, 0.0
  %v3333 = vmax.f32 %v3235, 0.0
  %v3334 = vmax.f32 %v3238, 0.0
  %v3335 = vmax.f32 %v3243, 0.0
  %v3336 = vmax.f32 %v3246, 0.0
  %v3337 = vmax.f32 %v3251, 0.0
  %v3338 = vmax.f32 %v3254, 0.0
  %v3339 = vmax.f32 %v3259, 0.0
  %v3340 = vmax.f32 %v3262, 0.0
  %v3341 = vmax.f32 %v3267, 0.0
  %v3342 = vmax.f32 %v3270, 0.0
  %v3343 = vmax.f32 %v3275, 0.0
  %v3344 = vmax.f32 %v3278, 0.0
  %v3345 = vpack.c.bf16 %v3282, %v3281
  %v3346 = vpack.c.bf16 %v3284, %v3283
  %v3347 = vpack.c.bf16 %v3286, %v3285
  %v3348 = vpack.c.bf16 %v3288, %v3287
  %v3349 = vpack.c.bf16 %v3290, %v3289
  %v3350 = vpack.c.bf16 %v3292, %v3291
  %v3351 = vpack.c.bf16 %v3294, %v3293
  %v3352 = vpack.c.bf16 %v3296, %v3295
  %v3353 = vpack.c.bf16 %v3298, %v3297
  %v3354 = vpack.c.bf16 %v3300, %v3299
  %v3355 = vpack.c.bf16 %v3302, %v3301
  %v3356 = vpack.c.bf16 %v3304, %v3303
  %v3357 = vpack.c.bf16 %v3306, %v3305
  %v3358 = vpack.c.bf16 %v3308, %v3307
  %v3359 = vpack.c.bf16 %v3310, %v3309
  %v3360 = vpack.c.bf16 %v3312, %v3311
  %v3361 = vpack.c.bf16 %v3314, %v3313
  %v3362 = vpack.c.bf16 %v3316, %v3315
  %v3363 = vpack.c.bf16 %v3318, %v3317
  %v3364 = vpack.c.bf16 %v3320, %v3319
  %v3365 = vpack.c.bf16 %v3322, %v3321
  %v3366 = vpack.c.bf16 %v3324, %v3323
  %v3367 = vpack.c.bf16 %v3326, %v3325
  %v3368 = vpack.c.bf16 %v3328, %v3327
  %v3369 = vpack.c.bf16 %v3330, %v3329
  %v3370 = vpack.c.bf16 %v3332, %v3331
  %v3371 = vpack.c.bf16 %v3334, %v3333
  %v3372 = vpack.c.bf16 %v3336, %v3335
  %v3373 = vpack.c.bf16 %v3338, %v3337
  %v3374 = vpack.c.bf16 %v3340, %v3339
  %v3375 = vpack.c.bf16 %v3342, %v3341
  %v3376 = vpack.c.bf16 %v3344, %v3343
  %v3409 = vcombine.high %v3345, %v3345
  %v3411 = vunpack.c.l.s4 1966171168
  %v3412 = vunpack.c.0.s8 %v3411
  %v3413 = vlaneseq
  %v3414 = vshrl.u32 %v3413, 7
  %v3415 = vsub.s32 %v3412, %v3414
  %v3416 = vrot.slane %v3345, %v3415
  %v3418 = vunpack.c.l.s4 1966171168
  %v3419 = vunpack.c.0.s8 %v3418
  %v3420 = vlaneseq
  %v3421 = vshrl.u32 %v3420, 7
  %v3422 = vsub.s32 %v3419, %v3421
  %v3423 = vrot.slane %v3409, %v3422
  %v3424 = vcombine.high %v3416, %v3416
  %v3425 = vcombine.high %v3423, %v3423
  %v3427 = vunpack.c.l.s4 1966171168
  %v3428 = vunpack.c.0.s8 %v3427
  %v3429 = vlaneseq
  %v3430 = vshrl.u32 %v3429, 7
  %v3431 = vsub.s32 %v3428, %v3430
  %v3432 = vrot.slane %v3416, %v3431
  %v3434 = vunpack.c.l.s4 1966171168
  %v3435 = vunpack.c.0.s8 %v3434
  %v3436 = vlaneseq
  %v3437 = vshrl.u32 %v3436, 7
  %v3438 = vsub.s32 %v3435, %v3437
  %v3439 = vrot.slane %v3423, %v3438
  %v3441 = vunpack.c.l.s4 1966171168
  %v3442 = vunpack.c.0.s8 %v3441
  %v3443 = vlaneseq
  %v3444 = vshrl.u32 %v3443, 7
  %v3445 = vsub.s32 %v3442, %v3444
  %v3446 = vrot.slane %v3424, %v3445
  %v3448 = vunpack.c.l.s4 1966171168
  %v3449 = vunpack.c.0.s8 %v3448
  %v3450 = vlaneseq
  %v3451 = vshrl.u32 %v3450, 7
  %v3452 = vsub.s32 %v3449, %v3451
  %v3453 = vrot.slane %v3425, %v3452
  %v3454 = vcombine.high %v3432, %v3432
  %v3455 = vcombine.high %v3439, %v3439
  %v3456 = vcombine.high %v3446, %v3446
  %v3457 = vcombine.high %v3453, %v3453
  %v3458 = vcombine.high %v3346, %v3346
  %v3460 = vunpack.c.l.s4 1966171168
  %v3461 = vunpack.c.0.s8 %v3460
  %v3462 = vlaneseq
  %v3463 = vshrl.u32 %v3462, 7
  %v3464 = vsub.s32 %v3461, %v3463
  %v3465 = vrot.slane %v3346, %v3464
  %v3467 = vunpack.c.l.s4 1966171168
  %v3468 = vunpack.c.0.s8 %v3467
  %v3469 = vlaneseq
  %v3470 = vshrl.u32 %v3469, 7
  %v3471 = vsub.s32 %v3468, %v3470
  %v3472 = vrot.slane %v3458, %v3471
  %v3473 = vcombine.high %v3465, %v3465
  %v3474 = vcombine.high %v3472, %v3472
  %v3476 = vunpack.c.l.s4 1966171168
  %v3477 = vunpack.c.0.s8 %v3476
  %v3478 = vlaneseq
  %v3479 = vshrl.u32 %v3478, 7
  %v3480 = vsub.s32 %v3477, %v3479
  %v3481 = vrot.slane %v3465, %v3480
  %v3483 = vunpack.c.l.s4 1966171168
  %v3484 = vunpack.c.0.s8 %v3483
  %v3485 = vlaneseq
  %v3486 = vshrl.u32 %v3485, 7
  %v3487 = vsub.s32 %v3484, %v3486
  %v3488 = vrot.slane %v3472, %v3487
  %v3490 = vunpack.c.l.s4 1966171168
  %v3491 = vunpack.c.0.s8 %v3490
  %v3492 = vlaneseq
  %v3493 = vshrl.u32 %v3492, 7
  %v3494 = vsub.s32 %v3491, %v3493
  %v3495 = vrot.slane %v3473, %v3494
  %v3497 = vunpack.c.l.s4 1966171168
  %v3498 = vunpack.c.0.s8 %v3497
  %v3499 = vlaneseq
  %v3500 = vshrl.u32 %v3499, 7
  %v3501 = vsub.s32 %v3498, %v3500
  %v3502 = vrot.slane %v3474, %v3501
  %v3503 = vcombine.high %v3481, %v3481
  %v3504 = vcombine.high %v3488, %v3488
  %v3505 = vcombine.high %v3495, %v3495
  %v3506 = vcombine.high %v3502, %v3502
  %v3507 = vcombine.high %v3347, %v3347
  %v3509 = vunpack.c.l.s4 1966171168
  %v3510 = vunpack.c.0.s8 %v3509
  %v3511 = vlaneseq
  %v3512 = vshrl.u32 %v3511, 7
  %v3513 = vsub.s32 %v3510, %v3512
  %v3514 = vrot.slane %v3347, %v3513
  %v3516 = vunpack.c.l.s4 1966171168
  %v3517 = vunpack.c.0.s8 %v3516
  %v3518 = vlaneseq
  %v3519 = vshrl.u32 %v3518, 7
  %v3520 = vsub.s32 %v3517, %v3519
  %v3521 = vrot.slane %v3507, %v3520
  %v3522 = vcombine.high %v3514, %v3514
  %v3523 = vcombine.high %v3521, %v3521
  %v3525 = vunpack.c.l.s4 1966171168
  %v3526 = vunpack.c.0.s8 %v3525
  %v3527 = vlaneseq
  %v3528 = vshrl.u32 %v3527, 7
  %v3529 = vsub.s32 %v3526, %v3528
  %v3530 = vrot.slane %v3514, %v3529
  %v3532 = vunpack.c.l.s4 1966171168
  %v3533 = vunpack.c.0.s8 %v3532
  %v3534 = vlaneseq
  %v3535 = vshrl.u32 %v3534, 7
  %v3536 = vsub.s32 %v3533, %v3535
  %v3537 = vrot.slane %v3521, %v3536
  %v3539 = vunpack.c.l.s4 1966171168
  %v3540 = vunpack.c.0.s8 %v3539
  %v3541 = vlaneseq
  %v3542 = vshrl.u32 %v3541, 7
  %v3543 = vsub.s32 %v3540, %v3542
  %v3544 = vrot.slane %v3522, %v3543
  %v3546 = vunpack.c.l.s4 1966171168
  %v3547 = vunpack.c.0.s8 %v3546
  %v3548 = vlaneseq
  %v3549 = vshrl.u32 %v3548, 7
  %v3550 = vsub.s32 %v3547, %v3549
  %v3551 = vrot.slane %v3523, %v3550
  %v3552 = vcombine.high %v3530, %v3530
  %v3553 = vcombine.high %v3537, %v3537
  %v3554 = vcombine.high %v3544, %v3544
  %v3555 = vcombine.high %v3551, %v3551
  %v3556 = vcombine.high %v3348, %v3348
  %v3558 = vunpack.c.l.s4 1966171168
  %v3559 = vunpack.c.0.s8 %v3558
  %v3560 = vlaneseq
  %v3561 = vshrl.u32 %v3560, 7
  %v3562 = vsub.s32 %v3559, %v3561
  %v3563 = vrot.slane %v3348, %v3562
  %v3565 = vunpack.c.l.s4 1966171168
  %v3566 = vunpack.c.0.s8 %v3565
  %v3567 = vlaneseq
  %v3568 = vshrl.u32 %v3567, 7
  %v3569 = vsub.s32 %v3566, %v3568
  %v3570 = vrot.slane %v3556, %v3569
  %v3571 = vcombine.high %v3563, %v3563
  %v3572 = vcombine.high %v3570, %v3570
  %v3574 = vunpack.c.l.s4 1966171168
  %v3575 = vunpack.c.0.s8 %v3574
  %v3576 = vlaneseq
  %v3577 = vshrl.u32 %v3576, 7
  %v3578 = vsub.s32 %v3575, %v3577
  %v3579 = vrot.slane %v3563, %v3578
  %v3581 = vunpack.c.l.s4 1966171168
  %v3582 = vunpack.c.0.s8 %v3581
  %v3583 = vlaneseq
  %v3584 = vshrl.u32 %v3583, 7
  %v3585 = vsub.s32 %v3582, %v3584
  %v3586 = vrot.slane %v3570, %v3585
  %v3588 = vunpack.c.l.s4 1966171168
  %v3589 = vunpack.c.0.s8 %v3588
  %v3590 = vlaneseq
  %v3591 = vshrl.u32 %v3590, 7
  %v3592 = vsub.s32 %v3589, %v3591
  %v3593 = vrot.slane %v3571, %v3592
  %v3595 = vunpack.c.l.s4 1966171168
  %v3596 = vunpack.c.0.s8 %v3595
  %v3597 = vlaneseq
  %v3598 = vshrl.u32 %v3597, 7
  %v3599 = vsub.s32 %v3596, %v3598
  %v3600 = vrot.slane %v3572, %v3599
  %v3601 = vcombine.high %v3579, %v3579
  %v3602 = vcombine.high %v3586, %v3586
  %v3603 = vcombine.high %v3593, %v3593
  %v3604 = vcombine.high %v3600, %v3600
  %v3605 = vcombine.high %v3349, %v3349
  %v3607 = vunpack.c.l.s4 1966171168
  %v3608 = vunpack.c.0.s8 %v3607
  %v3609 = vlaneseq
  %v3610 = vshrl.u32 %v3609, 7
  %v3611 = vsub.s32 %v3608, %v3610
  %v3612 = vrot.slane %v3349, %v3611
  %v3614 = vunpack.c.l.s4 1966171168
  %v3615 = vunpack.c.0.s8 %v3614
  %v3616 = vlaneseq
  %v3617 = vshrl.u32 %v3616, 7
  %v3618 = vsub.s32 %v3615, %v3617
  %v3619 = vrot.slane %v3605, %v3618
  %v3620 = vcombine.high %v3612, %v3612
  %v3621 = vcombine.high %v3619, %v3619
  %v3623 = vunpack.c.l.s4 1966171168
  %v3624 = vunpack.c.0.s8 %v3623
  %v3625 = vlaneseq
  %v3626 = vshrl.u32 %v3625, 7
  %v3627 = vsub.s32 %v3624, %v3626
  %v3628 = vrot.slane %v3612, %v3627
  %v3630 = vunpack.c.l.s4 1966171168
  %v3631 = vunpack.c.0.s8 %v3630
  %v3632 = vlaneseq
  %v3633 = vshrl.u32 %v3632, 7
  %v3634 = vsub.s32 %v3631, %v3633
  %v3635 = vrot.slane %v3619, %v3634
  %v3637 = vunpack.c.l.s4 1966171168
  %v3638 = vunpack.c.0.s8 %v3637
  %v3639 = vlaneseq
  %v3640 = vshrl.u32 %v3639, 7
  %v3641 = vsub.s32 %v3638, %v3640
  %v3642 = vrot.slane %v3620, %v3641
  %v3644 = vunpack.c.l.s4 1966171168
  %v3645 = vunpack.c.0.s8 %v3644
  %v3646 = vlaneseq
  %v3647 = vshrl.u32 %v3646, 7
  %v3648 = vsub.s32 %v3645, %v3647
  %v3649 = vrot.slane %v3621, %v3648
  %v3650 = vcombine.high %v3628, %v3628
  %v3651 = vcombine.high %v3635, %v3635
  %v3652 = vcombine.high %v3642, %v3642
  %v3653 = vcombine.high %v3649, %v3649
  %v3654 = vcombine.high %v3350, %v3350
  %v3656 = vunpack.c.l.s4 1966171168
  %v3657 = vunpack.c.0.s8 %v3656
  %v3658 = vlaneseq
  %v3659 = vshrl.u32 %v3658, 7
  %v3660 = vsub.s32 %v3657, %v3659
  %v3661 = vrot.slane %v3350, %v3660
  %v3663 = vunpack.c.l.s4 1966171168
  %v3664 = vunpack.c.0.s8 %v3663
  %v3665 = vlaneseq
  %v3666 = vshrl.u32 %v3665, 7
  %v3667 = vsub.s32 %v3664, %v3666
  %v3668 = vrot.slane %v3654, %v3667
  %v3669 = vcombine.high %v3661, %v3661
  %v3670 = vcombine.high %v3668, %v3668
  %v3672 = vunpack.c.l.s4 1966171168
  %v3673 = vunpack.c.0.s8 %v3672
  %v3674 = vlaneseq
  %v3675 = vshrl.u32 %v3674, 7
  %v3676 = vsub.s32 %v3673, %v3675
  %v3677 = vrot.slane %v3661, %v3676
  %v3679 = vunpack.c.l.s4 1966171168
  %v3680 = vunpack.c.0.s8 %v3679
  %v3681 = vlaneseq
  %v3682 = vshrl.u32 %v3681, 7
  %v3683 = vsub.s32 %v3680, %v3682
  %v3684 = vrot.slane %v3668, %v3683
  %v3686 = vunpack.c.l.s4 1966171168
  %v3687 = vunpack.c.0.s8 %v3686
  %v3688 = vlaneseq
  %v3689 = vshrl.u32 %v3688, 7
  %v3690 = vsub.s32 %v3687, %v3689
  %v3691 = vrot.slane %v3669, %v3690
  %v3693 = vunpack.c.l.s4 1966171168
  %v3694 = vunpack.c.0.s8 %v3693
  %v3695 = vlaneseq
  %v3696 = vshrl.u32 %v3695, 7
  %v3697 = vsub.s32 %v3694, %v3696
  %v3698 = vrot.slane %v3670, %v3697
  %v3699 = vcombine.high %v3677, %v3677
  %v3700 = vcombine.high %v3684, %v3684
  %v3701 = vcombine.high %v3691, %v3691
  %v3702 = vcombine.high %v3698, %v3698
  %v3703 = vcombine.high %v3351, %v3351
  %v3705 = vunpack.c.l.s4 1966171168
  %v3706 = vunpack.c.0.s8 %v3705
  %v3707 = vlaneseq
  %v3708 = vshrl.u32 %v3707, 7
  %v3709 = vsub.s32 %v3706, %v3708
  %v3710 = vrot.slane %v3351, %v3709
  %v3712 = vunpack.c.l.s4 1966171168
  %v3713 = vunpack.c.0.s8 %v3712
  %v3714 = vlaneseq
  %v3715 = vshrl.u32 %v3714, 7
  %v3716 = vsub.s32 %v3713, %v3715
  %v3717 = vrot.slane %v3703, %v3716
  %v3718 = vcombine.high %v3710, %v3710
  %v3719 = vcombine.high %v3717, %v3717
  %v3721 = vunpack.c.l.s4 1966171168
  %v3722 = vunpack.c.0.s8 %v3721
  %v3723 = vlaneseq
  %v3724 = vshrl.u32 %v3723, 7
  %v3725 = vsub.s32 %v3722, %v3724
  %v3726 = vrot.slane %v3710, %v3725
  %v3728 = vunpack.c.l.s4 1966171168
  %v3729 = vunpack.c.0.s8 %v3728
  %v3730 = vlaneseq
  %v3731 = vshrl.u32 %v3730, 7
  %v3732 = vsub.s32 %v3729, %v3731
  %v3733 = vrot.slane %v3717, %v3732
  %v3735 = vunpack.c.l.s4 1966171168
  %v3736 = vunpack.c.0.s8 %v3735
  %v3737 = vlaneseq
  %v3738 = vshrl.u32 %v3737, 7
  %v3739 = vsub.s32 %v3736, %v3738
  %v3740 = vrot.slane %v3718, %v3739
  %v3742 = vunpack.c.l.s4 1966171168
  %v3743 = vunpack.c.0.s8 %v3742
  %v3744 = vlaneseq
  %v3745 = vshrl.u32 %v3744, 7
  %v3746 = vsub.s32 %v3743, %v3745
  %v3747 = vrot.slane %v3719, %v3746
  %v3748 = vcombine.high %v3726, %v3726
  %v3749 = vcombine.high %v3733, %v3733
  %v3750 = vcombine.high %v3740, %v3740
  %v3751 = vcombine.high %v3747, %v3747
  %v3752 = vcombine.high %v3352, %v3352
  %v3754 = vunpack.c.l.s4 1966171168
  %v3755 = vunpack.c.0.s8 %v3754
  %v3756 = vlaneseq
  %v3757 = vshrl.u32 %v3756, 7
  %v3758 = vsub.s32 %v3755, %v3757
  %v3759 = vrot.slane %v3352, %v3758
  %v3761 = vunpack.c.l.s4 1966171168
  %v3762 = vunpack.c.0.s8 %v3761
  %v3763 = vlaneseq
  %v3764 = vshrl.u32 %v3763, 7
  %v3765 = vsub.s32 %v3762, %v3764
  %v3766 = vrot.slane %v3752, %v3765
  %v3767 = vcombine.high %v3759, %v3759
  %v3768 = vcombine.high %v3766, %v3766
  %v3770 = vunpack.c.l.s4 1966171168
  %v3771 = vunpack.c.0.s8 %v3770
  %v3772 = vlaneseq
  %v3773 = vshrl.u32 %v3772, 7
  %v3774 = vsub.s32 %v3771, %v3773
  %v3775 = vrot.slane %v3759, %v3774
  %v3777 = vunpack.c.l.s4 1966171168
  %v3778 = vunpack.c.0.s8 %v3777
  %v3779 = vlaneseq
  %v3780 = vshrl.u32 %v3779, 7
  %v3781 = vsub.s32 %v3778, %v3780
  %v3782 = vrot.slane %v3766, %v3781
  %v3784 = vunpack.c.l.s4 1966171168
  %v3785 = vunpack.c.0.s8 %v3784
  %v3786 = vlaneseq
  %v3787 = vshrl.u32 %v3786, 7
  %v3788 = vsub.s32 %v3785, %v3787
  %v3789 = vrot.slane %v3767, %v3788
  %v3791 = vunpack.c.l.s4 1966171168
  %v3792 = vunpack.c.0.s8 %v3791
  %v3793 = vlaneseq
  %v3794 = vshrl.u32 %v3793, 7
  %v3795 = vsub.s32 %v3792, %v3794
  %v3796 = vrot.slane %v3768, %v3795
  %v3797 = vcombine.high %v3775, %v3775
  %v3798 = vcombine.high %v3782, %v3782
  %v3799 = vcombine.high %v3789, %v3789
  %v3800 = vcombine.high %v3796, %v3796
  %v3801 = vcombine.high %v3353, %v3353
  %v3803 = vunpack.c.l.s4 1966171168
  %v3804 = vunpack.c.0.s8 %v3803
  %v3805 = vlaneseq
  %v3806 = vshrl.u32 %v3805, 7
  %v3807 = vsub.s32 %v3804, %v3806
  %v3808 = vrot.slane %v3353, %v3807
  %v3810 = vunpack.c.l.s4 1966171168
  %v3811 = vunpack.c.0.s8 %v3810
  %v3812 = vlaneseq
  %v3813 = vshrl.u32 %v3812, 7
  %v3814 = vsub.s32 %v3811, %v3813
  %v3815 = vrot.slane %v3801, %v3814
  %v3816 = vcombine.high %v3808, %v3808
  %v3817 = vcombine.high %v3815, %v3815
  %v3819 = vunpack.c.l.s4 1966171168
  %v3820 = vunpack.c.0.s8 %v3819
  %v3821 = vlaneseq
  %v3822 = vshrl.u32 %v3821, 7
  %v3823 = vsub.s32 %v3820, %v3822
  %v3824 = vrot.slane %v3808, %v3823
  %v3826 = vunpack.c.l.s4 1966171168
  %v3827 = vunpack.c.0.s8 %v3826
  %v3828 = vlaneseq
  %v3829 = vshrl.u32 %v3828, 7
  %v3830 = vsub.s32 %v3827, %v3829
  %v3831 = vrot.slane %v3815, %v3830
  %v3833 = vunpack.c.l.s4 1966171168
  %v3834 = vunpack.c.0.s8 %v3833
  %v3835 = vlaneseq
  %v3836 = vshrl.u32 %v3835, 7
  %v3837 = vsub.s32 %v3834, %v3836
  %v3838 = vrot.slane %v3816, %v3837
  %v3840 = vunpack.c.l.s4 1966171168
  %v3841 = vunpack.c.0.s8 %v3840
  %v3842 = vlaneseq
  %v3843 = vshrl.u32 %v3842, 7
  %v3844 = vsub.s32 %v3841, %v3843
  %v3845 = vrot.slane %v3817, %v3844
  %v3846 = vcombine.high %v3824, %v3824
  %v3847 = vcombine.high %v3831, %v3831
  %v3848 = vcombine.high %v3838, %v3838
  %v3849 = vcombine.high %v3845, %v3845
  %v3850 = vcombine.high %v3354, %v3354
  %v3852 = vunpack.c.l.s4 1966171168
  %v3853 = vunpack.c.0.s8 %v3852
  %v3854 = vlaneseq
  %v3855 = vshrl.u32 %v3854, 7
  %v3856 = vsub.s32 %v3853, %v3855
  %v3857 = vrot.slane %v3354, %v3856
  %v3859 = vunpack.c.l.s4 1966171168
  %v3860 = vunpack.c.0.s8 %v3859
  %v3861 = vlaneseq
  %v3862 = vshrl.u32 %v3861, 7
  %v3863 = vsub.s32 %v3860, %v3862
  %v3864 = vrot.slane %v3850, %v3863
  %v3865 = vcombine.high %v3857, %v3857
  %v3866 = vcombine.high %v3864, %v3864
  %v3868 = vunpack.c.l.s4 1966171168
  %v3869 = vunpack.c.0.s8 %v3868
  %v3870 = vlaneseq
  %v3871 = vshrl.u32 %v3870, 7
  %v3872 = vsub.s32 %v3869, %v3871
  %v3873 = vrot.slane %v3857, %v3872
  %v3875 = vunpack.c.l.s4 1966171168
  %v3876 = vunpack.c.0.s8 %v3875
  %v3877 = vlaneseq
  %v3878 = vshrl.u32 %v3877, 7
  %v3879 = vsub.s32 %v3876, %v3878
  %v3880 = vrot.slane %v3864, %v3879
  %v3882 = vunpack.c.l.s4 1966171168
  %v3883 = vunpack.c.0.s8 %v3882
  %v3884 = vlaneseq
  %v3885 = vshrl.u32 %v3884, 7
  %v3886 = vsub.s32 %v3883, %v3885
  %v3887 = vrot.slane %v3865, %v3886
  %v3889 = vunpack.c.l.s4 1966171168
  %v3890 = vunpack.c.0.s8 %v3889
  %v3891 = vlaneseq
  %v3892 = vshrl.u32 %v3891, 7
  %v3893 = vsub.s32 %v3890, %v3892
  %v3894 = vrot.slane %v3866, %v3893
  %v3895 = vcombine.high %v3873, %v3873
  %v3896 = vcombine.high %v3880, %v3880
  %v3897 = vcombine.high %v3887, %v3887
  %v3898 = vcombine.high %v3894, %v3894
  %v3899 = vcombine.high %v3355, %v3355
  %v3901 = vunpack.c.l.s4 1966171168
  %v3902 = vunpack.c.0.s8 %v3901
  %v3903 = vlaneseq
  %v3904 = vshrl.u32 %v3903, 7
  %v3905 = vsub.s32 %v3902, %v3904
  %v3906 = vrot.slane %v3355, %v3905
  %v3908 = vunpack.c.l.s4 1966171168
  %v3909 = vunpack.c.0.s8 %v3908
  %v3910 = vlaneseq
  %v3911 = vshrl.u32 %v3910, 7
  %v3912 = vsub.s32 %v3909, %v3911
  %v3913 = vrot.slane %v3899, %v3912
  %v3914 = vcombine.high %v3906, %v3906
  %v3915 = vcombine.high %v3913, %v3913
  %v3917 = vunpack.c.l.s4 1966171168
  %v3918 = vunpack.c.0.s8 %v3917
  %v3919 = vlaneseq
  %v3920 = vshrl.u32 %v3919, 7
  %v3921 = vsub.s32 %v3918, %v3920
  %v3922 = vrot.slane %v3906, %v3921
  %v3924 = vunpack.c.l.s4 1966171168
  %v3925 = vunpack.c.0.s8 %v3924
  %v3926 = vlaneseq
  %v3927 = vshrl.u32 %v3926, 7
  %v3928 = vsub.s32 %v3925, %v3927
  %v3929 = vrot.slane %v3913, %v3928
  %v3931 = vunpack.c.l.s4 1966171168
  %v3932 = vunpack.c.0.s8 %v3931
  %v3933 = vlaneseq
  %v3934 = vshrl.u32 %v3933, 7
  %v3935 = vsub.s32 %v3932, %v3934
  %v3936 = vrot.slane %v3914, %v3935
  %v3938 = vunpack.c.l.s4 1966171168
  %v3939 = vunpack.c.0.s8 %v3938
  %v3940 = vlaneseq
  %v3941 = vshrl.u32 %v3940, 7
  %v3942 = vsub.s32 %v3939, %v3941
  %v3943 = vrot.slane %v3915, %v3942
  %v3944 = vcombine.high %v3922, %v3922
  %v3945 = vcombine.high %v3929, %v3929
  %v3946 = vcombine.high %v3936, %v3936
  %v3947 = vcombine.high %v3943, %v3943
  %v3948 = vcombine.high %v3356, %v3356
  %v3950 = vunpack.c.l.s4 1966171168
  %v3951 = vunpack.c.0.s8 %v3950
  %v3952 = vlaneseq
  %v3953 = vshrl.u32 %v3952, 7
  %v3954 = vsub.s32 %v3951, %v3953
  %v3955 = vrot.slane %v3356, %v3954
  %v3957 = vunpack.c.l.s4 1966171168
  %v3958 = vunpack.c.0.s8 %v3957
  %v3959 = vlaneseq
  %v3960 = vshrl.u32 %v3959, 7
  %v3961 = vsub.s32 %v3958, %v3960
  %v3962 = vrot.slane %v3948, %v3961
  %v3963 = vcombine.high %v3955, %v3955
  %v3964 = vcombine.high %v3962, %v3962
  %v3966 = vunpack.c.l.s4 1966171168
  %v3967 = vunpack.c.0.s8 %v3966
  %v3968 = vlaneseq
  %v3969 = vshrl.u32 %v3968, 7
  %v3970 = vsub.s32 %v3967, %v3969
  %v3971 = vrot.slane %v3955, %v3970
  %v3973 = vunpack.c.l.s4 1966171168
  %v3974 = vunpack.c.0.s8 %v3973
  %v3975 = vlaneseq
  %v3976 = vshrl.u32 %v3975, 7
  %v3977 = vsub.s32 %v3974, %v3976
  %v3978 = vrot.slane %v3962, %v3977
  %v3980 = vunpack.c.l.s4 1966171168
  %v3981 = vunpack.c.0.s8 %v3980
  %v3982 = vlaneseq
  %v3983 = vshrl.u32 %v3982, 7
  %v3984 = vsub.s32 %v3981, %v3983
  %v3985 = vrot.slane %v3963, %v3984
  %v3987 = vunpack.c.l.s4 1966171168
  %v3988 = vunpack.c.0.s8 %v3987
  %v3989 = vlaneseq
  %v3990 = vshrl.u32 %v3989, 7
  %v3991 = vsub.s32 %v3988, %v3990
  %v3992 = vrot.slane %v3964, %v3991
  %v3993 = vcombine.high %v3971, %v3971
  %v3994 = vcombine.high %v3978, %v3978
  %v3995 = vcombine.high %v3985, %v3985
  %v3996 = vcombine.high %v3992, %v3992
  %v3997 = vcombine.high %v3357, %v3357
  %v3999 = vunpack.c.l.s4 1966171168
  %v4000 = vunpack.c.0.s8 %v3999
  %v4001 = vlaneseq
  %v4002 = vshrl.u32 %v4001, 7
  %v4003 = vsub.s32 %v4000, %v4002
  %v4004 = vrot.slane %v3357, %v4003
  %v4006 = vunpack.c.l.s4 1966171168
  %v4007 = vunpack.c.0.s8 %v4006
  %v4008 = vlaneseq
  %v4009 = vshrl.u32 %v4008, 7
  %v4010 = vsub.s32 %v4007, %v4009
  %v4011 = vrot.slane %v3997, %v4010
  %v4012 = vcombine.high %v4004, %v4004
  %v4013 = vcombine.high %v4011, %v4011
  %v4015 = vunpack.c.l.s4 1966171168
  %v4016 = vunpack.c.0.s8 %v4015
  %v4017 = vlaneseq
  %v4018 = vshrl.u32 %v4017, 7
  %v4019 = vsub.s32 %v4016, %v4018
  %v4020 = vrot.slane %v4004, %v4019
  %v4022 = vunpack.c.l.s4 1966171168
  %v4023 = vunpack.c.0.s8 %v4022
  %v4024 = vlaneseq
  %v4025 = vshrl.u32 %v4024, 7
  %v4026 = vsub.s32 %v4023, %v4025
  %v4027 = vrot.slane %v4011, %v4026
  %v4029 = vunpack.c.l.s4 1966171168
  %v4030 = vunpack.c.0.s8 %v4029
  %v4031 = vlaneseq
  %v4032 = vshrl.u32 %v4031, 7
  %v4033 = vsub.s32 %v4030, %v4032
  %v4034 = vrot.slane %v4012, %v4033
  %v4036 = vunpack.c.l.s4 1966171168
  %v4037 = vunpack.c.0.s8 %v4036
  %v4038 = vlaneseq
  %v4039 = vshrl.u32 %v4038, 7
  %v4040 = vsub.s32 %v4037, %v4039
  %v4041 = vrot.slane %v4013, %v4040
  %v4042 = vcombine.high %v4020, %v4020
  %v4043 = vcombine.high %v4027, %v4027
  %v4044 = vcombine.high %v4034, %v4034
  %v4045 = vcombine.high %v4041, %v4041
  %v4046 = vcombine.high %v3358, %v3358
  %v4048 = vunpack.c.l.s4 1966171168
  %v4049 = vunpack.c.0.s8 %v4048
  %v4050 = vlaneseq
  %v4051 = vshrl.u32 %v4050, 7
  %v4052 = vsub.s32 %v4049, %v4051
  %v4053 = vrot.slane %v3358, %v4052
  %v4055 = vunpack.c.l.s4 1966171168
  %v4056 = vunpack.c.0.s8 %v4055
  %v4057 = vlaneseq
  %v4058 = vshrl.u32 %v4057, 7
  %v4059 = vsub.s32 %v4056, %v4058
  %v4060 = vrot.slane %v4046, %v4059
  %v4061 = vcombine.high %v4053, %v4053
  %v4062 = vcombine.high %v4060, %v4060
  %v4064 = vunpack.c.l.s4 1966171168
  %v4065 = vunpack.c.0.s8 %v4064
  %v4066 = vlaneseq
  %v4067 = vshrl.u32 %v4066, 7
  %v4068 = vsub.s32 %v4065, %v4067
  %v4069 = vrot.slane %v4053, %v4068
  %v4071 = vunpack.c.l.s4 1966171168
  %v4072 = vunpack.c.0.s8 %v4071
  %v4073 = vlaneseq
  %v4074 = vshrl.u32 %v4073, 7
  %v4075 = vsub.s32 %v4072, %v4074
  %v4076 = vrot.slane %v4060, %v4075
  %v4078 = vunpack.c.l.s4 1966171168
  %v4079 = vunpack.c.0.s8 %v4078
  %v4080 = vlaneseq
  %v4081 = vshrl.u32 %v4080, 7
  %v4082 = vsub.s32 %v4079, %v4081
  %v4083 = vrot.slane %v4061, %v4082
  %v4085 = vunpack.c.l.s4 1966171168
  %v4086 = vunpack.c.0.s8 %v4085
  %v4087 = vlaneseq
  %v4088 = vshrl.u32 %v4087, 7
  %v4089 = vsub.s32 %v4086, %v4088
  %v4090 = vrot.slane %v4062, %v4089
  %v4091 = vcombine.high %v4069, %v4069
  %v4092 = vcombine.high %v4076, %v4076
  %v4093 = vcombine.high %v4083, %v4083
  %v4094 = vcombine.high %v4090, %v4090
  %v4095 = vcombine.high %v3359, %v3359
  %v4097 = vunpack.c.l.s4 1966171168
  %v4098 = vunpack.c.0.s8 %v4097
  %v4099 = vlaneseq
  %v4100 = vshrl.u32 %v4099, 7
  %v4101 = vsub.s32 %v4098, %v4100
  %v4102 = vrot.slane %v3359, %v4101
  %v4104 = vunpack.c.l.s4 1966171168
  %v4105 = vunpack.c.0.s8 %v4104
  %v4106 = vlaneseq
  %v4107 = vshrl.u32 %v4106, 7
  %v4108 = vsub.s32 %v4105, %v4107
  %v4109 = vrot.slane %v4095, %v4108
  %v4110 = vcombine.high %v4102, %v4102
  %v4111 = vcombine.high %v4109, %v4109
  %v4113 = vunpack.c.l.s4 1966171168
  %v4114 = vunpack.c.0.s8 %v4113
  %v4115 = vlaneseq
  %v4116 = vshrl.u32 %v4115, 7
  %v4117 = vsub.s32 %v4114, %v4116
  %v4118 = vrot.slane %v4102, %v4117
  %v4120 = vunpack.c.l.s4 1966171168
  %v4121 = vunpack.c.0.s8 %v4120
  %v4122 = vlaneseq
  %v4123 = vshrl.u32 %v4122, 7
  %v4124 = vsub.s32 %v4121, %v4123
  %v4125 = vrot.slane %v4109, %v4124
  %v4127 = vunpack.c.l.s4 1966171168
  %v4128 = vunpack.c.0.s8 %v4127
  %v4129 = vlaneseq
  %v4130 = vshrl.u32 %v4129, 7
  %v4131 = vsub.s32 %v4128, %v4130
  %v4132 = vrot.slane %v4110, %v4131
  %v4134 = vunpack.c.l.s4 1966171168
  %v4135 = vunpack.c.0.s8 %v4134
  %v4136 = vlaneseq
  %v4137 = vshrl.u32 %v4136, 7
  %v4138 = vsub.s32 %v4135, %v4137
  %v4139 = vrot.slane %v4111, %v4138
  %v4140 = vcombine.high %v4118, %v4118
  %v4141 = vcombine.high %v4125, %v4125
  %v4142 = vcombine.high %v4132, %v4132
  %v4143 = vcombine.high %v4139, %v4139
  %v4144 = vcombine.high %v3360, %v3360
  %v4146 = vunpack.c.l.s4 1966171168
  %v4147 = vunpack.c.0.s8 %v4146
  %v4148 = vlaneseq
  %v4149 = vshrl.u32 %v4148, 7
  %v4150 = vsub.s32 %v4147, %v4149
  %v4151 = vrot.slane %v3360, %v4150
  %v4153 = vunpack.c.l.s4 1966171168
  %v4154 = vunpack.c.0.s8 %v4153
  %v4155 = vlaneseq
  %v4156 = vshrl.u32 %v4155, 7
  %v4157 = vsub.s32 %v4154, %v4156
  %v4158 = vrot.slane %v4144, %v4157
  %v4159 = vcombine.high %v4151, %v4151
  %v4160 = vcombine.high %v4158, %v4158
  %v4162 = vunpack.c.l.s4 1966171168
  %v4163 = vunpack.c.0.s8 %v4162
  %v4164 = vlaneseq
  %v4165 = vshrl.u32 %v4164, 7
  %v4166 = vsub.s32 %v4163, %v4165
  %v4167 = vrot.slane %v4151, %v4166
  %v4169 = vunpack.c.l.s4 1966171168
  %v4170 = vunpack.c.0.s8 %v4169
  %v4171 = vlaneseq
  %v4172 = vshrl.u32 %v4171, 7
  %v4173 = vsub.s32 %v4170, %v4172
  %v4174 = vrot.slane %v4158, %v4173
  %v4176 = vunpack.c.l.s4 1966171168
  %v4177 = vunpack.c.0.s8 %v4176
  %v4178 = vlaneseq
  %v4179 = vshrl.u32 %v4178, 7
  %v4180 = vsub.s32 %v4177, %v4179
  %v4181 = vrot.slane %v4159, %v4180
  %v4183 = vunpack.c.l.s4 1966171168
  %v4184 = vunpack.c.0.s8 %v4183
  %v4185 = vlaneseq
  %v4186 = vshrl.u32 %v4185, 7
  %v4187 = vsub.s32 %v4184, %v4186
  %v4188 = vrot.slane %v4160, %v4187
  %v4189 = vcombine.high %v4167, %v4167
  %v4190 = vcombine.high %v4174, %v4174
  %v4191 = vcombine.high %v4181, %v4181
  %v4192 = vcombine.high %v4188, %v4188
  %v4193 = vcombine.high %v3361, %v3361
  %v4195 = vunpack.c.l.s4 1966171168
  %v4196 = vunpack.c.0.s8 %v4195
  %v4197 = vlaneseq
  %v4198 = vshrl.u32 %v4197, 7
  %v4199 = vsub.s32 %v4196, %v4198
  %v4200 = vrot.slane %v3361, %v4199
  %v4202 = vunpack.c.l.s4 1966171168
  %v4203 = vunpack.c.0.s8 %v4202
  %v4204 = vlaneseq
  %v4205 = vshrl.u32 %v4204, 7
  %v4206 = vsub.s32 %v4203, %v4205
  %v4207 = vrot.slane %v4193, %v4206
  %v4208 = vcombine.high %v4200, %v4200
  %v4209 = vcombine.high %v4207, %v4207
  %v4211 = vunpack.c.l.s4 1966171168
  %v4212 = vunpack.c.0.s8 %v4211
  %v4213 = vlaneseq
  %v4214 = vshrl.u32 %v4213, 7
  %v4215 = vsub.s32 %v4212, %v4214
  %v4216 = vrot.slane %v4200, %v4215
  %v4218 = vunpack.c.l.s4 1966171168
  %v4219 = vunpack.c.0.s8 %v4218
  %v4220 = vlaneseq
  %v4221 = vshrl.u32 %v4220, 7
  %v4222 = vsub.s32 %v4219, %v4221
  %v4223 = vrot.slane %v4207, %v4222
  %v4225 = vunpack.c.l.s4 1966171168
  %v4226 = vunpack.c.0.s8 %v4225
  %v4227 = vlaneseq
  %v4228 = vshrl.u32 %v4227, 7
  %v4229 = vsub.s32 %v4226, %v4228
  %v4230 = vrot.slane %v4208, %v4229
  %v4232 = vunpack.c.l.s4 1966171168
  %v4233 = vunpack.c.0.s8 %v4232
  %v4234 = vlaneseq
  %v4235 = vshrl.u32 %v4234, 7
  %v4236 = vsub.s32 %v4233, %v4235
  %v4237 = vrot.slane %v4209, %v4236
  %v4238 = vcombine.high %v4216, %v4216
  %v4239 = vcombine.high %v4223, %v4223
  %v4240 = vcombine.high %v4230, %v4230
  %v4241 = vcombine.high %v4237, %v4237
  %v4242 = vcombine.high %v3362, %v3362
  %v4244 = vunpack.c.l.s4 1966171168
  %v4245 = vunpack.c.0.s8 %v4244
  %v4246 = vlaneseq
  %v4247 = vshrl.u32 %v4246, 7
  %v4248 = vsub.s32 %v4245, %v4247
  %v4249 = vrot.slane %v3362, %v4248
  %v4251 = vunpack.c.l.s4 1966171168
  %v4252 = vunpack.c.0.s8 %v4251
  %v4253 = vlaneseq
  %v4254 = vshrl.u32 %v4253, 7
  %v4255 = vsub.s32 %v4252, %v4254
  %v4256 = vrot.slane %v4242, %v4255
  %v4257 = vcombine.high %v4249, %v4249
  %v4258 = vcombine.high %v4256, %v4256
  %v4260 = vunpack.c.l.s4 1966171168
  %v4261 = vunpack.c.0.s8 %v4260
  %v4262 = vlaneseq
  %v4263 = vshrl.u32 %v4262, 7
  %v4264 = vsub.s32 %v4261, %v4263
  %v4265 = vrot.slane %v4249, %v4264
  %v4267 = vunpack.c.l.s4 1966171168
  %v4268 = vunpack.c.0.s8 %v4267
  %v4269 = vlaneseq
  %v4270 = vshrl.u32 %v4269, 7
  %v4271 = vsub.s32 %v4268, %v4270
  %v4272 = vrot.slane %v4256, %v4271
  %v4274 = vunpack.c.l.s4 1966171168
  %v4275 = vunpack.c.0.s8 %v4274
  %v4276 = vlaneseq
  %v4277 = vshrl.u32 %v4276, 7
  %v4278 = vsub.s32 %v4275, %v4277
  %v4279 = vrot.slane %v4257, %v4278
  %v4281 = vunpack.c.l.s4 1966171168
  %v4282 = vunpack.c.0.s8 %v4281
  %v4283 = vlaneseq
  %v4284 = vshrl.u32 %v4283, 7
  %v4285 = vsub.s32 %v4282, %v4284
  %v4286 = vrot.slane %v4258, %v4285
  %v4287 = vcombine.high %v4265, %v4265
  %v4288 = vcombine.high %v4272, %v4272
  %v4289 = vcombine.high %v4279, %v4279
  %v4290 = vcombine.high %v4286, %v4286
  %v4291 = vcombine.high %v3363, %v3363
  %v4293 = vunpack.c.l.s4 1966171168
  %v4294 = vunpack.c.0.s8 %v4293
  %v4295 = vlaneseq
  %v4296 = vshrl.u32 %v4295, 7
  %v4297 = vsub.s32 %v4294, %v4296
  %v4298 = vrot.slane %v3363, %v4297
  %v4300 = vunpack.c.l.s4 1966171168
  %v4301 = vunpack.c.0.s8 %v4300
  %v4302 = vlaneseq
  %v4303 = vshrl.u32 %v4302, 7
  %v4304 = vsub.s32 %v4301, %v4303
  %v4305 = vrot.slane %v4291, %v4304
  %v4306 = vcombine.high %v4298, %v4298
  %v4307 = vcombine.high %v4305, %v4305
  %v4309 = vunpack.c.l.s4 1966171168
  %v4310 = vunpack.c.0.s8 %v4309
  %v4311 = vlaneseq
  %v4312 = vshrl.u32 %v4311, 7
  %v4313 = vsub.s32 %v4310, %v4312
  %v4314 = vrot.slane %v4298, %v4313
  %v4316 = vunpack.c.l.s4 1966171168
  %v4317 = vunpack.c.0.s8 %v4316
  %v4318 = vlaneseq
  %v4319 = vshrl.u32 %v4318, 7
  %v4320 = vsub.s32 %v4317, %v4319
  %v4321 = vrot.slane %v4305, %v4320
  %v4323 = vunpack.c.l.s4 1966171168
  %v4324 = vunpack.c.0.s8 %v4323
  %v4325 = vlaneseq
  %v4326 = vshrl.u32 %v4325, 7
  %v4327 = vsub.s32 %v4324, %v4326
  %v4328 = vrot.slane %v4306, %v4327
  %v4330 = vunpack.c.l.s4 1966171168
  %v4331 = vunpack.c.0.s8 %v4330
  %v4332 = vlaneseq
  %v4333 = vshrl.u32 %v4332, 7
  %v4334 = vsub.s32 %v4331, %v4333
  %v4335 = vrot.slane %v4307, %v4334
  %v4336 = vcombine.high %v4314, %v4314
  %v4337 = vcombine.high %v4321, %v4321
  %v4338 = vcombine.high %v4328, %v4328
  %v4339 = vcombine.high %v4335, %v4335
  %v4340 = vcombine.high %v3364, %v3364
  %v4342 = vunpack.c.l.s4 1966171168
  %v4343 = vunpack.c.0.s8 %v4342
  %v4344 = vlaneseq
  %v4345 = vshrl.u32 %v4344, 7
  %v4346 = vsub.s32 %v4343, %v4345
  %v4347 = vrot.slane %v3364, %v4346
  %v4349 = vunpack.c.l.s4 1966171168
  %v4350 = vunpack.c.0.s8 %v4349
  %v4351 = vlaneseq
  %v4352 = vshrl.u32 %v4351, 7
  %v4353 = vsub.s32 %v4350, %v4352
  %v4354 = vrot.slane %v4340, %v4353
  %v4355 = vcombine.high %v4347, %v4347
  %v4356 = vcombine.high %v4354, %v4354
  %v4358 = vunpack.c.l.s4 1966171168
  %v4359 = vunpack.c.0.s8 %v4358
  %v4360 = vlaneseq
  %v4361 = vshrl.u32 %v4360, 7
  %v4362 = vsub.s32 %v4359, %v4361
  %v4363 = vrot.slane %v4347, %v4362
  %v4365 = vunpack.c.l.s4 1966171168
  %v4366 = vunpack.c.0.s8 %v4365
  %v4367 = vlaneseq
  %v4368 = vshrl.u32 %v4367, 7
  %v4369 = vsub.s32 %v4366, %v4368
  %v4370 = vrot.slane %v4354, %v4369
  %v4372 = vunpack.c.l.s4 1966171168
  %v4373 = vunpack.c.0.s8 %v4372
  %v4374 = vlaneseq
  %v4375 = vshrl.u32 %v4374, 7
  %v4376 = vsub.s32 %v4373, %v4375
  %v4377 = vrot.slane %v4355, %v4376
  %v4379 = vunpack.c.l.s4 1966171168
  %v4380 = vunpack.c.0.s8 %v4379
  %v4381 = vlaneseq
  %v4382 = vshrl.u32 %v4381, 7
  %v4383 = vsub.s32 %v4380, %v4382
  %v4384 = vrot.slane %v4356, %v4383
  %v4385 = vcombine.high %v4363, %v4363
  %v4386 = vcombine.high %v4370, %v4370
  %v4387 = vcombine.high %v4377, %v4377
  %v4388 = vcombine.high %v4384, %v4384
  %v4389 = vcombine.high %v3365, %v3365
  %v4391 = vunpack.c.l.s4 1966171168
  %v4392 = vunpack.c.0.s8 %v4391
  %v4393 = vlaneseq
  %v4394 = vshrl.u32 %v4393, 7
  %v4395 = vsub.s32 %v4392, %v4394
  %v4396 = vrot.slane %v3365, %v4395
  %v4398 = vunpack.c.l.s4 1966171168
  %v4399 = vunpack.c.0.s8 %v4398
  %v4400 = vlaneseq
  %v4401 = vshrl.u32 %v4400, 7
  %v4402 = vsub.s32 %v4399, %v4401
  %v4403 = vrot.slane %v4389, %v4402
  %v4404 = vcombine.high %v4396, %v4396
  %v4405 = vcombine.high %v4403, %v4403
  %v4407 = vunpack.c.l.s4 1966171168
  %v4408 = vunpack.c.0.s8 %v4407
  %v4409 = vlaneseq
  %v4410 = vshrl.u32 %v4409, 7
  %v4411 = vsub.s32 %v4408, %v4410
  %v4412 = vrot.slane %v4396, %v4411
  %v4414 = vunpack.c.l.s4 1966171168
  %v4415 = vunpack.c.0.s8 %v4414
  %v4416 = vlaneseq
  %v4417 = vshrl.u32 %v4416, 7
  %v4418 = vsub.s32 %v4415, %v4417
  %v4419 = vrot.slane %v4403, %v4418
  %v4421 = vunpack.c.l.s4 1966171168
  %v4422 = vunpack.c.0.s8 %v4421
  %v4423 = vlaneseq
  %v4424 = vshrl.u32 %v4423, 7
  %v4425 = vsub.s32 %v4422, %v4424
  %v4426 = vrot.slane %v4404, %v4425
  %v4428 = vunpack.c.l.s4 1966171168
  %v4429 = vunpack.c.0.s8 %v4428
  %v4430 = vlaneseq
  %v4431 = vshrl.u32 %v4430, 7
  %v4432 = vsub.s32 %v4429, %v4431
  %v4433 = vrot.slane %v4405, %v4432
  %v4434 = vcombine.high %v4412, %v4412
  %v4435 = vcombine.high %v4419, %v4419
  %v4436 = vcombine.high %v4426, %v4426
  %v4437 = vcombine.high %v4433, %v4433
  %v4438 = vcombine.high %v3366, %v3366
  %v4440 = vunpack.c.l.s4 1966171168
  %v4441 = vunpack.c.0.s8 %v4440
  %v4442 = vlaneseq
  %v4443 = vshrl.u32 %v4442, 7
  %v4444 = vsub.s32 %v4441, %v4443
  %v4445 = vrot.slane %v3366, %v4444
  %v4447 = vunpack.c.l.s4 1966171168
  %v4448 = vunpack.c.0.s8 %v4447
  %v4449 = vlaneseq
  %v4450 = vshrl.u32 %v4449, 7
  %v4451 = vsub.s32 %v4448, %v4450
  %v4452 = vrot.slane %v4438, %v4451
  %v4453 = vcombine.high %v4445, %v4445
  %v4454 = vcombine.high %v4452, %v4452
  %v4456 = vunpack.c.l.s4 1966171168
  %v4457 = vunpack.c.0.s8 %v4456
  %v4458 = vlaneseq
  %v4459 = vshrl.u32 %v4458, 7
  %v4460 = vsub.s32 %v4457, %v4459
  %v4461 = vrot.slane %v4445, %v4460
  %v4463 = vunpack.c.l.s4 1966171168
  %v4464 = vunpack.c.0.s8 %v4463
  %v4465 = vlaneseq
  %v4466 = vshrl.u32 %v4465, 7
  %v4467 = vsub.s32 %v4464, %v4466
  %v4468 = vrot.slane %v4452, %v4467
  %v4470 = vunpack.c.l.s4 1966171168
  %v4471 = vunpack.c.0.s8 %v4470
  %v4472 = vlaneseq
  %v4473 = vshrl.u32 %v4472, 7
  %v4474 = vsub.s32 %v4471, %v4473
  %v4475 = vrot.slane %v4453, %v4474
  %v4477 = vunpack.c.l.s4 1966171168
  %v4478 = vunpack.c.0.s8 %v4477
  %v4479 = vlaneseq
  %v4480 = vshrl.u32 %v4479, 7
  %v4481 = vsub.s32 %v4478, %v4480
  %v4482 = vrot.slane %v4454, %v4481
  %v4483 = vcombine.high %v4461, %v4461
  %v4484 = vcombine.high %v4468, %v4468
  %v4485 = vcombine.high %v4475, %v4475
  %v4486 = vcombine.high %v4482, %v4482
  %v4487 = vcombine.high %v3367, %v3367
  %v4489 = vunpack.c.l.s4 1966171168
  %v4490 = vunpack.c.0.s8 %v4489
  %v4491 = vlaneseq
  %v4492 = vshrl.u32 %v4491, 7
  %v4493 = vsub.s32 %v4490, %v4492
  %v4494 = vrot.slane %v3367, %v4493
  %v4496 = vunpack.c.l.s4 1966171168
  %v4497 = vunpack.c.0.s8 %v4496
  %v4498 = vlaneseq
  %v4499 = vshrl.u32 %v4498, 7
  %v4500 = vsub.s32 %v4497, %v4499
  %v4501 = vrot.slane %v4487, %v4500
  %v4502 = vcombine.high %v4494, %v4494
  %v4503 = vcombine.high %v4501, %v4501
  %v4505 = vunpack.c.l.s4 1966171168
  %v4506 = vunpack.c.0.s8 %v4505
  %v4507 = vlaneseq
  %v4508 = vshrl.u32 %v4507, 7
  %v4509 = vsub.s32 %v4506, %v4508
  %v4510 = vrot.slane %v4494, %v4509
  %v4512 = vunpack.c.l.s4 1966171168
  %v4513 = vunpack.c.0.s8 %v4512
  %v4514 = vlaneseq
  %v4515 = vshrl.u32 %v4514, 7
  %v4516 = vsub.s32 %v4513, %v4515
  %v4517 = vrot.slane %v4501, %v4516
  %v4519 = vunpack.c.l.s4 1966171168
  %v4520 = vunpack.c.0.s8 %v4519
  %v4521 = vlaneseq
  %v4522 = vshrl.u32 %v4521, 7
  %v4523 = vsub.s32 %v4520, %v4522
  %v4524 = vrot.slane %v4502, %v4523
  %v4526 = vunpack.c.l.s4 1966171168
  %v4527 = vunpack.c.0.s8 %v4526
  %v4528 = vlaneseq
  %v4529 = vshrl.u32 %v4528, 7
  %v4530 = vsub.s32 %v4527, %v4529
  %v4531 = vrot.slane %v4503, %v4530
  %v4532 = vcombine.high %v4510, %v4510
  %v4533 = vcombine.high %v4517, %v4517
  %v4534 = vcombine.high %v4524, %v4524
  %v4535 = vcombine.high %v4531, %v4531
  %v4536 = vcombine.high %v3368, %v3368
  %v4538 = vunpack.c.l.s4 1966171168
  %v4539 = vunpack.c.0.s8 %v4538
  %v4540 = vlaneseq
  %v4541 = vshrl.u32 %v4540, 7
  %v4542 = vsub.s32 %v4539, %v4541
  %v4543 = vrot.slane %v3368, %v4542
  %v4545 = vunpack.c.l.s4 1966171168
  %v4546 = vunpack.c.0.s8 %v4545
  %v4547 = vlaneseq
  %v4548 = vshrl.u32 %v4547, 7
  %v4549 = vsub.s32 %v4546, %v4548
  %v4550 = vrot.slane %v4536, %v4549
  %v4551 = vcombine.high %v4543, %v4543
  %v4552 = vcombine.high %v4550, %v4550
  %v4554 = vunpack.c.l.s4 1966171168
  %v4555 = vunpack.c.0.s8 %v4554
  %v4556 = vlaneseq
  %v4557 = vshrl.u32 %v4556, 7
  %v4558 = vsub.s32 %v4555, %v4557
  %v4559 = vrot.slane %v4543, %v4558
  %v4561 = vunpack.c.l.s4 1966171168
  %v4562 = vunpack.c.0.s8 %v4561
  %v4563 = vlaneseq
  %v4564 = vshrl.u32 %v4563, 7
  %v4565 = vsub.s32 %v4562, %v4564
  %v4566 = vrot.slane %v4550, %v4565
  %v4568 = vunpack.c.l.s4 1966171168
  %v4569 = vunpack.c.0.s8 %v4568
  %v4570 = vlaneseq
  %v4571 = vshrl.u32 %v4570, 7
  %v4572 = vsub.s32 %v4569, %v4571
  %v4573 = vrot.slane %v4551, %v4572
  %v4575 = vunpack.c.l.s4 1966171168
  %v4576 = vunpack.c.0.s8 %v4575
  %v4577 = vlaneseq
  %v4578 = vshrl.u32 %v4577, 7
  %v4579 = vsub.s32 %v4576, %v4578
  %v4580 = vrot.slane %v4552, %v4579
  %v4581 = vcombine.high %v4559, %v4559
  %v4582 = vcombine.high %v4566, %v4566
  %v4583 = vcombine.high %v4573, %v4573
  %v4584 = vcombine.high %v4580, %v4580
  %v4585 = vcombine.high %v3369, %v3369
  %v4587 = vunpack.c.l.s4 1966171168
  %v4588 = vunpack.c.0.s8 %v4587
  %v4589 = vlaneseq
  %v4590 = vshrl.u32 %v4589, 7
  %v4591 = vsub.s32 %v4588, %v4590
  %v4592 = vrot.slane %v3369, %v4591
  %v4594 = vunpack.c.l.s4 1966171168
  %v4595 = vunpack.c.0.s8 %v4594
  %v4596 = vlaneseq
  %v4597 = vshrl.u32 %v4596, 7
  %v4598 = vsub.s32 %v4595, %v4597
  %v4599 = vrot.slane %v4585, %v4598
  %v4600 = vcombine.high %v4592, %v4592
  %v4601 = vcombine.high %v4599, %v4599
  %v4603 = vunpack.c.l.s4 1966171168
  %v4604 = vunpack.c.0.s8 %v4603
  %v4605 = vlaneseq
  %v4606 = vshrl.u32 %v4605, 7
  %v4607 = vsub.s32 %v4604, %v4606
  %v4608 = vrot.slane %v4592, %v4607
  %v4610 = vunpack.c.l.s4 1966171168
  %v4611 = vunpack.c.0.s8 %v4610
  %v4612 = vlaneseq
  %v4613 = vshrl.u32 %v4612, 7
  %v4614 = vsub.s32 %v4611, %v4613
  %v4615 = vrot.slane %v4599, %v4614
  %v4617 = vunpack.c.l.s4 1966171168
  %v4618 = vunpack.c.0.s8 %v4617
  %v4619 = vlaneseq
  %v4620 = vshrl.u32 %v4619, 7
  %v4621 = vsub.s32 %v4618, %v4620
  %v4622 = vrot.slane %v4600, %v4621
  %v4624 = vunpack.c.l.s4 1966171168
  %v4625 = vunpack.c.0.s8 %v4624
  %v4626 = vlaneseq
  %v4627 = vshrl.u32 %v4626, 7
  %v4628 = vsub.s32 %v4625, %v4627
  %v4629 = vrot.slane %v4601, %v4628
  %v4630 = vcombine.high %v4608, %v4608
  %v4631 = vcombine.high %v4615, %v4615
  %v4632 = vcombine.high %v4622, %v4622
  %v4633 = vcombine.high %v4629, %v4629
  %v4634 = vcombine.high %v3370, %v3370
  %v4636 = vunpack.c.l.s4 1966171168
  %v4637 = vunpack.c.0.s8 %v4636
  %v4638 = vlaneseq
  %v4639 = vshrl.u32 %v4638, 7
  %v4640 = vsub.s32 %v4637, %v4639
  %v4641 = vrot.slane %v3370, %v4640
  %v4643 = vunpack.c.l.s4 1966171168
  %v4644 = vunpack.c.0.s8 %v4643
  %v4645 = vlaneseq
  %v4646 = vshrl.u32 %v4645, 7
  %v4647 = vsub.s32 %v4644, %v4646
  %v4648 = vrot.slane %v4634, %v4647
  %v4649 = vcombine.high %v4641, %v4641
  %v4650 = vcombine.high %v4648, %v4648
  %v4652 = vunpack.c.l.s4 1966171168
  %v4653 = vunpack.c.0.s8 %v4652
  %v4654 = vlaneseq
  %v4655 = vshrl.u32 %v4654, 7
  %v4656 = vsub.s32 %v4653, %v4655
  %v4657 = vrot.slane %v4641, %v4656
  %v4659 = vunpack.c.l.s4 1966171168
  %v4660 = vunpack.c.0.s8 %v4659
  %v4661 = vlaneseq
  %v4662 = vshrl.u32 %v4661, 7
  %v4663 = vsub.s32 %v4660, %v4662
  %v4664 = vrot.slane %v4648, %v4663
  %v4666 = vunpack.c.l.s4 1966171168
  %v4667 = vunpack.c.0.s8 %v4666
  %v4668 = vlaneseq
  %v4669 = vshrl.u32 %v4668, 7
  %v4670 = vsub.s32 %v4667, %v4669
  %v4671 = vrot.slane %v4649, %v4670
  %v4673 = vunpack.c.l.s4 1966171168
  %v4674 = vunpack.c.0.s8 %v4673
  %v4675 = vlaneseq
  %v4676 = vshrl.u32 %v4675, 7
  %v4677 = vsub.s32 %v4674, %v4676
  %v4678 = vrot.slane %v4650, %v4677
  %v4679 = vcombine.high %v4657, %v4657
  %v4680 = vcombine.high %v4664, %v4664
  %v4681 = vcombine.high %v4671, %v4671
  %v4682 = vcombine.high %v4678, %v4678
  %v4683 = vcombine.high %v3371, %v3371
  %v4685 = vunpack.c.l.s4 1966171168
  %v4686 = vunpack.c.0.s8 %v4685
  %v4687 = vlaneseq
  %v4688 = vshrl.u32 %v4687, 7
  %v4689 = vsub.s32 %v4686, %v4688
  %v4690 = vrot.slane %v3371, %v4689
  %v4692 = vunpack.c.l.s4 1966171168
  %v4693 = vunpack.c.0.s8 %v4692
  %v4694 = vlaneseq
  %v4695 = vshrl.u32 %v4694, 7
  %v4696 = vsub.s32 %v4693, %v4695
  %v4697 = vrot.slane %v4683, %v4696
  %v4698 = vcombine.high %v4690, %v4690
  %v4699 = vcombine.high %v4697, %v4697
  %v4701 = vunpack.c.l.s4 1966171168
  %v4702 = vunpack.c.0.s8 %v4701
  %v4703 = vlaneseq
  %v4704 = vshrl.u32 %v4703, 7
  %v4705 = vsub.s32 %v4702, %v4704
  %v4706 = vrot.slane %v4690, %v4705
  %v4708 = vunpack.c.l.s4 1966171168
  %v4709 = vunpack.c.0.s8 %v4708
  %v4710 = vlaneseq
  %v4711 = vshrl.u32 %v4710, 7
  %v4712 = vsub.s32 %v4709, %v4711
  %v4713 = vrot.slane %v4697, %v4712
  %v4715 = vunpack.c.l.s4 1966171168
  %v4716 = vunpack.c.0.s8 %v4715
  %v4717 = vlaneseq
  %v4718 = vshrl.u32 %v4717, 7
  %v4719 = vsub.s32 %v4716, %v4718
  %v4720 = vrot.slane %v4698, %v4719
  %v4722 = vunpack.c.l.s4 1966171168
  %v4723 = vunpack.c.0.s8 %v4722
  %v4724 = vlaneseq
  %v4725 = vshrl.u32 %v4724, 7
  %v4726 = vsub.s32 %v4723, %v4725
  %v4727 = vrot.slane %v4699, %v4726
  %v4728 = vcombine.high %v4706, %v4706
  %v4729 = vcombine.high %v4713, %v4713
  %v4730 = vcombine.high %v4720, %v4720
  %v4731 = vcombine.high %v4727, %v4727
  %v4732 = vcombine.high %v3372, %v3372
  %v4734 = vunpack.c.l.s4 1966171168
  %v4735 = vunpack.c.0.s8 %v4734
  %v4736 = vlaneseq
  %v4737 = vshrl.u32 %v4736, 7
  %v4738 = vsub.s32 %v4735, %v4737
  %v4739 = vrot.slane %v3372, %v4738
  %v4741 = vunpack.c.l.s4 1966171168
  %v4742 = vunpack.c.0.s8 %v4741
  %v4743 = vlaneseq
  %v4744 = vshrl.u32 %v4743, 7
  %v4745 = vsub.s32 %v4742, %v4744
  %v4746 = vrot.slane %v4732, %v4745
  %v4747 = vcombine.high %v4739, %v4739
  %v4748 = vcombine.high %v4746, %v4746
  %v4750 = vunpack.c.l.s4 1966171168
  %v4751 = vunpack.c.0.s8 %v4750
  %v4752 = vlaneseq
  %v4753 = vshrl.u32 %v4752, 7
  %v4754 = vsub.s32 %v4751, %v4753
  %v4755 = vrot.slane %v4739, %v4754
  %v4757 = vunpack.c.l.s4 1966171168
  %v4758 = vunpack.c.0.s8 %v4757
  %v4759 = vlaneseq
  %v4760 = vshrl.u32 %v4759, 7
  %v4761 = vsub.s32 %v4758, %v4760
  %v4762 = vrot.slane %v4746, %v4761
  %v4764 = vunpack.c.l.s4 1966171168
  %v4765 = vunpack.c.0.s8 %v4764
  %v4766 = vlaneseq
  %v4767 = vshrl.u32 %v4766, 7
  %v4768 = vsub.s32 %v4765, %v4767
  %v4769 = vrot.slane %v4747, %v4768
  %v4771 = vunpack.c.l.s4 1966171168
  %v4772 = vunpack.c.0.s8 %v4771
  %v4773 = vlaneseq
  %v4774 = vshrl.u32 %v4773, 7
  %v4775 = vsub.s32 %v4772, %v4774
  %v4776 = vrot.slane %v4748, %v4775
  %v4777 = vcombine.high %v4755, %v4755
  %v4778 = vcombine.high %v4762, %v4762
  %v4779 = vcombine.high %v4769, %v4769
  %v4780 = vcombine.high %v4776, %v4776
  %v4781 = vcombine.high %v3373, %v3373
  %v4783 = vunpack.c.l.s4 1966171168
  %v4784 = vunpack.c.0.s8 %v4783
  %v4785 = vlaneseq
  %v4786 = vshrl.u32 %v4785, 7
  %v4787 = vsub.s32 %v4784, %v4786
  %v4788 = vrot.slane %v3373, %v4787
  %v4790 = vunpack.c.l.s4 1966171168
  %v4791 = vunpack.c.0.s8 %v4790
  %v4792 = vlaneseq
  %v4793 = vshrl.u32 %v4792, 7
  %v4794 = vsub.s32 %v4791, %v4793
  %v4795 = vrot.slane %v4781, %v4794
  %v4796 = vcombine.high %v4788, %v4788
  %v4797 = vcombine.high %v4795, %v4795
  %v4799 = vunpack.c.l.s4 1966171168
  %v4800 = vunpack.c.0.s8 %v4799
  %v4801 = vlaneseq
  %v4802 = vshrl.u32 %v4801, 7
  %v4803 = vsub.s32 %v4800, %v4802
  %v4804 = vrot.slane %v4788, %v4803
  %v4806 = vunpack.c.l.s4 1966171168
  %v4807 = vunpack.c.0.s8 %v4806
  %v4808 = vlaneseq
  %v4809 = vshrl.u32 %v4808, 7
  %v4810 = vsub.s32 %v4807, %v4809
  %v4811 = vrot.slane %v4795, %v4810
  %v4813 = vunpack.c.l.s4 1966171168
  %v4814 = vunpack.c.0.s8 %v4813
  %v4815 = vlaneseq
  %v4816 = vshrl.u32 %v4815, 7
  %v4817 = vsub.s32 %v4814, %v4816
  %v4818 = vrot.slane %v4796, %v4817
  %v4820 = vunpack.c.l.s4 1966171168
  %v4821 = vunpack.c.0.s8 %v4820
  %v4822 = vlaneseq
  %v4823 = vshrl.u32 %v4822, 7
  %v4824 = vsub.s32 %v4821, %v4823
  %v4825 = vrot.slane %v4797, %v4824
  %v4826 = vcombine.high %v4804, %v4804
  %v4827 = vcombine.high %v4811, %v4811
  %v4828 = vcombine.high %v4818, %v4818
  %v4829 = vcombine.high %v4825, %v4825
  %v4830 = vcombine.high %v3374, %v3374
  %v4832 = vunpack.c.l.s4 1966171168
  %v4833 = vunpack.c.0.s8 %v4832
  %v4834 = vlaneseq
  %v4835 = vshrl.u32 %v4834, 7
  %v4836 = vsub.s32 %v4833, %v4835
  %v4837 = vrot.slane %v3374, %v4836
  %v4839 = vunpack.c.l.s4 1966171168
  %v4840 = vunpack.c.0.s8 %v4839
  %v4841 = vlaneseq
  %v4842 = vshrl.u32 %v4841, 7
  %v4843 = vsub.s32 %v4840, %v4842
  %v4844 = vrot.slane %v4830, %v4843
  %v4845 = vcombine.high %v4837, %v4837
  %v4846 = vcombine.high %v4844, %v4844
  %v4848 = vunpack.c.l.s4 1966171168
  %v4849 = vunpack.c.0.s8 %v4848
  %v4850 = vlaneseq
  %v4851 = vshrl.u32 %v4850, 7
  %v4852 = vsub.s32 %v4849, %v4851
  %v4853 = vrot.slane %v4837, %v4852
  %v4855 = vunpack.c.l.s4 1966171168
  %v4856 = vunpack.c.0.s8 %v4855
  %v4857 = vlaneseq
  %v4858 = vshrl.u32 %v4857, 7
  %v4859 = vsub.s32 %v4856, %v4858
  %v4860 = vrot.slane %v4844, %v4859
  %v4862 = vunpack.c.l.s4 1966171168
  %v4863 = vunpack.c.0.s8 %v4862
  %v4864 = vlaneseq
  %v4865 = vshrl.u32 %v4864, 7
  %v4866 = vsub.s32 %v4863, %v4865
  %v4867 = vrot.slane %v4845, %v4866
  %v4869 = vunpack.c.l.s4 1966171168
  %v4870 = vunpack.c.0.s8 %v4869
  %v4871 = vlaneseq
  %v4872 = vshrl.u32 %v4871, 7
  %v4873 = vsub.s32 %v4870, %v4872
  %v4874 = vrot.slane %v4846, %v4873
  %v4875 = vcombine.high %v4853, %v4853
  %v4876 = vcombine.high %v4860, %v4860
  %v4877 = vcombine.high %v4867, %v4867
  %v4878 = vcombine.high %v4874, %v4874
  %v4879 = vcombine.high %v3375, %v3375
  %v4881 = vunpack.c.l.s4 1966171168
  %v4882 = vunpack.c.0.s8 %v4881
  %v4883 = vlaneseq
  %v4884 = vshrl.u32 %v4883, 7
  %v4885 = vsub.s32 %v4882, %v4884
  %v4886 = vrot.slane %v3375, %v4885
  %v4888 = vunpack.c.l.s4 1966171168
  %v4889 = vunpack.c.0.s8 %v4888
  %v4890 = vlaneseq
  %v4891 = vshrl.u32 %v4890, 7
  %v4892 = vsub.s32 %v4889, %v4891
  %v4893 = vrot.slane %v4879, %v4892
  %v4894 = vcombine.high %v4886, %v4886
  %v4895 = vcombine.high %v4893, %v4893
  %v4897 = vunpack.c.l.s4 1966171168
  %v4898 = vunpack.c.0.s8 %v4897
  %v4899 = vlaneseq
  %v4900 = vshrl.u32 %v4899, 7
  %v4901 = vsub.s32 %v4898, %v4900
  %v4902 = vrot.slane %v4886, %v4901
  %v4904 = vunpack.c.l.s4 1966171168
  %v4905 = vunpack.c.0.s8 %v4904
  %v4906 = vlaneseq
  %v4907 = vshrl.u32 %v4906, 7
  %v4908 = vsub.s32 %v4905, %v4907
  %v4909 = vrot.slane %v4893, %v4908
  %v4911 = vunpack.c.l.s4 1966171168
  %v4912 = vunpack.c.0.s8 %v4911
  %v4913 = vlaneseq
  %v4914 = vshrl.u32 %v4913, 7
  %v4915 = vsub.s32 %v4912, %v4914
  %v4916 = vrot.slane %v4894, %v4915
  %v4918 = vunpack.c.l.s4 1966171168
  %v4919 = vunpack.c.0.s8 %v4918
  %v4920 = vlaneseq
  %v4921 = vshrl.u32 %v4920, 7
  %v4922 = vsub.s32 %v4919, %v4921
  %v4923 = vrot.slane %v4895, %v4922
  %v4924 = vcombine.high %v4902, %v4902
  %v4925 = vcombine.high %v4909, %v4909
  %v4926 = vcombine.high %v4916, %v4916
  %v4927 = vcombine.high %v4923, %v4923
  %v4928 = vcombine.high %v3376, %v3376
  %v4930 = vunpack.c.l.s4 1966171168
  %v4931 = vunpack.c.0.s8 %v4930
  %v4932 = vlaneseq
  %v4933 = vshrl.u32 %v4932, 7
  %v4934 = vsub.s32 %v4931, %v4933
  %v4935 = vrot.slane %v3376, %v4934
  %v4937 = vunpack.c.l.s4 1966171168
  %v4938 = vunpack.c.0.s8 %v4937
  %v4939 = vlaneseq
  %v4940 = vshrl.u32 %v4939, 7
  %v4941 = vsub.s32 %v4938, %v4940
  %v4942 = vrot.slane %v4928, %v4941
  %v4943 = vcombine.high %v4935, %v4935
  %v4944 = vcombine.high %v4942, %v4942
  %v4946 = vunpack.c.l.s4 1966171168
  %v4947 = vunpack.c.0.s8 %v4946
  %v4948 = vlaneseq
  %v4949 = vshrl.u32 %v4948, 7
  %v4950 = vsub.s32 %v4947, %v4949
  %v4951 = vrot.slane %v4935, %v4950
  %v4953 = vunpack.c.l.s4 1966171168
  %v4954 = vunpack.c.0.s8 %v4953
  %v4955 = vlaneseq
  %v4956 = vshrl.u32 %v4955, 7
  %v4957 = vsub.s32 %v4954, %v4956
  %v4958 = vrot.slane %v4942, %v4957
  %v4960 = vunpack.c.l.s4 1966171168
  %v4961 = vunpack.c.0.s8 %v4960
  %v4962 = vlaneseq
  %v4963 = vshrl.u32 %v4962, 7
  %v4964 = vsub.s32 %v4961, %v4963
  %v4965 = vrot.slane %v4943, %v4964
  %v4967 = vunpack.c.l.s4 1966171168
  %v4968 = vunpack.c.0.s8 %v4967
  %v4969 = vlaneseq
  %v4970 = vshrl.u32 %v4969, 7
  %v4971 = vsub.s32 %v4968, %v4970
  %v4972 = vrot.slane %v4944, %v4971
  %v4973 = vcombine.high %v4951, %v4951
  %v4974 = vcombine.high %v4958, %v4958
  %v4975 = vcombine.high %v4965, %v4965
  %v4976 = vcombine.high %v4972, %v4972
  %v4978 = vunpack.c.l.s4 1966171168
  %v4979 = vunpack.c.0.s8 %v4978
  %v4980 = vlaneseq
  %v4981 = vshrl.u32 %v4980, 7
  %v4982 = vsub.s32 %v4979, %v4981
  %v4983 = vrot.slane %v3432, %v4982
  %v4985 = vunpack.c.l.s4 1966171168
  %v4986 = vunpack.c.0.s8 %v4985
  %v4987 = vlaneseq
  %v4988 = vshrl.u32 %v4987, 7
  %v4989 = vsub.s32 %v4986, %v4988
  %v4990 = vrot.slane %v4983, %v4989
  %v4992 = vunpack.c.l.s4 1966171168
  %v4993 = vunpack.c.0.s8 %v4992
  %v4994 = vlaneseq
  %v4995 = vshrl.u32 %v4994, 7
  %v4996 = vsub.s32 %v4993, %v4995
  %v4997 = vrot.slane %v3446, %v4996
  %v4999 = vunpack.c.l.s4 1966171168
  %v5000 = vunpack.c.0.s8 %v4999
  %v5001 = vlaneseq
  %v5002 = vshrl.u32 %v5001, 7
  %v5003 = vsub.s32 %v5000, %v5002
  %v5004 = vrot.slane %v4997, %v5003
  %v5006 = vunpack.c.l.s4 1966171168
  %v5007 = vunpack.c.0.s8 %v5006
  %v5008 = vlaneseq
  %v5009 = vshrl.u32 %v5008, 7
  %v5010 = vsub.s32 %v5007, %v5009
  %v5011 = vrot.slane %v3454, %v5010
  %v5013 = vunpack.c.l.s4 1966171168
  %v5014 = vunpack.c.0.s8 %v5013
  %v5015 = vlaneseq
  %v5016 = vshrl.u32 %v5015, 7
  %v5017 = vsub.s32 %v5014, %v5016
  %v5018 = vrot.slane %v5011, %v5017
  %v5020 = vunpack.c.l.s4 1966171168
  %v5021 = vunpack.c.0.s8 %v5020
  %v5022 = vlaneseq
  %v5023 = vshrl.u32 %v5022, 7
  %v5024 = vsub.s32 %v5021, %v5023
  %v5025 = vrot.slane %v3481, %v5024
  %v5027 = vunpack.c.l.s4 1966171168
  %v5028 = vunpack.c.0.s8 %v5027
  %v5029 = vlaneseq
  %v5030 = vshrl.u32 %v5029, 7
  %v5031 = vsub.s32 %v5028, %v5030
  %v5032 = vrot.slane %v5025, %v5031
  %v5034 = vunpack.c.l.s4 1966171168
  %v5035 = vunpack.c.0.s8 %v5034
  %v5036 = vlaneseq
  %v5037 = vshrl.u32 %v5036, 7
  %v5038 = vsub.s32 %v5035, %v5037
  %v5039 = vrot.slane %v3495, %v5038
  %v5041 = vunpack.c.l.s4 1966171168
  %v5042 = vunpack.c.0.s8 %v5041
  %v5043 = vlaneseq
  %v5044 = vshrl.u32 %v5043, 7
  %v5045 = vsub.s32 %v5042, %v5044
  %v5046 = vrot.slane %v5039, %v5045
  %v5048 = vunpack.c.l.s4 1966171168
  %v5049 = vunpack.c.0.s8 %v5048
  %v5050 = vlaneseq
  %v5051 = vshrl.u32 %v5050, 7
  %v5052 = vsub.s32 %v5049, %v5051
  %v5053 = vrot.slane %v3503, %v5052
  %v5055 = vunpack.c.l.s4 1966171168
  %v5056 = vunpack.c.0.s8 %v5055
  %v5057 = vlaneseq
  %v5058 = vshrl.u32 %v5057, 7
  %v5059 = vsub.s32 %v5056, %v5058
  %v5060 = vrot.slane %v5053, %v5059
  %v5062 = vunpack.c.l.s4 1966171168
  %v5063 = vunpack.c.0.s8 %v5062
  %v5064 = vlaneseq
  %v5065 = vshrl.u32 %v5064, 7
  %v5066 = vsub.s32 %v5063, %v5065
  %v5067 = vrot.slane %v3530, %v5066
  %v5069 = vunpack.c.l.s4 1966171168
  %v5070 = vunpack.c.0.s8 %v5069
  %v5071 = vlaneseq
  %v5072 = vshrl.u32 %v5071, 7
  %v5073 = vsub.s32 %v5070, %v5072
  %v5074 = vrot.slane %v5067, %v5073
  %v5076 = vunpack.c.l.s4 1966171168
  %v5077 = vunpack.c.0.s8 %v5076
  %v5078 = vlaneseq
  %v5079 = vshrl.u32 %v5078, 7
  %v5080 = vsub.s32 %v5077, %v5079
  %v5081 = vrot.slane %v3544, %v5080
  %v5083 = vunpack.c.l.s4 1966171168
  %v5084 = vunpack.c.0.s8 %v5083
  %v5085 = vlaneseq
  %v5086 = vshrl.u32 %v5085, 7
  %v5087 = vsub.s32 %v5084, %v5086
  %v5088 = vrot.slane %v5081, %v5087
  %v5090 = vunpack.c.l.s4 1966171168
  %v5091 = vunpack.c.0.s8 %v5090
  %v5092 = vlaneseq
  %v5093 = vshrl.u32 %v5092, 7
  %v5094 = vsub.s32 %v5091, %v5093
  %v5095 = vrot.slane %v3552, %v5094
  %v5097 = vunpack.c.l.s4 1966171168
  %v5098 = vunpack.c.0.s8 %v5097
  %v5099 = vlaneseq
  %v5100 = vshrl.u32 %v5099, 7
  %v5101 = vsub.s32 %v5098, %v5100
  %v5102 = vrot.slane %v5095, %v5101
  %v5104 = vunpack.c.l.s4 1966171168
  %v5105 = vunpack.c.0.s8 %v5104
  %v5106 = vlaneseq
  %v5107 = vshrl.u32 %v5106, 7
  %v5108 = vsub.s32 %v5105, %v5107
  %v5109 = vrot.slane %v3628, %v5108
  %v5111 = vunpack.c.l.s4 1966171168
  %v5112 = vunpack.c.0.s8 %v5111
  %v5113 = vlaneseq
  %v5114 = vshrl.u32 %v5113, 7
  %v5115 = vsub.s32 %v5112, %v5114
  %v5116 = vrot.slane %v5109, %v5115
  %v5118 = vunpack.c.l.s4 1966171168
  %v5119 = vunpack.c.0.s8 %v5118
  %v5120 = vlaneseq
  %v5121 = vshrl.u32 %v5120, 7
  %v5122 = vsub.s32 %v5119, %v5121
  %v5123 = vrot.slane %v3642, %v5122
  %v5125 = vunpack.c.l.s4 1966171168
  %v5126 = vunpack.c.0.s8 %v5125
  %v5127 = vlaneseq
  %v5128 = vshrl.u32 %v5127, 7
  %v5129 = vsub.s32 %v5126, %v5128
  %v5130 = vrot.slane %v5123, %v5129
  %v5132 = vunpack.c.l.s4 1966171168
  %v5133 = vunpack.c.0.s8 %v5132
  %v5134 = vlaneseq
  %v5135 = vshrl.u32 %v5134, 7
  %v5136 = vsub.s32 %v5133, %v5135
  %v5137 = vrot.slane %v3650, %v5136
  %v5139 = vunpack.c.l.s4 1966171168
  %v5140 = vunpack.c.0.s8 %v5139
  %v5141 = vlaneseq
  %v5142 = vshrl.u32 %v5141, 7
  %v5143 = vsub.s32 %v5140, %v5142
  %v5144 = vrot.slane %v5137, %v5143
  %v5146 = vunpack.c.l.s4 1966171168
  %v5147 = vunpack.c.0.s8 %v5146
  %v5148 = vlaneseq
  %v5149 = vshrl.u32 %v5148, 7
  %v5150 = vsub.s32 %v5147, %v5149
  %v5151 = vrot.slane %v3677, %v5150
  %v5153 = vunpack.c.l.s4 1966171168
  %v5154 = vunpack.c.0.s8 %v5153
  %v5155 = vlaneseq
  %v5156 = vshrl.u32 %v5155, 7
  %v5157 = vsub.s32 %v5154, %v5156
  %v5158 = vrot.slane %v5151, %v5157
  %v5160 = vunpack.c.l.s4 1966171168
  %v5161 = vunpack.c.0.s8 %v5160
  %v5162 = vlaneseq
  %v5163 = vshrl.u32 %v5162, 7
  %v5164 = vsub.s32 %v5161, %v5163
  %v5165 = vrot.slane %v3691, %v5164
  %v5167 = vunpack.c.l.s4 1966171168
  %v5168 = vunpack.c.0.s8 %v5167
  %v5169 = vlaneseq
  %v5170 = vshrl.u32 %v5169, 7
  %v5171 = vsub.s32 %v5168, %v5170
  %v5172 = vrot.slane %v5165, %v5171
  %v5174 = vunpack.c.l.s4 1966171168
  %v5175 = vunpack.c.0.s8 %v5174
  %v5176 = vlaneseq
  %v5177 = vshrl.u32 %v5176, 7
  %v5178 = vsub.s32 %v5175, %v5177
  %v5179 = vrot.slane %v3699, %v5178
  %v5181 = vunpack.c.l.s4 1966171168
  %v5182 = vunpack.c.0.s8 %v5181
  %v5183 = vlaneseq
  %v5184 = vshrl.u32 %v5183, 7
  %v5185 = vsub.s32 %v5182, %v5184
  %v5186 = vrot.slane %v5179, %v5185
  %v5188 = vunpack.c.l.s4 1966171168
  %v5189 = vunpack.c.0.s8 %v5188
  %v5190 = vlaneseq
  %v5191 = vshrl.u32 %v5190, 7
  %v5192 = vsub.s32 %v5189, %v5191
  %v5193 = vrot.slane %v3726, %v5192
  %v5195 = vunpack.c.l.s4 1966171168
  %v5196 = vunpack.c.0.s8 %v5195
  %v5197 = vlaneseq
  %v5198 = vshrl.u32 %v5197, 7
  %v5199 = vsub.s32 %v5196, %v5198
  %v5200 = vrot.slane %v5193, %v5199
  %v5202 = vunpack.c.l.s4 1966171168
  %v5203 = vunpack.c.0.s8 %v5202
  %v5204 = vlaneseq
  %v5205 = vshrl.u32 %v5204, 7
  %v5206 = vsub.s32 %v5203, %v5205
  %v5207 = vrot.slane %v3740, %v5206
  %v5209 = vunpack.c.l.s4 1966171168
  %v5210 = vunpack.c.0.s8 %v5209
  %v5211 = vlaneseq
  %v5212 = vshrl.u32 %v5211, 7
  %v5213 = vsub.s32 %v5210, %v5212
  %v5214 = vrot.slane %v5207, %v5213
  %v5216 = vunpack.c.l.s4 1966171168
  %v5217 = vunpack.c.0.s8 %v5216
  %v5218 = vlaneseq
  %v5219 = vshrl.u32 %v5218, 7
  %v5220 = vsub.s32 %v5217, %v5219
  %v5221 = vrot.slane %v3748, %v5220
  %v5223 = vunpack.c.l.s4 1966171168
  %v5224 = vunpack.c.0.s8 %v5223
  %v5225 = vlaneseq
  %v5226 = vshrl.u32 %v5225, 7
  %v5227 = vsub.s32 %v5224, %v5226
  %v5228 = vrot.slane %v5221, %v5227
  %v5230 = vunpack.c.l.s4 1966171168
  %v5231 = vunpack.c.0.s8 %v5230
  %v5232 = vlaneseq
  %v5233 = vshrl.u32 %v5232, 7
  %v5234 = vsub.s32 %v5231, %v5233
  %v5235 = vrot.slane %v3824, %v5234
  %v5237 = vunpack.c.l.s4 1966171168
  %v5238 = vunpack.c.0.s8 %v5237
  %v5239 = vlaneseq
  %v5240 = vshrl.u32 %v5239, 7
  %v5241 = vsub.s32 %v5238, %v5240
  %v5242 = vrot.slane %v5235, %v5241
  %v5244 = vunpack.c.l.s4 1966171168
  %v5245 = vunpack.c.0.s8 %v5244
  %v5246 = vlaneseq
  %v5247 = vshrl.u32 %v5246, 7
  %v5248 = vsub.s32 %v5245, %v5247
  %v5249 = vrot.slane %v3838, %v5248
  %v5251 = vunpack.c.l.s4 1966171168
  %v5252 = vunpack.c.0.s8 %v5251
  %v5253 = vlaneseq
  %v5254 = vshrl.u32 %v5253, 7
  %v5255 = vsub.s32 %v5252, %v5254
  %v5256 = vrot.slane %v5249, %v5255
  %v5258 = vunpack.c.l.s4 1966171168
  %v5259 = vunpack.c.0.s8 %v5258
  %v5260 = vlaneseq
  %v5261 = vshrl.u32 %v5260, 7
  %v5262 = vsub.s32 %v5259, %v5261
  %v5263 = vrot.slane %v3846, %v5262
  %v5265 = vunpack.c.l.s4 1966171168
  %v5266 = vunpack.c.0.s8 %v5265
  %v5267 = vlaneseq
  %v5268 = vshrl.u32 %v5267, 7
  %v5269 = vsub.s32 %v5266, %v5268
  %v5270 = vrot.slane %v5263, %v5269
  %v5272 = vunpack.c.l.s4 1966171168
  %v5273 = vunpack.c.0.s8 %v5272
  %v5274 = vlaneseq
  %v5275 = vshrl.u32 %v5274, 7
  %v5276 = vsub.s32 %v5273, %v5275
  %v5277 = vrot.slane %v3873, %v5276
  %v5279 = vunpack.c.l.s4 1966171168
  %v5280 = vunpack.c.0.s8 %v5279
  %v5281 = vlaneseq
  %v5282 = vshrl.u32 %v5281, 7
  %v5283 = vsub.s32 %v5280, %v5282
  %v5284 = vrot.slane %v5277, %v5283
  %v5286 = vunpack.c.l.s4 1966171168
  %v5287 = vunpack.c.0.s8 %v5286
  %v5288 = vlaneseq
  %v5289 = vshrl.u32 %v5288, 7
  %v5290 = vsub.s32 %v5287, %v5289
  %v5291 = vrot.slane %v3887, %v5290
  %v5293 = vunpack.c.l.s4 1966171168
  %v5294 = vunpack.c.0.s8 %v5293
  %v5295 = vlaneseq
  %v5296 = vshrl.u32 %v5295, 7
  %v5297 = vsub.s32 %v5294, %v5296
  %v5298 = vrot.slane %v5291, %v5297
  %v5300 = vunpack.c.l.s4 1966171168
  %v5301 = vunpack.c.0.s8 %v5300
  %v5302 = vlaneseq
  %v5303 = vshrl.u32 %v5302, 7
  %v5304 = vsub.s32 %v5301, %v5303
  %v5305 = vrot.slane %v3895, %v5304
  %v5307 = vunpack.c.l.s4 1966171168
  %v5308 = vunpack.c.0.s8 %v5307
  %v5309 = vlaneseq
  %v5310 = vshrl.u32 %v5309, 7
  %v5311 = vsub.s32 %v5308, %v5310
  %v5312 = vrot.slane %v5305, %v5311
  %v5314 = vunpack.c.l.s4 1966171168
  %v5315 = vunpack.c.0.s8 %v5314
  %v5316 = vlaneseq
  %v5317 = vshrl.u32 %v5316, 7
  %v5318 = vsub.s32 %v5315, %v5317
  %v5319 = vrot.slane %v3922, %v5318
  %v5321 = vunpack.c.l.s4 1966171168
  %v5322 = vunpack.c.0.s8 %v5321
  %v5323 = vlaneseq
  %v5324 = vshrl.u32 %v5323, 7
  %v5325 = vsub.s32 %v5322, %v5324
  %v5326 = vrot.slane %v5319, %v5325
  %v5328 = vunpack.c.l.s4 1966171168
  %v5329 = vunpack.c.0.s8 %v5328
  %v5330 = vlaneseq
  %v5331 = vshrl.u32 %v5330, 7
  %v5332 = vsub.s32 %v5329, %v5331
  %v5333 = vrot.slane %v3936, %v5332
  %v5335 = vunpack.c.l.s4 1966171168
  %v5336 = vunpack.c.0.s8 %v5335
  %v5337 = vlaneseq
  %v5338 = vshrl.u32 %v5337, 7
  %v5339 = vsub.s32 %v5336, %v5338
  %v5340 = vrot.slane %v5333, %v5339
  %v5342 = vunpack.c.l.s4 1966171168
  %v5343 = vunpack.c.0.s8 %v5342
  %v5344 = vlaneseq
  %v5345 = vshrl.u32 %v5344, 7
  %v5346 = vsub.s32 %v5343, %v5345
  %v5347 = vrot.slane %v3944, %v5346
  %v5349 = vunpack.c.l.s4 1966171168
  %v5350 = vunpack.c.0.s8 %v5349
  %v5351 = vlaneseq
  %v5352 = vshrl.u32 %v5351, 7
  %v5353 = vsub.s32 %v5350, %v5352
  %v5354 = vrot.slane %v5347, %v5353
  %v5356 = vunpack.c.l.s4 1966171168
  %v5357 = vunpack.c.0.s8 %v5356
  %v5358 = vlaneseq
  %v5359 = vshrl.u32 %v5358, 7
  %v5360 = vsub.s32 %v5357, %v5359
  %v5361 = vrot.slane %v4020, %v5360
  %v5363 = vunpack.c.l.s4 1966171168
  %v5364 = vunpack.c.0.s8 %v5363
  %v5365 = vlaneseq
  %v5366 = vshrl.u32 %v5365, 7
  %v5367 = vsub.s32 %v5364, %v5366
  %v5368 = vrot.slane %v5361, %v5367
  %v5370 = vunpack.c.l.s4 1966171168
  %v5371 = vunpack.c.0.s8 %v5370
  %v5372 = vlaneseq
  %v5373 = vshrl.u32 %v5372, 7
  %v5374 = vsub.s32 %v5371, %v5373
  %v5375 = vrot.slane %v4034, %v5374
  %v5377 = vunpack.c.l.s4 1966171168
  %v5378 = vunpack.c.0.s8 %v5377
  %v5379 = vlaneseq
  %v5380 = vshrl.u32 %v5379, 7
  %v5381 = vsub.s32 %v5378, %v5380
  %v5382 = vrot.slane %v5375, %v5381
  %v5384 = vunpack.c.l.s4 1966171168
  %v5385 = vunpack.c.0.s8 %v5384
  %v5386 = vlaneseq
  %v5387 = vshrl.u32 %v5386, 7
  %v5388 = vsub.s32 %v5385, %v5387
  %v5389 = vrot.slane %v4042, %v5388
  %v5391 = vunpack.c.l.s4 1966171168
  %v5392 = vunpack.c.0.s8 %v5391
  %v5393 = vlaneseq
  %v5394 = vshrl.u32 %v5393, 7
  %v5395 = vsub.s32 %v5392, %v5394
  %v5396 = vrot.slane %v5389, %v5395
  %v5398 = vunpack.c.l.s4 1966171168
  %v5399 = vunpack.c.0.s8 %v5398
  %v5400 = vlaneseq
  %v5401 = vshrl.u32 %v5400, 7
  %v5402 = vsub.s32 %v5399, %v5401
  %v5403 = vrot.slane %v4069, %v5402
  %v5405 = vunpack.c.l.s4 1966171168
  %v5406 = vunpack.c.0.s8 %v5405
  %v5407 = vlaneseq
  %v5408 = vshrl.u32 %v5407, 7
  %v5409 = vsub.s32 %v5406, %v5408
  %v5410 = vrot.slane %v5403, %v5409
  %v5412 = vunpack.c.l.s4 1966171168
  %v5413 = vunpack.c.0.s8 %v5412
  %v5414 = vlaneseq
  %v5415 = vshrl.u32 %v5414, 7
  %v5416 = vsub.s32 %v5413, %v5415
  %v5417 = vrot.slane %v4083, %v5416
  %v5419 = vunpack.c.l.s4 1966171168
  %v5420 = vunpack.c.0.s8 %v5419
  %v5421 = vlaneseq
  %v5422 = vshrl.u32 %v5421, 7
  %v5423 = vsub.s32 %v5420, %v5422
  %v5424 = vrot.slane %v5417, %v5423
  %v5426 = vunpack.c.l.s4 1966171168
  %v5427 = vunpack.c.0.s8 %v5426
  %v5428 = vlaneseq
  %v5429 = vshrl.u32 %v5428, 7
  %v5430 = vsub.s32 %v5427, %v5429
  %v5431 = vrot.slane %v4091, %v5430
  %v5433 = vunpack.c.l.s4 1966171168
  %v5434 = vunpack.c.0.s8 %v5433
  %v5435 = vlaneseq
  %v5436 = vshrl.u32 %v5435, 7
  %v5437 = vsub.s32 %v5434, %v5436
  %v5438 = vrot.slane %v5431, %v5437
  %v5440 = vunpack.c.l.s4 1966171168
  %v5441 = vunpack.c.0.s8 %v5440
  %v5442 = vlaneseq
  %v5443 = vshrl.u32 %v5442, 7
  %v5444 = vsub.s32 %v5441, %v5443
  %v5445 = vrot.slane %v4118, %v5444
  %v5447 = vunpack.c.l.s4 1966171168
  %v5448 = vunpack.c.0.s8 %v5447
  %v5449 = vlaneseq
  %v5450 = vshrl.u32 %v5449, 7
  %v5451 = vsub.s32 %v5448, %v5450
  %v5452 = vrot.slane %v5445, %v5451
  %v5454 = vunpack.c.l.s4 1966171168
  %v5455 = vunpack.c.0.s8 %v5454
  %v5456 = vlaneseq
  %v5457 = vshrl.u32 %v5456, 7
  %v5458 = vsub.s32 %v5455, %v5457
  %v5459 = vrot.slane %v4132, %v5458
  %v5461 = vunpack.c.l.s4 1966171168
  %v5462 = vunpack.c.0.s8 %v5461
  %v5463 = vlaneseq
  %v5464 = vshrl.u32 %v5463, 7
  %v5465 = vsub.s32 %v5462, %v5464
  %v5466 = vrot.slane %v5459, %v5465
  %v5468 = vunpack.c.l.s4 1966171168
  %v5469 = vunpack.c.0.s8 %v5468
  %v5470 = vlaneseq
  %v5471 = vshrl.u32 %v5470, 7
  %v5472 = vsub.s32 %v5469, %v5471
  %v5473 = vrot.slane %v4140, %v5472
  %v5475 = vunpack.c.l.s4 1966171168
  %v5476 = vunpack.c.0.s8 %v5475
  %v5477 = vlaneseq
  %v5478 = vshrl.u32 %v5477, 7
  %v5479 = vsub.s32 %v5476, %v5478
  %v5480 = vrot.slane %v5473, %v5479
  %v5482 = vunpack.c.l.s4 1966171168
  %v5483 = vunpack.c.0.s8 %v5482
  %v5484 = vlaneseq
  %v5485 = vshrl.u32 %v5484, 7
  %v5486 = vsub.s32 %v5483, %v5485
  %v5487 = vrot.slane %v4216, %v5486
  %v5489 = vunpack.c.l.s4 1966171168
  %v5490 = vunpack.c.0.s8 %v5489
  %v5491 = vlaneseq
  %v5492 = vshrl.u32 %v5491, 7
  %v5493 = vsub.s32 %v5490, %v5492
  %v5494 = vrot.slane %v5487, %v5493
  %v5496 = vunpack.c.l.s4 1966171168
  %v5497 = vunpack.c.0.s8 %v5496
  %v5498 = vlaneseq
  %v5499 = vshrl.u32 %v5498, 7
  %v5500 = vsub.s32 %v5497, %v5499
  %v5501 = vrot.slane %v4230, %v5500
  %v5503 = vunpack.c.l.s4 1966171168
  %v5504 = vunpack.c.0.s8 %v5503
  %v5505 = vlaneseq
  %v5506 = vshrl.u32 %v5505, 7
  %v5507 = vsub.s32 %v5504, %v5506
  %v5508 = vrot.slane %v5501, %v5507
  %v5510 = vunpack.c.l.s4 1966171168
  %v5511 = vunpack.c.0.s8 %v5510
  %v5512 = vlaneseq
  %v5513 = vshrl.u32 %v5512, 7
  %v5514 = vsub.s32 %v5511, %v5513
  %v5515 = vrot.slane %v4238, %v5514
  %v5517 = vunpack.c.l.s4 1966171168
  %v5518 = vunpack.c.0.s8 %v5517
  %v5519 = vlaneseq
  %v5520 = vshrl.u32 %v5519, 7
  %v5521 = vsub.s32 %v5518, %v5520
  %v5522 = vrot.slane %v5515, %v5521
  %v5524 = vunpack.c.l.s4 1966171168
  %v5525 = vunpack.c.0.s8 %v5524
  %v5526 = vlaneseq
  %v5527 = vshrl.u32 %v5526, 7
  %v5528 = vsub.s32 %v5525, %v5527
  %v5529 = vrot.slane %v4265, %v5528
  %v5531 = vunpack.c.l.s4 1966171168
  %v5532 = vunpack.c.0.s8 %v5531
  %v5533 = vlaneseq
  %v5534 = vshrl.u32 %v5533, 7
  %v5535 = vsub.s32 %v5532, %v5534
  %v5536 = vrot.slane %v5529, %v5535
  %v5538 = vunpack.c.l.s4 1966171168
  %v5539 = vunpack.c.0.s8 %v5538
  %v5540 = vlaneseq
  %v5541 = vshrl.u32 %v5540, 7
  %v5542 = vsub.s32 %v5539, %v5541
  %v5543 = vrot.slane %v4279, %v5542
  %v5545 = vunpack.c.l.s4 1966171168
  %v5546 = vunpack.c.0.s8 %v5545
  %v5547 = vlaneseq
  %v5548 = vshrl.u32 %v5547, 7
  %v5549 = vsub.s32 %v5546, %v5548
  %v5550 = vrot.slane %v5543, %v5549
  %v5552 = vunpack.c.l.s4 1966171168
  %v5553 = vunpack.c.0.s8 %v5552
  %v5554 = vlaneseq
  %v5555 = vshrl.u32 %v5554, 7
  %v5556 = vsub.s32 %v5553, %v5555
  %v5557 = vrot.slane %v4287, %v5556
  %v5559 = vunpack.c.l.s4 1966171168
  %v5560 = vunpack.c.0.s8 %v5559
  %v5561 = vlaneseq
  %v5562 = vshrl.u32 %v5561, 7
  %v5563 = vsub.s32 %v5560, %v5562
  %v5564 = vrot.slane %v5557, %v5563
  %v5566 = vunpack.c.l.s4 1966171168
  %v5567 = vunpack.c.0.s8 %v5566
  %v5568 = vlaneseq
  %v5569 = vshrl.u32 %v5568, 7
  %v5570 = vsub.s32 %v5567, %v5569
  %v5571 = vrot.slane %v4314, %v5570
  %v5573 = vunpack.c.l.s4 1966171168
  %v5574 = vunpack.c.0.s8 %v5573
  %v5575 = vlaneseq
  %v5576 = vshrl.u32 %v5575, 7
  %v5577 = vsub.s32 %v5574, %v5576
  %v5578 = vrot.slane %v5571, %v5577
  %v5580 = vunpack.c.l.s4 1966171168
  %v5581 = vunpack.c.0.s8 %v5580
  %v5582 = vlaneseq
  %v5583 = vshrl.u32 %v5582, 7
  %v5584 = vsub.s32 %v5581, %v5583
  %v5585 = vrot.slane %v4328, %v5584
  %v5587 = vunpack.c.l.s4 1966171168
  %v5588 = vunpack.c.0.s8 %v5587
  %v5589 = vlaneseq
  %v5590 = vshrl.u32 %v5589, 7
  %v5591 = vsub.s32 %v5588, %v5590
  %v5592 = vrot.slane %v5585, %v5591
  %v5594 = vunpack.c.l.s4 1966171168
  %v5595 = vunpack.c.0.s8 %v5594
  %v5596 = vlaneseq
  %v5597 = vshrl.u32 %v5596, 7
  %v5598 = vsub.s32 %v5595, %v5597
  %v5599 = vrot.slane %v4336, %v5598
  %v5601 = vunpack.c.l.s4 1966171168
  %v5602 = vunpack.c.0.s8 %v5601
  %v5603 = vlaneseq
  %v5604 = vshrl.u32 %v5603, 7
  %v5605 = vsub.s32 %v5602, %v5604
  %v5606 = vrot.slane %v5599, %v5605
  %v5608 = vunpack.c.l.s4 1966171168
  %v5609 = vunpack.c.0.s8 %v5608
  %v5610 = vlaneseq
  %v5611 = vshrl.u32 %v5610, 7
  %v5612 = vsub.s32 %v5609, %v5611
  %v5613 = vrot.slane %v4412, %v5612
  %v5615 = vunpack.c.l.s4 1966171168
  %v5616 = vunpack.c.0.s8 %v5615
  %v5617 = vlaneseq
  %v5618 = vshrl.u32 %v5617, 7
  %v5619 = vsub.s32 %v5616, %v5618
  %v5620 = vrot.slane %v5613, %v5619
  %v5622 = vunpack.c.l.s4 1966171168
  %v5623 = vunpack.c.0.s8 %v5622
  %v5624 = vlaneseq
  %v5625 = vshrl.u32 %v5624, 7
  %v5626 = vsub.s32 %v5623, %v5625
  %v5627 = vrot.slane %v4426, %v5626
  %v5629 = vunpack.c.l.s4 1966171168
  %v5630 = vunpack.c.0.s8 %v5629
  %v5631 = vlaneseq
  %v5632 = vshrl.u32 %v5631, 7
  %v5633 = vsub.s32 %v5630, %v5632
  %v5634 = vrot.slane %v5627, %v5633
  %v5636 = vunpack.c.l.s4 1966171168
  %v5637 = vunpack.c.0.s8 %v5636
  %v5638 = vlaneseq
  %v5639 = vshrl.u32 %v5638, 7
  %v5640 = vsub.s32 %v5637, %v5639
  %v5641 = vrot.slane %v4434, %v5640
  %v5643 = vunpack.c.l.s4 1966171168
  %v5644 = vunpack.c.0.s8 %v5643
  %v5645 = vlaneseq
  %v5646 = vshrl.u32 %v5645, 7
  %v5647 = vsub.s32 %v5644, %v5646
  %v5648 = vrot.slane %v5641, %v5647
  %v5650 = vunpack.c.l.s4 1966171168
  %v5651 = vunpack.c.0.s8 %v5650
  %v5652 = vlaneseq
  %v5653 = vshrl.u32 %v5652, 7
  %v5654 = vsub.s32 %v5651, %v5653
  %v5655 = vrot.slane %v4461, %v5654
  %v5657 = vunpack.c.l.s4 1966171168
  %v5658 = vunpack.c.0.s8 %v5657
  %v5659 = vlaneseq
  %v5660 = vshrl.u32 %v5659, 7
  %v5661 = vsub.s32 %v5658, %v5660
  %v5662 = vrot.slane %v5655, %v5661
  %v5664 = vunpack.c.l.s4 1966171168
  %v5665 = vunpack.c.0.s8 %v5664
  %v5666 = vlaneseq
  %v5667 = vshrl.u32 %v5666, 7
  %v5668 = vsub.s32 %v5665, %v5667
  %v5669 = vrot.slane %v4475, %v5668
  %v5671 = vunpack.c.l.s4 1966171168
  %v5672 = vunpack.c.0.s8 %v5671
  %v5673 = vlaneseq
  %v5674 = vshrl.u32 %v5673, 7
  %v5675 = vsub.s32 %v5672, %v5674
  %v5676 = vrot.slane %v5669, %v5675
  %v5678 = vunpack.c.l.s4 1966171168
  %v5679 = vunpack.c.0.s8 %v5678
  %v5680 = vlaneseq
  %v5681 = vshrl.u32 %v5680, 7
  %v5682 = vsub.s32 %v5679, %v5681
  %v5683 = vrot.slane %v4483, %v5682
  %v5685 = vunpack.c.l.s4 1966171168
  %v5686 = vunpack.c.0.s8 %v5685
  %v5687 = vlaneseq
  %v5688 = vshrl.u32 %v5687, 7
  %v5689 = vsub.s32 %v5686, %v5688
  %v5690 = vrot.slane %v5683, %v5689
  %v5692 = vunpack.c.l.s4 1966171168
  %v5693 = vunpack.c.0.s8 %v5692
  %v5694 = vlaneseq
  %v5695 = vshrl.u32 %v5694, 7
  %v5696 = vsub.s32 %v5693, %v5695
  %v5697 = vrot.slane %v4510, %v5696
  %v5699 = vunpack.c.l.s4 1966171168
  %v5700 = vunpack.c.0.s8 %v5699
  %v5701 = vlaneseq
  %v5702 = vshrl.u32 %v5701, 7
  %v5703 = vsub.s32 %v5700, %v5702
  %v5704 = vrot.slane %v5697, %v5703
  %v5706 = vunpack.c.l.s4 1966171168
  %v5707 = vunpack.c.0.s8 %v5706
  %v5708 = vlaneseq
  %v5709 = vshrl.u32 %v5708, 7
  %v5710 = vsub.s32 %v5707, %v5709
  %v5711 = vrot.slane %v4524, %v5710
  %v5713 = vunpack.c.l.s4 1966171168
  %v5714 = vunpack.c.0.s8 %v5713
  %v5715 = vlaneseq
  %v5716 = vshrl.u32 %v5715, 7
  %v5717 = vsub.s32 %v5714, %v5716
  %v5718 = vrot.slane %v5711, %v5717
  %v5720 = vunpack.c.l.s4 1966171168
  %v5721 = vunpack.c.0.s8 %v5720
  %v5722 = vlaneseq
  %v5723 = vshrl.u32 %v5722, 7
  %v5724 = vsub.s32 %v5721, %v5723
  %v5725 = vrot.slane %v4532, %v5724
  %v5727 = vunpack.c.l.s4 1966171168
  %v5728 = vunpack.c.0.s8 %v5727
  %v5729 = vlaneseq
  %v5730 = vshrl.u32 %v5729, 7
  %v5731 = vsub.s32 %v5728, %v5730
  %v5732 = vrot.slane %v5725, %v5731
  %v5734 = vunpack.c.l.s4 1966171168
  %v5735 = vunpack.c.0.s8 %v5734
  %v5736 = vlaneseq
  %v5737 = vshrl.u32 %v5736, 7
  %v5738 = vsub.s32 %v5735, %v5737
  %v5739 = vrot.slane %v4608, %v5738
  %v5741 = vunpack.c.l.s4 1966171168
  %v5742 = vunpack.c.0.s8 %v5741
  %v5743 = vlaneseq
  %v5744 = vshrl.u32 %v5743, 7
  %v5745 = vsub.s32 %v5742, %v5744
  %v5746 = vrot.slane %v5739, %v5745
  %v5748 = vunpack.c.l.s4 1966171168
  %v5749 = vunpack.c.0.s8 %v5748
  %v5750 = vlaneseq
  %v5751 = vshrl.u32 %v5750, 7
  %v5752 = vsub.s32 %v5749, %v5751
  %v5753 = vrot.slane %v4622, %v5752
  %v5755 = vunpack.c.l.s4 1966171168
  %v5756 = vunpack.c.0.s8 %v5755
  %v5757 = vlaneseq
  %v5758 = vshrl.u32 %v5757, 7
  %v5759 = vsub.s32 %v5756, %v5758
  %v5760 = vrot.slane %v5753, %v5759
  %v5762 = vunpack.c.l.s4 1966171168
  %v5763 = vunpack.c.0.s8 %v5762
  %v5764 = vlaneseq
  %v5765 = vshrl.u32 %v5764, 7
  %v5766 = vsub.s32 %v5763, %v5765
  %v5767 = vrot.slane %v4630, %v5766
  %v5769 = vunpack.c.l.s4 1966171168
  %v5770 = vunpack.c.0.s8 %v5769
  %v5771 = vlaneseq
  %v5772 = vshrl.u32 %v5771, 7
  %v5773 = vsub.s32 %v5770, %v5772
  %v5774 = vrot.slane %v5767, %v5773
  %v5776 = vunpack.c.l.s4 1966171168
  %v5777 = vunpack.c.0.s8 %v5776
  %v5778 = vlaneseq
  %v5779 = vshrl.u32 %v5778, 7
  %v5780 = vsub.s32 %v5777, %v5779
  %v5781 = vrot.slane %v4657, %v5780
  %v5783 = vunpack.c.l.s4 1966171168
  %v5784 = vunpack.c.0.s8 %v5783
  %v5785 = vlaneseq
  %v5786 = vshrl.u32 %v5785, 7
  %v5787 = vsub.s32 %v5784, %v5786
  %v5788 = vrot.slane %v5781, %v5787
  %v5790 = vunpack.c.l.s4 1966171168
  %v5791 = vunpack.c.0.s8 %v5790
  %v5792 = vlaneseq
  %v5793 = vshrl.u32 %v5792, 7
  %v5794 = vsub.s32 %v5791, %v5793
  %v5795 = vrot.slane %v4671, %v5794
  %v5797 = vunpack.c.l.s4 1966171168
  %v5798 = vunpack.c.0.s8 %v5797
  %v5799 = vlaneseq
  %v5800 = vshrl.u32 %v5799, 7
  %v5801 = vsub.s32 %v5798, %v5800
  %v5802 = vrot.slane %v5795, %v5801
  %v5804 = vunpack.c.l.s4 1966171168
  %v5805 = vunpack.c.0.s8 %v5804
  %v5806 = vlaneseq
  %v5807 = vshrl.u32 %v5806, 7
  %v5808 = vsub.s32 %v5805, %v5807
  %v5809 = vrot.slane %v4679, %v5808
  %v5811 = vunpack.c.l.s4 1966171168
  %v5812 = vunpack.c.0.s8 %v5811
  %v5813 = vlaneseq
  %v5814 = vshrl.u32 %v5813, 7
  %v5815 = vsub.s32 %v5812, %v5814
  %v5816 = vrot.slane %v5809, %v5815
  %v5818 = vunpack.c.l.s4 1966171168
  %v5819 = vunpack.c.0.s8 %v5818
  %v5820 = vlaneseq
  %v5821 = vshrl.u32 %v5820, 7
  %v5822 = vsub.s32 %v5819, %v5821
  %v5823 = vrot.slane %v4706, %v5822
  %v5825 = vunpack.c.l.s4 1966171168
  %v5826 = vunpack.c.0.s8 %v5825
  %v5827 = vlaneseq
  %v5828 = vshrl.u32 %v5827, 7
  %v5829 = vsub.s32 %v5826, %v5828
  %v5830 = vrot.slane %v5823, %v5829
  %v5832 = vunpack.c.l.s4 1966171168
  %v5833 = vunpack.c.0.s8 %v5832
  %v5834 = vlaneseq
  %v5835 = vshrl.u32 %v5834, 7
  %v5836 = vsub.s32 %v5833, %v5835
  %v5837 = vrot.slane %v4720, %v5836
  %v5839 = vunpack.c.l.s4 1966171168
  %v5840 = vunpack.c.0.s8 %v5839
  %v5841 = vlaneseq
  %v5842 = vshrl.u32 %v5841, 7
  %v5843 = vsub.s32 %v5840, %v5842
  %v5844 = vrot.slane %v5837, %v5843
  %v5846 = vunpack.c.l.s4 1966171168
  %v5847 = vunpack.c.0.s8 %v5846
  %v5848 = vlaneseq
  %v5849 = vshrl.u32 %v5848, 7
  %v5850 = vsub.s32 %v5847, %v5849
  %v5851 = vrot.slane %v4728, %v5850
  %v5853 = vunpack.c.l.s4 1966171168
  %v5854 = vunpack.c.0.s8 %v5853
  %v5855 = vlaneseq
  %v5856 = vshrl.u32 %v5855, 7
  %v5857 = vsub.s32 %v5854, %v5856
  %v5858 = vrot.slane %v5851, %v5857
  %v5860 = vunpack.c.l.s4 1966171168
  %v5861 = vunpack.c.0.s8 %v5860
  %v5862 = vlaneseq
  %v5863 = vshrl.u32 %v5862, 7
  %v5864 = vsub.s32 %v5861, %v5863
  %v5865 = vrot.slane %v4804, %v5864
  %v5867 = vunpack.c.l.s4 1966171168
  %v5868 = vunpack.c.0.s8 %v5867
  %v5869 = vlaneseq
  %v5870 = vshrl.u32 %v5869, 7
  %v5871 = vsub.s32 %v5868, %v5870
  %v5872 = vrot.slane %v5865, %v5871
  %v5874 = vunpack.c.l.s4 1966171168
  %v5875 = vunpack.c.0.s8 %v5874
  %v5876 = vlaneseq
  %v5877 = vshrl.u32 %v5876, 7
  %v5878 = vsub.s32 %v5875, %v5877
  %v5879 = vrot.slane %v4818, %v5878
  %v5881 = vunpack.c.l.s4 1966171168
  %v5882 = vunpack.c.0.s8 %v5881
  %v5883 = vlaneseq
  %v5884 = vshrl.u32 %v5883, 7
  %v5885 = vsub.s32 %v5882, %v5884
  %v5886 = vrot.slane %v5879, %v5885
  %v5888 = vunpack.c.l.s4 1966171168
  %v5889 = vunpack.c.0.s8 %v5888
  %v5890 = vlaneseq
  %v5891 = vshrl.u32 %v5890, 7
  %v5892 = vsub.s32 %v5889, %v5891
  %v5893 = vrot.slane %v4826, %v5892
  %v5895 = vunpack.c.l.s4 1966171168
  %v5896 = vunpack.c.0.s8 %v5895
  %v5897 = vlaneseq
  %v5898 = vshrl.u32 %v5897, 7
  %v5899 = vsub.s32 %v5896, %v5898
  %v5900 = vrot.slane %v5893, %v5899
  %v5902 = vunpack.c.l.s4 1966171168
  %v5903 = vunpack.c.0.s8 %v5902
  %v5904 = vlaneseq
  %v5905 = vshrl.u32 %v5904, 7
  %v5906 = vsub.s32 %v5903, %v5905
  %v5907 = vrot.slane %v4853, %v5906
  %v5909 = vunpack.c.l.s4 1966171168
  %v5910 = vunpack.c.0.s8 %v5909
  %v5911 = vlaneseq
  %v5912 = vshrl.u32 %v5911, 7
  %v5913 = vsub.s32 %v5910, %v5912
  %v5914 = vrot.slane %v5907, %v5913
  %v5916 = vunpack.c.l.s4 1966171168
  %v5917 = vunpack.c.0.s8 %v5916
  %v5918 = vlaneseq
  %v5919 = vshrl.u32 %v5918, 7
  %v5920 = vsub.s32 %v5917, %v5919
  %v5921 = vrot.slane %v4867, %v5920
  %v5923 = vunpack.c.l.s4 1966171168
  %v5924 = vunpack.c.0.s8 %v5923
  %v5925 = vlaneseq
  %v5926 = vshrl.u32 %v5925, 7
  %v5927 = vsub.s32 %v5924, %v5926
  %v5928 = vrot.slane %v5921, %v5927
  %v5930 = vunpack.c.l.s4 1966171168
  %v5931 = vunpack.c.0.s8 %v5930
  %v5932 = vlaneseq
  %v5933 = vshrl.u32 %v5932, 7
  %v5934 = vsub.s32 %v5931, %v5933
  %v5935 = vrot.slane %v4875, %v5934
  %v5937 = vunpack.c.l.s4 1966171168
  %v5938 = vunpack.c.0.s8 %v5937
  %v5939 = vlaneseq
  %v5940 = vshrl.u32 %v5939, 7
  %v5941 = vsub.s32 %v5938, %v5940
  %v5942 = vrot.slane %v5935, %v5941
  %v5944 = vunpack.c.l.s4 1966171168
  %v5945 = vunpack.c.0.s8 %v5944
  %v5946 = vlaneseq
  %v5947 = vshrl.u32 %v5946, 7
  %v5948 = vsub.s32 %v5945, %v5947
  %v5949 = vrot.slane %v4902, %v5948
  %v5951 = vunpack.c.l.s4 1966171168
  %v5952 = vunpack.c.0.s8 %v5951
  %v5953 = vlaneseq
  %v5954 = vshrl.u32 %v5953, 7
  %v5955 = vsub.s32 %v5952, %v5954
  %v5956 = vrot.slane %v5949, %v5955
  %v5958 = vunpack.c.l.s4 1966171168
  %v5959 = vunpack.c.0.s8 %v5958
  %v5960 = vlaneseq
  %v5961 = vshrl.u32 %v5960, 7
  %v5962 = vsub.s32 %v5959, %v5961
  %v5963 = vrot.slane %v4916, %v5962
  %v5965 = vunpack.c.l.s4 1966171168
  %v5966 = vunpack.c.0.s8 %v5965
  %v5967 = vlaneseq
  %v5968 = vshrl.u32 %v5967, 7
  %v5969 = vsub.s32 %v5966, %v5968
  %v5970 = vrot.slane %v5963, %v5969
  %v5972 = vunpack.c.l.s4 1966171168
  %v5973 = vunpack.c.0.s8 %v5972
  %v5974 = vlaneseq
  %v5975 = vshrl.u32 %v5974, 7
  %v5976 = vsub.s32 %v5973, %v5975
  %v5977 = vrot.slane %v4924, %v5976
  %v5979 = vunpack.c.l.s4 1966171168
  %v5980 = vunpack.c.0.s8 %v5979
  %v5981 = vlaneseq
  %v5982 = vshrl.u32 %v5981, 7
  %v5983 = vsub.s32 %v5980, %v5982
  %v5984 = vrot.slane %v5977, %v5983
  %v5985 = vunpack.c.l.b16 %v4990
  %v5986 = vunpack.c.l.b16 %v5004
  %v5987 = vunpack.c.l.b16 %v5018
  %v5988 = vunpack.c.l.b16 %v5032
  %v5989 = vunpack.c.l.b16 %v5046
  %v5990 = vunpack.c.l.b16 %v5060
  %v5991 = vunpack.c.l.b16 %v5074
  %v5992 = vunpack.c.l.b16 %v5088
  %v5993 = vunpack.c.l.b16 %v5102
  %v5994 = vunpack.c.l.b16 %v5116
  %v5995 = vunpack.c.l.b16 %v5130
  %v5996 = vunpack.c.l.b16 %v5144
  %v5997 = vunpack.c.l.b16 %v5158
  %v5998 = vunpack.c.l.b16 %v5172
  %v5999 = vunpack.c.l.b16 %v5186
  %v6000 = vunpack.c.l.b16 %v5200
  %v6001 = vunpack.c.l.b16 %v5214
  %v6002 = vunpack.c.l.b16 %v5228
  %v6003 = vunpack.c.l.b16 %v5242
  %v6004 = vunpack.c.l.b16 %v5256
  %v6005 = vunpack.c.l.b16 %v5270
  %v6006 = vunpack.c.l.b16 %v5284
  %v6007 = vunpack.c.l.b16 %v5298
  %v6008 = vunpack.c.l.b16 %v5312
  %v6009 = vunpack.c.l.b16 %v5326
  %v6010 = vunpack.c.l.b16 %v5340
  %v6011 = vunpack.c.l.b16 %v5354
  %v6012 = vunpack.c.l.b16 %v5368
  %v6013 = vunpack.c.l.b16 %v5382
  %v6014 = vunpack.c.l.b16 %v5396
  %v6015 = vunpack.c.l.b16 %v5410
  %v6016 = vunpack.c.l.b16 %v5424
  %v6017 = vunpack.c.l.b16 %v5438
  %v6018 = vunpack.c.l.b16 %v5452
  %v6019 = vunpack.c.l.b16 %v5466
  %v6020 = vunpack.c.l.b16 %v5480
  %v6021 = vunpack.c.l.b16 %v5494
  %v6022 = vunpack.c.l.b16 %v5508
  %v6023 = vunpack.c.l.b16 %v5522
  %v6024 = vunpack.c.l.b16 %v5536
  %v6025 = vunpack.c.l.b16 %v5550
  %v6026 = vunpack.c.l.b16 %v5564
  %v6027 = vunpack.c.l.b16 %v5578
  %v6028 = vunpack.c.l.b16 %v5592
  %v6029 = vunpack.c.l.b16 %v5606
  %v6030 = vunpack.c.l.b16 %v5620
  %v6031 = vunpack.c.l.b16 %v5634
  %v6032 = vunpack.c.l.b16 %v5648
  %v6033 = vunpack.c.l.b16 %v5662
  %v6034 = vunpack.c.l.b16 %v5676
  %v6035 = vunpack.c.l.b16 %v5690
  %v6036 = vunpack.c.l.b16 %v5704
  %v6037 = vunpack.c.l.b16 %v5718
  %v6038 = vunpack.c.l.b16 %v5732
  %v6039 = vunpack.c.l.b16 %v5746
  %v6040 = vunpack.c.l.b16 %v5760
  %v6041 = vunpack.c.l.b16 %v5774
  %v6042 = vunpack.c.l.b16 %v5788
  %v6043 = vunpack.c.l.b16 %v5802
  %v6044 = vunpack.c.l.b16 %v5816
  %v6045 = vunpack.c.l.b16 %v5830
  %v6046 = vunpack.c.l.b16 %v5844
  %v6047 = vunpack.c.l.b16 %v5858
  %v6048 = vunpack.c.l.b16 %v5872
  %v6049 = vunpack.c.l.b16 %v5886
  %v6050 = vunpack.c.l.b16 %v5900
  %v6051 = vunpack.c.l.b16 %v5914
  %v6052 = vunpack.c.l.b16 %v5928
  %v6053 = vunpack.c.l.b16 %v5942
  %v6054 = vunpack.c.l.b16 %v5956
  %v6055 = vunpack.c.l.b16 %v5970
  %v6056 = vunpack.c.l.b16 %v5984
  %v6057 = vrot.slane %v5986, 7
  %vm6058 = vcmask 1041409
  %v6059 = vsel %vm6058, %v6057, %v5985
  %v6060 = vrot.slane %v5987, 6
  %vm6061 = vcmask 1042434
  %v6062 = vsel %vm6061, %v6060, %v6059
  %v6063 = vrot.slane %v5989, 7
  %v6064 = vsel %vm6058, %v6063, %v5988
  %v6065 = vrot.slane %v5990, 6
  %v6066 = vsel %vm6061, %v6065, %v6064
  %v6067 = vrot.slane %v5992, 7
  %v6068 = vsel %vm6058, %v6067, %v5991
  %v6069 = vrot.slane %v5993, 6
  %v6070 = vsel %vm6061, %v6069, %v6068
  %v6071 = vrot.slane %v5995, 7
  %v6072 = vsel %vm6058, %v6071, %v5994
  %v6073 = vrot.slane %v5996, 6
  %v6074 = vsel %vm6061, %v6073, %v6072
  %v6075 = vrot.slane %v5998, 7
  %v6076 = vsel %vm6058, %v6075, %v5997
  %v6077 = vrot.slane %v5999, 6
  %v6078 = vsel %vm6061, %v6077, %v6076
  %v6079 = vrot.slane %v6001, 7
  %v6080 = vsel %vm6058, %v6079, %v6000
  %v6081 = vrot.slane %v6002, 6
  %v6082 = vsel %vm6061, %v6081, %v6080
  %v6083 = vrot.slane %v6004, 7
  %v6084 = vsel %vm6058, %v6083, %v6003
  %v6085 = vrot.slane %v6005, 6
  %v6086 = vsel %vm6061, %v6085, %v6084
  %v6087 = vrot.slane %v6007, 7
  %v6088 = vsel %vm6058, %v6087, %v6006
  %v6089 = vrot.slane %v6008, 6
  %v6090 = vsel %vm6061, %v6089, %v6088
  %v6091 = vrot.slane %v6010, 7
  %v6092 = vsel %vm6058, %v6091, %v6009
  %v6093 = vrot.slane %v6011, 6
  %v6094 = vsel %vm6061, %v6093, %v6092
  %v6095 = vrot.slane %v6013, 7
  %v6096 = vsel %vm6058, %v6095, %v6012
  %v6097 = vrot.slane %v6014, 6
  %v6098 = vsel %vm6061, %v6097, %v6096
  %v6099 = vrot.slane %v6016, 7
  %v6100 = vsel %vm6058, %v6099, %v6015
  %v6101 = vrot.slane %v6017, 6
  %v6102 = vsel %vm6061, %v6101, %v6100
  %v6103 = vrot.slane %v6019, 7
  %v6104 = vsel %vm6058, %v6103, %v6018
  %v6105 = vrot.slane %v6020, 6
  %v6106 = vsel %vm6061, %v6105, %v6104
  %v6107 = vrot.slane %v6022, 7
  %v6108 = vsel %vm6058, %v6107, %v6021
  %v6109 = vrot.slane %v6023, 6
  %v6110 = vsel %vm6061, %v6109, %v6108
  %v6111 = vrot.slane %v6025, 7
  %v6112 = vsel %vm6058, %v6111, %v6024
  %v6113 = vrot.slane %v6026, 6
  %v6114 = vsel %vm6061, %v6113, %v6112
  %v6115 = vrot.slane %v6028, 7
  %v6116 = vsel %vm6058, %v6115, %v6027
  %v6117 = vrot.slane %v6029, 6
  %v6118 = vsel %vm6061, %v6117, %v6116
  %v6119 = vrot.slane %v6031, 7
  %v6120 = vsel %vm6058, %v6119, %v6030
  %v6121 = vrot.slane %v6032, 6
  %v6122 = vsel %vm6061, %v6121, %v6120
  %v6123 = vrot.slane %v6034, 7
  %v6124 = vsel %vm6058, %v6123, %v6033
  %v6125 = vrot.slane %v6035, 6
  %v6126 = vsel %vm6061, %v6125, %v6124
  %v6127 = vrot.slane %v6037, 7
  %v6128 = vsel %vm6058, %v6127, %v6036
  %v6129 = vrot.slane %v6038, 6
  %v6130 = vsel %vm6061, %v6129, %v6128
  %v6131 = vrot.slane %v6040, 7
  %v6132 = vsel %vm6058, %v6131, %v6039
  %v6133 = vrot.slane %v6041, 6
  %v6134 = vsel %vm6061, %v6133, %v6132
  %v6135 = vrot.slane %v6043, 7
  %v6136 = vsel %vm6058, %v6135, %v6042
  %v6137 = vrot.slane %v6044, 6
  %v6138 = vsel %vm6061, %v6137, %v6136
  %v6139 = vrot.slane %v6046, 7
  %v6140 = vsel %vm6058, %v6139, %v6045
  %v6141 = vrot.slane %v6047, 6
  %v6142 = vsel %vm6061, %v6141, %v6140
  %v6143 = vrot.slane %v6049, 7
  %v6144 = vsel %vm6058, %v6143, %v6048
  %v6145 = vrot.slane %v6050, 6
  %v6146 = vsel %vm6061, %v6145, %v6144
  %v6147 = vrot.slane %v6052, 7
  %v6148 = vsel %vm6058, %v6147, %v6051
  %v6149 = vrot.slane %v6053, 6
  %v6150 = vsel %vm6061, %v6149, %v6148
  %v6151 = vrot.slane %v6055, 7
  %v6152 = vsel %vm6058, %v6151, %v6054
  %v6153 = vrot.slane %v6056, 6
  %v6154 = vsel %vm6061, %v6153, %v6152
  %v6155 = vpack.c.b16 %v6062, %v6062
  %v6156 = vpack.c.b16 %v6066, %v6066
  %v6157 = vpack.c.b16 %v6070, %v6070
  %v6158 = vpack.c.b16 %v6074, %v6074
  %v6159 = vpack.c.b16 %v6078, %v6078
  %v6160 = vpack.c.b16 %v6082, %v6082
  %v6161 = vpack.c.b16 %v6086, %v6086
  %v6162 = vpack.c.b16 %v6090, %v6090
  %v6163 = vpack.c.b16 %v6094, %v6094
  %v6164 = vpack.c.b16 %v6098, %v6098
  %v6165 = vpack.c.b16 %v6102, %v6102
  %v6166 = vpack.c.b16 %v6106, %v6106
  %v6167 = vpack.c.b16 %v6110, %v6110
  %v6168 = vpack.c.b16 %v6114, %v6114
  %v6169 = vpack.c.b16 %v6118, %v6118
  %v6170 = vpack.c.b16 %v6122, %v6122
  %v6171 = vpack.c.b16 %v6126, %v6126
  %v6172 = vpack.c.b16 %v6130, %v6130
  %v6173 = vpack.c.b16 %v6134, %v6134
  %v6174 = vpack.c.b16 %v6138, %v6138
  %v6175 = vpack.c.b16 %v6142, %v6142
  %v6176 = vpack.c.b16 %v6146, %v6146
  %v6177 = vpack.c.b16 %v6150, %v6150
  %v6178 = vpack.c.b16 %v6154, %v6154
  %v6179 = vrot.slane %v5985, 1
  %v6180 = vsel %vm6058, %v5986, %v6179
  %v6181 = vrot.slane %v5987, 7
  %v6182 = vsel %vm6061, %v6181, %v6180
  %v6183 = vrot.slane %v5988, 1
  %v6184 = vsel %vm6058, %v5989, %v6183
  %v6185 = vrot.slane %v5990, 7
  %v6186 = vsel %vm6061, %v6185, %v6184
  %v6187 = vrot.slane %v5991, 1
  %v6188 = vsel %vm6058, %v5992, %v6187
  %v6189 = vrot.slane %v5993, 7
  %v6190 = vsel %vm6061, %v6189, %v6188
  %v6191 = vrot.slane %v5994, 1
  %v6192 = vsel %vm6058, %v5995, %v6191
  %v6193 = vrot.slane %v5996, 7
  %v6194 = vsel %vm6061, %v6193, %v6192
  %v6195 = vrot.slane %v5997, 1
  %v6196 = vsel %vm6058, %v5998, %v6195
  %v6197 = vrot.slane %v5999, 7
  %v6198 = vsel %vm6061, %v6197, %v6196
  %v6199 = vrot.slane %v6000, 1
  %v6200 = vsel %vm6058, %v6001, %v6199
  %v6201 = vrot.slane %v6002, 7
  %v6202 = vsel %vm6061, %v6201, %v6200
  %v6203 = vrot.slane %v6003, 1
  %v6204 = vsel %vm6058, %v6004, %v6203
  %v6205 = vrot.slane %v6005, 7
  %v6206 = vsel %vm6061, %v6205, %v6204
  %v6207 = vrot.slane %v6006, 1
  %v6208 = vsel %vm6058, %v6007, %v6207
  %v6209 = vrot.slane %v6008, 7
  %v6210 = vsel %vm6061, %v6209, %v6208
  %v6211 = vrot.slane %v6009, 1
  %v6212 = vsel %vm6058, %v6010, %v6211
  %v6213 = vrot.slane %v6011, 7
  %v6214 = vsel %vm6061, %v6213, %v6212
  %v6215 = vrot.slane %v6012, 1
  %v6216 = vsel %vm6058, %v6013, %v6215
  %v6217 = vrot.slane %v6014, 7
  %v6218 = vsel %vm6061, %v6217, %v6216
  %v6219 = vrot.slane %v6015, 1
  %v6220 = vsel %vm6058, %v6016, %v6219
  %v6221 = vrot.slane %v6017, 7
  %v6222 = vsel %vm6061, %v6221, %v6220
  %v6223 = vrot.slane %v6018, 1
  %v6224 = vsel %vm6058, %v6019, %v6223
  %v6225 = vrot.slane %v6020, 7
  %v6226 = vsel %vm6061, %v6225, %v6224
  %v6227 = vrot.slane %v6021, 1
  %v6228 = vsel %vm6058, %v6022, %v6227
  %v6229 = vrot.slane %v6023, 7
  %v6230 = vsel %vm6061, %v6229, %v6228
  %v6231 = vrot.slane %v6024, 1
  %v6232 = vsel %vm6058, %v6025, %v6231
  %v6233 = vrot.slane %v6026, 7
  %v6234 = vsel %vm6061, %v6233, %v6232
  %v6235 = vrot.slane %v6027, 1
  %v6236 = vsel %vm6058, %v6028, %v6235
  %v6237 = vrot.slane %v6029, 7
  %v6238 = vsel %vm6061, %v6237, %v6236
  %v6239 = vrot.slane %v6030, 1
  %v6240 = vsel %vm6058, %v6031, %v6239
  %v6241 = vrot.slane %v6032, 7
  %v6242 = vsel %vm6061, %v6241, %v6240
  %v6243 = vrot.slane %v6033, 1
  %v6244 = vsel %vm6058, %v6034, %v6243
  %v6245 = vrot.slane %v6035, 7
  %v6246 = vsel %vm6061, %v6245, %v6244
  %v6247 = vrot.slane %v6036, 1
  %v6248 = vsel %vm6058, %v6037, %v6247
  %v6249 = vrot.slane %v6038, 7
  %v6250 = vsel %vm6061, %v6249, %v6248
  %v6251 = vrot.slane %v6039, 1
  %v6252 = vsel %vm6058, %v6040, %v6251
  %v6253 = vrot.slane %v6041, 7
  %v6254 = vsel %vm6061, %v6253, %v6252
  %v6255 = vrot.slane %v6042, 1
  %v6256 = vsel %vm6058, %v6043, %v6255
  %v6257 = vrot.slane %v6044, 7
  %v6258 = vsel %vm6061, %v6257, %v6256
  %v6259 = vrot.slane %v6045, 1
  %v6260 = vsel %vm6058, %v6046, %v6259
  %v6261 = vrot.slane %v6047, 7
  %v6262 = vsel %vm6061, %v6261, %v6260
  %v6263 = vrot.slane %v6048, 1
  %v6264 = vsel %vm6058, %v6049, %v6263
  %v6265 = vrot.slane %v6050, 7
  %v6266 = vsel %vm6061, %v6265, %v6264
  %v6267 = vrot.slane %v6051, 1
  %v6268 = vsel %vm6058, %v6052, %v6267
  %v6269 = vrot.slane %v6053, 7
  %v6270 = vsel %vm6061, %v6269, %v6268
  %v6271 = vrot.slane %v6054, 1
  %v6272 = vsel %vm6058, %v6055, %v6271
  %v6273 = vrot.slane %v6056, 7
  %v6274 = vsel %vm6061, %v6273, %v6272
  %v6275 = vpack.c.b16 %v6182, %v6182
  %v6276 = vpack.c.b16 %v6186, %v6186
  %v6277 = vpack.c.b16 %v6190, %v6190
  %v6278 = vpack.c.b16 %v6194, %v6194
  %v6279 = vpack.c.b16 %v6198, %v6198
  %v6280 = vpack.c.b16 %v6202, %v6202
  %v6281 = vpack.c.b16 %v6206, %v6206
  %v6282 = vpack.c.b16 %v6210, %v6210
  %v6283 = vpack.c.b16 %v6214, %v6214
  %v6284 = vpack.c.b16 %v6218, %v6218
  %v6285 = vpack.c.b16 %v6222, %v6222
  %v6286 = vpack.c.b16 %v6226, %v6226
  %v6287 = vpack.c.b16 %v6230, %v6230
  %v6288 = vpack.c.b16 %v6234, %v6234
  %v6289 = vpack.c.b16 %v6238, %v6238
  %v6290 = vpack.c.b16 %v6242, %v6242
  %v6291 = vpack.c.b16 %v6246, %v6246
  %v6292 = vpack.c.b16 %v6250, %v6250
  %v6293 = vpack.c.b16 %v6254, %v6254
  %v6294 = vpack.c.b16 %v6258, %v6258
  %v6295 = vpack.c.b16 %v6262, %v6262
  %v6296 = vpack.c.b16 %v6266, %v6266
  %v6297 = vpack.c.b16 %v6270, %v6270
  %v6298 = vpack.c.b16 %v6274, %v6274
  %6299 = vrot.lane.b32.xlu0 %v6275, 32
  %v6300 = vpop.permute.xlu0 %6299
  %6301 = vrot.lane.b32.xlu0 %v6276, 32
  %v6302 = vpop.permute.xlu0 %6301
  %6303 = vrot.lane.b32.xlu0 %v6277, 32
  %v6304 = vpop.permute.xlu0 %6303
  %6305 = vrot.lane.b32.xlu0 %v6278, 32
  %v6306 = vpop.permute.xlu0 %6305
  %6307 = vrot.lane.b32.xlu0 %v6279, 32
  %v6308 = vpop.permute.xlu0 %6307
  %6309 = vrot.lane.b32.xlu0 %v6280, 32
  %v6310 = vpop.permute.xlu0 %6309
  %6311 = vrot.lane.b32.xlu0 %v6281, 32
  %v6312 = vpop.permute.xlu0 %6311
  %6313 = vrot.lane.b32.xlu0 %v6282, 32
  %v6314 = vpop.permute.xlu0 %6313
  %6315 = vrot.lane.b32.xlu0 %v6283, 32
  %v6316 = vpop.permute.xlu0 %6315
  %6317 = vrot.lane.b32.xlu0 %v6284, 32
  %v6318 = vpop.permute.xlu0 %6317
  %6319 = vrot.lane.b32.xlu0 %v6285, 32
  %v6320 = vpop.permute.xlu0 %6319
  %6321 = vrot.lane.b32.xlu0 %v6286, 32
  %v6322 = vpop.permute.xlu0 %6321
  %6323 = vrot.lane.b32.xlu0 %v6287, 32
  %v6324 = vpop.permute.xlu0 %6323
  %6325 = vrot.lane.b32.xlu0 %v6288, 32
  %v6326 = vpop.permute.xlu0 %6325
  %6327 = vrot.lane.b32.xlu0 %v6289, 32
  %v6328 = vpop.permute.xlu0 %6327
  %6329 = vrot.lane.b32.xlu0 %v6290, 32
  %v6330 = vpop.permute.xlu0 %6329
  %6331 = vrot.lane.b32.xlu0 %v6291, 32
  %v6332 = vpop.permute.xlu0 %6331
  %6333 = vrot.lane.b32.xlu0 %v6292, 32
  %v6334 = vpop.permute.xlu0 %6333
  %6335 = vrot.lane.b32.xlu0 %v6293, 32
  %v6336 = vpop.permute.xlu0 %6335
  %6337 = vrot.lane.b32.xlu0 %v6294, 32
  %v6338 = vpop.permute.xlu0 %6337
  %6339 = vrot.lane.b32.xlu0 %v6295, 32
  %v6340 = vpop.permute.xlu0 %6339
  %6341 = vrot.lane.b32.xlu0 %v6296, 32
  %v6342 = vpop.permute.xlu0 %6341
  %6343 = vrot.lane.b32.xlu0 %v6297, 32
  %v6344 = vpop.permute.xlu0 %6343
  %6345 = vrot.lane.b32.xlu0 %v6298, 32
  %v6346 = vpop.permute.xlu0 %6345
  %v6348 = vunpack.c.l.s4 1966171168
  %v6349 = vunpack.c.0.s8 %v6348
  %v6350 = vlaneseq
  %v6351 = vshrl.u32 %v6350, 7
  %v6352 = vsub.s32 %v6349, %v6351
  %v6353 = vrot.slane %v3456, %v6352
  %v6355 = vunpack.c.l.s4 1966171168
  %v6356 = vunpack.c.0.s8 %v6355
  %v6357 = vlaneseq
  %v6358 = vshrl.u32 %v6357, 7
  %v6359 = vsub.s32 %v6356, %v6358
  %v6360 = vrot.slane %v6353, %v6359
  %v6362 = vunpack.c.l.s4 1966171168
  %v6363 = vunpack.c.0.s8 %v6362
  %v6364 = vlaneseq
  %v6365 = vshrl.u32 %v6364, 7
  %v6366 = vsub.s32 %v6363, %v6365
  %v6367 = vrot.slane %v3505, %v6366
  %v6369 = vunpack.c.l.s4 1966171168
  %v6370 = vunpack.c.0.s8 %v6369
  %v6371 = vlaneseq
  %v6372 = vshrl.u32 %v6371, 7
  %v6373 = vsub.s32 %v6370, %v6372
  %v6374 = vrot.slane %v6367, %v6373
  %v6376 = vunpack.c.l.s4 1966171168
  %v6377 = vunpack.c.0.s8 %v6376
  %v6378 = vlaneseq
  %v6379 = vshrl.u32 %v6378, 7
  %v6380 = vsub.s32 %v6377, %v6379
  %v6381 = vrot.slane %v3554, %v6380
  %v6383 = vunpack.c.l.s4 1966171168
  %v6384 = vunpack.c.0.s8 %v6383
  %v6385 = vlaneseq
  %v6386 = vshrl.u32 %v6385, 7
  %v6387 = vsub.s32 %v6384, %v6386
  %v6388 = vrot.slane %v6381, %v6387
  %v6390 = vunpack.c.l.s4 1966171168
  %v6391 = vunpack.c.0.s8 %v6390
  %v6392 = vlaneseq
  %v6393 = vshrl.u32 %v6392, 7
  %v6394 = vsub.s32 %v6391, %v6393
  %v6395 = vrot.slane %v3652, %v6394
  %v6397 = vunpack.c.l.s4 1966171168
  %v6398 = vunpack.c.0.s8 %v6397
  %v6399 = vlaneseq
  %v6400 = vshrl.u32 %v6399, 7
  %v6401 = vsub.s32 %v6398, %v6400
  %v6402 = vrot.slane %v6395, %v6401
  %v6404 = vunpack.c.l.s4 1966171168
  %v6405 = vunpack.c.0.s8 %v6404
  %v6406 = vlaneseq
  %v6407 = vshrl.u32 %v6406, 7
  %v6408 = vsub.s32 %v6405, %v6407
  %v6409 = vrot.slane %v3701, %v6408
  %v6411 = vunpack.c.l.s4 1966171168
  %v6412 = vunpack.c.0.s8 %v6411
  %v6413 = vlaneseq
  %v6414 = vshrl.u32 %v6413, 7
  %v6415 = vsub.s32 %v6412, %v6414
  %v6416 = vrot.slane %v6409, %v6415
  %v6418 = vunpack.c.l.s4 1966171168
  %v6419 = vunpack.c.0.s8 %v6418
  %v6420 = vlaneseq
  %v6421 = vshrl.u32 %v6420, 7
  %v6422 = vsub.s32 %v6419, %v6421
  %v6423 = vrot.slane %v3750, %v6422
  %v6425 = vunpack.c.l.s4 1966171168
  %v6426 = vunpack.c.0.s8 %v6425
  %v6427 = vlaneseq
  %v6428 = vshrl.u32 %v6427, 7
  %v6429 = vsub.s32 %v6426, %v6428
  %v6430 = vrot.slane %v6423, %v6429
  %v6432 = vunpack.c.l.s4 1966171168
  %v6433 = vunpack.c.0.s8 %v6432
  %v6434 = vlaneseq
  %v6435 = vshrl.u32 %v6434, 7
  %v6436 = vsub.s32 %v6433, %v6435
  %v6437 = vrot.slane %v3848, %v6436
  %v6439 = vunpack.c.l.s4 1966171168
  %v6440 = vunpack.c.0.s8 %v6439
  %v6441 = vlaneseq
  %v6442 = vshrl.u32 %v6441, 7
  %v6443 = vsub.s32 %v6440, %v6442
  %v6444 = vrot.slane %v6437, %v6443
  %v6446 = vunpack.c.l.s4 1966171168
  %v6447 = vunpack.c.0.s8 %v6446
  %v6448 = vlaneseq
  %v6449 = vshrl.u32 %v6448, 7
  %v6450 = vsub.s32 %v6447, %v6449
  %v6451 = vrot.slane %v3897, %v6450
  %v6453 = vunpack.c.l.s4 1966171168
  %v6454 = vunpack.c.0.s8 %v6453
  %v6455 = vlaneseq
  %v6456 = vshrl.u32 %v6455, 7
  %v6457 = vsub.s32 %v6454, %v6456
  %v6458 = vrot.slane %v6451, %v6457
  %v6460 = vunpack.c.l.s4 1966171168
  %v6461 = vunpack.c.0.s8 %v6460
  %v6462 = vlaneseq
  %v6463 = vshrl.u32 %v6462, 7
  %v6464 = vsub.s32 %v6461, %v6463
  %v6465 = vrot.slane %v3946, %v6464
  %v6467 = vunpack.c.l.s4 1966171168
  %v6468 = vunpack.c.0.s8 %v6467
  %v6469 = vlaneseq
  %v6470 = vshrl.u32 %v6469, 7
  %v6471 = vsub.s32 %v6468, %v6470
  %v6472 = vrot.slane %v6465, %v6471
  %v6474 = vunpack.c.l.s4 1966171168
  %v6475 = vunpack.c.0.s8 %v6474
  %v6476 = vlaneseq
  %v6477 = vshrl.u32 %v6476, 7
  %v6478 = vsub.s32 %v6475, %v6477
  %v6479 = vrot.slane %v4044, %v6478
  %v6481 = vunpack.c.l.s4 1966171168
  %v6482 = vunpack.c.0.s8 %v6481
  %v6483 = vlaneseq
  %v6484 = vshrl.u32 %v6483, 7
  %v6485 = vsub.s32 %v6482, %v6484
  %v6486 = vrot.slane %v6479, %v6485
  %v6488 = vunpack.c.l.s4 1966171168
  %v6489 = vunpack.c.0.s8 %v6488
  %v6490 = vlaneseq
  %v6491 = vshrl.u32 %v6490, 7
  %v6492 = vsub.s32 %v6489, %v6491
  %v6493 = vrot.slane %v4093, %v6492
  %v6495 = vunpack.c.l.s4 1966171168
  %v6496 = vunpack.c.0.s8 %v6495
  %v6497 = vlaneseq
  %v6498 = vshrl.u32 %v6497, 7
  %v6499 = vsub.s32 %v6496, %v6498
  %v6500 = vrot.slane %v6493, %v6499
  %v6502 = vunpack.c.l.s4 1966171168
  %v6503 = vunpack.c.0.s8 %v6502
  %v6504 = vlaneseq
  %v6505 = vshrl.u32 %v6504, 7
  %v6506 = vsub.s32 %v6503, %v6505
  %v6507 = vrot.slane %v4142, %v6506
  %v6509 = vunpack.c.l.s4 1966171168
  %v6510 = vunpack.c.0.s8 %v6509
  %v6511 = vlaneseq
  %v6512 = vshrl.u32 %v6511, 7
  %v6513 = vsub.s32 %v6510, %v6512
  %v6514 = vrot.slane %v6507, %v6513
  %v6516 = vunpack.c.l.s4 1966171168
  %v6517 = vunpack.c.0.s8 %v6516
  %v6518 = vlaneseq
  %v6519 = vshrl.u32 %v6518, 7
  %v6520 = vsub.s32 %v6517, %v6519
  %v6521 = vrot.slane %v4240, %v6520
  %v6523 = vunpack.c.l.s4 1966171168
  %v6524 = vunpack.c.0.s8 %v6523
  %v6525 = vlaneseq
  %v6526 = vshrl.u32 %v6525, 7
  %v6527 = vsub.s32 %v6524, %v6526
  %v6528 = vrot.slane %v6521, %v6527
  %v6530 = vunpack.c.l.s4 1966171168
  %v6531 = vunpack.c.0.s8 %v6530
  %v6532 = vlaneseq
  %v6533 = vshrl.u32 %v6532, 7
  %v6534 = vsub.s32 %v6531, %v6533
  %v6535 = vrot.slane %v4289, %v6534
  %v6537 = vunpack.c.l.s4 1966171168
  %v6538 = vunpack.c.0.s8 %v6537
  %v6539 = vlaneseq
  %v6540 = vshrl.u32 %v6539, 7
  %v6541 = vsub.s32 %v6538, %v6540
  %v6542 = vrot.slane %v6535, %v6541
  %v6544 = vunpack.c.l.s4 1966171168
  %v6545 = vunpack.c.0.s8 %v6544
  %v6546 = vlaneseq
  %v6547 = vshrl.u32 %v6546, 7
  %v6548 = vsub.s32 %v6545, %v6547
  %v6549 = vrot.slane %v4338, %v6548
  %v6551 = vunpack.c.l.s4 1966171168
  %v6552 = vunpack.c.0.s8 %v6551
  %v6553 = vlaneseq
  %v6554 = vshrl.u32 %v6553, 7
  %v6555 = vsub.s32 %v6552, %v6554
  %v6556 = vrot.slane %v6549, %v6555
  %v6558 = vunpack.c.l.s4 1966171168
  %v6559 = vunpack.c.0.s8 %v6558
  %v6560 = vlaneseq
  %v6561 = vshrl.u32 %v6560, 7
  %v6562 = vsub.s32 %v6559, %v6561
  %v6563 = vrot.slane %v4436, %v6562
  %v6565 = vunpack.c.l.s4 1966171168
  %v6566 = vunpack.c.0.s8 %v6565
  %v6567 = vlaneseq
  %v6568 = vshrl.u32 %v6567, 7
  %v6569 = vsub.s32 %v6566, %v6568
  %v6570 = vrot.slane %v6563, %v6569
  %v6572 = vunpack.c.l.s4 1966171168
  %v6573 = vunpack.c.0.s8 %v6572
  %v6574 = vlaneseq
  %v6575 = vshrl.u32 %v6574, 7
  %v6576 = vsub.s32 %v6573, %v6575
  %v6577 = vrot.slane %v4485, %v6576
  %v6579 = vunpack.c.l.s4 1966171168
  %v6580 = vunpack.c.0.s8 %v6579
  %v6581 = vlaneseq
  %v6582 = vshrl.u32 %v6581, 7
  %v6583 = vsub.s32 %v6580, %v6582
  %v6584 = vrot.slane %v6577, %v6583
  %v6586 = vunpack.c.l.s4 1966171168
  %v6587 = vunpack.c.0.s8 %v6586
  %v6588 = vlaneseq
  %v6589 = vshrl.u32 %v6588, 7
  %v6590 = vsub.s32 %v6587, %v6589
  %v6591 = vrot.slane %v4534, %v6590
  %v6593 = vunpack.c.l.s4 1966171168
  %v6594 = vunpack.c.0.s8 %v6593
  %v6595 = vlaneseq
  %v6596 = vshrl.u32 %v6595, 7
  %v6597 = vsub.s32 %v6594, %v6596
  %v6598 = vrot.slane %v6591, %v6597
  %v6600 = vunpack.c.l.s4 1966171168
  %v6601 = vunpack.c.0.s8 %v6600
  %v6602 = vlaneseq
  %v6603 = vshrl.u32 %v6602, 7
  %v6604 = vsub.s32 %v6601, %v6603
  %v6605 = vrot.slane %v4632, %v6604
  %v6607 = vunpack.c.l.s4 1966171168
  %v6608 = vunpack.c.0.s8 %v6607
  %v6609 = vlaneseq
  %v6610 = vshrl.u32 %v6609, 7
  %v6611 = vsub.s32 %v6608, %v6610
  %v6612 = vrot.slane %v6605, %v6611
  %v6614 = vunpack.c.l.s4 1966171168
  %v6615 = vunpack.c.0.s8 %v6614
  %v6616 = vlaneseq
  %v6617 = vshrl.u32 %v6616, 7
  %v6618 = vsub.s32 %v6615, %v6617
  %v6619 = vrot.slane %v4681, %v6618
  %v6621 = vunpack.c.l.s4 1966171168
  %v6622 = vunpack.c.0.s8 %v6621
  %v6623 = vlaneseq
  %v6624 = vshrl.u32 %v6623, 7
  %v6625 = vsub.s32 %v6622, %v6624
  %v6626 = vrot.slane %v6619, %v6625
  %v6628 = vunpack.c.l.s4 1966171168
  %v6629 = vunpack.c.0.s8 %v6628
  %v6630 = vlaneseq
  %v6631 = vshrl.u32 %v6630, 7
  %v6632 = vsub.s32 %v6629, %v6631
  %v6633 = vrot.slane %v4730, %v6632
  %v6635 = vunpack.c.l.s4 1966171168
  %v6636 = vunpack.c.0.s8 %v6635
  %v6637 = vlaneseq
  %v6638 = vshrl.u32 %v6637, 7
  %v6639 = vsub.s32 %v6636, %v6638
  %v6640 = vrot.slane %v6633, %v6639
  %v6642 = vunpack.c.l.s4 1966171168
  %v6643 = vunpack.c.0.s8 %v6642
  %v6644 = vlaneseq
  %v6645 = vshrl.u32 %v6644, 7
  %v6646 = vsub.s32 %v6643, %v6645
  %v6647 = vrot.slane %v4828, %v6646
  %v6649 = vunpack.c.l.s4 1966171168
  %v6650 = vunpack.c.0.s8 %v6649
  %v6651 = vlaneseq
  %v6652 = vshrl.u32 %v6651, 7
  %v6653 = vsub.s32 %v6650, %v6652
  %v6654 = vrot.slane %v6647, %v6653
  %v6656 = vunpack.c.l.s4 1966171168
  %v6657 = vunpack.c.0.s8 %v6656
  %v6658 = vlaneseq
  %v6659 = vshrl.u32 %v6658, 7
  %v6660 = vsub.s32 %v6657, %v6659
  %v6661 = vrot.slane %v4877, %v6660
  %v6663 = vunpack.c.l.s4 1966171168
  %v6664 = vunpack.c.0.s8 %v6663
  %v6665 = vlaneseq
  %v6666 = vshrl.u32 %v6665, 7
  %v6667 = vsub.s32 %v6664, %v6666
  %v6668 = vrot.slane %v6661, %v6667
  %v6670 = vunpack.c.l.s4 1966171168
  %v6671 = vunpack.c.0.s8 %v6670
  %v6672 = vlaneseq
  %v6673 = vshrl.u32 %v6672, 7
  %v6674 = vsub.s32 %v6671, %v6673
  %v6675 = vrot.slane %v4926, %v6674
  %v6677 = vunpack.c.l.s4 1966171168
  %v6678 = vunpack.c.0.s8 %v6677
  %v6679 = vlaneseq
  %v6680 = vshrl.u32 %v6679, 7
  %v6681 = vsub.s32 %v6678, %v6680
  %v6682 = vrot.slane %v6675, %v6681
  %v6683 = vunpack.c.l.b16 %v6360
  %v6684 = vunpack.c.l.b16 %v6374
  %v6685 = vunpack.c.l.b16 %v6388
  %v6686 = vunpack.c.l.b16 %v6402
  %v6687 = vunpack.c.l.b16 %v6416
  %v6688 = vunpack.c.l.b16 %v6430
  %v6689 = vunpack.c.l.b16 %v6444
  %v6690 = vunpack.c.l.b16 %v6458
  %v6691 = vunpack.c.l.b16 %v6472
  %v6692 = vunpack.c.l.b16 %v6486
  %v6693 = vunpack.c.l.b16 %v6500
  %v6694 = vunpack.c.l.b16 %v6514
  %v6695 = vunpack.c.l.b16 %v6528
  %v6696 = vunpack.c.l.b16 %v6542
  %v6697 = vunpack.c.l.b16 %v6556
  %v6698 = vunpack.c.l.b16 %v6570
  %v6699 = vunpack.c.l.b16 %v6584
  %v6700 = vunpack.c.l.b16 %v6598
  %v6701 = vunpack.c.l.b16 %v6612
  %v6702 = vunpack.c.l.b16 %v6626
  %v6703 = vunpack.c.l.b16 %v6640
  %v6704 = vunpack.c.l.b16 %v6654
  %v6705 = vunpack.c.l.b16 %v6668
  %v6706 = vunpack.c.l.b16 %v6682
  %v6707 = vsel %vm6058, %v6181, %v5986
  %v6708 = vrot.slane %v6683, 6
  %v6709 = vsel %vm6061, %v6708, %v6707
  %v6710 = vsel %vm6058, %v6185, %v5989
  %v6711 = vrot.slane %v6684, 6
  %v6712 = vsel %vm6061, %v6711, %v6710
  %v6713 = vsel %vm6058, %v6189, %v5992
  %v6714 = vrot.slane %v6685, 6
  %v6715 = vsel %vm6061, %v6714, %v6713
  %v6716 = vsel %vm6058, %v6193, %v5995
  %v6717 = vrot.slane %v6686, 6
  %v6718 = vsel %vm6061, %v6717, %v6716
  %v6719 = vsel %vm6058, %v6197, %v5998
  %v6720 = vrot.slane %v6687, 6
  %v6721 = vsel %vm6061, %v6720, %v6719
  %v6722 = vsel %vm6058, %v6201, %v6001
  %v6723 = vrot.slane %v6688, 6
  %v6724 = vsel %vm6061, %v6723, %v6722
  %v6725 = vsel %vm6058, %v6205, %v6004
  %v6726 = vrot.slane %v6689, 6
  %v6727 = vsel %vm6061, %v6726, %v6725
  %v6728 = vsel %vm6058, %v6209, %v6007
  %v6729 = vrot.slane %v6690, 6
  %v6730 = vsel %vm6061, %v6729, %v6728
  %v6731 = vsel %vm6058, %v6213, %v6010
  %v6732 = vrot.slane %v6691, 6
  %v6733 = vsel %vm6061, %v6732, %v6731
  %v6734 = vsel %vm6058, %v6217, %v6013
  %v6735 = vrot.slane %v6692, 6
  %v6736 = vsel %vm6061, %v6735, %v6734
  %v6737 = vsel %vm6058, %v6221, %v6016
  %v6738 = vrot.slane %v6693, 6
  %v6739 = vsel %vm6061, %v6738, %v6737
  %v6740 = vsel %vm6058, %v6225, %v6019
  %v6741 = vrot.slane %v6694, 6
  %v6742 = vsel %vm6061, %v6741, %v6740
  %v6743 = vsel %vm6058, %v6229, %v6022
  %v6744 = vrot.slane %v6695, 6
  %v6745 = vsel %vm6061, %v6744, %v6743
  %v6746 = vsel %vm6058, %v6233, %v6025
  %v6747 = vrot.slane %v6696, 6
  %v6748 = vsel %vm6061, %v6747, %v6746
  %v6749 = vsel %vm6058, %v6237, %v6028
  %v6750 = vrot.slane %v6697, 6
  %v6751 = vsel %vm6061, %v6750, %v6749
  %v6752 = vsel %vm6058, %v6241, %v6031
  %v6753 = vrot.slane %v6698, 6
  %v6754 = vsel %vm6061, %v6753, %v6752
  %v6755 = vsel %vm6058, %v6245, %v6034
  %v6756 = vrot.slane %v6699, 6
  %v6757 = vsel %vm6061, %v6756, %v6755
  %v6758 = vsel %vm6058, %v6249, %v6037
  %v6759 = vrot.slane %v6700, 6
  %v6760 = vsel %vm6061, %v6759, %v6758
  %v6761 = vsel %vm6058, %v6253, %v6040
  %v6762 = vrot.slane %v6701, 6
  %v6763 = vsel %vm6061, %v6762, %v6761
  %v6764 = vsel %vm6058, %v6257, %v6043
  %v6765 = vrot.slane %v6702, 6
  %v6766 = vsel %vm6061, %v6765, %v6764
  %v6767 = vsel %vm6058, %v6261, %v6046
  %v6768 = vrot.slane %v6703, 6
  %v6769 = vsel %vm6061, %v6768, %v6767
  %v6770 = vsel %vm6058, %v6265, %v6049
  %v6771 = vrot.slane %v6704, 6
  %v6772 = vsel %vm6061, %v6771, %v6770
  %v6773 = vsel %vm6058, %v6269, %v6052
  %v6774 = vrot.slane %v6705, 6
  %v6775 = vsel %vm6061, %v6774, %v6773
  %v6776 = vsel %vm6058, %v6273, %v6055
  %v6777 = vrot.slane %v6706, 6
  %v6778 = vsel %vm6061, %v6777, %v6776
  %v6779 = vpack.c.b16 %v6709, %v6709
  %v6780 = vpack.c.b16 %v6712, %v6712
  %v6781 = vpack.c.b16 %v6715, %v6715
  %v6782 = vpack.c.b16 %v6718, %v6718
  %v6783 = vpack.c.b16 %v6721, %v6721
  %v6784 = vpack.c.b16 %v6724, %v6724
  %v6785 = vpack.c.b16 %v6727, %v6727
  %v6786 = vpack.c.b16 %v6730, %v6730
  %v6787 = vpack.c.b16 %v6733, %v6733
  %v6788 = vpack.c.b16 %v6736, %v6736
  %v6789 = vpack.c.b16 %v6739, %v6739
  %v6790 = vpack.c.b16 %v6742, %v6742
  %v6791 = vpack.c.b16 %v6745, %v6745
  %v6792 = vpack.c.b16 %v6748, %v6748
  %v6793 = vpack.c.b16 %v6751, %v6751
  %v6794 = vpack.c.b16 %v6754, %v6754
  %v6795 = vpack.c.b16 %v6757, %v6757
  %v6796 = vpack.c.b16 %v6760, %v6760
  %v6797 = vpack.c.b16 %v6763, %v6763
  %v6798 = vpack.c.b16 %v6766, %v6766
  %v6799 = vpack.c.b16 %v6769, %v6769
  %v6800 = vpack.c.b16 %v6772, %v6772
  %v6801 = vpack.c.b16 %v6775, %v6775
  %v6802 = vpack.c.b16 %v6778, %v6778
  %6803 = vrot.lane.b32.xlu0 %v6779, 64
  %v6804 = vpop.permute.xlu0 %6803
  %6805 = vrot.lane.b32.xlu0 %v6780, 64
  %v6806 = vpop.permute.xlu0 %6805
  %6807 = vrot.lane.b32.xlu0 %v6781, 64
  %v6808 = vpop.permute.xlu0 %6807
  %6809 = vrot.lane.b32.xlu0 %v6782, 64
  %v6810 = vpop.permute.xlu0 %6809
  %6811 = vrot.lane.b32.xlu0 %v6783, 64
  %v6812 = vpop.permute.xlu0 %6811
  %6813 = vrot.lane.b32.xlu0 %v6784, 64
  %v6814 = vpop.permute.xlu0 %6813
  %6815 = vrot.lane.b32.xlu0 %v6785, 64
  %v6816 = vpop.permute.xlu0 %6815
  %6817 = vrot.lane.b32.xlu0 %v6786, 64
  %v6818 = vpop.permute.xlu0 %6817
  %6819 = vrot.lane.b32.xlu0 %v6787, 64
  %v6820 = vpop.permute.xlu0 %6819
  %6821 = vrot.lane.b32.xlu0 %v6788, 64
  %v6822 = vpop.permute.xlu0 %6821
  %6823 = vrot.lane.b32.xlu0 %v6789, 64
  %v6824 = vpop.permute.xlu0 %6823
  %6825 = vrot.lane.b32.xlu0 %v6790, 64
  %v6826 = vpop.permute.xlu0 %6825
  %6827 = vrot.lane.b32.xlu0 %v6791, 64
  %v6828 = vpop.permute.xlu0 %6827
  %6829 = vrot.lane.b32.xlu0 %v6792, 64
  %v6830 = vpop.permute.xlu0 %6829
  %6831 = vrot.lane.b32.xlu0 %v6793, 64
  %v6832 = vpop.permute.xlu0 %6831
  %6833 = vrot.lane.b32.xlu0 %v6794, 64
  %v6834 = vpop.permute.xlu0 %6833
  %6835 = vrot.lane.b32.xlu0 %v6795, 64
  %v6836 = vpop.permute.xlu0 %6835
  %6837 = vrot.lane.b32.xlu0 %v6796, 64
  %v6838 = vpop.permute.xlu0 %6837
  %6839 = vrot.lane.b32.xlu0 %v6797, 64
  %v6840 = vpop.permute.xlu0 %6839
  %6841 = vrot.lane.b32.xlu0 %v6798, 64
  %v6842 = vpop.permute.xlu0 %6841
  %6843 = vrot.lane.b32.xlu0 %v6799, 64
  %v6844 = vpop.permute.xlu0 %6843
  %6845 = vrot.lane.b32.xlu0 %v6800, 64
  %v6846 = vpop.permute.xlu0 %6845
  %6847 = vrot.lane.b32.xlu0 %v6801, 64
  %v6848 = vpop.permute.xlu0 %6847
  %6849 = vrot.lane.b32.xlu0 %v6802, 64
  %v6850 = vpop.permute.xlu0 %6849
  %v6851 = vrot.slane %v5986, 1
  %v6852 = vsel %vm6058, %v5987, %v6851
  %v6853 = vrot.slane %v6683, 7
  %v6854 = vsel %vm6061, %v6853, %v6852
  %v6855 = vrot.slane %v5989, 1
  %v6856 = vsel %vm6058, %v5990, %v6855
  %v6857 = vrot.slane %v6684, 7
  %v6858 = vsel %vm6061, %v6857, %v6856
  %v6859 = vrot.slane %v5992, 1
  %v6860 = vsel %vm6058, %v5993, %v6859
  %v6861 = vrot.slane %v6685, 7
  %v6862 = vsel %vm6061, %v6861, %v6860
  %v6863 = vrot.slane %v5995, 1
  %v6864 = vsel %vm6058, %v5996, %v6863
  %v6865 = vrot.slane %v6686, 7
  %v6866 = vsel %vm6061, %v6865, %v6864
  %v6867 = vrot.slane %v5998, 1
  %v6868 = vsel %vm6058, %v5999, %v6867
  %v6869 = vrot.slane %v6687, 7
  %v6870 = vsel %vm6061, %v6869, %v6868
  %v6871 = vrot.slane %v6001, 1
  %v6872 = vsel %vm6058, %v6002, %v6871
  %v6873 = vrot.slane %v6688, 7
  %v6874 = vsel %vm6061, %v6873, %v6872
  %v6875 = vrot.slane %v6004, 1
  %v6876 = vsel %vm6058, %v6005, %v6875
  %v6877 = vrot.slane %v6689, 7
  %v6878 = vsel %vm6061, %v6877, %v6876
  %v6879 = vrot.slane %v6007, 1
  %v6880 = vsel %vm6058, %v6008, %v6879
  %v6881 = vrot.slane %v6690, 7
  %v6882 = vsel %vm6061, %v6881, %v6880
  %v6883 = vrot.slane %v6010, 1
  %v6884 = vsel %vm6058, %v6011, %v6883
  %v6885 = vrot.slane %v6691, 7
  %v6886 = vsel %vm6061, %v6885, %v6884
  %v6887 = vrot.slane %v6013, 1
  %v6888 = vsel %vm6058, %v6014, %v6887
  %v6889 = vrot.slane %v6692, 7
  %v6890 = vsel %vm6061, %v6889, %v6888
  %v6891 = vrot.slane %v6016, 1
  %v6892 = vsel %vm6058, %v6017, %v6891
  %v6893 = vrot.slane %v6693, 7
  %v6894 = vsel %vm6061, %v6893, %v6892
  %v6895 = vrot.slane %v6019, 1
  %v6896 = vsel %vm6058, %v6020, %v6895
  %v6897 = vrot.slane %v6694, 7
  %v6898 = vsel %vm6061, %v6897, %v6896
  %v6899 = vrot.slane %v6022, 1
  %v6900 = vsel %vm6058, %v6023, %v6899
  %v6901 = vrot.slane %v6695, 7
  %v6902 = vsel %vm6061, %v6901, %v6900
  %v6903 = vrot.slane %v6025, 1
  %v6904 = vsel %vm6058, %v6026, %v6903
  %v6905 = vrot.slane %v6696, 7
  %v6906 = vsel %vm6061, %v6905, %v6904
  %v6907 = vrot.slane %v6028, 1
  %v6908 = vsel %vm6058, %v6029, %v6907
  %v6909 = vrot.slane %v6697, 7
  %v6910 = vsel %vm6061, %v6909, %v6908
  %v6911 = vrot.slane %v6031, 1
  %v6912 = vsel %vm6058, %v6032, %v6911
  %v6913 = vrot.slane %v6698, 7
  %v6914 = vsel %vm6061, %v6913, %v6912
  %v6915 = vrot.slane %v6034, 1
  %v6916 = vsel %vm6058, %v6035, %v6915
  %v6917 = vrot.slane %v6699, 7
  %v6918 = vsel %vm6061, %v6917, %v6916
  %v6919 = vrot.slane %v6037, 1
  %v6920 = vsel %vm6058, %v6038, %v6919
  %v6921 = vrot.slane %v6700, 7
  %v6922 = vsel %vm6061, %v6921, %v6920
  %v6923 = vrot.slane %v6040, 1
  %v6924 = vsel %vm6058, %v6041, %v6923
  %v6925 = vrot.slane %v6701, 7
  %v6926 = vsel %vm6061, %v6925, %v6924
  %v6927 = vrot.slane %v6043, 1
  %v6928 = vsel %vm6058, %v6044, %v6927
  %v6929 = vrot.slane %v6702, 7
  %v6930 = vsel %vm6061, %v6929, %v6928
  %v6931 = vrot.slane %v6046, 1
  %v6932 = vsel %vm6058, %v6047, %v6931
  %v6933 = vrot.slane %v6703, 7
  %v6934 = vsel %vm6061, %v6933, %v6932
  %v6935 = vrot.slane %v6049, 1
  %v6936 = vsel %vm6058, %v6050, %v6935
  %v6937 = vrot.slane %v6704, 7
  %v6938 = vsel %vm6061, %v6937, %v6936
  %v6939 = vrot.slane %v6052, 1
  %v6940 = vsel %vm6058, %v6053, %v6939
  %v6941 = vrot.slane %v6705, 7
  %v6942 = vsel %vm6061, %v6941, %v6940
  %v6943 = vrot.slane %v6055, 1
  %v6944 = vsel %vm6058, %v6056, %v6943
  %v6945 = vrot.slane %v6706, 7
  %v6946 = vsel %vm6061, %v6945, %v6944
  %v6947 = vpack.c.b16 %v6854, %v6854
  %v6948 = vpack.c.b16 %v6858, %v6858
  %v6949 = vpack.c.b16 %v6862, %v6862
  %v6950 = vpack.c.b16 %v6866, %v6866
  %v6951 = vpack.c.b16 %v6870, %v6870
  %v6952 = vpack.c.b16 %v6874, %v6874
  %v6953 = vpack.c.b16 %v6878, %v6878
  %v6954 = vpack.c.b16 %v6882, %v6882
  %v6955 = vpack.c.b16 %v6886, %v6886
  %v6956 = vpack.c.b16 %v6890, %v6890
  %v6957 = vpack.c.b16 %v6894, %v6894
  %v6958 = vpack.c.b16 %v6898, %v6898
  %v6959 = vpack.c.b16 %v6902, %v6902
  %v6960 = vpack.c.b16 %v6906, %v6906
  %v6961 = vpack.c.b16 %v6910, %v6910
  %v6962 = vpack.c.b16 %v6914, %v6914
  %v6963 = vpack.c.b16 %v6918, %v6918
  %v6964 = vpack.c.b16 %v6922, %v6922
  %v6965 = vpack.c.b16 %v6926, %v6926
  %v6966 = vpack.c.b16 %v6930, %v6930
  %v6967 = vpack.c.b16 %v6934, %v6934
  %v6968 = vpack.c.b16 %v6938, %v6938
  %v6969 = vpack.c.b16 %v6942, %v6942
  %v6970 = vpack.c.b16 %v6946, %v6946
  %6971 = vrot.lane.b32.xlu0 %v6947, 96
  %v6972 = vpop.permute.xlu0 %6971
  %6973 = vrot.lane.b32.xlu0 %v6948, 96
  %v6974 = vpop.permute.xlu0 %6973
  %6975 = vrot.lane.b32.xlu0 %v6949, 96
  %v6976 = vpop.permute.xlu0 %6975
  %6977 = vrot.lane.b32.xlu0 %v6950, 96
  %v6978 = vpop.permute.xlu0 %6977
  %6979 = vrot.lane.b32.xlu0 %v6951, 96
  %v6980 = vpop.permute.xlu0 %6979
  %6981 = vrot.lane.b32.xlu0 %v6952, 96
  %v6982 = vpop.permute.xlu0 %6981
  %6983 = vrot.lane.b32.xlu0 %v6953, 96
  %v6984 = vpop.permute.xlu0 %6983
  %6985 = vrot.lane.b32.xlu0 %v6954, 96
  %v6986 = vpop.permute.xlu0 %6985
  %6987 = vrot.lane.b32.xlu0 %v6955, 96
  %v6988 = vpop.permute.xlu0 %6987
  %6989 = vrot.lane.b32.xlu0 %v6956, 96
  %v6990 = vpop.permute.xlu0 %6989
  %6991 = vrot.lane.b32.xlu0 %v6957, 96
  %v6992 = vpop.permute.xlu0 %6991
  %6993 = vrot.lane.b32.xlu0 %v6958, 96
  %v6994 = vpop.permute.xlu0 %6993
  %6995 = vrot.lane.b32.xlu0 %v6959, 96
  %v6996 = vpop.permute.xlu0 %6995
  %6997 = vrot.lane.b32.xlu0 %v6960, 96
  %v6998 = vpop.permute.xlu0 %6997
  %6999 = vrot.lane.b32.xlu0 %v6961, 96
  %v7000 = vpop.permute.xlu0 %6999
  %7001 = vrot.lane.b32.xlu0 %v6962, 96
  %v7002 = vpop.permute.xlu0 %7001
  %7003 = vrot.lane.b32.xlu0 %v6963, 96
  %v7004 = vpop.permute.xlu0 %7003
  %7005 = vrot.lane.b32.xlu0 %v6964, 96
  %v7006 = vpop.permute.xlu0 %7005
  %7007 = vrot.lane.b32.xlu0 %v6965, 96
  %v7008 = vpop.permute.xlu0 %7007
  %7009 = vrot.lane.b32.xlu0 %v6966, 96
  %v7010 = vpop.permute.xlu0 %7009
  %7011 = vrot.lane.b32.xlu0 %v6967, 96
  %v7012 = vpop.permute.xlu0 %7011
  %7013 = vrot.lane.b32.xlu0 %v6968, 96
  %v7014 = vpop.permute.xlu0 %7013
  %7015 = vrot.lane.b32.xlu0 %v6969, 96
  %v7016 = vpop.permute.xlu0 %7015
  %7017 = vrot.lane.b32.xlu0 %v6970, 96
  %v7018 = vpop.permute.xlu0 %7017
  %v7020 = vunpack.c.l.s4 1966171168
  %v7021 = vunpack.c.0.s8 %v7020
  %v7022 = vlaneseq
  %v7023 = vshrl.u32 %v7022, 7
  %v7024 = vsub.s32 %v7021, %v7023
  %v7025 = vrot.slane %v3439, %v7024
  %v7027 = vunpack.c.l.s4 1966171168
  %v7028 = vunpack.c.0.s8 %v7027
  %v7029 = vlaneseq
  %v7030 = vshrl.u32 %v7029, 7
  %v7031 = vsub.s32 %v7028, %v7030
  %v7032 = vrot.slane %v7025, %v7031
  %v7034 = vunpack.c.l.s4 1966171168
  %v7035 = vunpack.c.0.s8 %v7034
  %v7036 = vlaneseq
  %v7037 = vshrl.u32 %v7036, 7
  %v7038 = vsub.s32 %v7035, %v7037
  %v7039 = vrot.slane %v3453, %v7038
  %v7041 = vunpack.c.l.s4 1966171168
  %v7042 = vunpack.c.0.s8 %v7041
  %v7043 = vlaneseq
  %v7044 = vshrl.u32 %v7043, 7
  %v7045 = vsub.s32 %v7042, %v7044
  %v7046 = vrot.slane %v7039, %v7045
  %v7048 = vunpack.c.l.s4 1966171168
  %v7049 = vunpack.c.0.s8 %v7048
  %v7050 = vlaneseq
  %v7051 = vshrl.u32 %v7050, 7
  %v7052 = vsub.s32 %v7049, %v7051
  %v7053 = vrot.slane %v3455, %v7052
  %v7055 = vunpack.c.l.s4 1966171168
  %v7056 = vunpack.c.0.s8 %v7055
  %v7057 = vlaneseq
  %v7058 = vshrl.u32 %v7057, 7
  %v7059 = vsub.s32 %v7056, %v7058
  %v7060 = vrot.slane %v7053, %v7059
  %v7062 = vunpack.c.l.s4 1966171168
  %v7063 = vunpack.c.0.s8 %v7062
  %v7064 = vlaneseq
  %v7065 = vshrl.u32 %v7064, 7
  %v7066 = vsub.s32 %v7063, %v7065
  %v7067 = vrot.slane %v3488, %v7066
  %v7069 = vunpack.c.l.s4 1966171168
  %v7070 = vunpack.c.0.s8 %v7069
  %v7071 = vlaneseq
  %v7072 = vshrl.u32 %v7071, 7
  %v7073 = vsub.s32 %v7070, %v7072
  %v7074 = vrot.slane %v7067, %v7073
  %v7076 = vunpack.c.l.s4 1966171168
  %v7077 = vunpack.c.0.s8 %v7076
  %v7078 = vlaneseq
  %v7079 = vshrl.u32 %v7078, 7
  %v7080 = vsub.s32 %v7077, %v7079
  %v7081 = vrot.slane %v3502, %v7080
  %v7083 = vunpack.c.l.s4 1966171168
  %v7084 = vunpack.c.0.s8 %v7083
  %v7085 = vlaneseq
  %v7086 = vshrl.u32 %v7085, 7
  %v7087 = vsub.s32 %v7084, %v7086
  %v7088 = vrot.slane %v7081, %v7087
  %v7090 = vunpack.c.l.s4 1966171168
  %v7091 = vunpack.c.0.s8 %v7090
  %v7092 = vlaneseq
  %v7093 = vshrl.u32 %v7092, 7
  %v7094 = vsub.s32 %v7091, %v7093
  %v7095 = vrot.slane %v3504, %v7094
  %v7097 = vunpack.c.l.s4 1966171168
  %v7098 = vunpack.c.0.s8 %v7097
  %v7099 = vlaneseq
  %v7100 = vshrl.u32 %v7099, 7
  %v7101 = vsub.s32 %v7098, %v7100
  %v7102 = vrot.slane %v7095, %v7101
  %v7104 = vunpack.c.l.s4 1966171168
  %v7105 = vunpack.c.0.s8 %v7104
  %v7106 = vlaneseq
  %v7107 = vshrl.u32 %v7106, 7
  %v7108 = vsub.s32 %v7105, %v7107
  %v7109 = vrot.slane %v3537, %v7108
  %v7111 = vunpack.c.l.s4 1966171168
  %v7112 = vunpack.c.0.s8 %v7111
  %v7113 = vlaneseq
  %v7114 = vshrl.u32 %v7113, 7
  %v7115 = vsub.s32 %v7112, %v7114
  %v7116 = vrot.slane %v7109, %v7115
  %v7118 = vunpack.c.l.s4 1966171168
  %v7119 = vunpack.c.0.s8 %v7118
  %v7120 = vlaneseq
  %v7121 = vshrl.u32 %v7120, 7
  %v7122 = vsub.s32 %v7119, %v7121
  %v7123 = vrot.slane %v3551, %v7122
  %v7125 = vunpack.c.l.s4 1966171168
  %v7126 = vunpack.c.0.s8 %v7125
  %v7127 = vlaneseq
  %v7128 = vshrl.u32 %v7127, 7
  %v7129 = vsub.s32 %v7126, %v7128
  %v7130 = vrot.slane %v7123, %v7129
  %v7132 = vunpack.c.l.s4 1966171168
  %v7133 = vunpack.c.0.s8 %v7132
  %v7134 = vlaneseq
  %v7135 = vshrl.u32 %v7134, 7
  %v7136 = vsub.s32 %v7133, %v7135
  %v7137 = vrot.slane %v3553, %v7136
  %v7139 = vunpack.c.l.s4 1966171168
  %v7140 = vunpack.c.0.s8 %v7139
  %v7141 = vlaneseq
  %v7142 = vshrl.u32 %v7141, 7
  %v7143 = vsub.s32 %v7140, %v7142
  %v7144 = vrot.slane %v7137, %v7143
  %v7146 = vunpack.c.l.s4 1966171168
  %v7147 = vunpack.c.0.s8 %v7146
  %v7148 = vlaneseq
  %v7149 = vshrl.u32 %v7148, 7
  %v7150 = vsub.s32 %v7147, %v7149
  %v7151 = vrot.slane %v3635, %v7150
  %v7153 = vunpack.c.l.s4 1966171168
  %v7154 = vunpack.c.0.s8 %v7153
  %v7155 = vlaneseq
  %v7156 = vshrl.u32 %v7155, 7
  %v7157 = vsub.s32 %v7154, %v7156
  %v7158 = vrot.slane %v7151, %v7157
  %v7160 = vunpack.c.l.s4 1966171168
  %v7161 = vunpack.c.0.s8 %v7160
  %v7162 = vlaneseq
  %v7163 = vshrl.u32 %v7162, 7
  %v7164 = vsub.s32 %v7161, %v7163
  %v7165 = vrot.slane %v3649, %v7164
  %v7167 = vunpack.c.l.s4 1966171168
  %v7168 = vunpack.c.0.s8 %v7167
  %v7169 = vlaneseq
  %v7170 = vshrl.u32 %v7169, 7
  %v7171 = vsub.s32 %v7168, %v7170
  %v7172 = vrot.slane %v7165, %v7171
  %v7174 = vunpack.c.l.s4 1966171168
  %v7175 = vunpack.c.0.s8 %v7174
  %v7176 = vlaneseq
  %v7177 = vshrl.u32 %v7176, 7
  %v7178 = vsub.s32 %v7175, %v7177
  %v7179 = vrot.slane %v3651, %v7178
  %v7181 = vunpack.c.l.s4 1966171168
  %v7182 = vunpack.c.0.s8 %v7181
  %v7183 = vlaneseq
  %v7184 = vshrl.u32 %v7183, 7
  %v7185 = vsub.s32 %v7182, %v7184
  %v7186 = vrot.slane %v7179, %v7185
  %v7188 = vunpack.c.l.s4 1966171168
  %v7189 = vunpack.c.0.s8 %v7188
  %v7190 = vlaneseq
  %v7191 = vshrl.u32 %v7190, 7
  %v7192 = vsub.s32 %v7189, %v7191
  %v7193 = vrot.slane %v3684, %v7192
  %v7195 = vunpack.c.l.s4 1966171168
  %v7196 = vunpack.c.0.s8 %v7195
  %v7197 = vlaneseq
  %v7198 = vshrl.u32 %v7197, 7
  %v7199 = vsub.s32 %v7196, %v7198
  %v7200 = vrot.slane %v7193, %v7199
  %v7202 = vunpack.c.l.s4 1966171168
  %v7203 = vunpack.c.0.s8 %v7202
  %v7204 = vlaneseq
  %v7205 = vshrl.u32 %v7204, 7
  %v7206 = vsub.s32 %v7203, %v7205
  %v7207 = vrot.slane %v3698, %v7206
  %v7209 = vunpack.c.l.s4 1966171168
  %v7210 = vunpack.c.0.s8 %v7209
  %v7211 = vlaneseq
  %v7212 = vshrl.u32 %v7211, 7
  %v7213 = vsub.s32 %v7210, %v7212
  %v7214 = vrot.slane %v7207, %v7213
  %v7216 = vunpack.c.l.s4 1966171168
  %v7217 = vunpack.c.0.s8 %v7216
  %v7218 = vlaneseq
  %v7219 = vshrl.u32 %v7218, 7
  %v7220 = vsub.s32 %v7217, %v7219
  %v7221 = vrot.slane %v3700, %v7220
  %v7223 = vunpack.c.l.s4 1966171168
  %v7224 = vunpack.c.0.s8 %v7223
  %v7225 = vlaneseq
  %v7226 = vshrl.u32 %v7225, 7
  %v7227 = vsub.s32 %v7224, %v7226
  %v7228 = vrot.slane %v7221, %v7227
  %v7230 = vunpack.c.l.s4 1966171168
  %v7231 = vunpack.c.0.s8 %v7230
  %v7232 = vlaneseq
  %v7233 = vshrl.u32 %v7232, 7
  %v7234 = vsub.s32 %v7231, %v7233
  %v7235 = vrot.slane %v3733, %v7234
  %v7237 = vunpack.c.l.s4 1966171168
  %v7238 = vunpack.c.0.s8 %v7237
  %v7239 = vlaneseq
  %v7240 = vshrl.u32 %v7239, 7
  %v7241 = vsub.s32 %v7238, %v7240
  %v7242 = vrot.slane %v7235, %v7241
  %v7244 = vunpack.c.l.s4 1966171168
  %v7245 = vunpack.c.0.s8 %v7244
  %v7246 = vlaneseq
  %v7247 = vshrl.u32 %v7246, 7
  %v7248 = vsub.s32 %v7245, %v7247
  %v7249 = vrot.slane %v3747, %v7248
  %v7251 = vunpack.c.l.s4 1966171168
  %v7252 = vunpack.c.0.s8 %v7251
  %v7253 = vlaneseq
  %v7254 = vshrl.u32 %v7253, 7
  %v7255 = vsub.s32 %v7252, %v7254
  %v7256 = vrot.slane %v7249, %v7255
  %v7258 = vunpack.c.l.s4 1966171168
  %v7259 = vunpack.c.0.s8 %v7258
  %v7260 = vlaneseq
  %v7261 = vshrl.u32 %v7260, 7
  %v7262 = vsub.s32 %v7259, %v7261
  %v7263 = vrot.slane %v3749, %v7262
  %v7265 = vunpack.c.l.s4 1966171168
  %v7266 = vunpack.c.0.s8 %v7265
  %v7267 = vlaneseq
  %v7268 = vshrl.u32 %v7267, 7
  %v7269 = vsub.s32 %v7266, %v7268
  %v7270 = vrot.slane %v7263, %v7269
  %v7272 = vunpack.c.l.s4 1966171168
  %v7273 = vunpack.c.0.s8 %v7272
  %v7274 = vlaneseq
  %v7275 = vshrl.u32 %v7274, 7
  %v7276 = vsub.s32 %v7273, %v7275
  %v7277 = vrot.slane %v3831, %v7276
  %v7279 = vunpack.c.l.s4 1966171168
  %v7280 = vunpack.c.0.s8 %v7279
  %v7281 = vlaneseq
  %v7282 = vshrl.u32 %v7281, 7
  %v7283 = vsub.s32 %v7280, %v7282
  %v7284 = vrot.slane %v7277, %v7283
  %v7286 = vunpack.c.l.s4 1966171168
  %v7287 = vunpack.c.0.s8 %v7286
  %v7288 = vlaneseq
  %v7289 = vshrl.u32 %v7288, 7
  %v7290 = vsub.s32 %v7287, %v7289
  %v7291 = vrot.slane %v3845, %v7290
  %v7293 = vunpack.c.l.s4 1966171168
  %v7294 = vunpack.c.0.s8 %v7293
  %v7295 = vlaneseq
  %v7296 = vshrl.u32 %v7295, 7
  %v7297 = vsub.s32 %v7294, %v7296
  %v7298 = vrot.slane %v7291, %v7297
  %v7300 = vunpack.c.l.s4 1966171168
  %v7301 = vunpack.c.0.s8 %v7300
  %v7302 = vlaneseq
  %v7303 = vshrl.u32 %v7302, 7
  %v7304 = vsub.s32 %v7301, %v7303
  %v7305 = vrot.slane %v3847, %v7304
  %v7307 = vunpack.c.l.s4 1966171168
  %v7308 = vunpack.c.0.s8 %v7307
  %v7309 = vlaneseq
  %v7310 = vshrl.u32 %v7309, 7
  %v7311 = vsub.s32 %v7308, %v7310
  %v7312 = vrot.slane %v7305, %v7311
  %v7314 = vunpack.c.l.s4 1966171168
  %v7315 = vunpack.c.0.s8 %v7314
  %v7316 = vlaneseq
  %v7317 = vshrl.u32 %v7316, 7
  %v7318 = vsub.s32 %v7315, %v7317
  %v7319 = vrot.slane %v3880, %v7318
  %v7321 = vunpack.c.l.s4 1966171168
  %v7322 = vunpack.c.0.s8 %v7321
  %v7323 = vlaneseq
  %v7324 = vshrl.u32 %v7323, 7
  %v7325 = vsub.s32 %v7322, %v7324
  %v7326 = vrot.slane %v7319, %v7325
  %v7328 = vunpack.c.l.s4 1966171168
  %v7329 = vunpack.c.0.s8 %v7328
  %v7330 = vlaneseq
  %v7331 = vshrl.u32 %v7330, 7
  %v7332 = vsub.s32 %v7329, %v7331
  %v7333 = vrot.slane %v3894, %v7332
  %v7335 = vunpack.c.l.s4 1966171168
  %v7336 = vunpack.c.0.s8 %v7335
  %v7337 = vlaneseq
  %v7338 = vshrl.u32 %v7337, 7
  %v7339 = vsub.s32 %v7336, %v7338
  %v7340 = vrot.slane %v7333, %v7339
  %v7342 = vunpack.c.l.s4 1966171168
  %v7343 = vunpack.c.0.s8 %v7342
  %v7344 = vlaneseq
  %v7345 = vshrl.u32 %v7344, 7
  %v7346 = vsub.s32 %v7343, %v7345
  %v7347 = vrot.slane %v3896, %v7346
  %v7349 = vunpack.c.l.s4 1966171168
  %v7350 = vunpack.c.0.s8 %v7349
  %v7351 = vlaneseq
  %v7352 = vshrl.u32 %v7351, 7
  %v7353 = vsub.s32 %v7350, %v7352
  %v7354 = vrot.slane %v7347, %v7353
  %v7356 = vunpack.c.l.s4 1966171168
  %v7357 = vunpack.c.0.s8 %v7356
  %v7358 = vlaneseq
  %v7359 = vshrl.u32 %v7358, 7
  %v7360 = vsub.s32 %v7357, %v7359
  %v7361 = vrot.slane %v3929, %v7360
  %v7363 = vunpack.c.l.s4 1966171168
  %v7364 = vunpack.c.0.s8 %v7363
  %v7365 = vlaneseq
  %v7366 = vshrl.u32 %v7365, 7
  %v7367 = vsub.s32 %v7364, %v7366
  %v7368 = vrot.slane %v7361, %v7367
  %v7370 = vunpack.c.l.s4 1966171168
  %v7371 = vunpack.c.0.s8 %v7370
  %v7372 = vlaneseq
  %v7373 = vshrl.u32 %v7372, 7
  %v7374 = vsub.s32 %v7371, %v7373
  %v7375 = vrot.slane %v3943, %v7374
  %v7377 = vunpack.c.l.s4 1966171168
  %v7378 = vunpack.c.0.s8 %v7377
  %v7379 = vlaneseq
  %v7380 = vshrl.u32 %v7379, 7
  %v7381 = vsub.s32 %v7378, %v7380
  %v7382 = vrot.slane %v7375, %v7381
  %v7384 = vunpack.c.l.s4 1966171168
  %v7385 = vunpack.c.0.s8 %v7384
  %v7386 = vlaneseq
  %v7387 = vshrl.u32 %v7386, 7
  %v7388 = vsub.s32 %v7385, %v7387
  %v7389 = vrot.slane %v3945, %v7388
  %v7391 = vunpack.c.l.s4 1966171168
  %v7392 = vunpack.c.0.s8 %v7391
  %v7393 = vlaneseq
  %v7394 = vshrl.u32 %v7393, 7
  %v7395 = vsub.s32 %v7392, %v7394
  %v7396 = vrot.slane %v7389, %v7395
  %v7398 = vunpack.c.l.s4 1966171168
  %v7399 = vunpack.c.0.s8 %v7398
  %v7400 = vlaneseq
  %v7401 = vshrl.u32 %v7400, 7
  %v7402 = vsub.s32 %v7399, %v7401
  %v7403 = vrot.slane %v4027, %v7402
  %v7405 = vunpack.c.l.s4 1966171168
  %v7406 = vunpack.c.0.s8 %v7405
  %v7407 = vlaneseq
  %v7408 = vshrl.u32 %v7407, 7
  %v7409 = vsub.s32 %v7406, %v7408
  %v7410 = vrot.slane %v7403, %v7409
  %v7412 = vunpack.c.l.s4 1966171168
  %v7413 = vunpack.c.0.s8 %v7412
  %v7414 = vlaneseq
  %v7415 = vshrl.u32 %v7414, 7
  %v7416 = vsub.s32 %v7413, %v7415
  %v7417 = vrot.slane %v4041, %v7416
  %v7419 = vunpack.c.l.s4 1966171168
  %v7420 = vunpack.c.0.s8 %v7419
  %v7421 = vlaneseq
  %v7422 = vshrl.u32 %v7421, 7
  %v7423 = vsub.s32 %v7420, %v7422
  %v7424 = vrot.slane %v7417, %v7423
  %v7426 = vunpack.c.l.s4 1966171168
  %v7427 = vunpack.c.0.s8 %v7426
  %v7428 = vlaneseq
  %v7429 = vshrl.u32 %v7428, 7
  %v7430 = vsub.s32 %v7427, %v7429
  %v7431 = vrot.slane %v4043, %v7430
  %v7433 = vunpack.c.l.s4 1966171168
  %v7434 = vunpack.c.0.s8 %v7433
  %v7435 = vlaneseq
  %v7436 = vshrl.u32 %v7435, 7
  %v7437 = vsub.s32 %v7434, %v7436
  %v7438 = vrot.slane %v7431, %v7437
  %v7440 = vunpack.c.l.s4 1966171168
  %v7441 = vunpack.c.0.s8 %v7440
  %v7442 = vlaneseq
  %v7443 = vshrl.u32 %v7442, 7
  %v7444 = vsub.s32 %v7441, %v7443
  %v7445 = vrot.slane %v4076, %v7444
  %v7447 = vunpack.c.l.s4 1966171168
  %v7448 = vunpack.c.0.s8 %v7447
  %v7449 = vlaneseq
  %v7450 = vshrl.u32 %v7449, 7
  %v7451 = vsub.s32 %v7448, %v7450
  %v7452 = vrot.slane %v7445, %v7451
  %v7454 = vunpack.c.l.s4 1966171168
  %v7455 = vunpack.c.0.s8 %v7454
  %v7456 = vlaneseq
  %v7457 = vshrl.u32 %v7456, 7
  %v7458 = vsub.s32 %v7455, %v7457
  %v7459 = vrot.slane %v4090, %v7458
  %v7461 = vunpack.c.l.s4 1966171168
  %v7462 = vunpack.c.0.s8 %v7461
  %v7463 = vlaneseq
  %v7464 = vshrl.u32 %v7463, 7
  %v7465 = vsub.s32 %v7462, %v7464
  %v7466 = vrot.slane %v7459, %v7465
  %v7468 = vunpack.c.l.s4 1966171168
  %v7469 = vunpack.c.0.s8 %v7468
  %v7470 = vlaneseq
  %v7471 = vshrl.u32 %v7470, 7
  %v7472 = vsub.s32 %v7469, %v7471
  %v7473 = vrot.slane %v4092, %v7472
  %v7475 = vunpack.c.l.s4 1966171168
  %v7476 = vunpack.c.0.s8 %v7475
  %v7477 = vlaneseq
  %v7478 = vshrl.u32 %v7477, 7
  %v7479 = vsub.s32 %v7476, %v7478
  %v7480 = vrot.slane %v7473, %v7479
  %v7482 = vunpack.c.l.s4 1966171168
  %v7483 = vunpack.c.0.s8 %v7482
  %v7484 = vlaneseq
  %v7485 = vshrl.u32 %v7484, 7
  %v7486 = vsub.s32 %v7483, %v7485
  %v7487 = vrot.slane %v4125, %v7486
  %v7489 = vunpack.c.l.s4 1966171168
  %v7490 = vunpack.c.0.s8 %v7489
  %v7491 = vlaneseq
  %v7492 = vshrl.u32 %v7491, 7
  %v7493 = vsub.s32 %v7490, %v7492
  %v7494 = vrot.slane %v7487, %v7493
  %v7496 = vunpack.c.l.s4 1966171168
  %v7497 = vunpack.c.0.s8 %v7496
  %v7498 = vlaneseq
  %v7499 = vshrl.u32 %v7498, 7
  %v7500 = vsub.s32 %v7497, %v7499
  %v7501 = vrot.slane %v4139, %v7500
  %v7503 = vunpack.c.l.s4 1966171168
  %v7504 = vunpack.c.0.s8 %v7503
  %v7505 = vlaneseq
  %v7506 = vshrl.u32 %v7505, 7
  %v7507 = vsub.s32 %v7504, %v7506
  %v7508 = vrot.slane %v7501, %v7507
  %v7510 = vunpack.c.l.s4 1966171168
  %v7511 = vunpack.c.0.s8 %v7510
  %v7512 = vlaneseq
  %v7513 = vshrl.u32 %v7512, 7
  %v7514 = vsub.s32 %v7511, %v7513
  %v7515 = vrot.slane %v4141, %v7514
  %v7517 = vunpack.c.l.s4 1966171168
  %v7518 = vunpack.c.0.s8 %v7517
  %v7519 = vlaneseq
  %v7520 = vshrl.u32 %v7519, 7
  %v7521 = vsub.s32 %v7518, %v7520
  %v7522 = vrot.slane %v7515, %v7521
  %v7524 = vunpack.c.l.s4 1966171168
  %v7525 = vunpack.c.0.s8 %v7524
  %v7526 = vlaneseq
  %v7527 = vshrl.u32 %v7526, 7
  %v7528 = vsub.s32 %v7525, %v7527
  %v7529 = vrot.slane %v4223, %v7528
  %v7531 = vunpack.c.l.s4 1966171168
  %v7532 = vunpack.c.0.s8 %v7531
  %v7533 = vlaneseq
  %v7534 = vshrl.u32 %v7533, 7
  %v7535 = vsub.s32 %v7532, %v7534
  %v7536 = vrot.slane %v7529, %v7535
  %v7538 = vunpack.c.l.s4 1966171168
  %v7539 = vunpack.c.0.s8 %v7538
  %v7540 = vlaneseq
  %v7541 = vshrl.u32 %v7540, 7
  %v7542 = vsub.s32 %v7539, %v7541
  %v7543 = vrot.slane %v4237, %v7542
  %v7545 = vunpack.c.l.s4 1966171168
  %v7546 = vunpack.c.0.s8 %v7545
  %v7547 = vlaneseq
  %v7548 = vshrl.u32 %v7547, 7
  %v7549 = vsub.s32 %v7546, %v7548
  %v7550 = vrot.slane %v7543, %v7549
  %v7552 = vunpack.c.l.s4 1966171168
  %v7553 = vunpack.c.0.s8 %v7552
  %v7554 = vlaneseq
  %v7555 = vshrl.u32 %v7554, 7
  %v7556 = vsub.s32 %v7553, %v7555
  %v7557 = vrot.slane %v4239, %v7556
  %v7559 = vunpack.c.l.s4 1966171168
  %v7560 = vunpack.c.0.s8 %v7559
  %v7561 = vlaneseq
  %v7562 = vshrl.u32 %v7561, 7
  %v7563 = vsub.s32 %v7560, %v7562
  %v7564 = vrot.slane %v7557, %v7563
  %v7566 = vunpack.c.l.s4 1966171168
  %v7567 = vunpack.c.0.s8 %v7566
  %v7568 = vlaneseq
  %v7569 = vshrl.u32 %v7568, 7
  %v7570 = vsub.s32 %v7567, %v7569
  %v7571 = vrot.slane %v4272, %v7570
  %v7573 = vunpack.c.l.s4 1966171168
  %v7574 = vunpack.c.0.s8 %v7573
  %v7575 = vlaneseq
  %v7576 = vshrl.u32 %v7575, 7
  %v7577 = vsub.s32 %v7574, %v7576
  %v7578 = vrot.slane %v7571, %v7577
  %v7580 = vunpack.c.l.s4 1966171168
  %v7581 = vunpack.c.0.s8 %v7580
  %v7582 = vlaneseq
  %v7583 = vshrl.u32 %v7582, 7
  %v7584 = vsub.s32 %v7581, %v7583
  %v7585 = vrot.slane %v4286, %v7584
  %v7587 = vunpack.c.l.s4 1966171168
  %v7588 = vunpack.c.0.s8 %v7587
  %v7589 = vlaneseq
  %v7590 = vshrl.u32 %v7589, 7
  %v7591 = vsub.s32 %v7588, %v7590
  %v7592 = vrot.slane %v7585, %v7591
  %v7594 = vunpack.c.l.s4 1966171168
  %v7595 = vunpack.c.0.s8 %v7594
  %v7596 = vlaneseq
  %v7597 = vshrl.u32 %v7596, 7
  %v7598 = vsub.s32 %v7595, %v7597
  %v7599 = vrot.slane %v4288, %v7598
  %v7601 = vunpack.c.l.s4 1966171168
  %v7602 = vunpack.c.0.s8 %v7601
  %v7603 = vlaneseq
  %v7604 = vshrl.u32 %v7603, 7
  %v7605 = vsub.s32 %v7602, %v7604
  %v7606 = vrot.slane %v7599, %v7605
  %v7608 = vunpack.c.l.s4 1966171168
  %v7609 = vunpack.c.0.s8 %v7608
  %v7610 = vlaneseq
  %v7611 = vshrl.u32 %v7610, 7
  %v7612 = vsub.s32 %v7609, %v7611
  %v7613 = vrot.slane %v4321, %v7612
  %v7615 = vunpack.c.l.s4 1966171168
  %v7616 = vunpack.c.0.s8 %v7615
  %v7617 = vlaneseq
  %v7618 = vshrl.u32 %v7617, 7
  %v7619 = vsub.s32 %v7616, %v7618
  %v7620 = vrot.slane %v7613, %v7619
  %v7622 = vunpack.c.l.s4 1966171168
  %v7623 = vunpack.c.0.s8 %v7622
  %v7624 = vlaneseq
  %v7625 = vshrl.u32 %v7624, 7
  %v7626 = vsub.s32 %v7623, %v7625
  %v7627 = vrot.slane %v4335, %v7626
  %v7629 = vunpack.c.l.s4 1966171168
  %v7630 = vunpack.c.0.s8 %v7629
  %v7631 = vlaneseq
  %v7632 = vshrl.u32 %v7631, 7
  %v7633 = vsub.s32 %v7630, %v7632
  %v7634 = vrot.slane %v7627, %v7633
  %v7636 = vunpack.c.l.s4 1966171168
  %v7637 = vunpack.c.0.s8 %v7636
  %v7638 = vlaneseq
  %v7639 = vshrl.u32 %v7638, 7
  %v7640 = vsub.s32 %v7637, %v7639
  %v7641 = vrot.slane %v4337, %v7640
  %v7643 = vunpack.c.l.s4 1966171168
  %v7644 = vunpack.c.0.s8 %v7643
  %v7645 = vlaneseq
  %v7646 = vshrl.u32 %v7645, 7
  %v7647 = vsub.s32 %v7644, %v7646
  %v7648 = vrot.slane %v7641, %v7647
  %v7650 = vunpack.c.l.s4 1966171168
  %v7651 = vunpack.c.0.s8 %v7650
  %v7652 = vlaneseq
  %v7653 = vshrl.u32 %v7652, 7
  %v7654 = vsub.s32 %v7651, %v7653
  %v7655 = vrot.slane %v4419, %v7654
  %v7657 = vunpack.c.l.s4 1966171168
  %v7658 = vunpack.c.0.s8 %v7657
  %v7659 = vlaneseq
  %v7660 = vshrl.u32 %v7659, 7
  %v7661 = vsub.s32 %v7658, %v7660
  %v7662 = vrot.slane %v7655, %v7661
  %v7664 = vunpack.c.l.s4 1966171168
  %v7665 = vunpack.c.0.s8 %v7664
  %v7666 = vlaneseq
  %v7667 = vshrl.u32 %v7666, 7
  %v7668 = vsub.s32 %v7665, %v7667
  %v7669 = vrot.slane %v4433, %v7668
  %v7671 = vunpack.c.l.s4 1966171168
  %v7672 = vunpack.c.0.s8 %v7671
  %v7673 = vlaneseq
  %v7674 = vshrl.u32 %v7673, 7
  %v7675 = vsub.s32 %v7672, %v7674
  %v7676 = vrot.slane %v7669, %v7675
  %v7678 = vunpack.c.l.s4 1966171168
  %v7679 = vunpack.c.0.s8 %v7678
  %v7680 = vlaneseq
  %v7681 = vshrl.u32 %v7680, 7
  %v7682 = vsub.s32 %v7679, %v7681
  %v7683 = vrot.slane %v4435, %v7682
  %v7685 = vunpack.c.l.s4 1966171168
  %v7686 = vunpack.c.0.s8 %v7685
  %v7687 = vlaneseq
  %v7688 = vshrl.u32 %v7687, 7
  %v7689 = vsub.s32 %v7686, %v7688
  %v7690 = vrot.slane %v7683, %v7689
  %v7692 = vunpack.c.l.s4 1966171168
  %v7693 = vunpack.c.0.s8 %v7692
  %v7694 = vlaneseq
  %v7695 = vshrl.u32 %v7694, 7
  %v7696 = vsub.s32 %v7693, %v7695
  %v7697 = vrot.slane %v4468, %v7696
  %v7699 = vunpack.c.l.s4 1966171168
  %v7700 = vunpack.c.0.s8 %v7699
  %v7701 = vlaneseq
  %v7702 = vshrl.u32 %v7701, 7
  %v7703 = vsub.s32 %v7700, %v7702
  %v7704 = vrot.slane %v7697, %v7703
  %v7706 = vunpack.c.l.s4 1966171168
  %v7707 = vunpack.c.0.s8 %v7706
  %v7708 = vlaneseq
  %v7709 = vshrl.u32 %v7708, 7
  %v7710 = vsub.s32 %v7707, %v7709
  %v7711 = vrot.slane %v4482, %v7710
  %v7713 = vunpack.c.l.s4 1966171168
  %v7714 = vunpack.c.0.s8 %v7713
  %v7715 = vlaneseq
  %v7716 = vshrl.u32 %v7715, 7
  %v7717 = vsub.s32 %v7714, %v7716
  %v7718 = vrot.slane %v7711, %v7717
  %v7720 = vunpack.c.l.s4 1966171168
  %v7721 = vunpack.c.0.s8 %v7720
  %v7722 = vlaneseq
  %v7723 = vshrl.u32 %v7722, 7
  %v7724 = vsub.s32 %v7721, %v7723
  %v7725 = vrot.slane %v4484, %v7724
  %v7727 = vunpack.c.l.s4 1966171168
  %v7728 = vunpack.c.0.s8 %v7727
  %v7729 = vlaneseq
  %v7730 = vshrl.u32 %v7729, 7
  %v7731 = vsub.s32 %v7728, %v7730
  %v7732 = vrot.slane %v7725, %v7731
  %v7734 = vunpack.c.l.s4 1966171168
  %v7735 = vunpack.c.0.s8 %v7734
  %v7736 = vlaneseq
  %v7737 = vshrl.u32 %v7736, 7
  %v7738 = vsub.s32 %v7735, %v7737
  %v7739 = vrot.slane %v4517, %v7738
  %v7741 = vunpack.c.l.s4 1966171168
  %v7742 = vunpack.c.0.s8 %v7741
  %v7743 = vlaneseq
  %v7744 = vshrl.u32 %v7743, 7
  %v7745 = vsub.s32 %v7742, %v7744
  %v7746 = vrot.slane %v7739, %v7745
  %v7748 = vunpack.c.l.s4 1966171168
  %v7749 = vunpack.c.0.s8 %v7748
  %v7750 = vlaneseq
  %v7751 = vshrl.u32 %v7750, 7
  %v7752 = vsub.s32 %v7749, %v7751
  %v7753 = vrot.slane %v4531, %v7752
  %v7755 = vunpack.c.l.s4 1966171168
  %v7756 = vunpack.c.0.s8 %v7755
  %v7757 = vlaneseq
  %v7758 = vshrl.u32 %v7757, 7
  %v7759 = vsub.s32 %v7756, %v7758
  %v7760 = vrot.slane %v7753, %v7759
  %v7762 = vunpack.c.l.s4 1966171168
  %v7763 = vunpack.c.0.s8 %v7762
  %v7764 = vlaneseq
  %v7765 = vshrl.u32 %v7764, 7
  %v7766 = vsub.s32 %v7763, %v7765
  %v7767 = vrot.slane %v4533, %v7766
  %v7769 = vunpack.c.l.s4 1966171168
  %v7770 = vunpack.c.0.s8 %v7769
  %v7771 = vlaneseq
  %v7772 = vshrl.u32 %v7771, 7
  %v7773 = vsub.s32 %v7770, %v7772
  %v7774 = vrot.slane %v7767, %v7773
  %v7776 = vunpack.c.l.s4 1966171168
  %v7777 = vunpack.c.0.s8 %v7776
  %v7778 = vlaneseq
  %v7779 = vshrl.u32 %v7778, 7
  %v7780 = vsub.s32 %v7777, %v7779
  %v7781 = vrot.slane %v4615, %v7780
  %v7783 = vunpack.c.l.s4 1966171168
  %v7784 = vunpack.c.0.s8 %v7783
  %v7785 = vlaneseq
  %v7786 = vshrl.u32 %v7785, 7
  %v7787 = vsub.s32 %v7784, %v7786
  %v7788 = vrot.slane %v7781, %v7787
  %v7790 = vunpack.c.l.s4 1966171168
  %v7791 = vunpack.c.0.s8 %v7790
  %v7792 = vlaneseq
  %v7793 = vshrl.u32 %v7792, 7
  %v7794 = vsub.s32 %v7791, %v7793
  %v7795 = vrot.slane %v4629, %v7794
  %v7797 = vunpack.c.l.s4 1966171168
  %v7798 = vunpack.c.0.s8 %v7797
  %v7799 = vlaneseq
  %v7800 = vshrl.u32 %v7799, 7
  %v7801 = vsub.s32 %v7798, %v7800
  %v7802 = vrot.slane %v7795, %v7801
  %v7804 = vunpack.c.l.s4 1966171168
  %v7805 = vunpack.c.0.s8 %v7804
  %v7806 = vlaneseq
  %v7807 = vshrl.u32 %v7806, 7
  %v7808 = vsub.s32 %v7805, %v7807
  %v7809 = vrot.slane %v4631, %v7808
  %v7811 = vunpack.c.l.s4 1966171168
  %v7812 = vunpack.c.0.s8 %v7811
  %v7813 = vlaneseq
  %v7814 = vshrl.u32 %v7813, 7
  %v7815 = vsub.s32 %v7812, %v7814
  %v7816 = vrot.slane %v7809, %v7815
  %v7818 = vunpack.c.l.s4 1966171168
  %v7819 = vunpack.c.0.s8 %v7818
  %v7820 = vlaneseq
  %v7821 = vshrl.u32 %v7820, 7
  %v7822 = vsub.s32 %v7819, %v7821
  %v7823 = vrot.slane %v4664, %v7822
  %v7825 = vunpack.c.l.s4 1966171168
  %v7826 = vunpack.c.0.s8 %v7825
  %v7827 = vlaneseq
  %v7828 = vshrl.u32 %v7827, 7
  %v7829 = vsub.s32 %v7826, %v7828
  %v7830 = vrot.slane %v7823, %v7829
  %v7832 = vunpack.c.l.s4 1966171168
  %v7833 = vunpack.c.0.s8 %v7832
  %v7834 = vlaneseq
  %v7835 = vshrl.u32 %v7834, 7
  %v7836 = vsub.s32 %v7833, %v7835
  %v7837 = vrot.slane %v4678, %v7836
  %v7839 = vunpack.c.l.s4 1966171168
  %v7840 = vunpack.c.0.s8 %v7839
  %v7841 = vlaneseq
  %v7842 = vshrl.u32 %v7841, 7
  %v7843 = vsub.s32 %v7840, %v7842
  %v7844 = vrot.slane %v7837, %v7843
  %v7846 = vunpack.c.l.s4 1966171168
  %v7847 = vunpack.c.0.s8 %v7846
  %v7848 = vlaneseq
  %v7849 = vshrl.u32 %v7848, 7
  %v7850 = vsub.s32 %v7847, %v7849
  %v7851 = vrot.slane %v4680, %v7850
  %v7853 = vunpack.c.l.s4 1966171168
  %v7854 = vunpack.c.0.s8 %v7853
  %v7855 = vlaneseq
  %v7856 = vshrl.u32 %v7855, 7
  %v7857 = vsub.s32 %v7854, %v7856
  %v7858 = vrot.slane %v7851, %v7857
  %v7860 = vunpack.c.l.s4 1966171168
  %v7861 = vunpack.c.0.s8 %v7860
  %v7862 = vlaneseq
  %v7863 = vshrl.u32 %v7862, 7
  %v7864 = vsub.s32 %v7861, %v7863
  %v7865 = vrot.slane %v4713, %v7864
  %v7867 = vunpack.c.l.s4 1966171168
  %v7868 = vunpack.c.0.s8 %v7867
  %v7869 = vlaneseq
  %v7870 = vshrl.u32 %v7869, 7
  %v7871 = vsub.s32 %v7868, %v7870
  %v7872 = vrot.slane %v7865, %v7871
  %v7874 = vunpack.c.l.s4 1966171168
  %v7875 = vunpack.c.0.s8 %v7874
  %v7876 = vlaneseq
  %v7877 = vshrl.u32 %v7876, 7
  %v7878 = vsub.s32 %v7875, %v7877
  %v7879 = vrot.slane %v4727, %v7878
  %v7881 = vunpack.c.l.s4 1966171168
  %v7882 = vunpack.c.0.s8 %v7881
  %v7883 = vlaneseq
  %v7884 = vshrl.u32 %v7883, 7
  %v7885 = vsub.s32 %v7882, %v7884
  %v7886 = vrot.slane %v7879, %v7885
  %v7888 = vunpack.c.l.s4 1966171168
  %v7889 = vunpack.c.0.s8 %v7888
  %v7890 = vlaneseq
  %v7891 = vshrl.u32 %v7890, 7
  %v7892 = vsub.s32 %v7889, %v7891
  %v7893 = vrot.slane %v4729, %v7892
  %v7895 = vunpack.c.l.s4 1966171168
  %v7896 = vunpack.c.0.s8 %v7895
  %v7897 = vlaneseq
  %v7898 = vshrl.u32 %v7897, 7
  %v7899 = vsub.s32 %v7896, %v7898
  %v7900 = vrot.slane %v7893, %v7899
  %v7902 = vunpack.c.l.s4 1966171168
  %v7903 = vunpack.c.0.s8 %v7902
  %v7904 = vlaneseq
  %v7905 = vshrl.u32 %v7904, 7
  %v7906 = vsub.s32 %v7903, %v7905
  %v7907 = vrot.slane %v4811, %v7906
  %v7909 = vunpack.c.l.s4 1966171168
  %v7910 = vunpack.c.0.s8 %v7909
  %v7911 = vlaneseq
  %v7912 = vshrl.u32 %v7911, 7
  %v7913 = vsub.s32 %v7910, %v7912
  %v7914 = vrot.slane %v7907, %v7913
  %v7916 = vunpack.c.l.s4 1966171168
  %v7917 = vunpack.c.0.s8 %v7916
  %v7918 = vlaneseq
  %v7919 = vshrl.u32 %v7918, 7
  %v7920 = vsub.s32 %v7917, %v7919
  %v7921 = vrot.slane %v4825, %v7920
  %v7923 = vunpack.c.l.s4 1966171168
  %v7924 = vunpack.c.0.s8 %v7923
  %v7925 = vlaneseq
  %v7926 = vshrl.u32 %v7925, 7
  %v7927 = vsub.s32 %v7924, %v7926
  %v7928 = vrot.slane %v7921, %v7927
  %v7930 = vunpack.c.l.s4 1966171168
  %v7931 = vunpack.c.0.s8 %v7930
  %v7932 = vlaneseq
  %v7933 = vshrl.u32 %v7932, 7
  %v7934 = vsub.s32 %v7931, %v7933
  %v7935 = vrot.slane %v4827, %v7934
  %v7937 = vunpack.c.l.s4 1966171168
  %v7938 = vunpack.c.0.s8 %v7937
  %v7939 = vlaneseq
  %v7940 = vshrl.u32 %v7939, 7
  %v7941 = vsub.s32 %v7938, %v7940
  %v7942 = vrot.slane %v7935, %v7941
  %v7944 = vunpack.c.l.s4 1966171168
  %v7945 = vunpack.c.0.s8 %v7944
  %v7946 = vlaneseq
  %v7947 = vshrl.u32 %v7946, 7
  %v7948 = vsub.s32 %v7945, %v7947
  %v7949 = vrot.slane %v4860, %v7948
  %v7951 = vunpack.c.l.s4 1966171168
  %v7952 = vunpack.c.0.s8 %v7951
  %v7953 = vlaneseq
  %v7954 = vshrl.u32 %v7953, 7
  %v7955 = vsub.s32 %v7952, %v7954
  %v7956 = vrot.slane %v7949, %v7955
  %v7958 = vunpack.c.l.s4 1966171168
  %v7959 = vunpack.c.0.s8 %v7958
  %v7960 = vlaneseq
  %v7961 = vshrl.u32 %v7960, 7
  %v7962 = vsub.s32 %v7959, %v7961
  %v7963 = vrot.slane %v4874, %v7962
  %v7965 = vunpack.c.l.s4 1966171168
  %v7966 = vunpack.c.0.s8 %v7965
  %v7967 = vlaneseq
  %v7968 = vshrl.u32 %v7967, 7
  %v7969 = vsub.s32 %v7966, %v7968
  %v7970 = vrot.slane %v7963, %v7969
  %v7972 = vunpack.c.l.s4 1966171168
  %v7973 = vunpack.c.0.s8 %v7972
  %v7974 = vlaneseq
  %v7975 = vshrl.u32 %v7974, 7
  %v7976 = vsub.s32 %v7973, %v7975
  %v7977 = vrot.slane %v4876, %v7976
  %v7979 = vunpack.c.l.s4 1966171168
  %v7980 = vunpack.c.0.s8 %v7979
  %v7981 = vlaneseq
  %v7982 = vshrl.u32 %v7981, 7
  %v7983 = vsub.s32 %v7980, %v7982
  %v7984 = vrot.slane %v7977, %v7983
  %v7986 = vunpack.c.l.s4 1966171168
  %v7987 = vunpack.c.0.s8 %v7986
  %v7988 = vlaneseq
  %v7989 = vshrl.u32 %v7988, 7
  %v7990 = vsub.s32 %v7987, %v7989
  %v7991 = vrot.slane %v4909, %v7990
  %v7993 = vunpack.c.l.s4 1966171168
  %v7994 = vunpack.c.0.s8 %v7993
  %v7995 = vlaneseq
  %v7996 = vshrl.u32 %v7995, 7
  %v7997 = vsub.s32 %v7994, %v7996
  %v7998 = vrot.slane %v7991, %v7997
  %v8000 = vunpack.c.l.s4 1966171168
  %v8001 = vunpack.c.0.s8 %v8000
  %v8002 = vlaneseq
  %v8003 = vshrl.u32 %v8002, 7
  %v8004 = vsub.s32 %v8001, %v8003
  %v8005 = vrot.slane %v4923, %v8004
  %v8007 = vunpack.c.l.s4 1966171168
  %v8008 = vunpack.c.0.s8 %v8007
  %v8009 = vlaneseq
  %v8010 = vshrl.u32 %v8009, 7
  %v8011 = vsub.s32 %v8008, %v8010
  %v8012 = vrot.slane %v8005, %v8011
  %v8014 = vunpack.c.l.s4 1966171168
  %v8015 = vunpack.c.0.s8 %v8014
  %v8016 = vlaneseq
  %v8017 = vshrl.u32 %v8016, 7
  %v8018 = vsub.s32 %v8015, %v8017
  %v8019 = vrot.slane %v4925, %v8018
  %v8021 = vunpack.c.l.s4 1966171168
  %v8022 = vunpack.c.0.s8 %v8021
  %v8023 = vlaneseq
  %v8024 = vshrl.u32 %v8023, 7
  %v8025 = vsub.s32 %v8022, %v8024
  %v8026 = vrot.slane %v8019, %v8025
  %v8027 = vunpack.c.l.b16 %v7032
  %v8028 = vunpack.c.l.b16 %v7046
  %v8029 = vunpack.c.l.b16 %v7060
  %v8030 = vunpack.c.l.b16 %v7074
  %v8031 = vunpack.c.l.b16 %v7088
  %v8032 = vunpack.c.l.b16 %v7102
  %v8033 = vunpack.c.l.b16 %v7116
  %v8034 = vunpack.c.l.b16 %v7130
  %v8035 = vunpack.c.l.b16 %v7144
  %v8036 = vunpack.c.l.b16 %v7158
  %v8037 = vunpack.c.l.b16 %v7172
  %v8038 = vunpack.c.l.b16 %v7186
  %v8039 = vunpack.c.l.b16 %v7200
  %v8040 = vunpack.c.l.b16 %v7214
  %v8041 = vunpack.c.l.b16 %v7228
  %v8042 = vunpack.c.l.b16 %v7242
  %v8043 = vunpack.c.l.b16 %v7256
  %v8044 = vunpack.c.l.b16 %v7270
  %v8045 = vunpack.c.l.b16 %v7284
  %v8046 = vunpack.c.l.b16 %v7298
  %v8047 = vunpack.c.l.b16 %v7312
  %v8048 = vunpack.c.l.b16 %v7326
  %v8049 = vunpack.c.l.b16 %v7340
  %v8050 = vunpack.c.l.b16 %v7354
  %v8051 = vunpack.c.l.b16 %v7368
  %v8052 = vunpack.c.l.b16 %v7382
  %v8053 = vunpack.c.l.b16 %v7396
  %v8054 = vunpack.c.l.b16 %v7410
  %v8055 = vunpack.c.l.b16 %v7424
  %v8056 = vunpack.c.l.b16 %v7438
  %v8057 = vunpack.c.l.b16 %v7452
  %v8058 = vunpack.c.l.b16 %v7466
  %v8059 = vunpack.c.l.b16 %v7480
  %v8060 = vunpack.c.l.b16 %v7494
  %v8061 = vunpack.c.l.b16 %v7508
  %v8062 = vunpack.c.l.b16 %v7522
  %v8063 = vunpack.c.l.b16 %v7536
  %v8064 = vunpack.c.l.b16 %v7550
  %v8065 = vunpack.c.l.b16 %v7564
  %v8066 = vunpack.c.l.b16 %v7578
  %v8067 = vunpack.c.l.b16 %v7592
  %v8068 = vunpack.c.l.b16 %v7606
  %v8069 = vunpack.c.l.b16 %v7620
  %v8070 = vunpack.c.l.b16 %v7634
  %v8071 = vunpack.c.l.b16 %v7648
  %v8072 = vunpack.c.l.b16 %v7662
  %v8073 = vunpack.c.l.b16 %v7676
  %v8074 = vunpack.c.l.b16 %v7690
  %v8075 = vunpack.c.l.b16 %v7704
  %v8076 = vunpack.c.l.b16 %v7718
  %v8077 = vunpack.c.l.b16 %v7732
  %v8078 = vunpack.c.l.b16 %v7746
  %v8079 = vunpack.c.l.b16 %v7760
  %v8080 = vunpack.c.l.b16 %v7774
  %v8081 = vunpack.c.l.b16 %v7788
  %v8082 = vunpack.c.l.b16 %v7802
  %v8083 = vunpack.c.l.b16 %v7816
  %v8084 = vunpack.c.l.b16 %v7830
  %v8085 = vunpack.c.l.b16 %v7844
  %v8086 = vunpack.c.l.b16 %v7858
  %v8087 = vunpack.c.l.b16 %v7872
  %v8088 = vunpack.c.l.b16 %v7886
  %v8089 = vunpack.c.l.b16 %v7900
  %v8090 = vunpack.c.l.b16 %v7914
  %v8091 = vunpack.c.l.b16 %v7928
  %v8092 = vunpack.c.l.b16 %v7942
  %v8093 = vunpack.c.l.b16 %v7956
  %v8094 = vunpack.c.l.b16 %v7970
  %v8095 = vunpack.c.l.b16 %v7984
  %v8096 = vunpack.c.l.b16 %v7998
  %v8097 = vunpack.c.l.b16 %v8012
  %v8098 = vunpack.c.l.b16 %v8026
  %v8099 = vrot.slane %v8028, 7
  %v8100 = vsel %vm6058, %v8099, %v8027
  %v8101 = vrot.slane %v8029, 6
  %v8102 = vsel %vm6061, %v8101, %v8100
  %v8103 = vrot.slane %v8031, 7
  %v8104 = vsel %vm6058, %v8103, %v8030
  %v8105 = vrot.slane %v8032, 6
  %v8106 = vsel %vm6061, %v8105, %v8104
  %v8107 = vrot.slane %v8034, 7
  %v8108 = vsel %vm6058, %v8107, %v8033
  %v8109 = vrot.slane %v8035, 6
  %v8110 = vsel %vm6061, %v8109, %v8108
  %v8111 = vrot.slane %v8037, 7
  %v8112 = vsel %vm6058, %v8111, %v8036
  %v8113 = vrot.slane %v8038, 6
  %v8114 = vsel %vm6061, %v8113, %v8112
  %v8115 = vrot.slane %v8040, 7
  %v8116 = vsel %vm6058, %v8115, %v8039
  %v8117 = vrot.slane %v8041, 6
  %v8118 = vsel %vm6061, %v8117, %v8116
  %v8119 = vrot.slane %v8043, 7
  %v8120 = vsel %vm6058, %v8119, %v8042
  %v8121 = vrot.slane %v8044, 6
  %v8122 = vsel %vm6061, %v8121, %v8120
  %v8123 = vrot.slane %v8046, 7
  %v8124 = vsel %vm6058, %v8123, %v8045
  %v8125 = vrot.slane %v8047, 6
  %v8126 = vsel %vm6061, %v8125, %v8124
  %v8127 = vrot.slane %v8049, 7
  %v8128 = vsel %vm6058, %v8127, %v8048
  %v8129 = vrot.slane %v8050, 6
  %v8130 = vsel %vm6061, %v8129, %v8128
  %v8131 = vrot.slane %v8052, 7
  %v8132 = vsel %vm6058, %v8131, %v8051
  %v8133 = vrot.slane %v8053, 6
  %v8134 = vsel %vm6061, %v8133, %v8132
  %v8135 = vrot.slane %v8055, 7
  %v8136 = vsel %vm6058, %v8135, %v8054
  %v8137 = vrot.slane %v8056, 6
  %v8138 = vsel %vm6061, %v8137, %v8136
  %v8139 = vrot.slane %v8058, 7
  %v8140 = vsel %vm6058, %v8139, %v8057
  %v8141 = vrot.slane %v8059, 6
  %v8142 = vsel %vm6061, %v8141, %v8140
  %v8143 = vrot.slane %v8061, 7
  %v8144 = vsel %vm6058, %v8143, %v8060
  %v8145 = vrot.slane %v8062, 6
  %v8146 = vsel %vm6061, %v8145, %v8144
  %v8147 = vrot.slane %v8064, 7
  %v8148 = vsel %vm6058, %v8147, %v8063
  %v8149 = vrot.slane %v8065, 6
  %v8150 = vsel %vm6061, %v8149, %v8148
  %v8151 = vrot.slane %v8067, 7
  %v8152 = vsel %vm6058, %v8151, %v8066
  %v8153 = vrot.slane %v8068, 6
  %v8154 = vsel %vm6061, %v8153, %v8152
  %v8155 = vrot.slane %v8070, 7
  %v8156 = vsel %vm6058, %v8155, %v8069
  %v8157 = vrot.slane %v8071, 6
  %v8158 = vsel %vm6061, %v8157, %v8156
  %v8159 = vrot.slane %v8073, 7
  %v8160 = vsel %vm6058, %v8159, %v8072
  %v8161 = vrot.slane %v8074, 6
  %v8162 = vsel %vm6061, %v8161, %v8160
  %v8163 = vrot.slane %v8076, 7
  %v8164 = vsel %vm6058, %v8163, %v8075
  %v8165 = vrot.slane %v8077, 6
  %v8166 = vsel %vm6061, %v8165, %v8164
  %v8167 = vrot.slane %v8079, 7
  %v8168 = vsel %vm6058, %v8167, %v8078
  %v8169 = vrot.slane %v8080, 6
  %v8170 = vsel %vm6061, %v8169, %v8168
  %v8171 = vrot.slane %v8082, 7
  %v8172 = vsel %vm6058, %v8171, %v8081
  %v8173 = vrot.slane %v8083, 6
  %v8174 = vsel %vm6061, %v8173, %v8172
  %v8175 = vrot.slane %v8085, 7
  %v8176 = vsel %vm6058, %v8175, %v8084
  %v8177 = vrot.slane %v8086, 6
  %v8178 = vsel %vm6061, %v8177, %v8176
  %v8179 = vrot.slane %v8088, 7
  %v8180 = vsel %vm6058, %v8179, %v8087
  %v8181 = vrot.slane %v8089, 6
  %v8182 = vsel %vm6061, %v8181, %v8180
  %v8183 = vrot.slane %v8091, 7
  %v8184 = vsel %vm6058, %v8183, %v8090
  %v8185 = vrot.slane %v8092, 6
  %v8186 = vsel %vm6061, %v8185, %v8184
  %v8187 = vrot.slane %v8094, 7
  %v8188 = vsel %vm6058, %v8187, %v8093
  %v8189 = vrot.slane %v8095, 6
  %v8190 = vsel %vm6061, %v8189, %v8188
  %v8191 = vrot.slane %v8097, 7
  %v8192 = vsel %vm6058, %v8191, %v8096
  %v8193 = vrot.slane %v8098, 6
  %v8194 = vsel %vm6061, %v8193, %v8192
  %v8195 = vpack.c.b16 %v8102, %v8102
  %v8196 = vpack.c.b16 %v8106, %v8106
  %v8197 = vpack.c.b16 %v8110, %v8110
  %v8198 = vpack.c.b16 %v8114, %v8114
  %v8199 = vpack.c.b16 %v8118, %v8118
  %v8200 = vpack.c.b16 %v8122, %v8122
  %v8201 = vpack.c.b16 %v8126, %v8126
  %v8202 = vpack.c.b16 %v8130, %v8130
  %v8203 = vpack.c.b16 %v8134, %v8134
  %v8204 = vpack.c.b16 %v8138, %v8138
  %v8205 = vpack.c.b16 %v8142, %v8142
  %v8206 = vpack.c.b16 %v8146, %v8146
  %v8207 = vpack.c.b16 %v8150, %v8150
  %v8208 = vpack.c.b16 %v8154, %v8154
  %v8209 = vpack.c.b16 %v8158, %v8158
  %v8210 = vpack.c.b16 %v8162, %v8162
  %v8211 = vpack.c.b16 %v8166, %v8166
  %v8212 = vpack.c.b16 %v8170, %v8170
  %v8213 = vpack.c.b16 %v8174, %v8174
  %v8214 = vpack.c.b16 %v8178, %v8178
  %v8215 = vpack.c.b16 %v8182, %v8182
  %v8216 = vpack.c.b16 %v8186, %v8186
  %v8217 = vpack.c.b16 %v8190, %v8190
  %v8218 = vpack.c.b16 %v8194, %v8194
  %v8219 = vrot.slane %v8027, 1
  %v8220 = vsel %vm6058, %v8028, %v8219
  %v8221 = vrot.slane %v8029, 7
  %v8222 = vsel %vm6061, %v8221, %v8220
  %v8223 = vrot.slane %v8030, 1
  %v8224 = vsel %vm6058, %v8031, %v8223
  %v8225 = vrot.slane %v8032, 7
  %v8226 = vsel %vm6061, %v8225, %v8224
  %v8227 = vrot.slane %v8033, 1
  %v8228 = vsel %vm6058, %v8034, %v8227
  %v8229 = vrot.slane %v8035, 7
  %v8230 = vsel %vm6061, %v8229, %v8228
  %v8231 = vrot.slane %v8036, 1
  %v8232 = vsel %vm6058, %v8037, %v8231
  %v8233 = vrot.slane %v8038, 7
  %v8234 = vsel %vm6061, %v8233, %v8232
  %v8235 = vrot.slane %v8039, 1
  %v8236 = vsel %vm6058, %v8040, %v8235
  %v8237 = vrot.slane %v8041, 7
  %v8238 = vsel %vm6061, %v8237, %v8236
  %v8239 = vrot.slane %v8042, 1
  %v8240 = vsel %vm6058, %v8043, %v8239
  %v8241 = vrot.slane %v8044, 7
  %v8242 = vsel %vm6061, %v8241, %v8240
  %v8243 = vrot.slane %v8045, 1
  %v8244 = vsel %vm6058, %v8046, %v8243
  %v8245 = vrot.slane %v8047, 7
  %v8246 = vsel %vm6061, %v8245, %v8244
  %v8247 = vrot.slane %v8048, 1
  %v8248 = vsel %vm6058, %v8049, %v8247
  %v8249 = vrot.slane %v8050, 7
  %v8250 = vsel %vm6061, %v8249, %v8248
  %v8251 = vrot.slane %v8051, 1
  %v8252 = vsel %vm6058, %v8052, %v8251
  %v8253 = vrot.slane %v8053, 7
  %v8254 = vsel %vm6061, %v8253, %v8252
  %v8255 = vrot.slane %v8054, 1
  %v8256 = vsel %vm6058, %v8055, %v8255
  %v8257 = vrot.slane %v8056, 7
  %v8258 = vsel %vm6061, %v8257, %v8256
  %v8259 = vrot.slane %v8057, 1
  %v8260 = vsel %vm6058, %v8058, %v8259
  %v8261 = vrot.slane %v8059, 7
  %v8262 = vsel %vm6061, %v8261, %v8260
  %v8263 = vrot.slane %v8060, 1
  %v8264 = vsel %vm6058, %v8061, %v8263
  %v8265 = vrot.slane %v8062, 7
  %v8266 = vsel %vm6061, %v8265, %v8264
  %v8267 = vrot.slane %v8063, 1
  %v8268 = vsel %vm6058, %v8064, %v8267
  %v8269 = vrot.slane %v8065, 7
  %v8270 = vsel %vm6061, %v8269, %v8268
  %v8271 = vrot.slane %v8066, 1
  %v8272 = vsel %vm6058, %v8067, %v8271
  %v8273 = vrot.slane %v8068, 7
  %v8274 = vsel %vm6061, %v8273, %v8272
  %v8275 = vrot.slane %v8069, 1
  %v8276 = vsel %vm6058, %v8070, %v8275
  %v8277 = vrot.slane %v8071, 7
  %v8278 = vsel %vm6061, %v8277, %v8276
  %v8279 = vrot.slane %v8072, 1
  %v8280 = vsel %vm6058, %v8073, %v8279
  %v8281 = vrot.slane %v8074, 7
  %v8282 = vsel %vm6061, %v8281, %v8280
  %v8283 = vrot.slane %v8075, 1
  %v8284 = vsel %vm6058, %v8076, %v8283
  %v8285 = vrot.slane %v8077, 7
  %v8286 = vsel %vm6061, %v8285, %v8284
  %v8287 = vrot.slane %v8078, 1
  %v8288 = vsel %vm6058, %v8079, %v8287
  %v8289 = vrot.slane %v8080, 7
  %v8290 = vsel %vm6061, %v8289, %v8288
  %v8291 = vrot.slane %v8081, 1
  %v8292 = vsel %vm6058, %v8082, %v8291
  %v8293 = vrot.slane %v8083, 7
  %v8294 = vsel %vm6061, %v8293, %v8292
  %v8295 = vrot.slane %v8084, 1
  %v8296 = vsel %vm6058, %v8085, %v8295
  %v8297 = vrot.slane %v8086, 7
  %v8298 = vsel %vm6061, %v8297, %v8296
  %v8299 = vrot.slane %v8087, 1
  %v8300 = vsel %vm6058, %v8088, %v8299
  %v8301 = vrot.slane %v8089, 7
  %v8302 = vsel %vm6061, %v8301, %v8300
  %v8303 = vrot.slane %v8090, 1
  %v8304 = vsel %vm6058, %v8091, %v8303
  %v8305 = vrot.slane %v8092, 7
  %v8306 = vsel %vm6061, %v8305, %v8304
  %v8307 = vrot.slane %v8093, 1
  %v8308 = vsel %vm6058, %v8094, %v8307
  %v8309 = vrot.slane %v8095, 7
  %v8310 = vsel %vm6061, %v8309, %v8308
  %v8311 = vrot.slane %v8096, 1
  %v8312 = vsel %vm6058, %v8097, %v8311
  %v8313 = vrot.slane %v8098, 7
  %v8314 = vsel %vm6061, %v8313, %v8312
  %v8315 = vpack.c.b16 %v8222, %v8222
  %v8316 = vpack.c.b16 %v8226, %v8226
  %v8317 = vpack.c.b16 %v8230, %v8230
  %v8318 = vpack.c.b16 %v8234, %v8234
  %v8319 = vpack.c.b16 %v8238, %v8238
  %v8320 = vpack.c.b16 %v8242, %v8242
  %v8321 = vpack.c.b16 %v8246, %v8246
  %v8322 = vpack.c.b16 %v8250, %v8250
  %v8323 = vpack.c.b16 %v8254, %v8254
  %v8324 = vpack.c.b16 %v8258, %v8258
  %v8325 = vpack.c.b16 %v8262, %v8262
  %v8326 = vpack.c.b16 %v8266, %v8266
  %v8327 = vpack.c.b16 %v8270, %v8270
  %v8328 = vpack.c.b16 %v8274, %v8274
  %v8329 = vpack.c.b16 %v8278, %v8278
  %v8330 = vpack.c.b16 %v8282, %v8282
  %v8331 = vpack.c.b16 %v8286, %v8286
  %v8332 = vpack.c.b16 %v8290, %v8290
  %v8333 = vpack.c.b16 %v8294, %v8294
  %v8334 = vpack.c.b16 %v8298, %v8298
  %v8335 = vpack.c.b16 %v8302, %v8302
  %v8336 = vpack.c.b16 %v8306, %v8306
  %v8337 = vpack.c.b16 %v8310, %v8310
  %v8338 = vpack.c.b16 %v8314, %v8314
  %8339 = vrot.lane.b32.xlu0 %v8315, 32
  %v8340 = vpop.permute.xlu0 %8339
  %8341 = vrot.lane.b32.xlu0 %v8316, 32
  %v8342 = vpop.permute.xlu0 %8341
  %8343 = vrot.lane.b32.xlu0 %v8317, 32
  %v8344 = vpop.permute.xlu0 %8343
  %8345 = vrot.lane.b32.xlu0 %v8318, 32
  %v8346 = vpop.permute.xlu0 %8345
  %8347 = vrot.lane.b32.xlu0 %v8319, 32
  %v8348 = vpop.permute.xlu0 %8347
  %8349 = vrot.lane.b32.xlu0 %v8320, 32
  %v8350 = vpop.permute.xlu0 %8349
  %8351 = vrot.lane.b32.xlu0 %v8321, 32
  %v8352 = vpop.permute.xlu0 %8351
  %8353 = vrot.lane.b32.xlu0 %v8322, 32
  %v8354 = vpop.permute.xlu0 %8353
  %8355 = vrot.lane.b32.xlu0 %v8323, 32
  %v8356 = vpop.permute.xlu0 %8355
  %8357 = vrot.lane.b32.xlu0 %v8324, 32
  %v8358 = vpop.permute.xlu0 %8357
  %8359 = vrot.lane.b32.xlu0 %v8325, 32
  %v8360 = vpop.permute.xlu0 %8359
  %8361 = vrot.lane.b32.xlu0 %v8326, 32
  %v8362 = vpop.permute.xlu0 %8361
  %8363 = vrot.lane.b32.xlu0 %v8327, 32
  %v8364 = vpop.permute.xlu0 %8363
  %8365 = vrot.lane.b32.xlu0 %v8328, 32
  %v8366 = vpop.permute.xlu0 %8365
  %8367 = vrot.lane.b32.xlu0 %v8329, 32
  %v8368 = vpop.permute.xlu0 %8367
  %8369 = vrot.lane.b32.xlu0 %v8330, 32
  %v8370 = vpop.permute.xlu0 %8369
  %8371 = vrot.lane.b32.xlu0 %v8331, 32
  %v8372 = vpop.permute.xlu0 %8371
  %8373 = vrot.lane.b32.xlu0 %v8332, 32
  %v8374 = vpop.permute.xlu0 %8373
  %8375 = vrot.lane.b32.xlu0 %v8333, 32
  %v8376 = vpop.permute.xlu0 %8375
  %8377 = vrot.lane.b32.xlu0 %v8334, 32
  %v8378 = vpop.permute.xlu0 %8377
  %8379 = vrot.lane.b32.xlu0 %v8335, 32
  %v8380 = vpop.permute.xlu0 %8379
  %8381 = vrot.lane.b32.xlu0 %v8336, 32
  %v8382 = vpop.permute.xlu0 %8381
  %8383 = vrot.lane.b32.xlu0 %v8337, 32
  %v8384 = vpop.permute.xlu0 %8383
  %8385 = vrot.lane.b32.xlu0 %v8338, 32
  %v8386 = vpop.permute.xlu0 %8385
  %v8388 = vunpack.c.l.s4 1966171168
  %v8389 = vunpack.c.0.s8 %v8388
  %v8390 = vlaneseq
  %v8391 = vshrl.u32 %v8390, 7
  %v8392 = vsub.s32 %v8389, %v8391
  %v8393 = vrot.slane %v3457, %v8392
  %v8395 = vunpack.c.l.s4 1966171168
  %v8396 = vunpack.c.0.s8 %v8395
  %v8397 = vlaneseq
  %v8398 = vshrl.u32 %v8397, 7
  %v8399 = vsub.s32 %v8396, %v8398
  %v8400 = vrot.slane %v8393, %v8399
  %v8402 = vunpack.c.l.s4 1966171168
  %v8403 = vunpack.c.0.s8 %v8402
  %v8404 = vlaneseq
  %v8405 = vshrl.u32 %v8404, 7
  %v8406 = vsub.s32 %v8403, %v8405
  %v8407 = vrot.slane %v3506, %v8406
  %v8409 = vunpack.c.l.s4 1966171168
  %v8410 = vunpack.c.0.s8 %v8409
  %v8411 = vlaneseq
  %v8412 = vshrl.u32 %v8411, 7
  %v8413 = vsub.s32 %v8410, %v8412
  %v8414 = vrot.slane %v8407, %v8413
  %v8416 = vunpack.c.l.s4 1966171168
  %v8417 = vunpack.c.0.s8 %v8416
  %v8418 = vlaneseq
  %v8419 = vshrl.u32 %v8418, 7
  %v8420 = vsub.s32 %v8417, %v8419
  %v8421 = vrot.slane %v3555, %v8420
  %v8423 = vunpack.c.l.s4 1966171168
  %v8424 = vunpack.c.0.s8 %v8423
  %v8425 = vlaneseq
  %v8426 = vshrl.u32 %v8425, 7
  %v8427 = vsub.s32 %v8424, %v8426
  %v8428 = vrot.slane %v8421, %v8427
  %v8430 = vunpack.c.l.s4 1966171168
  %v8431 = vunpack.c.0.s8 %v8430
  %v8432 = vlaneseq
  %v8433 = vshrl.u32 %v8432, 7
  %v8434 = vsub.s32 %v8431, %v8433
  %v8435 = vrot.slane %v3653, %v8434
  %v8437 = vunpack.c.l.s4 1966171168
  %v8438 = vunpack.c.0.s8 %v8437
  %v8439 = vlaneseq
  %v8440 = vshrl.u32 %v8439, 7
  %v8441 = vsub.s32 %v8438, %v8440
  %v8442 = vrot.slane %v8435, %v8441
  %v8444 = vunpack.c.l.s4 1966171168
  %v8445 = vunpack.c.0.s8 %v8444
  %v8446 = vlaneseq
  %v8447 = vshrl.u32 %v8446, 7
  %v8448 = vsub.s32 %v8445, %v8447
  %v8449 = vrot.slane %v3702, %v8448
  %v8451 = vunpack.c.l.s4 1966171168
  %v8452 = vunpack.c.0.s8 %v8451
  %v8453 = vlaneseq
  %v8454 = vshrl.u32 %v8453, 7
  %v8455 = vsub.s32 %v8452, %v8454
  %v8456 = vrot.slane %v8449, %v8455
  %v8458 = vunpack.c.l.s4 1966171168
  %v8459 = vunpack.c.0.s8 %v8458
  %v8460 = vlaneseq
  %v8461 = vshrl.u32 %v8460, 7
  %v8462 = vsub.s32 %v8459, %v8461
  %v8463 = vrot.slane %v3751, %v8462
  %v8465 = vunpack.c.l.s4 1966171168
  %v8466 = vunpack.c.0.s8 %v8465
  %v8467 = vlaneseq
  %v8468 = vshrl.u32 %v8467, 7
  %v8469 = vsub.s32 %v8466, %v8468
  %v8470 = vrot.slane %v8463, %v8469
  %v8472 = vunpack.c.l.s4 1966171168
  %v8473 = vunpack.c.0.s8 %v8472
  %v8474 = vlaneseq
  %v8475 = vshrl.u32 %v8474, 7
  %v8476 = vsub.s32 %v8473, %v8475
  %v8477 = vrot.slane %v3849, %v8476
  %v8479 = vunpack.c.l.s4 1966171168
  %v8480 = vunpack.c.0.s8 %v8479
  %v8481 = vlaneseq
  %v8482 = vshrl.u32 %v8481, 7
  %v8483 = vsub.s32 %v8480, %v8482
  %v8484 = vrot.slane %v8477, %v8483
  %v8486 = vunpack.c.l.s4 1966171168
  %v8487 = vunpack.c.0.s8 %v8486
  %v8488 = vlaneseq
  %v8489 = vshrl.u32 %v8488, 7
  %v8490 = vsub.s32 %v8487, %v8489
  %v8491 = vrot.slane %v3898, %v8490
  %v8493 = vunpack.c.l.s4 1966171168
  %v8494 = vunpack.c.0.s8 %v8493
  %v8495 = vlaneseq
  %v8496 = vshrl.u32 %v8495, 7
  %v8497 = vsub.s32 %v8494, %v8496
  %v8498 = vrot.slane %v8491, %v8497
  %v8500 = vunpack.c.l.s4 1966171168
  %v8501 = vunpack.c.0.s8 %v8500
  %v8502 = vlaneseq
  %v8503 = vshrl.u32 %v8502, 7
  %v8504 = vsub.s32 %v8501, %v8503
  %v8505 = vrot.slane %v3947, %v8504
  %v8507 = vunpack.c.l.s4 1966171168
  %v8508 = vunpack.c.0.s8 %v8507
  %v8509 = vlaneseq
  %v8510 = vshrl.u32 %v8509, 7
  %v8511 = vsub.s32 %v8508, %v8510
  %v8512 = vrot.slane %v8505, %v8511
  %v8514 = vunpack.c.l.s4 1966171168
  %v8515 = vunpack.c.0.s8 %v8514
  %v8516 = vlaneseq
  %v8517 = vshrl.u32 %v8516, 7
  %v8518 = vsub.s32 %v8515, %v8517
  %v8519 = vrot.slane %v4045, %v8518
  %v8521 = vunpack.c.l.s4 1966171168
  %v8522 = vunpack.c.0.s8 %v8521
  %v8523 = vlaneseq
  %v8524 = vshrl.u32 %v8523, 7
  %v8525 = vsub.s32 %v8522, %v8524
  %v8526 = vrot.slane %v8519, %v8525
  %v8528 = vunpack.c.l.s4 1966171168
  %v8529 = vunpack.c.0.s8 %v8528
  %v8530 = vlaneseq
  %v8531 = vshrl.u32 %v8530, 7
  %v8532 = vsub.s32 %v8529, %v8531
  %v8533 = vrot.slane %v4094, %v8532
  %v8535 = vunpack.c.l.s4 1966171168
  %v8536 = vunpack.c.0.s8 %v8535
  %v8537 = vlaneseq
  %v8538 = vshrl.u32 %v8537, 7
  %v8539 = vsub.s32 %v8536, %v8538
  %v8540 = vrot.slane %v8533, %v8539
  %v8542 = vunpack.c.l.s4 1966171168
  %v8543 = vunpack.c.0.s8 %v8542
  %v8544 = vlaneseq
  %v8545 = vshrl.u32 %v8544, 7
  %v8546 = vsub.s32 %v8543, %v8545
  %v8547 = vrot.slane %v4143, %v8546
  %v8549 = vunpack.c.l.s4 1966171168
  %v8550 = vunpack.c.0.s8 %v8549
  %v8551 = vlaneseq
  %v8552 = vshrl.u32 %v8551, 7
  %v8553 = vsub.s32 %v8550, %v8552
  %v8554 = vrot.slane %v8547, %v8553
  %v8556 = vunpack.c.l.s4 1966171168
  %v8557 = vunpack.c.0.s8 %v8556
  %v8558 = vlaneseq
  %v8559 = vshrl.u32 %v8558, 7
  %v8560 = vsub.s32 %v8557, %v8559
  %v8561 = vrot.slane %v4241, %v8560
  %v8563 = vunpack.c.l.s4 1966171168
  %v8564 = vunpack.c.0.s8 %v8563
  %v8565 = vlaneseq
  %v8566 = vshrl.u32 %v8565, 7
  %v8567 = vsub.s32 %v8564, %v8566
  %v8568 = vrot.slane %v8561, %v8567
  %v8570 = vunpack.c.l.s4 1966171168
  %v8571 = vunpack.c.0.s8 %v8570
  %v8572 = vlaneseq
  %v8573 = vshrl.u32 %v8572, 7
  %v8574 = vsub.s32 %v8571, %v8573
  %v8575 = vrot.slane %v4290, %v8574
  %v8577 = vunpack.c.l.s4 1966171168
  %v8578 = vunpack.c.0.s8 %v8577
  %v8579 = vlaneseq
  %v8580 = vshrl.u32 %v8579, 7
  %v8581 = vsub.s32 %v8578, %v8580
  %v8582 = vrot.slane %v8575, %v8581
  %v8584 = vunpack.c.l.s4 1966171168
  %v8585 = vunpack.c.0.s8 %v8584
  %v8586 = vlaneseq
  %v8587 = vshrl.u32 %v8586, 7
  %v8588 = vsub.s32 %v8585, %v8587
  %v8589 = vrot.slane %v4339, %v8588
  %v8591 = vunpack.c.l.s4 1966171168
  %v8592 = vunpack.c.0.s8 %v8591
  %v8593 = vlaneseq
  %v8594 = vshrl.u32 %v8593, 7
  %v8595 = vsub.s32 %v8592, %v8594
  %v8596 = vrot.slane %v8589, %v8595
  %v8598 = vunpack.c.l.s4 1966171168
  %v8599 = vunpack.c.0.s8 %v8598
  %v8600 = vlaneseq
  %v8601 = vshrl.u32 %v8600, 7
  %v8602 = vsub.s32 %v8599, %v8601
  %v8603 = vrot.slane %v4437, %v8602
  %v8605 = vunpack.c.l.s4 1966171168
  %v8606 = vunpack.c.0.s8 %v8605
  %v8607 = vlaneseq
  %v8608 = vshrl.u32 %v8607, 7
  %v8609 = vsub.s32 %v8606, %v8608
  %v8610 = vrot.slane %v8603, %v8609
  %v8612 = vunpack.c.l.s4 1966171168
  %v8613 = vunpack.c.0.s8 %v8612
  %v8614 = vlaneseq
  %v8615 = vshrl.u32 %v8614, 7
  %v8616 = vsub.s32 %v8613, %v8615
  %v8617 = vrot.slane %v4486, %v8616
  %v8619 = vunpack.c.l.s4 1966171168
  %v8620 = vunpack.c.0.s8 %v8619
  %v8621 = vlaneseq
  %v8622 = vshrl.u32 %v8621, 7
  %v8623 = vsub.s32 %v8620, %v8622
  %v8624 = vrot.slane %v8617, %v8623
  %v8626 = vunpack.c.l.s4 1966171168
  %v8627 = vunpack.c.0.s8 %v8626
  %v8628 = vlaneseq
  %v8629 = vshrl.u32 %v8628, 7
  %v8630 = vsub.s32 %v8627, %v8629
  %v8631 = vrot.slane %v4535, %v8630
  %v8633 = vunpack.c.l.s4 1966171168
  %v8634 = vunpack.c.0.s8 %v8633
  %v8635 = vlaneseq
  %v8636 = vshrl.u32 %v8635, 7
  %v8637 = vsub.s32 %v8634, %v8636
  %v8638 = vrot.slane %v8631, %v8637
  %v8640 = vunpack.c.l.s4 1966171168
  %v8641 = vunpack.c.0.s8 %v8640
  %v8642 = vlaneseq
  %v8643 = vshrl.u32 %v8642, 7
  %v8644 = vsub.s32 %v8641, %v8643
  %v8645 = vrot.slane %v4633, %v8644
  %v8647 = vunpack.c.l.s4 1966171168
  %v8648 = vunpack.c.0.s8 %v8647
  %v8649 = vlaneseq
  %v8650 = vshrl.u32 %v8649, 7
  %v8651 = vsub.s32 %v8648, %v8650
  %v8652 = vrot.slane %v8645, %v8651
  %v8654 = vunpack.c.l.s4 1966171168
  %v8655 = vunpack.c.0.s8 %v8654
  %v8656 = vlaneseq
  %v8657 = vshrl.u32 %v8656, 7
  %v8658 = vsub.s32 %v8655, %v8657
  %v8659 = vrot.slane %v4682, %v8658
  %v8661 = vunpack.c.l.s4 1966171168
  %v8662 = vunpack.c.0.s8 %v8661
  %v8663 = vlaneseq
  %v8664 = vshrl.u32 %v8663, 7
  %v8665 = vsub.s32 %v8662, %v8664
  %v8666 = vrot.slane %v8659, %v8665
  %v8668 = vunpack.c.l.s4 1966171168
  %v8669 = vunpack.c.0.s8 %v8668
  %v8670 = vlaneseq
  %v8671 = vshrl.u32 %v8670, 7
  %v8672 = vsub.s32 %v8669, %v8671
  %v8673 = vrot.slane %v4731, %v8672
  %v8675 = vunpack.c.l.s4 1966171168
  %v8676 = vunpack.c.0.s8 %v8675
  %v8677 = vlaneseq
  %v8678 = vshrl.u32 %v8677, 7
  %v8679 = vsub.s32 %v8676, %v8678
  %v8680 = vrot.slane %v8673, %v8679
  %v8682 = vunpack.c.l.s4 1966171168
  %v8683 = vunpack.c.0.s8 %v8682
  %v8684 = vlaneseq
  %v8685 = vshrl.u32 %v8684, 7
  %v8686 = vsub.s32 %v8683, %v8685
  %v8687 = vrot.slane %v4829, %v8686
  %v8689 = vunpack.c.l.s4 1966171168
  %v8690 = vunpack.c.0.s8 %v8689
  %v8691 = vlaneseq
  %v8692 = vshrl.u32 %v8691, 7
  %v8693 = vsub.s32 %v8690, %v8692
  %v8694 = vrot.slane %v8687, %v8693
  %v8696 = vunpack.c.l.s4 1966171168
  %v8697 = vunpack.c.0.s8 %v8696
  %v8698 = vlaneseq
  %v8699 = vshrl.u32 %v8698, 7
  %v8700 = vsub.s32 %v8697, %v8699
  %v8701 = vrot.slane %v4878, %v8700
  %v8703 = vunpack.c.l.s4 1966171168
  %v8704 = vunpack.c.0.s8 %v8703
  %v8705 = vlaneseq
  %v8706 = vshrl.u32 %v8705, 7
  %v8707 = vsub.s32 %v8704, %v8706
  %v8708 = vrot.slane %v8701, %v8707
  %v8710 = vunpack.c.l.s4 1966171168
  %v8711 = vunpack.c.0.s8 %v8710
  %v8712 = vlaneseq
  %v8713 = vshrl.u32 %v8712, 7
  %v8714 = vsub.s32 %v8711, %v8713
  %v8715 = vrot.slane %v4927, %v8714
  %v8717 = vunpack.c.l.s4 1966171168
  %v8718 = vunpack.c.0.s8 %v8717
  %v8719 = vlaneseq
  %v8720 = vshrl.u32 %v8719, 7
  %v8721 = vsub.s32 %v8718, %v8720
  %v8722 = vrot.slane %v8715, %v8721
  %v8723 = vunpack.c.l.b16 %v8400
  %v8724 = vunpack.c.l.b16 %v8414
  %v8725 = vunpack.c.l.b16 %v8428
  %v8726 = vunpack.c.l.b16 %v8442
  %v8727 = vunpack.c.l.b16 %v8456
  %v8728 = vunpack.c.l.b16 %v8470
  %v8729 = vunpack.c.l.b16 %v8484
  %v8730 = vunpack.c.l.b16 %v8498
  %v8731 = vunpack.c.l.b16 %v8512
  %v8732 = vunpack.c.l.b16 %v8526
  %v8733 = vunpack.c.l.b16 %v8540
  %v8734 = vunpack.c.l.b16 %v8554
  %v8735 = vunpack.c.l.b16 %v8568
  %v8736 = vunpack.c.l.b16 %v8582
  %v8737 = vunpack.c.l.b16 %v8596
  %v8738 = vunpack.c.l.b16 %v8610
  %v8739 = vunpack.c.l.b16 %v8624
  %v8740 = vunpack.c.l.b16 %v8638
  %v8741 = vunpack.c.l.b16 %v8652
  %v8742 = vunpack.c.l.b16 %v8666
  %v8743 = vunpack.c.l.b16 %v8680
  %v8744 = vunpack.c.l.b16 %v8694
  %v8745 = vunpack.c.l.b16 %v8708
  %v8746 = vunpack.c.l.b16 %v8722
  %v8747 = vsel %vm6058, %v8221, %v8028
  %v8748 = vrot.slane %v8723, 6
  %v8749 = vsel %vm6061, %v8748, %v8747
  %v8750 = vsel %vm6058, %v8225, %v8031
  %v8751 = vrot.slane %v8724, 6
  %v8752 = vsel %vm6061, %v8751, %v8750
  %v8753 = vsel %vm6058, %v8229, %v8034
  %v8754 = vrot.slane %v8725, 6
  %v8755 = vsel %vm6061, %v8754, %v8753
  %v8756 = vsel %vm6058, %v8233, %v8037
  %v8757 = vrot.slane %v8726, 6
  %v8758 = vsel %vm6061, %v8757, %v8756
  %v8759 = vsel %vm6058, %v8237, %v8040
  %v8760 = vrot.slane %v8727, 6
  %v8761 = vsel %vm6061, %v8760, %v8759
  %v8762 = vsel %vm6058, %v8241, %v8043
  %v8763 = vrot.slane %v8728, 6
  %v8764 = vsel %vm6061, %v8763, %v8762
  %v8765 = vsel %vm6058, %v8245, %v8046
  %v8766 = vrot.slane %v8729, 6
  %v8767 = vsel %vm6061, %v8766, %v8765
  %v8768 = vsel %vm6058, %v8249, %v8049
  %v8769 = vrot.slane %v8730, 6
  %v8770 = vsel %vm6061, %v8769, %v8768
  %v8771 = vsel %vm6058, %v8253, %v8052
  %v8772 = vrot.slane %v8731, 6
  %v8773 = vsel %vm6061, %v8772, %v8771
  %v8774 = vsel %vm6058, %v8257, %v8055
  %v8775 = vrot.slane %v8732, 6
  %v8776 = vsel %vm6061, %v8775, %v8774
  %v8777 = vsel %vm6058, %v8261, %v8058
  %v8778 = vrot.slane %v8733, 6
  %v8779 = vsel %vm6061, %v8778, %v8777
  %v8780 = vsel %vm6058, %v8265, %v8061
  %v8781 = vrot.slane %v8734, 6
  %v8782 = vsel %vm6061, %v8781, %v8780
  %v8783 = vsel %vm6058, %v8269, %v8064
  %v8784 = vrot.slane %v8735, 6
  %v8785 = vsel %vm6061, %v8784, %v8783
  %v8786 = vsel %vm6058, %v8273, %v8067
  %v8787 = vrot.slane %v8736, 6
  %v8788 = vsel %vm6061, %v8787, %v8786
  %v8789 = vsel %vm6058, %v8277, %v8070
  %v8790 = vrot.slane %v8737, 6
  %v8791 = vsel %vm6061, %v8790, %v8789
  %v8792 = vsel %vm6058, %v8281, %v8073
  %v8793 = vrot.slane %v8738, 6
  %v8794 = vsel %vm6061, %v8793, %v8792
  %v8795 = vsel %vm6058, %v8285, %v8076
  %v8796 = vrot.slane %v8739, 6
  %v8797 = vsel %vm6061, %v8796, %v8795
  %v8798 = vsel %vm6058, %v8289, %v8079
  %v8799 = vrot.slane %v8740, 6
  %v8800 = vsel %vm6061, %v8799, %v8798
  %v8801 = vsel %vm6058, %v8293, %v8082
  %v8802 = vrot.slane %v8741, 6
  %v8803 = vsel %vm6061, %v8802, %v8801
  %v8804 = vsel %vm6058, %v8297, %v8085
  %v8805 = vrot.slane %v8742, 6
  %v8806 = vsel %vm6061, %v8805, %v8804
  %v8807 = vsel %vm6058, %v8301, %v8088
  %v8808 = vrot.slane %v8743, 6
  %v8809 = vsel %vm6061, %v8808, %v8807
  %v8810 = vsel %vm6058, %v8305, %v8091
  %v8811 = vrot.slane %v8744, 6
  %v8812 = vsel %vm6061, %v8811, %v8810
  %v8813 = vsel %vm6058, %v8309, %v8094
  %v8814 = vrot.slane %v8745, 6
  %v8815 = vsel %vm6061, %v8814, %v8813
  %v8816 = vsel %vm6058, %v8313, %v8097
  %v8817 = vrot.slane %v8746, 6
  %v8818 = vsel %vm6061, %v8817, %v8816
  %v8819 = vpack.c.b16 %v8749, %v8749
  %v8820 = vpack.c.b16 %v8752, %v8752
  %v8821 = vpack.c.b16 %v8755, %v8755
  %v8822 = vpack.c.b16 %v8758, %v8758
  %v8823 = vpack.c.b16 %v8761, %v8761
  %v8824 = vpack.c.b16 %v8764, %v8764
  %v8825 = vpack.c.b16 %v8767, %v8767
  %v8826 = vpack.c.b16 %v8770, %v8770
  %v8827 = vpack.c.b16 %v8773, %v8773
  %v8828 = vpack.c.b16 %v8776, %v8776
  %v8829 = vpack.c.b16 %v8779, %v8779
  %v8830 = vpack.c.b16 %v8782, %v8782
  %v8831 = vpack.c.b16 %v8785, %v8785
  %v8832 = vpack.c.b16 %v8788, %v8788
  %v8833 = vpack.c.b16 %v8791, %v8791
  %v8834 = vpack.c.b16 %v8794, %v8794
  %v8835 = vpack.c.b16 %v8797, %v8797
  %v8836 = vpack.c.b16 %v8800, %v8800
  %v8837 = vpack.c.b16 %v8803, %v8803
  %v8838 = vpack.c.b16 %v8806, %v8806
  %v8839 = vpack.c.b16 %v8809, %v8809
  %v8840 = vpack.c.b16 %v8812, %v8812
  %v8841 = vpack.c.b16 %v8815, %v8815
  %v8842 = vpack.c.b16 %v8818, %v8818
  %8843 = vrot.lane.b32.xlu0 %v8819, 64
  %v8844 = vpop.permute.xlu0 %8843
  %8845 = vrot.lane.b32.xlu0 %v8820, 64
  %v8846 = vpop.permute.xlu0 %8845
  %8847 = vrot.lane.b32.xlu0 %v8821, 64
  %v8848 = vpop.permute.xlu0 %8847
  %8849 = vrot.lane.b32.xlu0 %v8822, 64
  %v8850 = vpop.permute.xlu0 %8849
  %8851 = vrot.lane.b32.xlu0 %v8823, 64
  %v8852 = vpop.permute.xlu0 %8851
  %8853 = vrot.lane.b32.xlu0 %v8824, 64
  %v8854 = vpop.permute.xlu0 %8853
  %8855 = vrot.lane.b32.xlu0 %v8825, 64
  %v8856 = vpop.permute.xlu0 %8855
  %8857 = vrot.lane.b32.xlu0 %v8826, 64
  %v8858 = vpop.permute.xlu0 %8857
  %8859 = vrot.lane.b32.xlu0 %v8827, 64
  %v8860 = vpop.permute.xlu0 %8859
  %8861 = vrot.lane.b32.xlu0 %v8828, 64
  %v8862 = vpop.permute.xlu0 %8861
  %8863 = vrot.lane.b32.xlu0 %v8829, 64
  %v8864 = vpop.permute.xlu0 %8863
  %8865 = vrot.lane.b32.xlu0 %v8830, 64
  %v8866 = vpop.permute.xlu0 %8865
  %8867 = vrot.lane.b32.xlu0 %v8831, 64
  %v8868 = vpop.permute.xlu0 %8867
  %8869 = vrot.lane.b32.xlu0 %v8832, 64
  %v8870 = vpop.permute.xlu0 %8869
  %8871 = vrot.lane.b32.xlu0 %v8833, 64
  %v8872 = vpop.permute.xlu0 %8871
  %8873 = vrot.lane.b32.xlu0 %v8834, 64
  %v8874 = vpop.permute.xlu0 %8873
  %8875 = vrot.lane.b32.xlu0 %v8835, 64
  %v8876 = vpop.permute.xlu0 %8875
  %8877 = vrot.lane.b32.xlu0 %v8836, 64
  %v8878 = vpop.permute.xlu0 %8877
  %8879 = vrot.lane.b32.xlu0 %v8837, 64
  %v8880 = vpop.permute.xlu0 %8879
  %8881 = vrot.lane.b32.xlu0 %v8838, 64
  %v8882 = vpop.permute.xlu0 %8881
  %8883 = vrot.lane.b32.xlu0 %v8839, 64
  %v8884 = vpop.permute.xlu0 %8883
  %8885 = vrot.lane.b32.xlu0 %v8840, 64
  %v8886 = vpop.permute.xlu0 %8885
  %8887 = vrot.lane.b32.xlu0 %v8841, 64
  %v8888 = vpop.permute.xlu0 %8887
  %8889 = vrot.lane.b32.xlu0 %v8842, 64
  %v8890 = vpop.permute.xlu0 %8889
  %v8891 = vrot.slane %v8028, 1
  %v8892 = vsel %vm6058, %v8029, %v8891
  %v8893 = vrot.slane %v8723, 7
  %v8894 = vsel %vm6061, %v8893, %v8892
  %v8895 = vrot.slane %v8031, 1
  %v8896 = vsel %vm6058, %v8032, %v8895
  %v8897 = vrot.slane %v8724, 7
  %v8898 = vsel %vm6061, %v8897, %v8896
  %v8899 = vrot.slane %v8034, 1
  %v8900 = vsel %vm6058, %v8035, %v8899
  %v8901 = vrot.slane %v8725, 7
  %v8902 = vsel %vm6061, %v8901, %v8900
  %v8903 = vrot.slane %v8037, 1
  %v8904 = vsel %vm6058, %v8038, %v8903
  %v8905 = vrot.slane %v8726, 7
  %v8906 = vsel %vm6061, %v8905, %v8904
  %v8907 = vrot.slane %v8040, 1
  %v8908 = vsel %vm6058, %v8041, %v8907
  %v8909 = vrot.slane %v8727, 7
  %v8910 = vsel %vm6061, %v8909, %v8908
  %v8911 = vrot.slane %v8043, 1
  %v8912 = vsel %vm6058, %v8044, %v8911
  %v8913 = vrot.slane %v8728, 7
  %v8914 = vsel %vm6061, %v8913, %v8912
  %v8915 = vrot.slane %v8046, 1
  %v8916 = vsel %vm6058, %v8047, %v8915
  %v8917 = vrot.slane %v8729, 7
  %v8918 = vsel %vm6061, %v8917, %v8916
  %v8919 = vrot.slane %v8049, 1
  %v8920 = vsel %vm6058, %v8050, %v8919
  %v8921 = vrot.slane %v8730, 7
  %v8922 = vsel %vm6061, %v8921, %v8920
  %v8923 = vrot.slane %v8052, 1
  %v8924 = vsel %vm6058, %v8053, %v8923
  %v8925 = vrot.slane %v8731, 7
  %v8926 = vsel %vm6061, %v8925, %v8924
  %v8927 = vrot.slane %v8055, 1
  %v8928 = vsel %vm6058, %v8056, %v8927
  %v8929 = vrot.slane %v8732, 7
  %v8930 = vsel %vm6061, %v8929, %v8928
  %v8931 = vrot.slane %v8058, 1
  %v8932 = vsel %vm6058, %v8059, %v8931
  %v8933 = vrot.slane %v8733, 7
  %v8934 = vsel %vm6061, %v8933, %v8932
  %v8935 = vrot.slane %v8061, 1
  %v8936 = vsel %vm6058, %v8062, %v8935
  %v8937 = vrot.slane %v8734, 7
  %v8938 = vsel %vm6061, %v8937, %v8936
  %v8939 = vrot.slane %v8064, 1
  %v8940 = vsel %vm6058, %v8065, %v8939
  %v8941 = vrot.slane %v8735, 7
  %v8942 = vsel %vm6061, %v8941, %v8940
  %v8943 = vrot.slane %v8067, 1
  %v8944 = vsel %vm6058, %v8068, %v8943
  %v8945 = vrot.slane %v8736, 7
  %v8946 = vsel %vm6061, %v8945, %v8944
  %v8947 = vrot.slane %v8070, 1
  %v8948 = vsel %vm6058, %v8071, %v8947
  %v8949 = vrot.slane %v8737, 7
  %v8950 = vsel %vm6061, %v8949, %v8948
  %v8951 = vrot.slane %v8073, 1
  %v8952 = vsel %vm6058, %v8074, %v8951
  %v8953 = vrot.slane %v8738, 7
  %v8954 = vsel %vm6061, %v8953, %v8952
  %v8955 = vrot.slane %v8076, 1
  %v8956 = vsel %vm6058, %v8077, %v8955
  %v8957 = vrot.slane %v8739, 7
  %v8958 = vsel %vm6061, %v8957, %v8956
  %v8959 = vrot.slane %v8079, 1
  %v8960 = vsel %vm6058, %v8080, %v8959
  %v8961 = vrot.slane %v8740, 7
  %v8962 = vsel %vm6061, %v8961, %v8960
  %v8963 = vrot.slane %v8082, 1
  %v8964 = vsel %vm6058, %v8083, %v8963
  %v8965 = vrot.slane %v8741, 7
  %v8966 = vsel %vm6061, %v8965, %v8964
  %v8967 = vrot.slane %v8085, 1
  %v8968 = vsel %vm6058, %v8086, %v8967
  %v8969 = vrot.slane %v8742, 7
  %v8970 = vsel %vm6061, %v8969, %v8968
  %v8971 = vrot.slane %v8088, 1
  %v8972 = vsel %vm6058, %v8089, %v8971
  %v8973 = vrot.slane %v8743, 7
  %v8974 = vsel %vm6061, %v8973, %v8972
  %v8975 = vrot.slane %v8091, 1
  %v8976 = vsel %vm6058, %v8092, %v8975
  %v8977 = vrot.slane %v8744, 7
  %v8978 = vsel %vm6061, %v8977, %v8976
  %v8979 = vrot.slane %v8094, 1
  %v8980 = vsel %vm6058, %v8095, %v8979
  %v8981 = vrot.slane %v8745, 7
  %v8982 = vsel %vm6061, %v8981, %v8980
  %v8983 = vrot.slane %v8097, 1
  %v8984 = vsel %vm6058, %v8098, %v8983
  %v8985 = vrot.slane %v8746, 7
  %v8986 = vsel %vm6061, %v8985, %v8984
  %v8987 = vpack.c.b16 %v8894, %v8894
  %v8988 = vpack.c.b16 %v8898, %v8898
  %v8989 = vpack.c.b16 %v8902, %v8902
  %v8990 = vpack.c.b16 %v8906, %v8906
  %v8991 = vpack.c.b16 %v8910, %v8910
  %v8992 = vpack.c.b16 %v8914, %v8914
  %v8993 = vpack.c.b16 %v8918, %v8918
  %v8994 = vpack.c.b16 %v8922, %v8922
  %v8995 = vpack.c.b16 %v8926, %v8926
  %v8996 = vpack.c.b16 %v8930, %v8930
  %v8997 = vpack.c.b16 %v8934, %v8934
  %v8998 = vpack.c.b16 %v8938, %v8938
  %v8999 = vpack.c.b16 %v8942, %v8942
  %v9000 = vpack.c.b16 %v8946, %v8946
  %v9001 = vpack.c.b16 %v8950, %v8950
  %v9002 = vpack.c.b16 %v8954, %v8954
  %v9003 = vpack.c.b16 %v8958, %v8958
  %v9004 = vpack.c.b16 %v8962, %v8962
  %v9005 = vpack.c.b16 %v8966, %v8966
  %v9006 = vpack.c.b16 %v8970, %v8970
  %v9007 = vpack.c.b16 %v8974, %v8974
  %v9008 = vpack.c.b16 %v8978, %v8978
  %v9009 = vpack.c.b16 %v8982, %v8982
  %v9010 = vpack.c.b16 %v8986, %v8986
  %9011 = vrot.lane.b32.xlu0 %v8987, 96
  %v9012 = vpop.permute.xlu0 %9011
  %9013 = vrot.lane.b32.xlu0 %v8988, 96
  %v9014 = vpop.permute.xlu0 %9013
  %9015 = vrot.lane.b32.xlu0 %v8989, 96
  %v9016 = vpop.permute.xlu0 %9015
  %9017 = vrot.lane.b32.xlu0 %v8990, 96
  %v9018 = vpop.permute.xlu0 %9017
  %9019 = vrot.lane.b32.xlu0 %v8991, 96
  %v9020 = vpop.permute.xlu0 %9019
  %9021 = vrot.lane.b32.xlu0 %v8992, 96
  %v9022 = vpop.permute.xlu0 %9021
  %9023 = vrot.lane.b32.xlu0 %v8993, 96
  %v9024 = vpop.permute.xlu0 %9023
  %9025 = vrot.lane.b32.xlu0 %v8994, 96
  %v9026 = vpop.permute.xlu0 %9025
  %9027 = vrot.lane.b32.xlu0 %v8995, 96
  %v9028 = vpop.permute.xlu0 %9027
  %9029 = vrot.lane.b32.xlu0 %v8996, 96
  %v9030 = vpop.permute.xlu0 %9029
  %9031 = vrot.lane.b32.xlu0 %v8997, 96
  %v9032 = vpop.permute.xlu0 %9031
  %9033 = vrot.lane.b32.xlu0 %v8998, 96
  %v9034 = vpop.permute.xlu0 %9033
  %9035 = vrot.lane.b32.xlu0 %v8999, 96
  %v9036 = vpop.permute.xlu0 %9035
  %9037 = vrot.lane.b32.xlu0 %v9000, 96
  %v9038 = vpop.permute.xlu0 %9037
  %9039 = vrot.lane.b32.xlu0 %v9001, 96
  %v9040 = vpop.permute.xlu0 %9039
  %9041 = vrot.lane.b32.xlu0 %v9002, 96
  %v9042 = vpop.permute.xlu0 %9041
  %9043 = vrot.lane.b32.xlu0 %v9003, 96
  %v9044 = vpop.permute.xlu0 %9043
  %9045 = vrot.lane.b32.xlu0 %v9004, 96
  %v9046 = vpop.permute.xlu0 %9045
  %9047 = vrot.lane.b32.xlu0 %v9005, 96
  %v9048 = vpop.permute.xlu0 %9047
  %9049 = vrot.lane.b32.xlu0 %v9006, 96
  %v9050 = vpop.permute.xlu0 %9049
  %9051 = vrot.lane.b32.xlu0 %v9007, 96
  %v9052 = vpop.permute.xlu0 %9051
  %9053 = vrot.lane.b32.xlu0 %v9008, 96
  %v9054 = vpop.permute.xlu0 %9053
  %9055 = vrot.lane.b32.xlu0 %v9009, 96
  %v9056 = vpop.permute.xlu0 %9055
  %9057 = vrot.lane.b32.xlu0 %v9010, 96
  %v9058 = vpop.permute.xlu0 %9057
  %v9060 = vunpack.c.l.s4 1966171168
  %v9061 = vunpack.c.0.s8 %v9060
  %v9062 = vlaneseq
  %v9063 = vshrl.u32 %v9062, 7
  %v9064 = vsub.s32 %v9061, %v9063
  %v9065 = vrot.slane %v3579, %v9064
  %v9067 = vunpack.c.l.s4 1966171168
  %v9068 = vunpack.c.0.s8 %v9067
  %v9069 = vlaneseq
  %v9070 = vshrl.u32 %v9069, 7
  %v9071 = vsub.s32 %v9068, %v9070
  %v9072 = vrot.slane %v9065, %v9071
  %v9074 = vunpack.c.l.s4 1966171168
  %v9075 = vunpack.c.0.s8 %v9074
  %v9076 = vlaneseq
  %v9077 = vshrl.u32 %v9076, 7
  %v9078 = vsub.s32 %v9075, %v9077
  %v9079 = vrot.slane %v3593, %v9078
  %v9081 = vunpack.c.l.s4 1966171168
  %v9082 = vunpack.c.0.s8 %v9081
  %v9083 = vlaneseq
  %v9084 = vshrl.u32 %v9083, 7
  %v9085 = vsub.s32 %v9082, %v9084
  %v9086 = vrot.slane %v9079, %v9085
  %v9088 = vunpack.c.l.s4 1966171168
  %v9089 = vunpack.c.0.s8 %v9088
  %v9090 = vlaneseq
  %v9091 = vshrl.u32 %v9090, 7
  %v9092 = vsub.s32 %v9089, %v9091
  %v9093 = vrot.slane %v3601, %v9092
  %v9095 = vunpack.c.l.s4 1966171168
  %v9096 = vunpack.c.0.s8 %v9095
  %v9097 = vlaneseq
  %v9098 = vshrl.u32 %v9097, 7
  %v9099 = vsub.s32 %v9096, %v9098
  %v9100 = vrot.slane %v9093, %v9099
  %v9102 = vunpack.c.l.s4 1966171168
  %v9103 = vunpack.c.0.s8 %v9102
  %v9104 = vlaneseq
  %v9105 = vshrl.u32 %v9104, 7
  %v9106 = vsub.s32 %v9103, %v9105
  %v9107 = vrot.slane %v3775, %v9106
  %v9109 = vunpack.c.l.s4 1966171168
  %v9110 = vunpack.c.0.s8 %v9109
  %v9111 = vlaneseq
  %v9112 = vshrl.u32 %v9111, 7
  %v9113 = vsub.s32 %v9110, %v9112
  %v9114 = vrot.slane %v9107, %v9113
  %v9116 = vunpack.c.l.s4 1966171168
  %v9117 = vunpack.c.0.s8 %v9116
  %v9118 = vlaneseq
  %v9119 = vshrl.u32 %v9118, 7
  %v9120 = vsub.s32 %v9117, %v9119
  %v9121 = vrot.slane %v3789, %v9120
  %v9123 = vunpack.c.l.s4 1966171168
  %v9124 = vunpack.c.0.s8 %v9123
  %v9125 = vlaneseq
  %v9126 = vshrl.u32 %v9125, 7
  %v9127 = vsub.s32 %v9124, %v9126
  %v9128 = vrot.slane %v9121, %v9127
  %v9130 = vunpack.c.l.s4 1966171168
  %v9131 = vunpack.c.0.s8 %v9130
  %v9132 = vlaneseq
  %v9133 = vshrl.u32 %v9132, 7
  %v9134 = vsub.s32 %v9131, %v9133
  %v9135 = vrot.slane %v3797, %v9134
  %v9137 = vunpack.c.l.s4 1966171168
  %v9138 = vunpack.c.0.s8 %v9137
  %v9139 = vlaneseq
  %v9140 = vshrl.u32 %v9139, 7
  %v9141 = vsub.s32 %v9138, %v9140
  %v9142 = vrot.slane %v9135, %v9141
  %v9144 = vunpack.c.l.s4 1966171168
  %v9145 = vunpack.c.0.s8 %v9144
  %v9146 = vlaneseq
  %v9147 = vshrl.u32 %v9146, 7
  %v9148 = vsub.s32 %v9145, %v9147
  %v9149 = vrot.slane %v3971, %v9148
  %v9151 = vunpack.c.l.s4 1966171168
  %v9152 = vunpack.c.0.s8 %v9151
  %v9153 = vlaneseq
  %v9154 = vshrl.u32 %v9153, 7
  %v9155 = vsub.s32 %v9152, %v9154
  %v9156 = vrot.slane %v9149, %v9155
  %v9158 = vunpack.c.l.s4 1966171168
  %v9159 = vunpack.c.0.s8 %v9158
  %v9160 = vlaneseq
  %v9161 = vshrl.u32 %v9160, 7
  %v9162 = vsub.s32 %v9159, %v9161
  %v9163 = vrot.slane %v3985, %v9162
  %v9165 = vunpack.c.l.s4 1966171168
  %v9166 = vunpack.c.0.s8 %v9165
  %v9167 = vlaneseq
  %v9168 = vshrl.u32 %v9167, 7
  %v9169 = vsub.s32 %v9166, %v9168
  %v9170 = vrot.slane %v9163, %v9169
  %v9172 = vunpack.c.l.s4 1966171168
  %v9173 = vunpack.c.0.s8 %v9172
  %v9174 = vlaneseq
  %v9175 = vshrl.u32 %v9174, 7
  %v9176 = vsub.s32 %v9173, %v9175
  %v9177 = vrot.slane %v3993, %v9176
  %v9179 = vunpack.c.l.s4 1966171168
  %v9180 = vunpack.c.0.s8 %v9179
  %v9181 = vlaneseq
  %v9182 = vshrl.u32 %v9181, 7
  %v9183 = vsub.s32 %v9180, %v9182
  %v9184 = vrot.slane %v9177, %v9183
  %v9186 = vunpack.c.l.s4 1966171168
  %v9187 = vunpack.c.0.s8 %v9186
  %v9188 = vlaneseq
  %v9189 = vshrl.u32 %v9188, 7
  %v9190 = vsub.s32 %v9187, %v9189
  %v9191 = vrot.slane %v4167, %v9190
  %v9193 = vunpack.c.l.s4 1966171168
  %v9194 = vunpack.c.0.s8 %v9193
  %v9195 = vlaneseq
  %v9196 = vshrl.u32 %v9195, 7
  %v9197 = vsub.s32 %v9194, %v9196
  %v9198 = vrot.slane %v9191, %v9197
  %v9200 = vunpack.c.l.s4 1966171168
  %v9201 = vunpack.c.0.s8 %v9200
  %v9202 = vlaneseq
  %v9203 = vshrl.u32 %v9202, 7
  %v9204 = vsub.s32 %v9201, %v9203
  %v9205 = vrot.slane %v4181, %v9204
  %v9207 = vunpack.c.l.s4 1966171168
  %v9208 = vunpack.c.0.s8 %v9207
  %v9209 = vlaneseq
  %v9210 = vshrl.u32 %v9209, 7
  %v9211 = vsub.s32 %v9208, %v9210
  %v9212 = vrot.slane %v9205, %v9211
  %v9214 = vunpack.c.l.s4 1966171168
  %v9215 = vunpack.c.0.s8 %v9214
  %v9216 = vlaneseq
  %v9217 = vshrl.u32 %v9216, 7
  %v9218 = vsub.s32 %v9215, %v9217
  %v9219 = vrot.slane %v4189, %v9218
  %v9221 = vunpack.c.l.s4 1966171168
  %v9222 = vunpack.c.0.s8 %v9221
  %v9223 = vlaneseq
  %v9224 = vshrl.u32 %v9223, 7
  %v9225 = vsub.s32 %v9222, %v9224
  %v9226 = vrot.slane %v9219, %v9225
  %v9228 = vunpack.c.l.s4 1966171168
  %v9229 = vunpack.c.0.s8 %v9228
  %v9230 = vlaneseq
  %v9231 = vshrl.u32 %v9230, 7
  %v9232 = vsub.s32 %v9229, %v9231
  %v9233 = vrot.slane %v4363, %v9232
  %v9235 = vunpack.c.l.s4 1966171168
  %v9236 = vunpack.c.0.s8 %v9235
  %v9237 = vlaneseq
  %v9238 = vshrl.u32 %v9237, 7
  %v9239 = vsub.s32 %v9236, %v9238
  %v9240 = vrot.slane %v9233, %v9239
  %v9242 = vunpack.c.l.s4 1966171168
  %v9243 = vunpack.c.0.s8 %v9242
  %v9244 = vlaneseq
  %v9245 = vshrl.u32 %v9244, 7
  %v9246 = vsub.s32 %v9243, %v9245
  %v9247 = vrot.slane %v4377, %v9246
  %v9249 = vunpack.c.l.s4 1966171168
  %v9250 = vunpack.c.0.s8 %v9249
  %v9251 = vlaneseq
  %v9252 = vshrl.u32 %v9251, 7
  %v9253 = vsub.s32 %v9250, %v9252
  %v9254 = vrot.slane %v9247, %v9253
  %v9256 = vunpack.c.l.s4 1966171168
  %v9257 = vunpack.c.0.s8 %v9256
  %v9258 = vlaneseq
  %v9259 = vshrl.u32 %v9258, 7
  %v9260 = vsub.s32 %v9257, %v9259
  %v9261 = vrot.slane %v4385, %v9260
  %v9263 = vunpack.c.l.s4 1966171168
  %v9264 = vunpack.c.0.s8 %v9263
  %v9265 = vlaneseq
  %v9266 = vshrl.u32 %v9265, 7
  %v9267 = vsub.s32 %v9264, %v9266
  %v9268 = vrot.slane %v9261, %v9267
  %v9270 = vunpack.c.l.s4 1966171168
  %v9271 = vunpack.c.0.s8 %v9270
  %v9272 = vlaneseq
  %v9273 = vshrl.u32 %v9272, 7
  %v9274 = vsub.s32 %v9271, %v9273
  %v9275 = vrot.slane %v4559, %v9274
  %v9277 = vunpack.c.l.s4 1966171168
  %v9278 = vunpack.c.0.s8 %v9277
  %v9279 = vlaneseq
  %v9280 = vshrl.u32 %v9279, 7
  %v9281 = vsub.s32 %v9278, %v9280
  %v9282 = vrot.slane %v9275, %v9281
  %v9284 = vunpack.c.l.s4 1966171168
  %v9285 = vunpack.c.0.s8 %v9284
  %v9286 = vlaneseq
  %v9287 = vshrl.u32 %v9286, 7
  %v9288 = vsub.s32 %v9285, %v9287
  %v9289 = vrot.slane %v4573, %v9288
  %v9291 = vunpack.c.l.s4 1966171168
  %v9292 = vunpack.c.0.s8 %v9291
  %v9293 = vlaneseq
  %v9294 = vshrl.u32 %v9293, 7
  %v9295 = vsub.s32 %v9292, %v9294
  %v9296 = vrot.slane %v9289, %v9295
  %v9298 = vunpack.c.l.s4 1966171168
  %v9299 = vunpack.c.0.s8 %v9298
  %v9300 = vlaneseq
  %v9301 = vshrl.u32 %v9300, 7
  %v9302 = vsub.s32 %v9299, %v9301
  %v9303 = vrot.slane %v4581, %v9302
  %v9305 = vunpack.c.l.s4 1966171168
  %v9306 = vunpack.c.0.s8 %v9305
  %v9307 = vlaneseq
  %v9308 = vshrl.u32 %v9307, 7
  %v9309 = vsub.s32 %v9306, %v9308
  %v9310 = vrot.slane %v9303, %v9309
  %v9312 = vunpack.c.l.s4 1966171168
  %v9313 = vunpack.c.0.s8 %v9312
  %v9314 = vlaneseq
  %v9315 = vshrl.u32 %v9314, 7
  %v9316 = vsub.s32 %v9313, %v9315
  %v9317 = vrot.slane %v4755, %v9316
  %v9319 = vunpack.c.l.s4 1966171168
  %v9320 = vunpack.c.0.s8 %v9319
  %v9321 = vlaneseq
  %v9322 = vshrl.u32 %v9321, 7
  %v9323 = vsub.s32 %v9320, %v9322
  %v9324 = vrot.slane %v9317, %v9323
  %v9326 = vunpack.c.l.s4 1966171168
  %v9327 = vunpack.c.0.s8 %v9326
  %v9328 = vlaneseq
  %v9329 = vshrl.u32 %v9328, 7
  %v9330 = vsub.s32 %v9327, %v9329
  %v9331 = vrot.slane %v4769, %v9330
  %v9333 = vunpack.c.l.s4 1966171168
  %v9334 = vunpack.c.0.s8 %v9333
  %v9335 = vlaneseq
  %v9336 = vshrl.u32 %v9335, 7
  %v9337 = vsub.s32 %v9334, %v9336
  %v9338 = vrot.slane %v9331, %v9337
  %v9340 = vunpack.c.l.s4 1966171168
  %v9341 = vunpack.c.0.s8 %v9340
  %v9342 = vlaneseq
  %v9343 = vshrl.u32 %v9342, 7
  %v9344 = vsub.s32 %v9341, %v9343
  %v9345 = vrot.slane %v4777, %v9344
  %v9347 = vunpack.c.l.s4 1966171168
  %v9348 = vunpack.c.0.s8 %v9347
  %v9349 = vlaneseq
  %v9350 = vshrl.u32 %v9349, 7
  %v9351 = vsub.s32 %v9348, %v9350
  %v9352 = vrot.slane %v9345, %v9351
  %v9354 = vunpack.c.l.s4 1966171168
  %v9355 = vunpack.c.0.s8 %v9354
  %v9356 = vlaneseq
  %v9357 = vshrl.u32 %v9356, 7
  %v9358 = vsub.s32 %v9355, %v9357
  %v9359 = vrot.slane %v4951, %v9358
  %v9361 = vunpack.c.l.s4 1966171168
  %v9362 = vunpack.c.0.s8 %v9361
  %v9363 = vlaneseq
  %v9364 = vshrl.u32 %v9363, 7
  %v9365 = vsub.s32 %v9362, %v9364
  %v9366 = vrot.slane %v9359, %v9365
  %v9368 = vunpack.c.l.s4 1966171168
  %v9369 = vunpack.c.0.s8 %v9368
  %v9370 = vlaneseq
  %v9371 = vshrl.u32 %v9370, 7
  %v9372 = vsub.s32 %v9369, %v9371
  %v9373 = vrot.slane %v4965, %v9372
  %v9375 = vunpack.c.l.s4 1966171168
  %v9376 = vunpack.c.0.s8 %v9375
  %v9377 = vlaneseq
  %v9378 = vshrl.u32 %v9377, 7
  %v9379 = vsub.s32 %v9376, %v9378
  %v9380 = vrot.slane %v9373, %v9379
  %v9382 = vunpack.c.l.s4 1966171168
  %v9383 = vunpack.c.0.s8 %v9382
  %v9384 = vlaneseq
  %v9385 = vshrl.u32 %v9384, 7
  %v9386 = vsub.s32 %v9383, %v9385
  %v9387 = vrot.slane %v4973, %v9386
  %v9389 = vunpack.c.l.s4 1966171168
  %v9390 = vunpack.c.0.s8 %v9389
  %v9391 = vlaneseq
  %v9392 = vshrl.u32 %v9391, 7
  %v9393 = vsub.s32 %v9390, %v9392
  %v9394 = vrot.slane %v9387, %v9393
  %v9395 = vunpack.c.l.b16 %v9072
  %v9396 = vunpack.c.l.b16 %v9086
  %v9397 = vunpack.c.l.b16 %v9100
  %v9398 = vunpack.c.l.b16 %v9114
  %v9399 = vunpack.c.l.b16 %v9128
  %v9400 = vunpack.c.l.b16 %v9142
  %v9401 = vunpack.c.l.b16 %v9156
  %v9402 = vunpack.c.l.b16 %v9170
  %v9403 = vunpack.c.l.b16 %v9184
  %v9404 = vunpack.c.l.b16 %v9198
  %v9405 = vunpack.c.l.b16 %v9212
  %v9406 = vunpack.c.l.b16 %v9226
  %v9407 = vunpack.c.l.b16 %v9240
  %v9408 = vunpack.c.l.b16 %v9254
  %v9409 = vunpack.c.l.b16 %v9268
  %v9410 = vunpack.c.l.b16 %v9282
  %v9411 = vunpack.c.l.b16 %v9296
  %v9412 = vunpack.c.l.b16 %v9310
  %v9413 = vunpack.c.l.b16 %v9324
  %v9414 = vunpack.c.l.b16 %v9338
  %v9415 = vunpack.c.l.b16 %v9352
  %v9416 = vunpack.c.l.b16 %v9366
  %v9417 = vunpack.c.l.b16 %v9380
  %v9418 = vunpack.c.l.b16 %v9394
  %v9419 = vrot.slane %v9396, 7
  %v9420 = vsel %vm6058, %v9419, %v9395
  %v9421 = vrot.slane %v9397, 6
  %v9422 = vsel %vm6061, %v9421, %v9420
  %v9423 = vrot.slane %v9399, 7
  %v9424 = vsel %vm6058, %v9423, %v9398
  %v9425 = vrot.slane %v9400, 6
  %v9426 = vsel %vm6061, %v9425, %v9424
  %v9427 = vrot.slane %v9402, 7
  %v9428 = vsel %vm6058, %v9427, %v9401
  %v9429 = vrot.slane %v9403, 6
  %v9430 = vsel %vm6061, %v9429, %v9428
  %v9431 = vrot.slane %v9405, 7
  %v9432 = vsel %vm6058, %v9431, %v9404
  %v9433 = vrot.slane %v9406, 6
  %v9434 = vsel %vm6061, %v9433, %v9432
  %v9435 = vrot.slane %v9408, 7
  %v9436 = vsel %vm6058, %v9435, %v9407
  %v9437 = vrot.slane %v9409, 6
  %v9438 = vsel %vm6061, %v9437, %v9436
  %v9439 = vrot.slane %v9411, 7
  %v9440 = vsel %vm6058, %v9439, %v9410
  %v9441 = vrot.slane %v9412, 6
  %v9442 = vsel %vm6061, %v9441, %v9440
  %v9443 = vrot.slane %v9414, 7
  %v9444 = vsel %vm6058, %v9443, %v9413
  %v9445 = vrot.slane %v9415, 6
  %v9446 = vsel %vm6061, %v9445, %v9444
  %v9447 = vrot.slane %v9417, 7
  %v9448 = vsel %vm6058, %v9447, %v9416
  %v9449 = vrot.slane %v9418, 6
  %v9450 = vsel %vm6061, %v9449, %v9448
  %v9451 = vpack.c.b16 %v9422, %v9422
  %v9452 = vpack.c.b16 %v9426, %v9426
  %v9453 = vpack.c.b16 %v9430, %v9430
  %v9454 = vpack.c.b16 %v9434, %v9434
  %v9455 = vpack.c.b16 %v9438, %v9438
  %v9456 = vpack.c.b16 %v9442, %v9442
  %v9457 = vpack.c.b16 %v9446, %v9446
  %v9458 = vpack.c.b16 %v9450, %v9450
  %v9459 = vrot.slane %v9395, 1
  %v9460 = vsel %vm6058, %v9396, %v9459
  %v9461 = vrot.slane %v9397, 7
  %v9462 = vsel %vm6061, %v9461, %v9460
  %v9463 = vrot.slane %v9398, 1
  %v9464 = vsel %vm6058, %v9399, %v9463
  %v9465 = vrot.slane %v9400, 7
  %v9466 = vsel %vm6061, %v9465, %v9464
  %v9467 = vrot.slane %v9401, 1
  %v9468 = vsel %vm6058, %v9402, %v9467
  %v9469 = vrot.slane %v9403, 7
  %v9470 = vsel %vm6061, %v9469, %v9468
  %v9471 = vrot.slane %v9404, 1
  %v9472 = vsel %vm6058, %v9405, %v9471
  %v9473 = vrot.slane %v9406, 7
  %v9474 = vsel %vm6061, %v9473, %v9472
  %v9475 = vrot.slane %v9407, 1
  %v9476 = vsel %vm6058, %v9408, %v9475
  %v9477 = vrot.slane %v9409, 7
  %v9478 = vsel %vm6061, %v9477, %v9476
  %v9479 = vrot.slane %v9410, 1
  %v9480 = vsel %vm6058, %v9411, %v9479
  %v9481 = vrot.slane %v9412, 7
  %v9482 = vsel %vm6061, %v9481, %v9480
  %v9483 = vrot.slane %v9413, 1
  %v9484 = vsel %vm6058, %v9414, %v9483
  %v9485 = vrot.slane %v9415, 7
  %v9486 = vsel %vm6061, %v9485, %v9484
  %v9487 = vrot.slane %v9416, 1
  %v9488 = vsel %vm6058, %v9417, %v9487
  %v9489 = vrot.slane %v9418, 7
  %v9490 = vsel %vm6061, %v9489, %v9488
  %v9491 = vpack.c.b16 %v9462, %v9462
  %v9492 = vpack.c.b16 %v9466, %v9466
  %v9493 = vpack.c.b16 %v9470, %v9470
  %v9494 = vpack.c.b16 %v9474, %v9474
  %v9495 = vpack.c.b16 %v9478, %v9478
  %v9496 = vpack.c.b16 %v9482, %v9482
  %v9497 = vpack.c.b16 %v9486, %v9486
  %v9498 = vpack.c.b16 %v9490, %v9490
  %9499 = vrot.lane.b32.xlu0 %v9491, 32
  %v9500 = vpop.permute.xlu0 %9499
  %9501 = vrot.lane.b32.xlu0 %v9492, 32
  %v9502 = vpop.permute.xlu0 %9501
  %9503 = vrot.lane.b32.xlu0 %v9493, 32
  %v9504 = vpop.permute.xlu0 %9503
  %9505 = vrot.lane.b32.xlu0 %v9494, 32
  %v9506 = vpop.permute.xlu0 %9505
  %9507 = vrot.lane.b32.xlu0 %v9495, 32
  %v9508 = vpop.permute.xlu0 %9507
  %9509 = vrot.lane.b32.xlu0 %v9496, 32
  %v9510 = vpop.permute.xlu0 %9509
  %9511 = vrot.lane.b32.xlu0 %v9497, 32
  %v9512 = vpop.permute.xlu0 %9511
  %9513 = vrot.lane.b32.xlu0 %v9498, 32
  %v9514 = vpop.permute.xlu0 %9513
  %v9516 = vunpack.c.l.s4 1966171168
  %v9517 = vunpack.c.0.s8 %v9516
  %v9518 = vlaneseq
  %v9519 = vshrl.u32 %v9518, 7
  %v9520 = vsub.s32 %v9517, %v9519
  %v9521 = vrot.slane %v3603, %v9520
  %v9523 = vunpack.c.l.s4 1966171168
  %v9524 = vunpack.c.0.s8 %v9523
  %v9525 = vlaneseq
  %v9526 = vshrl.u32 %v9525, 7
  %v9527 = vsub.s32 %v9524, %v9526
  %v9528 = vrot.slane %v9521, %v9527
  %v9530 = vunpack.c.l.s4 1966171168
  %v9531 = vunpack.c.0.s8 %v9530
  %v9532 = vlaneseq
  %v9533 = vshrl.u32 %v9532, 7
  %v9534 = vsub.s32 %v9531, %v9533
  %v9535 = vrot.slane %v3799, %v9534
  %v9537 = vunpack.c.l.s4 1966171168
  %v9538 = vunpack.c.0.s8 %v9537
  %v9539 = vlaneseq
  %v9540 = vshrl.u32 %v9539, 7
  %v9541 = vsub.s32 %v9538, %v9540
  %v9542 = vrot.slane %v9535, %v9541
  %v9544 = vunpack.c.l.s4 1966171168
  %v9545 = vunpack.c.0.s8 %v9544
  %v9546 = vlaneseq
  %v9547 = vshrl.u32 %v9546, 7
  %v9548 = vsub.s32 %v9545, %v9547
  %v9549 = vrot.slane %v3995, %v9548
  %v9551 = vunpack.c.l.s4 1966171168
  %v9552 = vunpack.c.0.s8 %v9551
  %v9553 = vlaneseq
  %v9554 = vshrl.u32 %v9553, 7
  %v9555 = vsub.s32 %v9552, %v9554
  %v9556 = vrot.slane %v9549, %v9555
  %v9558 = vunpack.c.l.s4 1966171168
  %v9559 = vunpack.c.0.s8 %v9558
  %v9560 = vlaneseq
  %v9561 = vshrl.u32 %v9560, 7
  %v9562 = vsub.s32 %v9559, %v9561
  %v9563 = vrot.slane %v4191, %v9562
  %v9565 = vunpack.c.l.s4 1966171168
  %v9566 = vunpack.c.0.s8 %v9565
  %v9567 = vlaneseq
  %v9568 = vshrl.u32 %v9567, 7
  %v9569 = vsub.s32 %v9566, %v9568
  %v9570 = vrot.slane %v9563, %v9569
  %v9572 = vunpack.c.l.s4 1966171168
  %v9573 = vunpack.c.0.s8 %v9572
  %v9574 = vlaneseq
  %v9575 = vshrl.u32 %v9574, 7
  %v9576 = vsub.s32 %v9573, %v9575
  %v9577 = vrot.slane %v4387, %v9576
  %v9579 = vunpack.c.l.s4 1966171168
  %v9580 = vunpack.c.0.s8 %v9579
  %v9581 = vlaneseq
  %v9582 = vshrl.u32 %v9581, 7
  %v9583 = vsub.s32 %v9580, %v9582
  %v9584 = vrot.slane %v9577, %v9583
  %v9586 = vunpack.c.l.s4 1966171168
  %v9587 = vunpack.c.0.s8 %v9586
  %v9588 = vlaneseq
  %v9589 = vshrl.u32 %v9588, 7
  %v9590 = vsub.s32 %v9587, %v9589
  %v9591 = vrot.slane %v4583, %v9590
  %v9593 = vunpack.c.l.s4 1966171168
  %v9594 = vunpack.c.0.s8 %v9593
  %v9595 = vlaneseq
  %v9596 = vshrl.u32 %v9595, 7
  %v9597 = vsub.s32 %v9594, %v9596
  %v9598 = vrot.slane %v9591, %v9597
  %v9600 = vunpack.c.l.s4 1966171168
  %v9601 = vunpack.c.0.s8 %v9600
  %v9602 = vlaneseq
  %v9603 = vshrl.u32 %v9602, 7
  %v9604 = vsub.s32 %v9601, %v9603
  %v9605 = vrot.slane %v4779, %v9604
  %v9607 = vunpack.c.l.s4 1966171168
  %v9608 = vunpack.c.0.s8 %v9607
  %v9609 = vlaneseq
  %v9610 = vshrl.u32 %v9609, 7
  %v9611 = vsub.s32 %v9608, %v9610
  %v9612 = vrot.slane %v9605, %v9611
  %v9614 = vunpack.c.l.s4 1966171168
  %v9615 = vunpack.c.0.s8 %v9614
  %v9616 = vlaneseq
  %v9617 = vshrl.u32 %v9616, 7
  %v9618 = vsub.s32 %v9615, %v9617
  %v9619 = vrot.slane %v4975, %v9618
  %v9621 = vunpack.c.l.s4 1966171168
  %v9622 = vunpack.c.0.s8 %v9621
  %v9623 = vlaneseq
  %v9624 = vshrl.u32 %v9623, 7
  %v9625 = vsub.s32 %v9622, %v9624
  %v9626 = vrot.slane %v9619, %v9625
  %v9627 = vunpack.c.l.b16 %v9528
  %v9628 = vunpack.c.l.b16 %v9542
  %v9629 = vunpack.c.l.b16 %v9556
  %v9630 = vunpack.c.l.b16 %v9570
  %v9631 = vunpack.c.l.b16 %v9584
  %v9632 = vunpack.c.l.b16 %v9598
  %v9633 = vunpack.c.l.b16 %v9612
  %v9634 = vunpack.c.l.b16 %v9626
  %v9635 = vsel %vm6058, %v9461, %v9396
  %v9636 = vrot.slane %v9627, 6
  %v9637 = vsel %vm6061, %v9636, %v9635
  %v9638 = vsel %vm6058, %v9465, %v9399
  %v9639 = vrot.slane %v9628, 6
  %v9640 = vsel %vm6061, %v9639, %v9638
  %v9641 = vsel %vm6058, %v9469, %v9402
  %v9642 = vrot.slane %v9629, 6
  %v9643 = vsel %vm6061, %v9642, %v9641
  %v9644 = vsel %vm6058, %v9473, %v9405
  %v9645 = vrot.slane %v9630, 6
  %v9646 = vsel %vm6061, %v9645, %v9644
  %v9647 = vsel %vm6058, %v9477, %v9408
  %v9648 = vrot.slane %v9631, 6
  %v9649 = vsel %vm6061, %v9648, %v9647
  %v9650 = vsel %vm6058, %v9481, %v9411
  %v9651 = vrot.slane %v9632, 6
  %v9652 = vsel %vm6061, %v9651, %v9650
  %v9653 = vsel %vm6058, %v9485, %v9414
  %v9654 = vrot.slane %v9633, 6
  %v9655 = vsel %vm6061, %v9654, %v9653
  %v9656 = vsel %vm6058, %v9489, %v9417
  %v9657 = vrot.slane %v9634, 6
  %v9658 = vsel %vm6061, %v9657, %v9656
  %v9659 = vpack.c.b16 %v9637, %v9637
  %v9660 = vpack.c.b16 %v9640, %v9640
  %v9661 = vpack.c.b16 %v9643, %v9643
  %v9662 = vpack.c.b16 %v9646, %v9646
  %v9663 = vpack.c.b16 %v9649, %v9649
  %v9664 = vpack.c.b16 %v9652, %v9652
  %v9665 = vpack.c.b16 %v9655, %v9655
  %v9666 = vpack.c.b16 %v9658, %v9658
  %9667 = vrot.lane.b32.xlu0 %v9659, 64
  %v9668 = vpop.permute.xlu0 %9667
  %9669 = vrot.lane.b32.xlu0 %v9660, 64
  %v9670 = vpop.permute.xlu0 %9669
  %9671 = vrot.lane.b32.xlu0 %v9661, 64
  %v9672 = vpop.permute.xlu0 %9671
  %9673 = vrot.lane.b32.xlu0 %v9662, 64
  %v9674 = vpop.permute.xlu0 %9673
  %9675 = vrot.lane.b32.xlu0 %v9663, 64
  %v9676 = vpop.permute.xlu0 %9675
  %9677 = vrot.lane.b32.xlu0 %v9664, 64
  %v9678 = vpop.permute.xlu0 %9677
  %9679 = vrot.lane.b32.xlu0 %v9665, 64
  %v9680 = vpop.permute.xlu0 %9679
  %9681 = vrot.lane.b32.xlu0 %v9666, 64
  %v9682 = vpop.permute.xlu0 %9681
  %v9683 = vrot.slane %v9396, 1
  %v9684 = vsel %vm6058, %v9397, %v9683
  %v9685 = vrot.slane %v9627, 7
  %v9686 = vsel %vm6061, %v9685, %v9684
  %v9687 = vrot.slane %v9399, 1
  %v9688 = vsel %vm6058, %v9400, %v9687
  %v9689 = vrot.slane %v9628, 7
  %v9690 = vsel %vm6061, %v9689, %v9688
  %v9691 = vrot.slane %v9402, 1
  %v9692 = vsel %vm6058, %v9403, %v9691
  %v9693 = vrot.slane %v9629, 7
  %v9694 = vsel %vm6061, %v9693, %v9692
  %v9695 = vrot.slane %v9405, 1
  %v9696 = vsel %vm6058, %v9406, %v9695
  %v9697 = vrot.slane %v9630, 7
  %v9698 = vsel %vm6061, %v9697, %v9696
  %v9699 = vrot.slane %v9408, 1
  %v9700 = vsel %vm6058, %v9409, %v9699
  %v9701 = vrot.slane %v9631, 7
  %v9702 = vsel %vm6061, %v9701, %v9700
  %v9703 = vrot.slane %v9411, 1
  %v9704 = vsel %vm6058, %v9412, %v9703
  %v9705 = vrot.slane %v9632, 7
  %v9706 = vsel %vm6061, %v9705, %v9704
  %v9707 = vrot.slane %v9414, 1
  %v9708 = vsel %vm6058, %v9415, %v9707
  %v9709 = vrot.slane %v9633, 7
  %v9710 = vsel %vm6061, %v9709, %v9708
  %v9711 = vrot.slane %v9417, 1
  %v9712 = vsel %vm6058, %v9418, %v9711
  %v9713 = vrot.slane %v9634, 7
  %v9714 = vsel %vm6061, %v9713, %v9712
  %v9715 = vpack.c.b16 %v9686, %v9686
  %v9716 = vpack.c.b16 %v9690, %v9690
  %v9717 = vpack.c.b16 %v9694, %v9694
  %v9718 = vpack.c.b16 %v9698, %v9698
  %v9719 = vpack.c.b16 %v9702, %v9702
  %v9720 = vpack.c.b16 %v9706, %v9706
  %v9721 = vpack.c.b16 %v9710, %v9710
  %v9722 = vpack.c.b16 %v9714, %v9714
  %9723 = vrot.lane.b32.xlu0 %v9715, 96
  %v9724 = vpop.permute.xlu0 %9723
  %9725 = vrot.lane.b32.xlu0 %v9716, 96
  %v9726 = vpop.permute.xlu0 %9725
  %9727 = vrot.lane.b32.xlu0 %v9717, 96
  %v9728 = vpop.permute.xlu0 %9727
  %9729 = vrot.lane.b32.xlu0 %v9718, 96
  %v9730 = vpop.permute.xlu0 %9729
  %9731 = vrot.lane.b32.xlu0 %v9719, 96
  %v9732 = vpop.permute.xlu0 %9731
  %9733 = vrot.lane.b32.xlu0 %v9720, 96
  %v9734 = vpop.permute.xlu0 %9733
  %9735 = vrot.lane.b32.xlu0 %v9721, 96
  %v9736 = vpop.permute.xlu0 %9735
  %9737 = vrot.lane.b32.xlu0 %v9722, 96
  %v9738 = vpop.permute.xlu0 %9737
  %v9740 = vunpack.c.l.s4 1966171168
  %v9741 = vunpack.c.0.s8 %v9740
  %v9742 = vlaneseq
  %v9743 = vshrl.u32 %v9742, 7
  %v9744 = vsub.s32 %v9741, %v9743
  %v9745 = vrot.slane %v3586, %v9744
  %v9747 = vunpack.c.l.s4 1966171168
  %v9748 = vunpack.c.0.s8 %v9747
  %v9749 = vlaneseq
  %v9750 = vshrl.u32 %v9749, 7
  %v9751 = vsub.s32 %v9748, %v9750
  %v9752 = vrot.slane %v9745, %v9751
  %v9754 = vunpack.c.l.s4 1966171168
  %v9755 = vunpack.c.0.s8 %v9754
  %v9756 = vlaneseq
  %v9757 = vshrl.u32 %v9756, 7
  %v9758 = vsub.s32 %v9755, %v9757
  %v9759 = vrot.slane %v3600, %v9758
  %v9761 = vunpack.c.l.s4 1966171168
  %v9762 = vunpack.c.0.s8 %v9761
  %v9763 = vlaneseq
  %v9764 = vshrl.u32 %v9763, 7
  %v9765 = vsub.s32 %v9762, %v9764
  %v9766 = vrot.slane %v9759, %v9765
  %v9768 = vunpack.c.l.s4 1966171168
  %v9769 = vunpack.c.0.s8 %v9768
  %v9770 = vlaneseq
  %v9771 = vshrl.u32 %v9770, 7
  %v9772 = vsub.s32 %v9769, %v9771
  %v9773 = vrot.slane %v3602, %v9772
  %v9775 = vunpack.c.l.s4 1966171168
  %v9776 = vunpack.c.0.s8 %v9775
  %v9777 = vlaneseq
  %v9778 = vshrl.u32 %v9777, 7
  %v9779 = vsub.s32 %v9776, %v9778
  %v9780 = vrot.slane %v9773, %v9779
  %v9782 = vunpack.c.l.s4 1966171168
  %v9783 = vunpack.c.0.s8 %v9782
  %v9784 = vlaneseq
  %v9785 = vshrl.u32 %v9784, 7
  %v9786 = vsub.s32 %v9783, %v9785
  %v9787 = vrot.slane %v3782, %v9786
  %v9789 = vunpack.c.l.s4 1966171168
  %v9790 = vunpack.c.0.s8 %v9789
  %v9791 = vlaneseq
  %v9792 = vshrl.u32 %v9791, 7
  %v9793 = vsub.s32 %v9790, %v9792
  %v9794 = vrot.slane %v9787, %v9793
  %v9796 = vunpack.c.l.s4 1966171168
  %v9797 = vunpack.c.0.s8 %v9796
  %v9798 = vlaneseq
  %v9799 = vshrl.u32 %v9798, 7
  %v9800 = vsub.s32 %v9797, %v9799
  %v9801 = vrot.slane %v3796, %v9800
  %v9803 = vunpack.c.l.s4 1966171168
  %v9804 = vunpack.c.0.s8 %v9803
  %v9805 = vlaneseq
  %v9806 = vshrl.u32 %v9805, 7
  %v9807 = vsub.s32 %v9804, %v9806
  %v9808 = vrot.slane %v9801, %v9807
  %v9810 = vunpack.c.l.s4 1966171168
  %v9811 = vunpack.c.0.s8 %v9810
  %v9812 = vlaneseq
  %v9813 = vshrl.u32 %v9812, 7
  %v9814 = vsub.s32 %v9811, %v9813
  %v9815 = vrot.slane %v3798, %v9814
  %v9817 = vunpack.c.l.s4 1966171168
  %v9818 = vunpack.c.0.s8 %v9817
  %v9819 = vlaneseq
  %v9820 = vshrl.u32 %v9819, 7
  %v9821 = vsub.s32 %v9818, %v9820
  %v9822 = vrot.slane %v9815, %v9821
  %v9824 = vunpack.c.l.s4 1966171168
  %v9825 = vunpack.c.0.s8 %v9824
  %v9826 = vlaneseq
  %v9827 = vshrl.u32 %v9826, 7
  %v9828 = vsub.s32 %v9825, %v9827
  %v9829 = vrot.slane %v3978, %v9828
  %v9831 = vunpack.c.l.s4 1966171168
  %v9832 = vunpack.c.0.s8 %v9831
  %v9833 = vlaneseq
  %v9834 = vshrl.u32 %v9833, 7
  %v9835 = vsub.s32 %v9832, %v9834
  %v9836 = vrot.slane %v9829, %v9835
  %v9838 = vunpack.c.l.s4 1966171168
  %v9839 = vunpack.c.0.s8 %v9838
  %v9840 = vlaneseq
  %v9841 = vshrl.u32 %v9840, 7
  %v9842 = vsub.s32 %v9839, %v9841
  %v9843 = vrot.slane %v3992, %v9842
  %v9845 = vunpack.c.l.s4 1966171168
  %v9846 = vunpack.c.0.s8 %v9845
  %v9847 = vlaneseq
  %v9848 = vshrl.u32 %v9847, 7
  %v9849 = vsub.s32 %v9846, %v9848
  %v9850 = vrot.slane %v9843, %v9849
  %v9852 = vunpack.c.l.s4 1966171168
  %v9853 = vunpack.c.0.s8 %v9852
  %v9854 = vlaneseq
  %v9855 = vshrl.u32 %v9854, 7
  %v9856 = vsub.s32 %v9853, %v9855
  %v9857 = vrot.slane %v3994, %v9856
  %v9859 = vunpack.c.l.s4 1966171168
  %v9860 = vunpack.c.0.s8 %v9859
  %v9861 = vlaneseq
  %v9862 = vshrl.u32 %v9861, 7
  %v9863 = vsub.s32 %v9860, %v9862
  %v9864 = vrot.slane %v9857, %v9863
  %v9866 = vunpack.c.l.s4 1966171168
  %v9867 = vunpack.c.0.s8 %v9866
  %v9868 = vlaneseq
  %v9869 = vshrl.u32 %v9868, 7
  %v9870 = vsub.s32 %v9867, %v9869
  %v9871 = vrot.slane %v4174, %v9870
  %v9873 = vunpack.c.l.s4 1966171168
  %v9874 = vunpack.c.0.s8 %v9873
  %v9875 = vlaneseq
  %v9876 = vshrl.u32 %v9875, 7
  %v9877 = vsub.s32 %v9874, %v9876
  %v9878 = vrot.slane %v9871, %v9877
  %v9880 = vunpack.c.l.s4 1966171168
  %v9881 = vunpack.c.0.s8 %v9880
  %v9882 = vlaneseq
  %v9883 = vshrl.u32 %v9882, 7
  %v9884 = vsub.s32 %v9881, %v9883
  %v9885 = vrot.slane %v4188, %v9884
  %v9887 = vunpack.c.l.s4 1966171168
  %v9888 = vunpack.c.0.s8 %v9887
  %v9889 = vlaneseq
  %v9890 = vshrl.u32 %v9889, 7
  %v9891 = vsub.s32 %v9888, %v9890
  %v9892 = vrot.slane %v9885, %v9891
  %v9894 = vunpack.c.l.s4 1966171168
  %v9895 = vunpack.c.0.s8 %v9894
  %v9896 = vlaneseq
  %v9897 = vshrl.u32 %v9896, 7
  %v9898 = vsub.s32 %v9895, %v9897
  %v9899 = vrot.slane %v4190, %v9898
  %v9901 = vunpack.c.l.s4 1966171168
  %v9902 = vunpack.c.0.s8 %v9901
  %v9903 = vlaneseq
  %v9904 = vshrl.u32 %v9903, 7
  %v9905 = vsub.s32 %v9902, %v9904
  %v9906 = vrot.slane %v9899, %v9905
  %v9908 = vunpack.c.l.s4 1966171168
  %v9909 = vunpack.c.0.s8 %v9908
  %v9910 = vlaneseq
  %v9911 = vshrl.u32 %v9910, 7
  %v9912 = vsub.s32 %v9909, %v9911
  %v9913 = vrot.slane %v4370, %v9912
  %v9915 = vunpack.c.l.s4 1966171168
  %v9916 = vunpack.c.0.s8 %v9915
  %v9917 = vlaneseq
  %v9918 = vshrl.u32 %v9917, 7
  %v9919 = vsub.s32 %v9916, %v9918
  %v9920 = vrot.slane %v9913, %v9919
  %v9922 = vunpack.c.l.s4 1966171168
  %v9923 = vunpack.c.0.s8 %v9922
  %v9924 = vlaneseq
  %v9925 = vshrl.u32 %v9924, 7
  %v9926 = vsub.s32 %v9923, %v9925
  %v9927 = vrot.slane %v4384, %v9926
  %v9929 = vunpack.c.l.s4 1966171168
  %v9930 = vunpack.c.0.s8 %v9929
  %v9931 = vlaneseq
  %v9932 = vshrl.u32 %v9931, 7
  %v9933 = vsub.s32 %v9930, %v9932
  %v9934 = vrot.slane %v9927, %v9933
  %v9936 = vunpack.c.l.s4 1966171168
  %v9937 = vunpack.c.0.s8 %v9936
  %v9938 = vlaneseq
  %v9939 = vshrl.u32 %v9938, 7
  %v9940 = vsub.s32 %v9937, %v9939
  %v9941 = vrot.slane %v4386, %v9940
  %v9943 = vunpack.c.l.s4 1966171168
  %v9944 = vunpack.c.0.s8 %v9943
  %v9945 = vlaneseq
  %v9946 = vshrl.u32 %v9945, 7
  %v9947 = vsub.s32 %v9944, %v9946
  %v9948 = vrot.slane %v9941, %v9947
  %v9950 = vunpack.c.l.s4 1966171168
  %v9951 = vunpack.c.0.s8 %v9950
  %v9952 = vlaneseq
  %v9953 = vshrl.u32 %v9952, 7
  %v9954 = vsub.s32 %v9951, %v9953
  %v9955 = vrot.slane %v4566, %v9954
  %v9957 = vunpack.c.l.s4 1966171168
  %v9958 = vunpack.c.0.s8 %v9957
  %v9959 = vlaneseq
  %v9960 = vshrl.u32 %v9959, 7
  %v9961 = vsub.s32 %v9958, %v9960
  %v9962 = vrot.slane %v9955, %v9961
  %v9964 = vunpack.c.l.s4 1966171168
  %v9965 = vunpack.c.0.s8 %v9964
  %v9966 = vlaneseq
  %v9967 = vshrl.u32 %v9966, 7
  %v9968 = vsub.s32 %v9965, %v9967
  %v9969 = vrot.slane %v4580, %v9968
  %v9971 = vunpack.c.l.s4 1966171168
  %v9972 = vunpack.c.0.s8 %v9971
  %v9973 = vlaneseq
  %v9974 = vshrl.u32 %v9973, 7
  %v9975 = vsub.s32 %v9972, %v9974
  %v9976 = vrot.slane %v9969, %v9975
  %v9978 = vunpack.c.l.s4 1966171168
  %v9979 = vunpack.c.0.s8 %v9978
  %v9980 = vlaneseq
  %v9981 = vshrl.u32 %v9980, 7
  %v9982 = vsub.s32 %v9979, %v9981
  %v9983 = vrot.slane %v4582, %v9982
  %v9985 = vunpack.c.l.s4 1966171168
  %v9986 = vunpack.c.0.s8 %v9985
  %v9987 = vlaneseq
  %v9988 = vshrl.u32 %v9987, 7
  %v9989 = vsub.s32 %v9986, %v9988
  %v9990 = vrot.slane %v9983, %v9989
  %v9992 = vunpack.c.l.s4 1966171168
  %v9993 = vunpack.c.0.s8 %v9992
  %v9994 = vlaneseq
  %v9995 = vshrl.u32 %v9994, 7
  %v9996 = vsub.s32 %v9993, %v9995
  %v9997 = vrot.slane %v4762, %v9996
  %v9999 = vunpack.c.l.s4 1966171168
  %v10000 = vunpack.c.0.s8 %v9999
  %v10001 = vlaneseq
  %v10002 = vshrl.u32 %v10001, 7
  %v10003 = vsub.s32 %v10000, %v10002
  %v10004 = vrot.slane %v9997, %v10003
  %v10006 = vunpack.c.l.s4 1966171168
  %v10007 = vunpack.c.0.s8 %v10006
  %v10008 = vlaneseq
  %v10009 = vshrl.u32 %v10008, 7
  %v10010 = vsub.s32 %v10007, %v10009
  %v10011 = vrot.slane %v4776, %v10010
  %v10013 = vunpack.c.l.s4 1966171168
  %v10014 = vunpack.c.0.s8 %v10013
  %v10015 = vlaneseq
  %v10016 = vshrl.u32 %v10015, 7
  %v10017 = vsub.s32 %v10014, %v10016
  %v10018 = vrot.slane %v10011, %v10017
  %v10020 = vunpack.c.l.s4 1966171168
  %v10021 = vunpack.c.0.s8 %v10020
  %v10022 = vlaneseq
  %v10023 = vshrl.u32 %v10022, 7
  %v10024 = vsub.s32 %v10021, %v10023
  %v10025 = vrot.slane %v4778, %v10024
  %v10027 = vunpack.c.l.s4 1966171168
  %v10028 = vunpack.c.0.s8 %v10027
  %v10029 = vlaneseq
  %v10030 = vshrl.u32 %v10029, 7
  %v10031 = vsub.s32 %v10028, %v10030
  %v10032 = vrot.slane %v10025, %v10031
  %v10034 = vunpack.c.l.s4 1966171168
  %v10035 = vunpack.c.0.s8 %v10034
  %v10036 = vlaneseq
  %v10037 = vshrl.u32 %v10036, 7
  %v10038 = vsub.s32 %v10035, %v10037
  %v10039 = vrot.slane %v4958, %v10038
  %v10041 = vunpack.c.l.s4 1966171168
  %v10042 = vunpack.c.0.s8 %v10041
  %v10043 = vlaneseq
  %v10044 = vshrl.u32 %v10043, 7
  %v10045 = vsub.s32 %v10042, %v10044
  %v10046 = vrot.slane %v10039, %v10045
  %v10048 = vunpack.c.l.s4 1966171168
  %v10049 = vunpack.c.0.s8 %v10048
  %v10050 = vlaneseq
  %v10051 = vshrl.u32 %v10050, 7
  %v10052 = vsub.s32 %v10049, %v10051
  %v10053 = vrot.slane %v4972, %v10052
  %v10055 = vunpack.c.l.s4 1966171168
  %v10056 = vunpack.c.0.s8 %v10055
  %v10057 = vlaneseq
  %v10058 = vshrl.u32 %v10057, 7
  %v10059 = vsub.s32 %v10056, %v10058
  %v10060 = vrot.slane %v10053, %v10059
  %v10062 = vunpack.c.l.s4 1966171168
  %v10063 = vunpack.c.0.s8 %v10062
  %v10064 = vlaneseq
  %v10065 = vshrl.u32 %v10064, 7
  %v10066 = vsub.s32 %v10063, %v10065
  %v10067 = vrot.slane %v4974, %v10066
  %v10069 = vunpack.c.l.s4 1966171168
  %v10070 = vunpack.c.0.s8 %v10069
  %v10071 = vlaneseq
  %v10072 = vshrl.u32 %v10071, 7
  %v10073 = vsub.s32 %v10070, %v10072
  %v10074 = vrot.slane %v10067, %v10073
  %v10075 = vunpack.c.l.b16 %v9752
  %v10076 = vunpack.c.l.b16 %v9766
  %v10077 = vunpack.c.l.b16 %v9780
  %v10078 = vunpack.c.l.b16 %v9794
  %v10079 = vunpack.c.l.b16 %v9808
  %v10080 = vunpack.c.l.b16 %v9822
  %v10081 = vunpack.c.l.b16 %v9836
  %v10082 = vunpack.c.l.b16 %v9850
  %v10083 = vunpack.c.l.b16 %v9864
  %v10084 = vunpack.c.l.b16 %v9878
  %v10085 = vunpack.c.l.b16 %v9892
  %v10086 = vunpack.c.l.b16 %v9906
  %v10087 = vunpack.c.l.b16 %v9920
  %v10088 = vunpack.c.l.b16 %v9934
  %v10089 = vunpack.c.l.b16 %v9948
  %v10090 = vunpack.c.l.b16 %v9962
  %v10091 = vunpack.c.l.b16 %v9976
  %v10092 = vunpack.c.l.b16 %v9990
  %v10093 = vunpack.c.l.b16 %v10004
  %v10094 = vunpack.c.l.b16 %v10018
  %v10095 = vunpack.c.l.b16 %v10032
  %v10096 = vunpack.c.l.b16 %v10046
  %v10097 = vunpack.c.l.b16 %v10060
  %v10098 = vunpack.c.l.b16 %v10074
  %v10099 = vrot.slane %v10076, 7
  %v10100 = vsel %vm6058, %v10099, %v10075
  %v10101 = vrot.slane %v10077, 6
  %v10102 = vsel %vm6061, %v10101, %v10100
  %v10103 = vrot.slane %v10079, 7
  %v10104 = vsel %vm6058, %v10103, %v10078
  %v10105 = vrot.slane %v10080, 6
  %v10106 = vsel %vm6061, %v10105, %v10104
  %v10107 = vrot.slane %v10082, 7
  %v10108 = vsel %vm6058, %v10107, %v10081
  %v10109 = vrot.slane %v10083, 6
  %v10110 = vsel %vm6061, %v10109, %v10108
  %v10111 = vrot.slane %v10085, 7
  %v10112 = vsel %vm6058, %v10111, %v10084
  %v10113 = vrot.slane %v10086, 6
  %v10114 = vsel %vm6061, %v10113, %v10112
  %v10115 = vrot.slane %v10088, 7
  %v10116 = vsel %vm6058, %v10115, %v10087
  %v10117 = vrot.slane %v10089, 6
  %v10118 = vsel %vm6061, %v10117, %v10116
  %v10119 = vrot.slane %v10091, 7
  %v10120 = vsel %vm6058, %v10119, %v10090
  %v10121 = vrot.slane %v10092, 6
  %v10122 = vsel %vm6061, %v10121, %v10120
  %v10123 = vrot.slane %v10094, 7
  %v10124 = vsel %vm6058, %v10123, %v10093
  %v10125 = vrot.slane %v10095, 6
  %v10126 = vsel %vm6061, %v10125, %v10124
  %v10127 = vrot.slane %v10097, 7
  %v10128 = vsel %vm6058, %v10127, %v10096
  %v10129 = vrot.slane %v10098, 6
  %v10130 = vsel %vm6061, %v10129, %v10128
  %v10131 = vpack.c.b16 %v10102, %v10102
  %v10132 = vpack.c.b16 %v10106, %v10106
  %v10133 = vpack.c.b16 %v10110, %v10110
  %v10134 = vpack.c.b16 %v10114, %v10114
  %v10135 = vpack.c.b16 %v10118, %v10118
  %v10136 = vpack.c.b16 %v10122, %v10122
  %v10137 = vpack.c.b16 %v10126, %v10126
  %v10138 = vpack.c.b16 %v10130, %v10130
  %v10139 = vrot.slane %v10075, 1
  %v10140 = vsel %vm6058, %v10076, %v10139
  %v10141 = vrot.slane %v10077, 7
  %v10142 = vsel %vm6061, %v10141, %v10140
  %v10143 = vrot.slane %v10078, 1
  %v10144 = vsel %vm6058, %v10079, %v10143
  %v10145 = vrot.slane %v10080, 7
  %v10146 = vsel %vm6061, %v10145, %v10144
  %v10147 = vrot.slane %v10081, 1
  %v10148 = vsel %vm6058, %v10082, %v10147
  %v10149 = vrot.slane %v10083, 7
  %v10150 = vsel %vm6061, %v10149, %v10148
  %v10151 = vrot.slane %v10084, 1
  %v10152 = vsel %vm6058, %v10085, %v10151
  %v10153 = vrot.slane %v10086, 7
  %v10154 = vsel %vm6061, %v10153, %v10152
  %v10155 = vrot.slane %v10087, 1
  %v10156 = vsel %vm6058, %v10088, %v10155
  %v10157 = vrot.slane %v10089, 7
  %v10158 = vsel %vm6061, %v10157, %v10156
  %v10159 = vrot.slane %v10090, 1
  %v10160 = vsel %vm6058, %v10091, %v10159
  %v10161 = vrot.slane %v10092, 7
  %v10162 = vsel %vm6061, %v10161, %v10160
  %v10163 = vrot.slane %v10093, 1
  %v10164 = vsel %vm6058, %v10094, %v10163
  %v10165 = vrot.slane %v10095, 7
  %v10166 = vsel %vm6061, %v10165, %v10164
  %v10167 = vrot.slane %v10096, 1
  %v10168 = vsel %vm6058, %v10097, %v10167
  %v10169 = vrot.slane %v10098, 7
  %v10170 = vsel %vm6061, %v10169, %v10168
  %v10171 = vpack.c.b16 %v10142, %v10142
  %v10172 = vpack.c.b16 %v10146, %v10146
  %v10173 = vpack.c.b16 %v10150, %v10150
  %v10174 = vpack.c.b16 %v10154, %v10154
  %v10175 = vpack.c.b16 %v10158, %v10158
  %v10176 = vpack.c.b16 %v10162, %v10162
  %v10177 = vpack.c.b16 %v10166, %v10166
  %v10178 = vpack.c.b16 %v10170, %v10170
  %10179 = vrot.lane.b32.xlu0 %v10171, 32
  %v10180 = vpop.permute.xlu0 %10179
  %10181 = vrot.lane.b32.xlu0 %v10172, 32
  %v10182 = vpop.permute.xlu0 %10181
  %10183 = vrot.lane.b32.xlu0 %v10173, 32
  %v10184 = vpop.permute.xlu0 %10183
  %10185 = vrot.lane.b32.xlu0 %v10174, 32
  %v10186 = vpop.permute.xlu0 %10185
  %10187 = vrot.lane.b32.xlu0 %v10175, 32
  %v10188 = vpop.permute.xlu0 %10187
  %10189 = vrot.lane.b32.xlu0 %v10176, 32
  %v10190 = vpop.permute.xlu0 %10189
  %10191 = vrot.lane.b32.xlu0 %v10177, 32
  %v10192 = vpop.permute.xlu0 %10191
  %10193 = vrot.lane.b32.xlu0 %v10178, 32
  %v10194 = vpop.permute.xlu0 %10193
  %v10196 = vunpack.c.l.s4 1966171168
  %v10197 = vunpack.c.0.s8 %v10196
  %v10198 = vlaneseq
  %v10199 = vshrl.u32 %v10198, 7
  %v10200 = vsub.s32 %v10197, %v10199
  %v10201 = vrot.slane %v3604, %v10200
  %v10203 = vunpack.c.l.s4 1966171168
  %v10204 = vunpack.c.0.s8 %v10203
  %v10205 = vlaneseq
  %v10206 = vshrl.u32 %v10205, 7
  %v10207 = vsub.s32 %v10204, %v10206
  %v10208 = vrot.slane %v10201, %v10207
  %v10210 = vunpack.c.l.s4 1966171168
  %v10211 = vunpack.c.0.s8 %v10210
  %v10212 = vlaneseq
  %v10213 = vshrl.u32 %v10212, 7
  %v10214 = vsub.s32 %v10211, %v10213
  %v10215 = vrot.slane %v3800, %v10214
  %v10217 = vunpack.c.l.s4 1966171168
  %v10218 = vunpack.c.0.s8 %v10217
  %v10219 = vlaneseq
  %v10220 = vshrl.u32 %v10219, 7
  %v10221 = vsub.s32 %v10218, %v10220
  %v10222 = vrot.slane %v10215, %v10221
  %v10224 = vunpack.c.l.s4 1966171168
  %v10225 = vunpack.c.0.s8 %v10224
  %v10226 = vlaneseq
  %v10227 = vshrl.u32 %v10226, 7
  %v10228 = vsub.s32 %v10225, %v10227
  %v10229 = vrot.slane %v3996, %v10228
  %v10231 = vunpack.c.l.s4 1966171168
  %v10232 = vunpack.c.0.s8 %v10231
  %v10233 = vlaneseq
  %v10234 = vshrl.u32 %v10233, 7
  %v10235 = vsub.s32 %v10232, %v10234
  %v10236 = vrot.slane %v10229, %v10235
  %v10238 = vunpack.c.l.s4 1966171168
  %v10239 = vunpack.c.0.s8 %v10238
  %v10240 = vlaneseq
  %v10241 = vshrl.u32 %v10240, 7
  %v10242 = vsub.s32 %v10239, %v10241
  %v10243 = vrot.slane %v4192, %v10242
  %v10245 = vunpack.c.l.s4 1966171168
  %v10246 = vunpack.c.0.s8 %v10245
  %v10247 = vlaneseq
  %v10248 = vshrl.u32 %v10247, 7
  %v10249 = vsub.s32 %v10246, %v10248
  %v10250 = vrot.slane %v10243, %v10249
  %v10252 = vunpack.c.l.s4 1966171168
  %v10253 = vunpack.c.0.s8 %v10252
  %v10254 = vlaneseq
  %v10255 = vshrl.u32 %v10254, 7
  %v10256 = vsub.s32 %v10253, %v10255
  %v10257 = vrot.slane %v4388, %v10256
  %v10259 = vunpack.c.l.s4 1966171168
  %v10260 = vunpack.c.0.s8 %v10259
  %v10261 = vlaneseq
  %v10262 = vshrl.u32 %v10261, 7
  %v10263 = vsub.s32 %v10260, %v10262
  %v10264 = vrot.slane %v10257, %v10263
  %v10266 = vunpack.c.l.s4 1966171168
  %v10267 = vunpack.c.0.s8 %v10266
  %v10268 = vlaneseq
  %v10269 = vshrl.u32 %v10268, 7
  %v10270 = vsub.s32 %v10267, %v10269
  %v10271 = vrot.slane %v4584, %v10270
  %v10273 = vunpack.c.l.s4 1966171168
  %v10274 = vunpack.c.0.s8 %v10273
  %v10275 = vlaneseq
  %v10276 = vshrl.u32 %v10275, 7
  %v10277 = vsub.s32 %v10274, %v10276
  %v10278 = vrot.slane %v10271, %v10277
  %v10280 = vunpack.c.l.s4 1966171168
  %v10281 = vunpack.c.0.s8 %v10280
  %v10282 = vlaneseq
  %v10283 = vshrl.u32 %v10282, 7
  %v10284 = vsub.s32 %v10281, %v10283
  %v10285 = vrot.slane %v4780, %v10284
  %v10287 = vunpack.c.l.s4 1966171168
  %v10288 = vunpack.c.0.s8 %v10287
  %v10289 = vlaneseq
  %v10290 = vshrl.u32 %v10289, 7
  %v10291 = vsub.s32 %v10288, %v10290
  %v10292 = vrot.slane %v10285, %v10291
  %v10294 = vunpack.c.l.s4 1966171168
  %v10295 = vunpack.c.0.s8 %v10294
  %v10296 = vlaneseq
  %v10297 = vshrl.u32 %v10296, 7
  %v10298 = vsub.s32 %v10295, %v10297
  %v10299 = vrot.slane %v4976, %v10298
  %v10301 = vunpack.c.l.s4 1966171168
  %v10302 = vunpack.c.0.s8 %v10301
  %v10303 = vlaneseq
  %v10304 = vshrl.u32 %v10303, 7
  %v10305 = vsub.s32 %v10302, %v10304
  %v10306 = vrot.slane %v10299, %v10305
  %v10307 = vunpack.c.l.b16 %v10208
  %v10308 = vunpack.c.l.b16 %v10222
  %v10309 = vunpack.c.l.b16 %v10236
  %v10310 = vunpack.c.l.b16 %v10250
  %v10311 = vunpack.c.l.b16 %v10264
  %v10312 = vunpack.c.l.b16 %v10278
  %v10313 = vunpack.c.l.b16 %v10292
  %v10314 = vunpack.c.l.b16 %v10306
  %v10315 = vsel %vm6058, %v10141, %v10076
  %v10316 = vrot.slane %v10307, 6
  %v10317 = vsel %vm6061, %v10316, %v10315
  %v10318 = vsel %vm6058, %v10145, %v10079
  %v10319 = vrot.slane %v10308, 6
  %v10320 = vsel %vm6061, %v10319, %v10318
  %v10321 = vsel %vm6058, %v10149, %v10082
  %v10322 = vrot.slane %v10309, 6
  %v10323 = vsel %vm6061, %v10322, %v10321
  %v10324 = vsel %vm6058, %v10153, %v10085
  %v10325 = vrot.slane %v10310, 6
  %v10326 = vsel %vm6061, %v10325, %v10324
  %v10327 = vsel %vm6058, %v10157, %v10088
  %v10328 = vrot.slane %v10311, 6
  %v10329 = vsel %vm6061, %v10328, %v10327
  %v10330 = vsel %vm6058, %v10161, %v10091
  %v10331 = vrot.slane %v10312, 6
  %v10332 = vsel %vm6061, %v10331, %v10330
  %v10333 = vsel %vm6058, %v10165, %v10094
  %v10334 = vrot.slane %v10313, 6
  %v10335 = vsel %vm6061, %v10334, %v10333
  %v10336 = vsel %vm6058, %v10169, %v10097
  %v10337 = vrot.slane %v10314, 6
  %v10338 = vsel %vm6061, %v10337, %v10336
  %v10339 = vpack.c.b16 %v10317, %v10317
  %v10340 = vpack.c.b16 %v10320, %v10320
  %v10341 = vpack.c.b16 %v10323, %v10323
  %v10342 = vpack.c.b16 %v10326, %v10326
  %v10343 = vpack.c.b16 %v10329, %v10329
  %v10344 = vpack.c.b16 %v10332, %v10332
  %v10345 = vpack.c.b16 %v10335, %v10335
  %v10346 = vpack.c.b16 %v10338, %v10338
  %10347 = vrot.lane.b32.xlu0 %v10339, 64
  %v10348 = vpop.permute.xlu0 %10347
  %10349 = vrot.lane.b32.xlu0 %v10340, 64
  %v10350 = vpop.permute.xlu0 %10349
  %10351 = vrot.lane.b32.xlu0 %v10341, 64
  %v10352 = vpop.permute.xlu0 %10351
  %10353 = vrot.lane.b32.xlu0 %v10342, 64
  %v10354 = vpop.permute.xlu0 %10353
  %10355 = vrot.lane.b32.xlu0 %v10343, 64
  %v10356 = vpop.permute.xlu0 %10355
  %10357 = vrot.lane.b32.xlu0 %v10344, 64
  %v10358 = vpop.permute.xlu0 %10357
  %10359 = vrot.lane.b32.xlu0 %v10345, 64
  %v10360 = vpop.permute.xlu0 %10359
  %10361 = vrot.lane.b32.xlu0 %v10346, 64
  %v10362 = vpop.permute.xlu0 %10361
  %v10363 = vrot.slane %v10076, 1
  %v10364 = vsel %vm6058, %v10077, %v10363
  %v10365 = vrot.slane %v10307, 7
  %v10366 = vsel %vm6061, %v10365, %v10364
  %v10367 = vrot.slane %v10079, 1
  %v10368 = vsel %vm6058, %v10080, %v10367
  %v10369 = vrot.slane %v10308, 7
  %v10370 = vsel %vm6061, %v10369, %v10368
  %v10371 = vrot.slane %v10082, 1
  %v10372 = vsel %vm6058, %v10083, %v10371
  %v10373 = vrot.slane %v10309, 7
  %v10374 = vsel %vm6061, %v10373, %v10372
  %v10375 = vrot.slane %v10085, 1
  %v10376 = vsel %vm6058, %v10086, %v10375
  %v10377 = vrot.slane %v10310, 7
  %v10378 = vsel %vm6061, %v10377, %v10376
  %v10379 = vrot.slane %v10088, 1
  %v10380 = vsel %vm6058, %v10089, %v10379
  %v10381 = vrot.slane %v10311, 7
  %v10382 = vsel %vm6061, %v10381, %v10380
  %v10383 = vrot.slane %v10091, 1
  %v10384 = vsel %vm6058, %v10092, %v10383
  %v10385 = vrot.slane %v10312, 7
  %v10386 = vsel %vm6061, %v10385, %v10384
  %v10387 = vrot.slane %v10094, 1
  %v10388 = vsel %vm6058, %v10095, %v10387
  %v10389 = vrot.slane %v10313, 7
  %v10390 = vsel %vm6061, %v10389, %v10388
  %v10391 = vrot.slane %v10097, 1
  %v10392 = vsel %vm6058, %v10098, %v10391
  %v10393 = vrot.slane %v10314, 7
  %v10394 = vsel %vm6061, %v10393, %v10392
  %v10395 = vpack.c.b16 %v10366, %v10366
  %v10396 = vpack.c.b16 %v10370, %v10370
  %v10397 = vpack.c.b16 %v10374, %v10374
  %v10398 = vpack.c.b16 %v10378, %v10378
  %v10399 = vpack.c.b16 %v10382, %v10382
  %v10400 = vpack.c.b16 %v10386, %v10386
  %v10401 = vpack.c.b16 %v10390, %v10390
  %v10402 = vpack.c.b16 %v10394, %v10394
  %10403 = vrot.lane.b32.xlu0 %v10395, 96
  %v10404 = vpop.permute.xlu0 %10403
  %10405 = vrot.lane.b32.xlu0 %v10396, 96
  %v10406 = vpop.permute.xlu0 %10405
  %10407 = vrot.lane.b32.xlu0 %v10397, 96
  %v10408 = vpop.permute.xlu0 %10407
  %10409 = vrot.lane.b32.xlu0 %v10398, 96
  %v10410 = vpop.permute.xlu0 %10409
  %10411 = vrot.lane.b32.xlu0 %v10399, 96
  %v10412 = vpop.permute.xlu0 %10411
  %10413 = vrot.lane.b32.xlu0 %v10400, 96
  %v10414 = vpop.permute.xlu0 %10413
  %10415 = vrot.lane.b32.xlu0 %v10401, 96
  %v10416 = vpop.permute.xlu0 %10415
  %10417 = vrot.lane.b32.xlu0 %v10402, 96
  %v10418 = vpop.permute.xlu0 %10417
  %vm10419 = vcmask 261120
  %v10422 = vsel %vm10419, %v6155, %v6300
  %v10425 = vsel %vm10419, %v6156, %v6302
  %v10428 = vsel %vm10419, %v6157, %v6304
  %v10431 = vsel %vm10419, %v6158, %v6306
  %v10434 = vsel %vm10419, %v6159, %v6308
  %v10437 = vsel %vm10419, %v6160, %v6310
  %v10440 = vsel %vm10419, %v6161, %v6312
  %v10443 = vsel %vm10419, %v6162, %v6314
  %v10446 = vsel %vm10419, %v6163, %v6316
  %v10449 = vsel %vm10419, %v6164, %v6318
  %v10452 = vsel %vm10419, %v6165, %v6320
  %v10455 = vsel %vm10419, %v6166, %v6322
  %v10458 = vsel %vm10419, %v6167, %v6324
  %v10461 = vsel %vm10419, %v6168, %v6326
  %v10464 = vsel %vm10419, %v6169, %v6328
  %v10467 = vsel %vm10419, %v6170, %v6330
  %v10470 = vsel %vm10419, %v6171, %v6332
  %v10473 = vsel %vm10419, %v6172, %v6334
  %v10476 = vsel %vm10419, %v6173, %v6336
  %v10479 = vsel %vm10419, %v6174, %v6338
  %v10482 = vsel %vm10419, %v6175, %v6340
  %v10485 = vsel %vm10419, %v6176, %v6342
  %v10488 = vsel %vm10419, %v6177, %v6344
  %v10491 = vsel %vm10419, %v6178, %v6346
  %v10493 = vsel %vm2088, %v10422, %v6804
  %v10495 = vsel %vm2088, %v10425, %v6806
  %v10497 = vsel %vm2088, %v10428, %v6808
  %v10499 = vsel %vm2088, %v10431, %v6810
  %v10501 = vsel %vm2088, %v10434, %v6812
  %v10503 = vsel %vm2088, %v10437, %v6814
  %v10505 = vsel %vm2088, %v10440, %v6816
  %v10507 = vsel %vm2088, %v10443, %v6818
  %v10509 = vsel %vm2088, %v10446, %v6820
  %v10511 = vsel %vm2088, %v10449, %v6822
  %v10513 = vsel %vm2088, %v10452, %v6824
  %v10515 = vsel %vm2088, %v10455, %v6826
  %v10517 = vsel %vm2088, %v10458, %v6828
  %v10519 = vsel %vm2088, %v10461, %v6830
  %v10521 = vsel %vm2088, %v10464, %v6832
  %v10523 = vsel %vm2088, %v10467, %v6834
  %v10525 = vsel %vm2088, %v10470, %v6836
  %v10527 = vsel %vm2088, %v10473, %v6838
  %v10529 = vsel %vm2088, %v10476, %v6840
  %v10531 = vsel %vm2088, %v10479, %v6842
  %v10533 = vsel %vm2088, %v10482, %v6844
  %v10535 = vsel %vm2088, %v10485, %v6846
  %v10537 = vsel %vm2088, %v10488, %v6848
  %v10539 = vsel %vm2088, %v10491, %v6850
  %vm10540 = vcmask 785408
  %v10542 = vsel %vm10540, %v10493, %v6972
  %v10544 = vsel %vm10540, %v10495, %v6974
  %v10546 = vsel %vm10540, %v10497, %v6976
  %v10548 = vsel %vm10540, %v10499, %v6978
  %v10550 = vsel %vm10540, %v10501, %v6980
  %v10552 = vsel %vm10540, %v10503, %v6982
  %v10554 = vsel %vm10540, %v10505, %v6984
  %v10556 = vsel %vm10540, %v10507, %v6986
  %v10558 = vsel %vm10540, %v10509, %v6988
  %v10560 = vsel %vm10540, %v10511, %v6990
  %v10562 = vsel %vm10540, %v10513, %v6992
  %v10564 = vsel %vm10540, %v10515, %v6994
  %v10566 = vsel %vm10540, %v10517, %v6996
  %v10568 = vsel %vm10540, %v10519, %v6998
  %v10570 = vsel %vm10540, %v10521, %v7000
  %v10572 = vsel %vm10540, %v10523, %v7002
  %v10574 = vsel %vm10540, %v10525, %v7004
  %v10576 = vsel %vm10540, %v10527, %v7006
  %v10578 = vsel %vm10540, %v10529, %v7008
  %v10580 = vsel %vm10540, %v10531, %v7010
  %v10582 = vsel %vm10540, %v10533, %v7012
  %v10584 = vsel %vm10540, %v10535, %v7014
  %v10586 = vsel %vm10540, %v10537, %v7016
  %v10588 = vsel %vm10540, %v10539, %v7018
  %v10591 = vsel %vm10419, %v8195, %v8340
  %v10594 = vsel %vm10419, %v8196, %v8342
  %v10597 = vsel %vm10419, %v8197, %v8344
  %v10600 = vsel %vm10419, %v8198, %v8346
  %v10603 = vsel %vm10419, %v8199, %v8348
  %v10606 = vsel %vm10419, %v8200, %v8350
  %v10609 = vsel %vm10419, %v8201, %v8352
  %v10612 = vsel %vm10419, %v8202, %v8354
  %v10615 = vsel %vm10419, %v8203, %v8356
  %v10618 = vsel %vm10419, %v8204, %v8358
  %v10621 = vsel %vm10419, %v8205, %v8360
  %v10624 = vsel %vm10419, %v8206, %v8362
  %v10627 = vsel %vm10419, %v8207, %v8364
  %v10630 = vsel %vm10419, %v8208, %v8366
  %v10633 = vsel %vm10419, %v8209, %v8368
  %v10636 = vsel %vm10419, %v8210, %v8370
  %v10639 = vsel %vm10419, %v8211, %v8372
  %v10642 = vsel %vm10419, %v8212, %v8374
  %v10645 = vsel %vm10419, %v8213, %v8376
  %v10648 = vsel %vm10419, %v8214, %v8378
  %v10651 = vsel %vm10419, %v8215, %v8380
  %v10654 = vsel %vm10419, %v8216, %v8382
  %v10657 = vsel %vm10419, %v8217, %v8384
  %v10660 = vsel %vm10419, %v8218, %v8386
  %v10662 = vsel %vm2088, %v10591, %v8844
  %v10664 = vsel %vm2088, %v10594, %v8846
  %v10666 = vsel %vm2088, %v10597, %v8848
  %v10668 = vsel %vm2088, %v10600, %v8850
  %v10670 = vsel %vm2088, %v10603, %v8852
  %v10672 = vsel %vm2088, %v10606, %v8854
  %v10674 = vsel %vm2088, %v10609, %v8856
  %v10676 = vsel %vm2088, %v10612, %v8858
  %v10678 = vsel %vm2088, %v10615, %v8860
  %v10680 = vsel %vm2088, %v10618, %v8862
  %v10682 = vsel %vm2088, %v10621, %v8864
  %v10684 = vsel %vm2088, %v10624, %v8866
  %v10686 = vsel %vm2088, %v10627, %v8868
  %v10688 = vsel %vm2088, %v10630, %v8870
  %v10690 = vsel %vm2088, %v10633, %v8872
  %v10692 = vsel %vm2088, %v10636, %v8874
  %v10694 = vsel %vm2088, %v10639, %v8876
  %v10696 = vsel %vm2088, %v10642, %v8878
  %v10698 = vsel %vm2088, %v10645, %v8880
  %v10700 = vsel %vm2088, %v10648, %v8882
  %v10702 = vsel %vm2088, %v10651, %v8884
  %v10704 = vsel %vm2088, %v10654, %v8886
  %v10706 = vsel %vm2088, %v10657, %v8888
  %v10708 = vsel %vm2088, %v10660, %v8890
  %v10710 = vsel %vm10540, %v10662, %v9012
  %v10712 = vsel %vm10540, %v10664, %v9014
  %v10714 = vsel %vm10540, %v10666, %v9016
  %v10716 = vsel %vm10540, %v10668, %v9018
  %v10718 = vsel %vm10540, %v10670, %v9020
  %v10720 = vsel %vm10540, %v10672, %v9022
  %v10722 = vsel %vm10540, %v10674, %v9024
  %v10724 = vsel %vm10540, %v10676, %v9026
  %v10726 = vsel %vm10540, %v10678, %v9028
  %v10728 = vsel %vm10540, %v10680, %v9030
  %v10730 = vsel %vm10540, %v10682, %v9032
  %v10732 = vsel %vm10540, %v10684, %v9034
  %v10734 = vsel %vm10540, %v10686, %v9036
  %v10736 = vsel %vm10540, %v10688, %v9038
  %v10738 = vsel %vm10540, %v10690, %v9040
  %v10740 = vsel %vm10540, %v10692, %v9042
  %v10742 = vsel %vm10540, %v10694, %v9044
  %v10744 = vsel %vm10540, %v10696, %v9046
  %v10746 = vsel %vm10540, %v10698, %v9048
  %v10748 = vsel %vm10540, %v10700, %v9050
  %v10750 = vsel %vm10540, %v10702, %v9052
  %v10752 = vsel %vm10540, %v10704, %v9054
  %v10754 = vsel %vm10540, %v10706, %v9056
  %v10756 = vsel %vm10540, %v10708, %v9058
  %v10759 = vsel %vm10419, %v9451, %v9500
  %v10762 = vsel %vm10419, %v9452, %v9502
  %v10765 = vsel %vm10419, %v9453, %v9504
  %v10768 = vsel %vm10419, %v9454, %v9506
  %v10771 = vsel %vm10419, %v9455, %v9508
  %v10774 = vsel %vm10419, %v9456, %v9510
  %v10777 = vsel %vm10419, %v9457, %v9512
  %v10780 = vsel %vm10419, %v9458, %v9514
  %v10782 = vsel %vm2088, %v10759, %v9668
  %v10784 = vsel %vm2088, %v10762, %v9670
  %v10786 = vsel %vm2088, %v10765, %v9672
  %v10788 = vsel %vm2088, %v10768, %v9674
  %v10790 = vsel %vm2088, %v10771, %v9676
  %v10792 = vsel %vm2088, %v10774, %v9678
  %v10794 = vsel %vm2088, %v10777, %v9680
  %v10796 = vsel %vm2088, %v10780, %v9682
  %v10798 = vsel %vm10540, %v10782, %v9724
  %v10800 = vsel %vm10540, %v10784, %v9726
  %v10802 = vsel %vm10540, %v10786, %v9728
  %v10804 = vsel %vm10540, %v10788, %v9730
  %v10806 = vsel %vm10540, %v10790, %v9732
  %v10808 = vsel %vm10540, %v10792, %v9734
  %v10810 = vsel %vm10540, %v10794, %v9736
  %v10812 = vsel %vm10540, %v10796, %v9738
  %v10815 = vsel %vm10419, %v10131, %v10180
  %v10818 = vsel %vm10419, %v10132, %v10182
  %v10821 = vsel %vm10419, %v10133, %v10184
  %v10824 = vsel %vm10419, %v10134, %v10186
  %v10827 = vsel %vm10419, %v10135, %v10188
  %v10830 = vsel %vm10419, %v10136, %v10190
  %v10833 = vsel %vm10419, %v10137, %v10192
  %v10836 = vsel %vm10419, %v10138, %v10194
  %v10838 = vsel %vm2088, %v10815, %v10348
  %v10840 = vsel %vm2088, %v10818, %v10350
  %v10842 = vsel %vm2088, %v10821, %v10352
  %v10844 = vsel %vm2088, %v10824, %v10354
  %v10846 = vsel %vm2088, %v10827, %v10356
  %v10848 = vsel %vm2088, %v10830, %v10358
  %v10850 = vsel %vm2088, %v10833, %v10360
  %v10852 = vsel %vm2088, %v10836, %v10362
  %v10854 = vsel %vm10540, %v10838, %v10404
  %v10856 = vsel %vm10540, %v10840, %v10406
  %v10858 = vsel %vm10540, %v10842, %v10408
  %v10860 = vsel %vm10540, %v10844, %v10410
  %v10862 = vsel %vm10540, %v10846, %v10412
  %v10864 = vsel %vm10540, %v10848, %v10414
  %v10866 = vsel %vm10540, %v10850, %v10416
  %v10868 = vsel %vm10540, %v10852, %v10418
  %v10933 = vcombine.low %v10542, %v10710
  %v10934 = vcombine.low %v10544, %v10712
  %v10936 = vunpack.c.l.s4 1966171168
  %v10937 = vunpack.c.0.s8 %v10936
  %v10938 = vlaneseq
  %v10939 = vshrl.u32 %v10938, 7
  %v10940 = vsub.s32 %v10937, %v10939
  %v10941 = vrot.slane %v10933, %v10940
  %v10943 = vunpack.c.l.s4 1966171168
  %v10944 = vunpack.c.0.s8 %v10943
  %v10945 = vlaneseq
  %v10946 = vshrl.u32 %v10945, 7
  %v10947 = vsub.s32 %v10944, %v10946
  %v10948 = vrot.slane %v10934, %v10947
  %v10949 = vcombine.low %v10941, %v10948
  %v10950 = vcombine.high %v10941, %v10948
  %v10952 = vunpack.c.l.s4 1966171168
  %v10953 = vunpack.c.0.s8 %v10952
  %v10954 = vlaneseq
  %v10955 = vshrl.u32 %v10954, 7
  %v10956 = vsub.s32 %v10953, %v10955
  %v10957 = vrot.slane %v10949, %v10956
  %v10959 = vunpack.c.l.s4 1966171168
  %v10960 = vunpack.c.0.s8 %v10959
  %v10961 = vlaneseq
  %v10962 = vshrl.u32 %v10961, 7
  %v10963 = vsub.s32 %v10960, %v10962
  %v10964 = vrot.slane %v10950, %v10963
  %v10965 = vcombine.low %v10546, %v10714
  %v10967 = vunpack.c.l.s4 1966171168
  %v10968 = vunpack.c.0.s8 %v10967
  %v10969 = vlaneseq
  %v10970 = vshrl.u32 %v10969, 7
  %v10971 = vsub.s32 %v10968, %v10970
  %v10972 = vrot.slane %v10965, %v10971
  %v10973 = vcombine.low %v10948, %v10972
  %v10974 = vcombine.high %v10948, %v10972
  %v10976 = vunpack.c.l.s4 1966171168
  %v10977 = vunpack.c.0.s8 %v10976
  %v10978 = vlaneseq
  %v10979 = vshrl.u32 %v10978, 7
  %v10980 = vsub.s32 %v10977, %v10979
  %v10981 = vrot.slane %v10973, %v10980
  %v10983 = vunpack.c.l.s4 1966171168
  %v10984 = vunpack.c.0.s8 %v10983
  %v10985 = vlaneseq
  %v10986 = vshrl.u32 %v10985, 7
  %v10987 = vsub.s32 %v10984, %v10986
  %v10988 = vrot.slane %v10974, %v10987
  %v10989 = vcombine.low %v10798, %v10854
  %v10991 = vunpack.c.l.s4 1966171168
  %v10992 = vunpack.c.0.s8 %v10991
  %v10993 = vlaneseq
  %v10994 = vshrl.u32 %v10993, 7
  %v10995 = vsub.s32 %v10992, %v10994
  %v10996 = vrot.slane %v10989, %v10995
  %v10997 = vcombine.low %v10972, %v10996
  %v10998 = vcombine.high %v10972, %v10996
  %v11000 = vunpack.c.l.s4 1966171168
  %v11001 = vunpack.c.0.s8 %v11000
  %v11002 = vlaneseq
  %v11003 = vshrl.u32 %v11002, 7
  %v11004 = vsub.s32 %v11001, %v11003
  %v11005 = vrot.slane %v10997, %v11004
  %v11007 = vunpack.c.l.s4 1966171168
  %v11008 = vunpack.c.0.s8 %v11007
  %v11009 = vlaneseq
  %v11010 = vshrl.u32 %v11009, 7
  %v11011 = vsub.s32 %v11008, %v11010
  %v11012 = vrot.slane %v10998, %v11011
  %v11013 = vcombine.low %v10548, %v10716
  %v11014 = vcombine.low %v10550, %v10718
  %v11016 = vunpack.c.l.s4 1966171168
  %v11017 = vunpack.c.0.s8 %v11016
  %v11018 = vlaneseq
  %v11019 = vshrl.u32 %v11018, 7
  %v11020 = vsub.s32 %v11017, %v11019
  %v11021 = vrot.slane %v11013, %v11020
  %v11023 = vunpack.c.l.s4 1966171168
  %v11024 = vunpack.c.0.s8 %v11023
  %v11025 = vlaneseq
  %v11026 = vshrl.u32 %v11025, 7
  %v11027 = vsub.s32 %v11024, %v11026
  %v11028 = vrot.slane %v11014, %v11027
  %v11029 = vcombine.low %v11021, %v11028
  %v11030 = vcombine.high %v11021, %v11028
  %v11032 = vunpack.c.l.s4 1966171168
  %v11033 = vunpack.c.0.s8 %v11032
  %v11034 = vlaneseq
  %v11035 = vshrl.u32 %v11034, 7
  %v11036 = vsub.s32 %v11033, %v11035
  %v11037 = vrot.slane %v11029, %v11036
  %v11039 = vunpack.c.l.s4 1966171168
  %v11040 = vunpack.c.0.s8 %v11039
  %v11041 = vlaneseq
  %v11042 = vshrl.u32 %v11041, 7
  %v11043 = vsub.s32 %v11040, %v11042
  %v11044 = vrot.slane %v11030, %v11043
  %v11045 = vcombine.low %v10552, %v10720
  %v11047 = vunpack.c.l.s4 1966171168
  %v11048 = vunpack.c.0.s8 %v11047
  %v11049 = vlaneseq
  %v11050 = vshrl.u32 %v11049, 7
  %v11051 = vsub.s32 %v11048, %v11050
  %v11052 = vrot.slane %v11045, %v11051
  %v11053 = vcombine.low %v11028, %v11052
  %v11054 = vcombine.high %v11028, %v11052
  %v11056 = vunpack.c.l.s4 1966171168
  %v11057 = vunpack.c.0.s8 %v11056
  %v11058 = vlaneseq
  %v11059 = vshrl.u32 %v11058, 7
  %v11060 = vsub.s32 %v11057, %v11059
  %v11061 = vrot.slane %v11053, %v11060
  %v11063 = vunpack.c.l.s4 1966171168
  %v11064 = vunpack.c.0.s8 %v11063
  %v11065 = vlaneseq
  %v11066 = vshrl.u32 %v11065, 7
  %v11067 = vsub.s32 %v11064, %v11066
  %v11068 = vrot.slane %v11054, %v11067
  %v11069 = vcombine.low %v10800, %v10856
  %v11071 = vunpack.c.l.s4 1966171168
  %v11072 = vunpack.c.0.s8 %v11071
  %v11073 = vlaneseq
  %v11074 = vshrl.u32 %v11073, 7
  %v11075 = vsub.s32 %v11072, %v11074
  %v11076 = vrot.slane %v11069, %v11075
  %v11077 = vcombine.low %v11052, %v11076
  %v11078 = vcombine.high %v11052, %v11076
  %v11080 = vunpack.c.l.s4 1966171168
  %v11081 = vunpack.c.0.s8 %v11080
  %v11082 = vlaneseq
  %v11083 = vshrl.u32 %v11082, 7
  %v11084 = vsub.s32 %v11081, %v11083
  %v11085 = vrot.slane %v11077, %v11084
  %v11087 = vunpack.c.l.s4 1966171168
  %v11088 = vunpack.c.0.s8 %v11087
  %v11089 = vlaneseq
  %v11090 = vshrl.u32 %v11089, 7
  %v11091 = vsub.s32 %v11088, %v11090
  %v11092 = vrot.slane %v11078, %v11091
  %v11093 = vcombine.low %v10554, %v10722
  %v11094 = vcombine.low %v10556, %v10724
  %v11096 = vunpack.c.l.s4 1966171168
  %v11097 = vunpack.c.0.s8 %v11096
  %v11098 = vlaneseq
  %v11099 = vshrl.u32 %v11098, 7
  %v11100 = vsub.s32 %v11097, %v11099
  %v11101 = vrot.slane %v11093, %v11100
  %v11103 = vunpack.c.l.s4 1966171168
  %v11104 = vunpack.c.0.s8 %v11103
  %v11105 = vlaneseq
  %v11106 = vshrl.u32 %v11105, 7
  %v11107 = vsub.s32 %v11104, %v11106
  %v11108 = vrot.slane %v11094, %v11107
  %v11109 = vcombine.low %v11101, %v11108
  %v11110 = vcombine.high %v11101, %v11108
  %v11112 = vunpack.c.l.s4 1966171168
  %v11113 = vunpack.c.0.s8 %v11112
  %v11114 = vlaneseq
  %v11115 = vshrl.u32 %v11114, 7
  %v11116 = vsub.s32 %v11113, %v11115
  %v11117 = vrot.slane %v11109, %v11116
  %v11119 = vunpack.c.l.s4 1966171168
  %v11120 = vunpack.c.0.s8 %v11119
  %v11121 = vlaneseq
  %v11122 = vshrl.u32 %v11121, 7
  %v11123 = vsub.s32 %v11120, %v11122
  %v11124 = vrot.slane %v11110, %v11123
  %v11125 = vcombine.low %v10558, %v10726
  %v11127 = vunpack.c.l.s4 1966171168
  %v11128 = vunpack.c.0.s8 %v11127
  %v11129 = vlaneseq
  %v11130 = vshrl.u32 %v11129, 7
  %v11131 = vsub.s32 %v11128, %v11130
  %v11132 = vrot.slane %v11125, %v11131
  %v11133 = vcombine.low %v11108, %v11132
  %v11134 = vcombine.high %v11108, %v11132
  %v11136 = vunpack.c.l.s4 1966171168
  %v11137 = vunpack.c.0.s8 %v11136
  %v11138 = vlaneseq
  %v11139 = vshrl.u32 %v11138, 7
  %v11140 = vsub.s32 %v11137, %v11139
  %v11141 = vrot.slane %v11133, %v11140
  %v11143 = vunpack.c.l.s4 1966171168
  %v11144 = vunpack.c.0.s8 %v11143
  %v11145 = vlaneseq
  %v11146 = vshrl.u32 %v11145, 7
  %v11147 = vsub.s32 %v11144, %v11146
  %v11148 = vrot.slane %v11134, %v11147
  %v11149 = vcombine.low %v10802, %v10858
  %v11151 = vunpack.c.l.s4 1966171168
  %v11152 = vunpack.c.0.s8 %v11151
  %v11153 = vlaneseq
  %v11154 = vshrl.u32 %v11153, 7
  %v11155 = vsub.s32 %v11152, %v11154
  %v11156 = vrot.slane %v11149, %v11155
  %v11157 = vcombine.low %v11132, %v11156
  %v11158 = vcombine.high %v11132, %v11156
  %v11160 = vunpack.c.l.s4 1966171168
  %v11161 = vunpack.c.0.s8 %v11160
  %v11162 = vlaneseq
  %v11163 = vshrl.u32 %v11162, 7
  %v11164 = vsub.s32 %v11161, %v11163
  %v11165 = vrot.slane %v11157, %v11164
  %v11167 = vunpack.c.l.s4 1966171168
  %v11168 = vunpack.c.0.s8 %v11167
  %v11169 = vlaneseq
  %v11170 = vshrl.u32 %v11169, 7
  %v11171 = vsub.s32 %v11168, %v11170
  %v11172 = vrot.slane %v11158, %v11171
  %v11173 = vcombine.low %v10560, %v10728
  %v11174 = vcombine.low %v10562, %v10730
  %v11176 = vunpack.c.l.s4 1966171168
  %v11177 = vunpack.c.0.s8 %v11176
  %v11178 = vlaneseq
  %v11179 = vshrl.u32 %v11178, 7
  %v11180 = vsub.s32 %v11177, %v11179
  %v11181 = vrot.slane %v11173, %v11180
  %v11183 = vunpack.c.l.s4 1966171168
  %v11184 = vunpack.c.0.s8 %v11183
  %v11185 = vlaneseq
  %v11186 = vshrl.u32 %v11185, 7
  %v11187 = vsub.s32 %v11184, %v11186
  %v11188 = vrot.slane %v11174, %v11187
  %v11189 = vcombine.low %v11181, %v11188
  %v11190 = vcombine.high %v11181, %v11188
  %v11192 = vunpack.c.l.s4 1966171168
  %v11193 = vunpack.c.0.s8 %v11192
  %v11194 = vlaneseq
  %v11195 = vshrl.u32 %v11194, 7
  %v11196 = vsub.s32 %v11193, %v11195
  %v11197 = vrot.slane %v11189, %v11196
  %v11199 = vunpack.c.l.s4 1966171168
  %v11200 = vunpack.c.0.s8 %v11199
  %v11201 = vlaneseq
  %v11202 = vshrl.u32 %v11201, 7
  %v11203 = vsub.s32 %v11200, %v11202
  %v11204 = vrot.slane %v11190, %v11203
  %v11205 = vcombine.low %v10564, %v10732
  %v11207 = vunpack.c.l.s4 1966171168
  %v11208 = vunpack.c.0.s8 %v11207
  %v11209 = vlaneseq
  %v11210 = vshrl.u32 %v11209, 7
  %v11211 = vsub.s32 %v11208, %v11210
  %v11212 = vrot.slane %v11205, %v11211
  %v11213 = vcombine.low %v11188, %v11212
  %v11214 = vcombine.high %v11188, %v11212
  %v11216 = vunpack.c.l.s4 1966171168
  %v11217 = vunpack.c.0.s8 %v11216
  %v11218 = vlaneseq
  %v11219 = vshrl.u32 %v11218, 7
  %v11220 = vsub.s32 %v11217, %v11219
  %v11221 = vrot.slane %v11213, %v11220
  %v11223 = vunpack.c.l.s4 1966171168
  %v11224 = vunpack.c.0.s8 %v11223
  %v11225 = vlaneseq
  %v11226 = vshrl.u32 %v11225, 7
  %v11227 = vsub.s32 %v11224, %v11226
  %v11228 = vrot.slane %v11214, %v11227
  %v11229 = vcombine.low %v10804, %v10860
  %v11231 = vunpack.c.l.s4 1966171168
  %v11232 = vunpack.c.0.s8 %v11231
  %v11233 = vlaneseq
  %v11234 = vshrl.u32 %v11233, 7
  %v11235 = vsub.s32 %v11232, %v11234
  %v11236 = vrot.slane %v11229, %v11235
  %v11237 = vcombine.low %v11212, %v11236
  %v11238 = vcombine.high %v11212, %v11236
  %v11240 = vunpack.c.l.s4 1966171168
  %v11241 = vunpack.c.0.s8 %v11240
  %v11242 = vlaneseq
  %v11243 = vshrl.u32 %v11242, 7
  %v11244 = vsub.s32 %v11241, %v11243
  %v11245 = vrot.slane %v11237, %v11244
  %v11247 = vunpack.c.l.s4 1966171168
  %v11248 = vunpack.c.0.s8 %v11247
  %v11249 = vlaneseq
  %v11250 = vshrl.u32 %v11249, 7
  %v11251 = vsub.s32 %v11248, %v11250
  %v11252 = vrot.slane %v11238, %v11251
  %v11253 = vcombine.low %v10566, %v10734
  %v11254 = vcombine.low %v10568, %v10736
  %v11256 = vunpack.c.l.s4 1966171168
  %v11257 = vunpack.c.0.s8 %v11256
  %v11258 = vlaneseq
  %v11259 = vshrl.u32 %v11258, 7
  %v11260 = vsub.s32 %v11257, %v11259
  %v11261 = vrot.slane %v11253, %v11260
  %v11263 = vunpack.c.l.s4 1966171168
  %v11264 = vunpack.c.0.s8 %v11263
  %v11265 = vlaneseq
  %v11266 = vshrl.u32 %v11265, 7
  %v11267 = vsub.s32 %v11264, %v11266
  %v11268 = vrot.slane %v11254, %v11267
  %v11269 = vcombine.low %v11261, %v11268
  %v11270 = vcombine.high %v11261, %v11268
  %v11272 = vunpack.c.l.s4 1966171168
  %v11273 = vunpack.c.0.s8 %v11272
  %v11274 = vlaneseq
  %v11275 = vshrl.u32 %v11274, 7
  %v11276 = vsub.s32 %v11273, %v11275
  %v11277 = vrot.slane %v11269, %v11276
  %v11279 = vunpack.c.l.s4 1966171168
  %v11280 = vunpack.c.0.s8 %v11279
  %v11281 = vlaneseq
  %v11282 = vshrl.u32 %v11281, 7
  %v11283 = vsub.s32 %v11280, %v11282
  %v11284 = vrot.slane %v11270, %v11283
  %v11285 = vcombine.low %v10570, %v10738
  %v11287 = vunpack.c.l.s4 1966171168
  %v11288 = vunpack.c.0.s8 %v11287
  %v11289 = vlaneseq
  %v11290 = vshrl.u32 %v11289, 7
  %v11291 = vsub.s32 %v11288, %v11290
  %v11292 = vrot.slane %v11285, %v11291
  %v11293 = vcombine.low %v11268, %v11292
  %v11294 = vcombine.high %v11268, %v11292
  %v11296 = vunpack.c.l.s4 1966171168
  %v11297 = vunpack.c.0.s8 %v11296
  %v11298 = vlaneseq
  %v11299 = vshrl.u32 %v11298, 7
  %v11300 = vsub.s32 %v11297, %v11299
  %v11301 = vrot.slane %v11293, %v11300
  %v11303 = vunpack.c.l.s4 1966171168
  %v11304 = vunpack.c.0.s8 %v11303
  %v11305 = vlaneseq
  %v11306 = vshrl.u32 %v11305, 7
  %v11307 = vsub.s32 %v11304, %v11306
  %v11308 = vrot.slane %v11294, %v11307
  %v11309 = vcombine.low %v10806, %v10862
  %v11311 = vunpack.c.l.s4 1966171168
  %v11312 = vunpack.c.0.s8 %v11311
  %v11313 = vlaneseq
  %v11314 = vshrl.u32 %v11313, 7
  %v11315 = vsub.s32 %v11312, %v11314
  %v11316 = vrot.slane %v11309, %v11315
  %v11317 = vcombine.low %v11292, %v11316
  %v11318 = vcombine.high %v11292, %v11316
  %v11320 = vunpack.c.l.s4 1966171168
  %v11321 = vunpack.c.0.s8 %v11320
  %v11322 = vlaneseq
  %v11323 = vshrl.u32 %v11322, 7
  %v11324 = vsub.s32 %v11321, %v11323
  %v11325 = vrot.slane %v11317, %v11324
  %v11327 = vunpack.c.l.s4 1966171168
  %v11328 = vunpack.c.0.s8 %v11327
  %v11329 = vlaneseq
  %v11330 = vshrl.u32 %v11329, 7
  %v11331 = vsub.s32 %v11328, %v11330
  %v11332 = vrot.slane %v11318, %v11331
  %v11333 = vcombine.low %v10572, %v10740
  %v11334 = vcombine.low %v10574, %v10742
  %v11336 = vunpack.c.l.s4 1966171168
  %v11337 = vunpack.c.0.s8 %v11336
  %v11338 = vlaneseq
  %v11339 = vshrl.u32 %v11338, 7
  %v11340 = vsub.s32 %v11337, %v11339
  %v11341 = vrot.slane %v11333, %v11340
  %v11343 = vunpack.c.l.s4 1966171168
  %v11344 = vunpack.c.0.s8 %v11343
  %v11345 = vlaneseq
  %v11346 = vshrl.u32 %v11345, 7
  %v11347 = vsub.s32 %v11344, %v11346
  %v11348 = vrot.slane %v11334, %v11347
  %v11349 = vcombine.low %v11341, %v11348
  %v11350 = vcombine.high %v11341, %v11348
  %v11352 = vunpack.c.l.s4 1966171168
  %v11353 = vunpack.c.0.s8 %v11352
  %v11354 = vlaneseq
  %v11355 = vshrl.u32 %v11354, 7
  %v11356 = vsub.s32 %v11353, %v11355
  %v11357 = vrot.slane %v11349, %v11356
  %v11359 = vunpack.c.l.s4 1966171168
  %v11360 = vunpack.c.0.s8 %v11359
  %v11361 = vlaneseq
  %v11362 = vshrl.u32 %v11361, 7
  %v11363 = vsub.s32 %v11360, %v11362
  %v11364 = vrot.slane %v11350, %v11363
  %v11365 = vcombine.low %v10576, %v10744
  %v11367 = vunpack.c.l.s4 1966171168
  %v11368 = vunpack.c.0.s8 %v11367
  %v11369 = vlaneseq
  %v11370 = vshrl.u32 %v11369, 7
  %v11371 = vsub.s32 %v11368, %v11370
  %v11372 = vrot.slane %v11365, %v11371
  %v11373 = vcombine.low %v11348, %v11372
  %v11374 = vcombine.high %v11348, %v11372
  %v11376 = vunpack.c.l.s4 1966171168
  %v11377 = vunpack.c.0.s8 %v11376
  %v11378 = vlaneseq
  %v11379 = vshrl.u32 %v11378, 7
  %v11380 = vsub.s32 %v11377, %v11379
  %v11381 = vrot.slane %v11373, %v11380
  %v11383 = vunpack.c.l.s4 1966171168
  %v11384 = vunpack.c.0.s8 %v11383
  %v11385 = vlaneseq
  %v11386 = vshrl.u32 %v11385, 7
  %v11387 = vsub.s32 %v11384, %v11386
  %v11388 = vrot.slane %v11374, %v11387
  %v11389 = vcombine.low %v10808, %v10864
  %v11391 = vunpack.c.l.s4 1966171168
  %v11392 = vunpack.c.0.s8 %v11391
  %v11393 = vlaneseq
  %v11394 = vshrl.u32 %v11393, 7
  %v11395 = vsub.s32 %v11392, %v11394
  %v11396 = vrot.slane %v11389, %v11395
  %v11397 = vcombine.low %v11372, %v11396
  %v11398 = vcombine.high %v11372, %v11396
  %v11400 = vunpack.c.l.s4 1966171168
  %v11401 = vunpack.c.0.s8 %v11400
  %v11402 = vlaneseq
  %v11403 = vshrl.u32 %v11402, 7
  %v11404 = vsub.s32 %v11401, %v11403
  %v11405 = vrot.slane %v11397, %v11404
  %v11407 = vunpack.c.l.s4 1966171168
  %v11408 = vunpack.c.0.s8 %v11407
  %v11409 = vlaneseq
  %v11410 = vshrl.u32 %v11409, 7
  %v11411 = vsub.s32 %v11408, %v11410
  %v11412 = vrot.slane %v11398, %v11411
  %v11413 = vcombine.low %v10578, %v10746
  %v11414 = vcombine.low %v10580, %v10748
  %v11416 = vunpack.c.l.s4 1966171168
  %v11417 = vunpack.c.0.s8 %v11416
  %v11418 = vlaneseq
  %v11419 = vshrl.u32 %v11418, 7
  %v11420 = vsub.s32 %v11417, %v11419
  %v11421 = vrot.slane %v11413, %v11420
  %v11423 = vunpack.c.l.s4 1966171168
  %v11424 = vunpack.c.0.s8 %v11423
  %v11425 = vlaneseq
  %v11426 = vshrl.u32 %v11425, 7
  %v11427 = vsub.s32 %v11424, %v11426
  %v11428 = vrot.slane %v11414, %v11427
  %v11429 = vcombine.low %v11421, %v11428
  %v11430 = vcombine.high %v11421, %v11428
  %v11432 = vunpack.c.l.s4 1966171168
  %v11433 = vunpack.c.0.s8 %v11432
  %v11434 = vlaneseq
  %v11435 = vshrl.u32 %v11434, 7
  %v11436 = vsub.s32 %v11433, %v11435
  %v11437 = vrot.slane %v11429, %v11436
  %v11439 = vunpack.c.l.s4 1966171168
  %v11440 = vunpack.c.0.s8 %v11439
  %v11441 = vlaneseq
  %v11442 = vshrl.u32 %v11441, 7
  %v11443 = vsub.s32 %v11440, %v11442
  %v11444 = vrot.slane %v11430, %v11443
  %v11445 = vcombine.low %v10582, %v10750
  %v11447 = vunpack.c.l.s4 1966171168
  %v11448 = vunpack.c.0.s8 %v11447
  %v11449 = vlaneseq
  %v11450 = vshrl.u32 %v11449, 7
  %v11451 = vsub.s32 %v11448, %v11450
  %v11452 = vrot.slane %v11445, %v11451
  %v11453 = vcombine.low %v11428, %v11452
  %v11454 = vcombine.high %v11428, %v11452
  %v11456 = vunpack.c.l.s4 1966171168
  %v11457 = vunpack.c.0.s8 %v11456
  %v11458 = vlaneseq
  %v11459 = vshrl.u32 %v11458, 7
  %v11460 = vsub.s32 %v11457, %v11459
  %v11461 = vrot.slane %v11453, %v11460
  %v11463 = vunpack.c.l.s4 1966171168
  %v11464 = vunpack.c.0.s8 %v11463
  %v11465 = vlaneseq
  %v11466 = vshrl.u32 %v11465, 7
  %v11467 = vsub.s32 %v11464, %v11466
  %v11468 = vrot.slane %v11454, %v11467
  %v11469 = vcombine.low %v10810, %v10866
  %v11471 = vunpack.c.l.s4 1966171168
  %v11472 = vunpack.c.0.s8 %v11471
  %v11473 = vlaneseq
  %v11474 = vshrl.u32 %v11473, 7
  %v11475 = vsub.s32 %v11472, %v11474
  %v11476 = vrot.slane %v11469, %v11475
  %v11477 = vcombine.low %v11452, %v11476
  %v11478 = vcombine.high %v11452, %v11476
  %v11480 = vunpack.c.l.s4 1966171168
  %v11481 = vunpack.c.0.s8 %v11480
  %v11482 = vlaneseq
  %v11483 = vshrl.u32 %v11482, 7
  %v11484 = vsub.s32 %v11481, %v11483
  %v11485 = vrot.slane %v11477, %v11484
  %v11487 = vunpack.c.l.s4 1966171168
  %v11488 = vunpack.c.0.s8 %v11487
  %v11489 = vlaneseq
  %v11490 = vshrl.u32 %v11489, 7
  %v11491 = vsub.s32 %v11488, %v11490
  %v11492 = vrot.slane %v11478, %v11491
  %v11493 = vcombine.low %v10584, %v10752
  %v11494 = vcombine.low %v10586, %v10754
  %v11496 = vunpack.c.l.s4 1966171168
  %v11497 = vunpack.c.0.s8 %v11496
  %v11498 = vlaneseq
  %v11499 = vshrl.u32 %v11498, 7
  %v11500 = vsub.s32 %v11497, %v11499
  %v11501 = vrot.slane %v11493, %v11500
  %v11503 = vunpack.c.l.s4 1966171168
  %v11504 = vunpack.c.0.s8 %v11503
  %v11505 = vlaneseq
  %v11506 = vshrl.u32 %v11505, 7
  %v11507 = vsub.s32 %v11504, %v11506
  %v11508 = vrot.slane %v11494, %v11507
  %v11509 = vcombine.low %v11501, %v11508
  %v11510 = vcombine.high %v11501, %v11508
  %v11512 = vunpack.c.l.s4 1966171168
  %v11513 = vunpack.c.0.s8 %v11512
  %v11514 = vlaneseq
  %v11515 = vshrl.u32 %v11514, 7
  %v11516 = vsub.s32 %v11513, %v11515
  %v11517 = vrot.slane %v11509, %v11516
  %v11519 = vunpack.c.l.s4 1966171168
  %v11520 = vunpack.c.0.s8 %v11519
  %v11521 = vlaneseq
  %v11522 = vshrl.u32 %v11521, 7
  %v11523 = vsub.s32 %v11520, %v11522
  %v11524 = vrot.slane %v11510, %v11523
  %v11525 = vcombine.low %v10588, %v10756
  %v11527 = vunpack.c.l.s4 1966171168
  %v11528 = vunpack.c.0.s8 %v11527
  %v11529 = vlaneseq
  %v11530 = vshrl.u32 %v11529, 7
  %v11531 = vsub.s32 %v11528, %v11530
  %v11532 = vrot.slane %v11525, %v11531
  %v11533 = vcombine.low %v11508, %v11532
  %v11534 = vcombine.high %v11508, %v11532
  %v11536 = vunpack.c.l.s4 1966171168
  %v11537 = vunpack.c.0.s8 %v11536
  %v11538 = vlaneseq
  %v11539 = vshrl.u32 %v11538, 7
  %v11540 = vsub.s32 %v11537, %v11539
  %v11541 = vrot.slane %v11533, %v11540
  %v11543 = vunpack.c.l.s4 1966171168
  %v11544 = vunpack.c.0.s8 %v11543
  %v11545 = vlaneseq
  %v11546 = vshrl.u32 %v11545, 7
  %v11547 = vsub.s32 %v11544, %v11546
  %v11548 = vrot.slane %v11534, %v11547
  %v11549 = vcombine.low %v10812, %v10868
  %v11551 = vunpack.c.l.s4 1966171168
  %v11552 = vunpack.c.0.s8 %v11551
  %v11553 = vlaneseq
  %v11554 = vshrl.u32 %v11553, 7
  %v11555 = vsub.s32 %v11552, %v11554
  %v11556 = vrot.slane %v11549, %v11555
  %v11557 = vcombine.low %v11532, %v11556
  %v11558 = vcombine.high %v11532, %v11556
  %v11560 = vunpack.c.l.s4 1966171168
  %v11561 = vunpack.c.0.s8 %v11560
  %v11562 = vlaneseq
  %v11563 = vshrl.u32 %v11562, 7
  %v11564 = vsub.s32 %v11561, %v11563
  %v11565 = vrot.slane %v11557, %v11564
  %v11567 = vunpack.c.l.s4 1966171168
  %v11568 = vunpack.c.0.s8 %v11567
  %v11569 = vlaneseq
  %v11570 = vshrl.u32 %v11569, 7
  %v11571 = vsub.s32 %v11568, %v11570
  %v11572 = vrot.slane %v11558, %v11571
  %v11573 = vunpack.i.l.s16 %v10957
  %v11574 = vunpack.i.h.s16 %v10957
  %v11575 = vunpack.i.l.s16 %v10964
  %v11576 = vunpack.i.l.s16 %v10981
  %v11577 = vunpack.i.h.s16 %v10981
  %v11578 = vunpack.i.l.s16 %v10988
  %v11579 = vunpack.i.l.s16 %v11005
  %v11580 = vunpack.i.h.s16 %v11005
  %v11581 = vunpack.i.l.s16 %v11012
  %v11582 = vunpack.i.l.s16 %v11037
  %v11583 = vunpack.i.h.s16 %v11037
  %v11584 = vunpack.i.l.s16 %v11044
  %v11585 = vunpack.i.l.s16 %v11061
  %v11586 = vunpack.i.h.s16 %v11061
  %v11587 = vunpack.i.l.s16 %v11068
  %v11588 = vunpack.i.l.s16 %v11085
  %v11589 = vunpack.i.h.s16 %v11085
  %v11590 = vunpack.i.l.s16 %v11092
  %v11591 = vunpack.i.l.s16 %v11117
  %v11592 = vunpack.i.h.s16 %v11117
  %v11593 = vunpack.i.l.s16 %v11124
  %v11594 = vunpack.i.l.s16 %v11141
  %v11595 = vunpack.i.h.s16 %v11141
  %v11596 = vunpack.i.l.s16 %v11148
  %v11597 = vunpack.i.l.s16 %v11165
  %v11598 = vunpack.i.h.s16 %v11165
  %v11599 = vunpack.i.l.s16 %v11172
  %v11600 = vunpack.i.l.s16 %v11197
  %v11601 = vunpack.i.h.s16 %v11197
  %v11602 = vunpack.i.l.s16 %v11204
  %v11603 = vunpack.i.l.s16 %v11221
  %v11604 = vunpack.i.h.s16 %v11221
  %v11605 = vunpack.i.l.s16 %v11228
  %v11606 = vunpack.i.l.s16 %v11245
  %v11607 = vunpack.i.h.s16 %v11245
  %v11608 = vunpack.i.l.s16 %v11252
  %v11609 = vunpack.i.l.s16 %v11277
  %v11610 = vunpack.i.h.s16 %v11277
  %v11611 = vunpack.i.l.s16 %v11284
  %v11612 = vunpack.i.l.s16 %v11301
  %v11613 = vunpack.i.h.s16 %v11301
  %v11614 = vunpack.i.l.s16 %v11308
  %v11615 = vunpack.i.l.s16 %v11325
  %v11616 = vunpack.i.h.s16 %v11325
  %v11617 = vunpack.i.l.s16 %v11332
  %v11618 = vunpack.i.l.s16 %v11357
  %v11619 = vunpack.i.h.s16 %v11357
  %v11620 = vunpack.i.l.s16 %v11364
  %v11621 = vunpack.i.l.s16 %v11381
  %v11622 = vunpack.i.h.s16 %v11381
  %v11623 = vunpack.i.l.s16 %v11388
  %v11624 = vunpack.i.l.s16 %v11405
  %v11625 = vunpack.i.h.s16 %v11405
  %v11626 = vunpack.i.l.s16 %v11412
  %v11627 = vunpack.i.l.s16 %v11437
  %v11628 = vunpack.i.h.s16 %v11437
  %v11629 = vunpack.i.l.s16 %v11444
  %v11630 = vunpack.i.l.s16 %v11461
  %v11631 = vunpack.i.h.s16 %v11461
  %v11632 = vunpack.i.l.s16 %v11468
  %v11633 = vunpack.i.l.s16 %v11485
  %v11634 = vunpack.i.h.s16 %v11485
  %v11635 = vunpack.i.l.s16 %v11492
  %v11636 = vunpack.i.l.s16 %v11517
  %v11637 = vunpack.i.h.s16 %v11517
  %v11638 = vunpack.i.l.s16 %v11524
  %v11639 = vunpack.i.l.s16 %v11541
  %v11640 = vunpack.i.h.s16 %v11541
  %v11641 = vunpack.i.l.s16 %v11548
  %v11642 = vunpack.i.l.s16 %v11565
  %v11643 = vunpack.i.h.s16 %v11565
  %v11644 = vunpack.i.l.s16 %v11572
  %v11645 = vld [vmem:[%s3] sm:$0xf]
  %v11646 = vld [vmem:[%s3 + $0x4] sm:$0xf]
  %v11647 = vld [vmem:[%s3 + $0x8] sm:$0xf]
  %v11648 = vld [vmem:[%s3 + $0xc] sm:$0xf]
  %v11649 = vld [vmem:[%s3 + $0x10] sm:$0xf]
  %v11650 = vld [vmem:[%s3 + $0x14] sm:$0xf]
  %v11651 = vld [vmem:[%s3 + $0x18] sm:$0xf]
  %v11652 = vld [vmem:[%s3 + $0x1c] sm:$0xf]
  %v11653 = vld [vmem:[%s3 + $0x20] sm:$0xf]
  %v11654 = vld [vmem:[%s3 + $0x24] sm:$0xf]
  %v11655 = vld [vmem:[%s3 + $0x28] sm:$0xf]
  %v11656 = vld [vmem:[%s3 + $0x2c] sm:$0xf]
  %v11657 = vld [vmem:[%s3 + $0x30] sm:$0xf]
  %v11658 = vld [vmem:[%s3 + $0x34] sm:$0xf]
  %v11659 = vld [vmem:[%s3 + $0x38] sm:$0xf]
  %v11660 = vld [vmem:[%s3 + $0x3c] sm:$0xf]
  %v11661 = vld [vmem:[%s3 + $0x40] sm:$0xf]
  %v11662 = vld [vmem:[%s3 + $0x44] sm:$0xf]
  %v11663 = vld [vmem:[%s3 + $0x48] sm:$0xf]
  %v11664 = vld [vmem:[%s3 + $0x4c] sm:$0xf]
  %v11665 = vld [vmem:[%s3 + $0x50] sm:$0xf]
  %v11666 = vld [vmem:[%s3 + $0x54] sm:$0xf]
  %v11667 = vld [vmem:[%s3 + $0x58] sm:$0xf]
  %v11668 = vld [vmem:[%s3 + $0x5c] sm:$0xf]
  %v11669 = vld [vmem:[%s3 + $0x60] sm:$0xf]
  %v11670 = vld [vmem:[%s3 + $0x64] sm:$0xf]
  %v11671 = vld [vmem:[%s3 + $0x68] sm:$0xf]
  %v11672 = vld [vmem:[%s3 + $0x6c] sm:$0xf]
  %v11673 = vld [vmem:[%s3 + $0x70] sm:$0xf]
  %v11674 = vld [vmem:[%s3 + $0x74] sm:$0xf]
  %v11675 = vld [vmem:[%s3 + $0x78] sm:$0xf]
  %v11676 = vld [vmem:[%s3 + $0x7c] sm:$0xf]
  %v11677 = vld [vmem:[%s3 + $0x80] sm:$0xf]
  %v11678 = vld [vmem:[%s3 + $0x84] sm:$0xf]
  %v11679 = vld [vmem:[%s3 + $0x88] sm:$0xf]
  %v11680 = vld [vmem:[%s3 + $0x8c] sm:$0xf]
  %v11681 = vld [vmem:[%s3 + $0x90] sm:$0xf]
  %v11682 = vld [vmem:[%s3 + $0x94] sm:$0xf]
  %v11683 = vld [vmem:[%s3 + $0x98] sm:$0xf]
  %v11684 = vld [vmem:[%s3 + $0x9c] sm:$0xf]
  %v11685 = vld [vmem:[%s3 + $0xa0] sm:$0xf]
  %v11686 = vld [vmem:[%s3 + $0xa4] sm:$0xf]
  %v11687 = vld [vmem:[%s3 + $0xa8] sm:$0xf]
  %v11688 = vld [vmem:[%s3 + $0xac] sm:$0xf]
  %v11689 = vld [vmem:[%s3 + $0xb0] sm:$0xf]
  %v11690 = vld [vmem:[%s3 + $0xb4] sm:$0xf]
  %v11691 = vld [vmem:[%s3 + $0xb8] sm:$0xf]
  %v11692 = vld [vmem:[%s3 + $0xbc] sm:$0xf]
  %v11693 = vld [vmem:[%s3 + $0xc0] sm:$0xf]
  %v11694 = vld [vmem:[%s3 + $0xc4] sm:$0xf]
  %v11695 = vld [vmem:[%s3 + $0xc8] sm:$0xf]
  %v11696 = vld [vmem:[%s3 + $0xcc] sm:$0xf]
  %v11697 = vld [vmem:[%s3 + $0xd0] sm:$0xf]
  %v11698 = vld [vmem:[%s3 + $0xd4] sm:$0xf]
  %v11699 = vld [vmem:[%s3 + $0xd8] sm:$0xf]
  %v11700 = vld [vmem:[%s3 + $0xdc] sm:$0xf]
  %v11701 = vld [vmem:[%s3 + $0xe0] sm:$0xf]
  %v11702 = vld [vmem:[%s3 + $0xe4] sm:$0xf]
  %v11703 = vld [vmem:[%s3 + $0xe8] sm:$0xf]
  %v11704 = vld [vmem:[%s3 + $0xec] sm:$0xf]
  %v11705 = vld [vmem:[%s3 + $0xf0] sm:$0xf]
  %v11706 = vld [vmem:[%s3 + $0xf4] sm:$0xf]
  %v11707 = vld [vmem:[%s3 + $0xf8] sm:$0xf]
  %v11708 = vld [vmem:[%s3 + $0xfc] sm:$0xf]
  %v11709 = vld [vmem:[%s4] sm:$0x1]
  %v11711 = vlaneseq
  %v11712 = vshrl.u32 %v11711, 7
  %v11713 = vsub.s32 0, %v11712
  %v11714 = vrot.slane %v11709, %v11713
  %v11716 = vpack.i.b16 %v11574, %v11573
  %v11717 = vpack.i.b16 %v11576, %v11575
  %v11718 = vpack.i.b16 %v11578, %v11577
  %v11719 = vpack.i.b16 %v11580, %v11579
  %v11720 = vpack.i.b16 %v11582, %v11581
  %v11721 = vpack.i.b16 %v11584, %v11583
  %v11722 = vpack.i.b16 %v11586, %v11585
  %v11723 = vpack.i.b16 %v11588, %v11587
  %v11724 = vpack.i.b16 %v11590, %v11589
  %v11725 = vpack.i.b16 %v11592, %v11591
  %v11726 = vpack.i.b16 %v11594, %v11593
  %v11727 = vpack.i.b16 %v11596, %v11595
  %v11728 = vpack.i.b16 %v11598, %v11597
  %v11729 = vpack.i.b16 %v11600, %v11599
  %v11730 = vpack.i.b16 %v11602, %v11601
  %v11731 = vpack.i.b16 %v11604, %v11603
  %v11732 = vpack.i.b16 %v11606, %v11605
  %v11733 = vpack.i.b16 %v11608, %v11607
  %v11734 = vpack.i.b16 %v11610, %v11609
  %v11735 = vpack.i.b16 %v11612, %v11611
  %v11736 = vpack.i.b16 %v11614, %v11613
  %v11737 = vpack.i.b16 %v11616, %v11615
  %v11738 = vpack.i.b16 %v11618, %v11617
  %v11739 = vpack.i.b16 %v11620, %v11619
  %v11740 = vpack.i.b16 %v11622, %v11621
  %v11741 = vpack.i.b16 %v11624, %v11623
  %v11742 = vpack.i.b16 %v11626, %v11625
  %v11743 = vpack.i.b16 %v11628, %v11627
  %v11744 = vpack.i.b16 %v11630, %v11629
  %v11745 = vpack.i.b16 %v11632, %v11631
  %v11746 = vpack.i.b16 %v11634, %v11633
  %v11747 = vpack.i.b16 %v11636, %v11635
  %v11748 = vpack.i.b16 %v11638, %v11637
  %v11749 = vpack.i.b16 %v11640, %v11639
  %v11750 = vpack.i.b16 %v11642, %v11641
  %v11751 = vpack.i.b16 %v11644, %v11643
  %v11752 = vcombine.low %v11716, %v11717
  %v11753 = vcombine.low %v11718, %v11719
  %v11754 = vcombine.low %v11720, %v11721
  %v11755 = vcombine.low %v11722, %v11723
  %v11757 = vunpack.c.l.s4 1966171168
  %v11758 = vunpack.c.0.s8 %v11757
  %v11759 = vlaneseq
  %v11760 = vshrl.u32 %v11759, 7
  %v11761 = vsub.s32 %v11758, %v11760
  %v11762 = vrot.slane %v11752, %v11761
  %v11764 = vunpack.c.l.s4 1966171168
  %v11765 = vunpack.c.0.s8 %v11764
  %v11766 = vlaneseq
  %v11767 = vshrl.u32 %v11766, 7
  %v11768 = vsub.s32 %v11765, %v11767
  %v11769 = vrot.slane %v11753, %v11768
  %v11771 = vunpack.c.l.s4 1966171168
  %v11772 = vunpack.c.0.s8 %v11771
  %v11773 = vlaneseq
  %v11774 = vshrl.u32 %v11773, 7
  %v11775 = vsub.s32 %v11772, %v11774
  %v11776 = vrot.slane %v11754, %v11775
  %v11778 = vunpack.c.l.s4 1966171168
  %v11779 = vunpack.c.0.s8 %v11778
  %v11780 = vlaneseq
  %v11781 = vshrl.u32 %v11780, 7
  %v11782 = vsub.s32 %v11779, %v11781
  %v11783 = vrot.slane %v11755, %v11782
  %v11784 = vcombine.low %v11762, %v11769
  %v11785 = vcombine.high %v11762, %v11769
  %v11786 = vcombine.low %v11776, %v11783
  %v11787 = vcombine.high %v11776, %v11783
  %v11789 = vunpack.c.l.s4 1966171168
  %v11790 = vunpack.c.0.s8 %v11789
  %v11791 = vlaneseq
  %v11792 = vshrl.u32 %v11791, 7
  %v11793 = vsub.s32 %v11790, %v11792
  %v11794 = vrot.slane %v11784, %v11793
  %v11796 = vunpack.c.l.s4 1966171168
  %v11797 = vunpack.c.0.s8 %v11796
  %v11798 = vlaneseq
  %v11799 = vshrl.u32 %v11798, 7
  %v11800 = vsub.s32 %v11797, %v11799
  %v11801 = vrot.slane %v11785, %v11800
  %v11803 = vunpack.c.l.s4 1966171168
  %v11804 = vunpack.c.0.s8 %v11803
  %v11805 = vlaneseq
  %v11806 = vshrl.u32 %v11805, 7
  %v11807 = vsub.s32 %v11804, %v11806
  %v11808 = vrot.slane %v11786, %v11807
  %v11810 = vunpack.c.l.s4 1966171168
  %v11811 = vunpack.c.0.s8 %v11810
  %v11812 = vlaneseq
  %v11813 = vshrl.u32 %v11812, 7
  %v11814 = vsub.s32 %v11811, %v11813
  %v11815 = vrot.slane %v11787, %v11814
  %v11816 = vcombine.low %v11794, %v11808
  %v11817 = vcombine.high %v11794, %v11808
  %v11818 = vcombine.low %v11801, %v11815
  %v11819 = vcombine.high %v11801, %v11815
  %v11820 = vcombine.low %v11724, %v11725
  %v11821 = vcombine.low %v11726, %v11727
  %v11822 = vcombine.low %v11728, %v11729
  %v11823 = vcombine.low %v11730, %v11731
  %v11825 = vunpack.c.l.s4 1966171168
  %v11826 = vunpack.c.0.s8 %v11825
  %v11827 = vlaneseq
  %v11828 = vshrl.u32 %v11827, 7
  %v11829 = vsub.s32 %v11826, %v11828
  %v11830 = vrot.slane %v11820, %v11829
  %v11832 = vunpack.c.l.s4 1966171168
  %v11833 = vunpack.c.0.s8 %v11832
  %v11834 = vlaneseq
  %v11835 = vshrl.u32 %v11834, 7
  %v11836 = vsub.s32 %v11833, %v11835
  %v11837 = vrot.slane %v11821, %v11836
  %v11839 = vunpack.c.l.s4 1966171168
  %v11840 = vunpack.c.0.s8 %v11839
  %v11841 = vlaneseq
  %v11842 = vshrl.u32 %v11841, 7
  %v11843 = vsub.s32 %v11840, %v11842
  %v11844 = vrot.slane %v11822, %v11843
  %v11846 = vunpack.c.l.s4 1966171168
  %v11847 = vunpack.c.0.s8 %v11846
  %v11848 = vlaneseq
  %v11849 = vshrl.u32 %v11848, 7
  %v11850 = vsub.s32 %v11847, %v11849
  %v11851 = vrot.slane %v11823, %v11850
  %v11852 = vcombine.low %v11830, %v11837
  %v11853 = vcombine.high %v11830, %v11837
  %v11854 = vcombine.low %v11844, %v11851
  %v11855 = vcombine.high %v11844, %v11851
  %v11857 = vunpack.c.l.s4 1966171168
  %v11858 = vunpack.c.0.s8 %v11857
  %v11859 = vlaneseq
  %v11860 = vshrl.u32 %v11859, 7
  %v11861 = vsub.s32 %v11858, %v11860
  %v11862 = vrot.slane %v11852, %v11861
  %v11864 = vunpack.c.l.s4 1966171168
  %v11865 = vunpack.c.0.s8 %v11864
  %v11866 = vlaneseq
  %v11867 = vshrl.u32 %v11866, 7
  %v11868 = vsub.s32 %v11865, %v11867
  %v11869 = vrot.slane %v11853, %v11868
  %v11871 = vunpack.c.l.s4 1966171168
  %v11872 = vunpack.c.0.s8 %v11871
  %v11873 = vlaneseq
  %v11874 = vshrl.u32 %v11873, 7
  %v11875 = vsub.s32 %v11872, %v11874
  %v11876 = vrot.slane %v11854, %v11875
  %v11878 = vunpack.c.l.s4 1966171168
  %v11879 = vunpack.c.0.s8 %v11878
  %v11880 = vlaneseq
  %v11881 = vshrl.u32 %v11880, 7
  %v11882 = vsub.s32 %v11879, %v11881
  %v11883 = vrot.slane %v11855, %v11882
  %v11884 = vcombine.low %v11862, %v11876
  %v11885 = vcombine.high %v11862, %v11876
  %v11886 = vcombine.low %v11869, %v11883
  %v11887 = vcombine.high %v11869, %v11883
  %v11888 = vcombine.low %v11732, %v11733
  %v11889 = vcombine.low %v11734, %v11735
  %v11890 = vcombine.low %v11736, %v11737
  %v11891 = vcombine.low %v11738, %v11739
  %v11893 = vunpack.c.l.s4 1966171168
  %v11894 = vunpack.c.0.s8 %v11893
  %v11895 = vlaneseq
  %v11896 = vshrl.u32 %v11895, 7
  %v11897 = vsub.s32 %v11894, %v11896
  %v11898 = vrot.slane %v11888, %v11897
  %v11900 = vunpack.c.l.s4 1966171168
  %v11901 = vunpack.c.0.s8 %v11900
  %v11902 = vlaneseq
  %v11903 = vshrl.u32 %v11902, 7
  %v11904 = vsub.s32 %v11901, %v11903
  %v11905 = vrot.slane %v11889, %v11904
  %v11907 = vunpack.c.l.s4 1966171168
  %v11908 = vunpack.c.0.s8 %v11907
  %v11909 = vlaneseq
  %v11910 = vshrl.u32 %v11909, 7
  %v11911 = vsub.s32 %v11908, %v11910
  %v11912 = vrot.slane %v11890, %v11911
  %v11914 = vunpack.c.l.s4 1966171168
  %v11915 = vunpack.c.0.s8 %v11914
  %v11916 = vlaneseq
  %v11917 = vshrl.u32 %v11916, 7
  %v11918 = vsub.s32 %v11915, %v11917
  %v11919 = vrot.slane %v11891, %v11918
  %v11920 = vcombine.low %v11898, %v11905
  %v11921 = vcombine.high %v11898, %v11905
  %v11922 = vcombine.low %v11912, %v11919
  %v11923 = vcombine.high %v11912, %v11919
  %v11925 = vunpack.c.l.s4 1966171168
  %v11926 = vunpack.c.0.s8 %v11925
  %v11927 = vlaneseq
  %v11928 = vshrl.u32 %v11927, 7
  %v11929 = vsub.s32 %v11926, %v11928
  %v11930 = vrot.slane %v11920, %v11929
  %v11932 = vunpack.c.l.s4 1966171168
  %v11933 = vunpack.c.0.s8 %v11932
  %v11934 = vlaneseq
  %v11935 = vshrl.u32 %v11934, 7
  %v11936 = vsub.s32 %v11933, %v11935
  %v11937 = vrot.slane %v11921, %v11936
  %v11939 = vunpack.c.l.s4 1966171168
  %v11940 = vunpack.c.0.s8 %v11939
  %v11941 = vlaneseq
  %v11942 = vshrl.u32 %v11941, 7
  %v11943 = vsub.s32 %v11940, %v11942
  %v11944 = vrot.slane %v11922, %v11943
  %v11946 = vunpack.c.l.s4 1966171168
  %v11947 = vunpack.c.0.s8 %v11946
  %v11948 = vlaneseq
  %v11949 = vshrl.u32 %v11948, 7
  %v11950 = vsub.s32 %v11947, %v11949
  %v11951 = vrot.slane %v11923, %v11950
  %v11952 = vcombine.low %v11930, %v11944
  %v11953 = vcombine.high %v11930, %v11944
  %v11954 = vcombine.low %v11937, %v11951
  %v11955 = vcombine.high %v11937, %v11951
  %v11956 = vcombine.low %v11740, %v11741
  %v11957 = vcombine.low %v11742, %v11743
  %v11958 = vcombine.low %v11744, %v11745
  %v11959 = vcombine.low %v11746, %v11747
  %v11961 = vunpack.c.l.s4 1966171168
  %v11962 = vunpack.c.0.s8 %v11961
  %v11963 = vlaneseq
  %v11964 = vshrl.u32 %v11963, 7
  %v11965 = vsub.s32 %v11962, %v11964
  %v11966 = vrot.slane %v11956, %v11965
  %v11968 = vunpack.c.l.s4 1966171168
  %v11969 = vunpack.c.0.s8 %v11968
  %v11970 = vlaneseq
  %v11971 = vshrl.u32 %v11970, 7
  %v11972 = vsub.s32 %v11969, %v11971
  %v11973 = vrot.slane %v11957, %v11972
  %v11975 = vunpack.c.l.s4 1966171168
  %v11976 = vunpack.c.0.s8 %v11975
  %v11977 = vlaneseq
  %v11978 = vshrl.u32 %v11977, 7
  %v11979 = vsub.s32 %v11976, %v11978
  %v11980 = vrot.slane %v11958, %v11979
  %v11982 = vunpack.c.l.s4 1966171168
  %v11983 = vunpack.c.0.s8 %v11982
  %v11984 = vlaneseq
  %v11985 = vshrl.u32 %v11984, 7
  %v11986 = vsub.s32 %v11983, %v11985
  %v11987 = vrot.slane %v11959, %v11986
  %v11988 = vcombine.low %v11966, %v11973
  %v11989 = vcombine.high %v11966, %v11973
  %v11990 = vcombine.low %v11980, %v11987
  %v11991 = vcombine.high %v11980, %v11987
  %v11993 = vunpack.c.l.s4 1966171168
  %v11994 = vunpack.c.0.s8 %v11993
  %v11995 = vlaneseq
  %v11996 = vshrl.u32 %v11995, 7
  %v11997 = vsub.s32 %v11994, %v11996
  %v11998 = vrot.slane %v11988, %v11997
  %v12000 = vunpack.c.l.s4 1966171168
  %v12001 = vunpack.c.0.s8 %v12000
  %v12002 = vlaneseq
  %v12003 = vshrl.u32 %v12002, 7
  %v12004 = vsub.s32 %v12001, %v12003
  %v12005 = vrot.slane %v11989, %v12004
  %v12007 = vunpack.c.l.s4 1966171168
  %v12008 = vunpack.c.0.s8 %v12007
  %v12009 = vlaneseq
  %v12010 = vshrl.u32 %v12009, 7
  %v12011 = vsub.s32 %v12008, %v12010
  %v12012 = vrot.slane %v11990, %v12011
  %v12014 = vunpack.c.l.s4 1966171168
  %v12015 = vunpack.c.0.s8 %v12014
  %v12016 = vlaneseq
  %v12017 = vshrl.u32 %v12016, 7
  %v12018 = vsub.s32 %v12015, %v12017
  %v12019 = vrot.slane %v11991, %v12018
  %v12020 = vcombine.low %v11998, %v12012
  %v12021 = vcombine.high %v11998, %v12012
  %v12022 = vcombine.low %v12005, %v12019
  %v12023 = vcombine.high %v12005, %v12019
  %v12024 = vcombine.low %v11748, %v11749
  %v12025 = vcombine.low %v11750, %v11751
  %v12027 = vunpack.c.l.s4 1966171168
  %v12028 = vunpack.c.0.s8 %v12027
  %v12029 = vlaneseq
  %v12030 = vshrl.u32 %v12029, 7
  %v12031 = vsub.s32 %v12028, %v12030
  %v12032 = vrot.slane %v12024, %v12031
  %v12034 = vunpack.c.l.s4 1966171168
  %v12035 = vunpack.c.0.s8 %v12034
  %v12036 = vlaneseq
  %v12037 = vshrl.u32 %v12036, 7
  %v12038 = vsub.s32 %v12035, %v12037
  %v12039 = vrot.slane %v12025, %v12038
  %v12040 = vcombine.low %v12032, %v12039
  %v12041 = vcombine.high %v12032, %v12039
  %v12043 = vunpack.c.l.s4 1966171168
  %v12044 = vunpack.c.0.s8 %v12043
  %v12045 = vlaneseq
  %v12046 = vshrl.u32 %v12045, 7
  %v12047 = vsub.s32 %v12044, %v12046
  %v12048 = vrot.slane %v12040, %v12047
  %v12050 = vunpack.c.l.s4 1966171168
  %v12051 = vunpack.c.0.s8 %v12050
  %v12052 = vlaneseq
  %v12053 = vshrl.u32 %v12052, 7
  %v12054 = vsub.s32 %v12051, %v12053
  %v12055 = vrot.slane %v12041, %v12054
  %v12056 = vcombine.high %v12048, %v12048
  %v12057 = vcombine.high %v12055, %v12055
  %v12142 = vunpack.c.l.b16 %v11645
  %v12143 = vunpack.c.l.b16 %v11646
  %v12144 = vunpack.c.l.b16 %v11647
  %v12145 = vunpack.c.l.b16 %v11648
  %v12146 = vunpack.c.l.b16 %v11649
  %v12147 = vunpack.c.l.b16 %v11650
  %v12148 = vunpack.c.l.b16 %v11651
  %v12149 = vunpack.c.l.b16 %v11652
  %v12150 = vunpack.c.l.b16 %v11653
  %v12151 = vunpack.c.l.b16 %v11654
  %v12152 = vunpack.c.l.b16 %v11655
  %v12153 = vunpack.c.l.b16 %v11656
  %v12154 = vunpack.c.l.b16 %v11657
  %v12155 = vunpack.c.l.b16 %v11658
  %v12156 = vunpack.c.l.b16 %v11659
  %v12157 = vunpack.c.l.b16 %v11660
  %v12158 = vunpack.c.l.b16 %v11661
  %v12159 = vunpack.c.l.b16 %v11662
  %v12160 = vunpack.c.l.b16 %v11663
  %v12161 = vunpack.c.l.b16 %v11664
  %v12162 = vunpack.c.l.b16 %v11665
  %v12163 = vunpack.c.l.b16 %v11666
  %v12164 = vunpack.c.l.b16 %v11667
  %v12165 = vunpack.c.l.b16 %v11668
  %v12166 = vunpack.c.l.b16 %v11669
  %v12167 = vunpack.c.l.b16 %v11670
  %v12168 = vunpack.c.l.b16 %v11671
  %v12169 = vunpack.c.l.b16 %v11672
  %v12170 = vunpack.c.l.b16 %v11673
  %v12171 = vunpack.c.l.b16 %v11674
  %v12172 = vunpack.c.l.b16 %v11675
  %v12173 = vunpack.c.l.b16 %v11676
  %v12174 = vunpack.c.l.b16 %v11677
  %v12175 = vunpack.c.l.b16 %v11678
  %v12176 = vunpack.c.l.b16 %v11679
  %v12177 = vunpack.c.l.b16 %v11680
  %v12178 = vunpack.c.l.b16 %v11681
  %v12179 = vunpack.c.l.b16 %v11682
  %v12180 = vunpack.c.l.b16 %v11683
  %v12181 = vunpack.c.l.b16 %v11684
  %v12182 = vunpack.c.l.b16 %v11685
  %v12183 = vunpack.c.l.b16 %v11686
  %v12184 = vunpack.c.l.b16 %v11687
  %v12185 = vunpack.c.l.b16 %v11688
  %v12186 = vunpack.c.l.b16 %v11689
  %v12187 = vunpack.c.l.b16 %v11690
  %v12188 = vunpack.c.l.b16 %v11691
  %v12189 = vunpack.c.l.b16 %v11692
  %v12190 = vunpack.c.l.b16 %v11693
  %v12191 = vunpack.c.l.b16 %v11694
  %v12192 = vunpack.c.l.b16 %v11695
  %v12193 = vunpack.c.l.b16 %v11696
  %v12194 = vunpack.c.l.b16 %v11697
  %v12195 = vunpack.c.l.b16 %v11698
  %v12196 = vunpack.c.l.b16 %v11699
  %v12197 = vunpack.c.l.b16 %v11700
  %v12198 = vunpack.c.l.b16 %v11701
  %v12199 = vunpack.c.l.b16 %v11702
  %v12200 = vunpack.c.l.b16 %v11703
  %v12201 = vunpack.c.l.b16 %v11704
  %v12202 = vunpack.c.l.b16 %v11705
  %v12203 = vunpack.c.l.b16 %v11706
  %v12204 = vunpack.c.l.b16 %v11707
  %v12205 = vunpack.c.l.b16 %v11708
  %v12206 = vpack.c.b16 %v12143, %v12142
  %v12207 = vpack.c.b16 %v12145, %v12144
  %v12208 = vpack.c.b16 %v12147, %v12146
  %v12209 = vpack.c.b16 %v12149, %v12148
  %v12210 = vpack.c.b16 %v12151, %v12150
  %v12211 = vpack.c.b16 %v12153, %v12152
  %v12212 = vpack.c.b16 %v12155, %v12154
  %v12213 = vpack.c.b16 %v12157, %v12156
  %v12214 = vpack.c.b16 %v12159, %v12158
  %v12215 = vpack.c.b16 %v12161, %v12160
  %v12216 = vpack.c.b16 %v12163, %v12162
  %v12217 = vpack.c.b16 %v12165, %v12164
  %v12218 = vpack.c.b16 %v12167, %v12166
  %v12219 = vpack.c.b16 %v12169, %v12168
  %v12220 = vpack.c.b16 %v12171, %v12170
  %v12221 = vpack.c.b16 %v12173, %v12172
  %v12222 = vpack.c.b16 %v12175, %v12174
  %v12223 = vpack.c.b16 %v12177, %v12176
  %v12224 = vpack.c.b16 %v12179, %v12178
  %v12225 = vpack.c.b16 %v12181, %v12180
  %v12226 = vpack.c.b16 %v12183, %v12182
  %v12227 = vpack.c.b16 %v12185, %v12184
  %v12228 = vpack.c.b16 %v12187, %v12186
  %v12229 = vpack.c.b16 %v12189, %v12188
  %v12230 = vpack.c.b16 %v12191, %v12190
  %v12231 = vpack.c.b16 %v12193, %v12192
  %v12232 = vpack.c.b16 %v12195, %v12194
  %v12233 = vpack.c.b16 %v12197, %v12196
  %v12234 = vpack.c.b16 %v12199, %v12198
  %v12235 = vpack.c.b16 %v12201, %v12200
  %v12236 = vpack.c.b16 %v12203, %v12202
  %v12237 = vpack.c.b16 %v12205, %v12204
  %12270 = vmatprep.subr.bf16.mxu0 0
  %12271 = vmatpush1.bf16.msra.mxu0 %v12213
  %12272 = vmatprep.subr.bf16.mxu0 0
  %12273 = vmatpush1.bf16.msra.mxu0 %v12212
  %12274 = vmatprep.subr.bf16.mxu0 0
  %12275 = vmatpush1.bf16.msra.mxu0 %v12211
  %12276 = vmatprep.subr.bf16.mxu0 0
  %12277 = vmatpush1.bf16.msra.mxu0 %v12210
  %12278 = vmatprep.subr.bf16.mxu0 0
  %12279 = vmatpush1.bf16.msra.mxu0 %v12209
  %12280 = vmatprep.subr.bf16.mxu0 0
  %12281 = vmatpush1.bf16.msra.mxu0 %v12208
  %12282 = vmatprep.subr.bf16.mxu0 0
  %12283 = vmatpush1.bf16.msra.mxu0 %v12207
  %12284 = vmatprep.subr.bf16.mxu0 0
  %12285 = vmatpush1.bf16.msra.mxu0 %v12206
  %12286 = vmatprep.subr.bf16.mxu0 0
  %12287 = vmatpush2.bf16.msra.mxu0 %v12221
  %12288 = vmatprep.subr.bf16.mxu0 0
  %12289 = vmatpush2.bf16.msra.mxu0 %v12220
  %12290 = vmatprep.subr.bf16.mxu0 0
  %12291 = vmatpush2.bf16.msra.mxu0 %v12219
  %12292 = vmatprep.subr.bf16.mxu0 0
  %12293 = vmatpush2.bf16.msra.mxu0 %v12218
  %12294 = vmatprep.subr.bf16.mxu0 0
  %12295 = vmatpush2.bf16.msra.mxu0 %v12217
  %12296 = vmatprep.subr.bf16.mxu0 0
  %12297 = vmatpush2.bf16.msra.mxu0 %v12216
  %12298 = vmatprep.subr.bf16.mxu0 0
  %12299 = vmatpush2.bf16.msra.mxu0 %v12215
  %12300 = vmatprep.subr.bf16.mxu0 0
  %12301 = vmatpush2.bf16.msra.mxu0 %v12214
  %12302 = vmatprep.mubr.bf16.mxu0 %v11818
  %12303 = vmatmul.mubr.bf16.gmra.mxu0 %v11816
  %v12304 = vpop.f32.mrf.mxu0
  %v12305 = vadd.f32 %v11714, %v12304
  %v12306 = vpop.f32.mrf.mxu0
  %v12307 = vpop.f32.mrf.mxu0
  %v12308 = vadd.f32 %v11714, %v12307
  %v12309 = vpop.f32.mrf.mxu0
  %12310 = vmatprep.mubr.bf16.mxu0 %v11886
  %12311 = vmatmul.mubr.bf16.gmra.mxu0 %v11884
  %v12312 = vpop.f32.mrf.mxu0
  %v12313 = vadd.f32 %v11714, %v12312
  %v12314 = vpop.f32.mrf.mxu0
  %v12315 = vpop.f32.mrf.mxu0
  %v12316 = vadd.f32 %v11714, %v12315
  %v12317 = vpop.f32.mrf.mxu0
  %12318 = vmatprep.mubr.bf16.mxu0 %v11954
  %12319 = vmatmul.mubr.bf16.gmra.mxu0 %v11952
  %v12320 = vpop.f32.mrf.mxu0
  %v12321 = vadd.f32 %v11714, %v12320
  %v12322 = vpop.f32.mrf.mxu0
  %v12323 = vpop.f32.mrf.mxu0
  %v12324 = vadd.f32 %v11714, %v12323
  %v12325 = vpop.f32.mrf.mxu0
  %12326 = vmatprep.mubr.bf16.mxu0 %v12022
  %12327 = vmatmul.mubr.bf16.gmra.mxu0 %v12020
  %v12328 = vpop.f32.mrf.mxu0
  %v12329 = vadd.f32 %v11714, %v12328
  %v12330 = vpop.f32.mrf.mxu0
  %v12331 = vpop.f32.mrf.mxu0
  %v12332 = vadd.f32 %v11714, %v12331
  %v12333 = vpop.f32.mrf.mxu0
  %12334 = vmatprep.mubr.bf16.mxu0 %v12055
  %12335 = vmatmul.mubr.bf16.gmra.mxu0 %v12048
  %v12336 = vpop.f32.mrf.mxu0
  %v12337 = vadd.f32 %v11714, %v12336
  %v12338 = vpop.f32.mrf.mxu0
  %v12339 = vpop.f32.mrf.mxu0
  %v12340 = vpop.f32.mrf.mxu0
  %12341 = vdwg.mxu0
  %12342 = vmatprep.subr.bf16.mxu0 0
  %12343 = vmatpush1.bf16.msra.mxu0 %v12229
  %12344 = vmatprep.subr.bf16.mxu0 0
  %12345 = vmatpush1.bf16.msra.mxu0 %v12228
  %12346 = vmatprep.subr.bf16.mxu0 0
  %12347 = vmatpush1.bf16.msra.mxu0 %v12227
  %12348 = vmatprep.subr.bf16.mxu0 0
  %12349 = vmatpush1.bf16.msra.mxu0 %v12226
  %12350 = vmatprep.subr.bf16.mxu0 0
  %12351 = vmatpush1.bf16.msra.mxu0 %v12225
  %12352 = vmatprep.subr.bf16.mxu0 0
  %12353 = vmatpush1.bf16.msra.mxu0 %v12224
  %12354 = vmatprep.subr.bf16.mxu0 0
  %12355 = vmatpush1.bf16.msra.mxu0 %v12223
  %12356 = vmatprep.subr.bf16.mxu0 0
  %12357 = vmatpush1.bf16.msra.mxu0 %v12222
  %12358 = vmatprep.subr.bf16.mxu0 0
  %12359 = vmatpush2.bf16.msra.mxu0 %v12237
  %12360 = vmatprep.subr.bf16.mxu0 0
  %12361 = vmatpush2.bf16.msra.mxu0 %v12236
  %12362 = vmatprep.subr.bf16.mxu0 0
  %12363 = vmatpush2.bf16.msra.mxu0 %v12235
  %12364 = vmatprep.subr.bf16.mxu0 0
  %12365 = vmatpush2.bf16.msra.mxu0 %v12234
  %12366 = vmatprep.subr.bf16.mxu0 0
  %12367 = vmatpush2.bf16.msra.mxu0 %v12233
  %12368 = vmatprep.subr.bf16.mxu0 0
  %12369 = vmatpush2.bf16.msra.mxu0 %v12232
  %12370 = vmatprep.subr.bf16.mxu0 0
  %12371 = vmatpush2.bf16.msra.mxu0 %v12231
  %12372 = vmatprep.subr.bf16.mxu0 0
  %12373 = vmatpush2.bf16.msra.mxu0 %v12230
  %12374 = vmatprep.mubr.bf16.mxu0 %v11819
  %12375 = vmatmul.mubr.bf16.gmra.mxu0 %v11817
  %v12376 = vpop.f32.mrf.mxu0
  %v12377 = vadd.f32 %v12305, %v12376
  %v12378 = vpop.f32.mrf.mxu0
  %v12379 = vpop.f32.mrf.mxu0
  %v12380 = vadd.f32 %v12308, %v12379
  %v12381 = vpop.f32.mrf.mxu0
  %12382 = vmatprep.mubr.bf16.mxu0 %v11887
  %12383 = vmatmul.mubr.bf16.gmra.mxu0 %v11885
  %v12384 = vpop.f32.mrf.mxu0
  %v12385 = vadd.f32 %v12313, %v12384
  %v12386 = vpop.f32.mrf.mxu0
  %v12387 = vpop.f32.mrf.mxu0
  %v12388 = vadd.f32 %v12316, %v12387
  %v12389 = vpop.f32.mrf.mxu0
  %12390 = vmatprep.mubr.bf16.mxu0 %v11955
  %12391 = vmatmul.mubr.bf16.gmra.mxu0 %v11953
  %v12392 = vpop.f32.mrf.mxu0
  %v12393 = vadd.f32 %v12321, %v12392
  %v12394 = vpop.f32.mrf.mxu0
  %v12395 = vpop.f32.mrf.mxu0
  %v12396 = vadd.f32 %v12324, %v12395
  %v12397 = vpop.f32.mrf.mxu0
  %12398 = vmatprep.mubr.bf16.mxu0 %v12023
  %12399 = vmatmul.mubr.bf16.gmra.mxu0 %v12021
  %v12400 = vpop.f32.mrf.mxu0
  %v12401 = vadd.f32 %v12329, %v12400
  %v12402 = vpop.f32.mrf.mxu0
  %v12403 = vpop.f32.mrf.mxu0
  %v12404 = vadd.f32 %v12332, %v12403
  %v12405 = vpop.f32.mrf.mxu0
  %12406 = vmatprep.mubr.bf16.mxu0 %v12057
  %12407 = vmatmul.mubr.bf16.gmra.mxu0 %v12056
  %v12408 = vpop.f32.mrf.mxu0
  %v12409 = vadd.f32 %v12337, %v12408
  %v12410 = vpop.f32.mrf.mxu0
  %v12411 = vpop.f32.mrf.mxu0
  %v12412 = vpop.f32.mrf.mxu0
  %12413 = vdwg.mxu0
  %v12414 = vmax.f32 %v12377, 0.0
  %v12415 = vmax.f32 %v12380, 0.0
  %v12416 = vmax.f32 %v12385, 0.0
  %v12417 = vmax.f32 %v12388, 0.0
  %v12418 = vmax.f32 %v12393, 0.0
  %v12419 = vmax.f32 %v12396, 0.0
  %v12420 = vmax.f32 %v12401, 0.0
  %v12421 = vmax.f32 %v12404, 0.0
  %v12422 = vmax.f32 %v12409, 0.0
  %v12423 = vpack.c.bf16 %v12415, %v12414
  %v12424 = vpack.c.bf16 %v12417, %v12416
  %v12425 = vpack.c.bf16 %v12419, %v12418
  %v12426 = vpack.c.bf16 %v12421, %v12420
  %v12427 = vpack.c.bf16 %v12422, %v12422
  %v12433 = vcombine.high %v12423, %v12423
  %v12435 = vunpack.c.l.s4 1966171168
  %v12436 = vunpack.c.0.s8 %v12435
  %v12437 = vlaneseq
  %v12438 = vshrl.u32 %v12437, 7
  %v12439 = vsub.s32 %v12436, %v12438
  %v12440 = vrot.slane %v12423, %v12439
  %v12442 = vunpack.c.l.s4 1966171168
  %v12443 = vunpack.c.0.s8 %v12442
  %v12444 = vlaneseq
  %v12445 = vshrl.u32 %v12444, 7
  %v12446 = vsub.s32 %v12443, %v12445
  %v12447 = vrot.slane %v12433, %v12446
  %v12448 = vcombine.high %v12440, %v12440
  %v12449 = vcombine.high %v12447, %v12447
  %v12451 = vunpack.c.l.s4 1966171168
  %v12452 = vunpack.c.0.s8 %v12451
  %v12453 = vlaneseq
  %v12454 = vshrl.u32 %v12453, 7
  %v12455 = vsub.s32 %v12452, %v12454
  %v12456 = vrot.slane %v12440, %v12455
  %v12458 = vunpack.c.l.s4 1966171168
  %v12459 = vunpack.c.0.s8 %v12458
  %v12460 = vlaneseq
  %v12461 = vshrl.u32 %v12460, 7
  %v12462 = vsub.s32 %v12459, %v12461
  %v12463 = vrot.slane %v12447, %v12462
  %v12465 = vunpack.c.l.s4 1966171168
  %v12466 = vunpack.c.0.s8 %v12465
  %v12467 = vlaneseq
  %v12468 = vshrl.u32 %v12467, 7
  %v12469 = vsub.s32 %v12466, %v12468
  %v12470 = vrot.slane %v12448, %v12469
  %v12472 = vunpack.c.l.s4 1966171168
  %v12473 = vunpack.c.0.s8 %v12472
  %v12474 = vlaneseq
  %v12475 = vshrl.u32 %v12474, 7
  %v12476 = vsub.s32 %v12473, %v12475
  %v12477 = vrot.slane %v12449, %v12476
  %v12478 = vcombine.high %v12456, %v12456
  %v12479 = vcombine.high %v12463, %v12463
  %v12480 = vcombine.high %v12470, %v12470
  %v12481 = vcombine.high %v12477, %v12477
  %v12482 = vcombine.high %v12424, %v12424
  %v12484 = vunpack.c.l.s4 1966171168
  %v12485 = vunpack.c.0.s8 %v12484
  %v12486 = vlaneseq
  %v12487 = vshrl.u32 %v12486, 7
  %v12488 = vsub.s32 %v12485, %v12487
  %v12489 = vrot.slane %v12424, %v12488
  %v12491 = vunpack.c.l.s4 1966171168
  %v12492 = vunpack.c.0.s8 %v12491
  %v12493 = vlaneseq
  %v12494 = vshrl.u32 %v12493, 7
  %v12495 = vsub.s32 %v12492, %v12494
  %v12496 = vrot.slane %v12482, %v12495
  %v12497 = vcombine.high %v12489, %v12489
  %v12498 = vcombine.high %v12496, %v12496
  %v12500 = vunpack.c.l.s4 1966171168
  %v12501 = vunpack.c.0.s8 %v12500
  %v12502 = vlaneseq
  %v12503 = vshrl.u32 %v12502, 7
  %v12504 = vsub.s32 %v12501, %v12503
  %v12505 = vrot.slane %v12489, %v12504
  %v12507 = vunpack.c.l.s4 1966171168
  %v12508 = vunpack.c.0.s8 %v12507
  %v12509 = vlaneseq
  %v12510 = vshrl.u32 %v12509, 7
  %v12511 = vsub.s32 %v12508, %v12510
  %v12512 = vrot.slane %v12496, %v12511
  %v12514 = vunpack.c.l.s4 1966171168
  %v12515 = vunpack.c.0.s8 %v12514
  %v12516 = vlaneseq
  %v12517 = vshrl.u32 %v12516, 7
  %v12518 = vsub.s32 %v12515, %v12517
  %v12519 = vrot.slane %v12497, %v12518
  %v12521 = vunpack.c.l.s4 1966171168
  %v12522 = vunpack.c.0.s8 %v12521
  %v12523 = vlaneseq
  %v12524 = vshrl.u32 %v12523, 7
  %v12525 = vsub.s32 %v12522, %v12524
  %v12526 = vrot.slane %v12498, %v12525
  %v12527 = vcombine.high %v12505, %v12505
  %v12528 = vcombine.high %v12512, %v12512
  %v12529 = vcombine.high %v12519, %v12519
  %v12530 = vcombine.high %v12526, %v12526
  %v12531 = vcombine.high %v12425, %v12425
  %v12533 = vunpack.c.l.s4 1966171168
  %v12534 = vunpack.c.0.s8 %v12533
  %v12535 = vlaneseq
  %v12536 = vshrl.u32 %v12535, 7
  %v12537 = vsub.s32 %v12534, %v12536
  %v12538 = vrot.slane %v12425, %v12537
  %v12540 = vunpack.c.l.s4 1966171168
  %v12541 = vunpack.c.0.s8 %v12540
  %v12542 = vlaneseq
  %v12543 = vshrl.u32 %v12542, 7
  %v12544 = vsub.s32 %v12541, %v12543
  %v12545 = vrot.slane %v12531, %v12544
  %v12546 = vcombine.high %v12538, %v12538
  %v12547 = vcombine.high %v12545, %v12545
  %v12549 = vunpack.c.l.s4 1966171168
  %v12550 = vunpack.c.0.s8 %v12549
  %v12551 = vlaneseq
  %v12552 = vshrl.u32 %v12551, 7
  %v12553 = vsub.s32 %v12550, %v12552
  %v12554 = vrot.slane %v12538, %v12553
  %v12556 = vunpack.c.l.s4 1966171168
  %v12557 = vunpack.c.0.s8 %v12556
  %v12558 = vlaneseq
  %v12559 = vshrl.u32 %v12558, 7
  %v12560 = vsub.s32 %v12557, %v12559
  %v12561 = vrot.slane %v12545, %v12560
  %v12563 = vunpack.c.l.s4 1966171168
  %v12564 = vunpack.c.0.s8 %v12563
  %v12565 = vlaneseq
  %v12566 = vshrl.u32 %v12565, 7
  %v12567 = vsub.s32 %v12564, %v12566
  %v12568 = vrot.slane %v12546, %v12567
  %v12570 = vunpack.c.l.s4 1966171168
  %v12571 = vunpack.c.0.s8 %v12570
  %v12572 = vlaneseq
  %v12573 = vshrl.u32 %v12572, 7
  %v12574 = vsub.s32 %v12571, %v12573
  %v12575 = vrot.slane %v12547, %v12574
  %v12576 = vcombine.high %v12554, %v12554
  %v12577 = vcombine.high %v12561, %v12561
  %v12578 = vcombine.high %v12568, %v12568
  %v12579 = vcombine.high %v12575, %v12575
  %v12580 = vcombine.high %v12426, %v12426
  %v12582 = vunpack.c.l.s4 1966171168
  %v12583 = vunpack.c.0.s8 %v12582
  %v12584 = vlaneseq
  %v12585 = vshrl.u32 %v12584, 7
  %v12586 = vsub.s32 %v12583, %v12585
  %v12587 = vrot.slane %v12426, %v12586
  %v12589 = vunpack.c.l.s4 1966171168
  %v12590 = vunpack.c.0.s8 %v12589
  %v12591 = vlaneseq
  %v12592 = vshrl.u32 %v12591, 7
  %v12593 = vsub.s32 %v12590, %v12592
  %v12594 = vrot.slane %v12580, %v12593
  %v12595 = vcombine.high %v12587, %v12587
  %v12596 = vcombine.high %v12594, %v12594
  %v12598 = vunpack.c.l.s4 1966171168
  %v12599 = vunpack.c.0.s8 %v12598
  %v12600 = vlaneseq
  %v12601 = vshrl.u32 %v12600, 7
  %v12602 = vsub.s32 %v12599, %v12601
  %v12603 = vrot.slane %v12587, %v12602
  %v12605 = vunpack.c.l.s4 1966171168
  %v12606 = vunpack.c.0.s8 %v12605
  %v12607 = vlaneseq
  %v12608 = vshrl.u32 %v12607, 7
  %v12609 = vsub.s32 %v12606, %v12608
  %v12610 = vrot.slane %v12594, %v12609
  %v12612 = vunpack.c.l.s4 1966171168
  %v12613 = vunpack.c.0.s8 %v12612
  %v12614 = vlaneseq
  %v12615 = vshrl.u32 %v12614, 7
  %v12616 = vsub.s32 %v12613, %v12615
  %v12617 = vrot.slane %v12595, %v12616
  %v12619 = vunpack.c.l.s4 1966171168
  %v12620 = vunpack.c.0.s8 %v12619
  %v12621 = vlaneseq
  %v12622 = vshrl.u32 %v12621, 7
  %v12623 = vsub.s32 %v12620, %v12622
  %v12624 = vrot.slane %v12596, %v12623
  %v12625 = vcombine.high %v12603, %v12603
  %v12626 = vcombine.high %v12610, %v12610
  %v12627 = vcombine.high %v12617, %v12617
  %v12628 = vcombine.high %v12624, %v12624
  %v12630 = vunpack.c.l.s4 1966171168
  %v12631 = vunpack.c.0.s8 %v12630
  %v12632 = vlaneseq
  %v12633 = vshrl.u32 %v12632, 7
  %v12634 = vsub.s32 %v12631, %v12633
  %v12635 = vrot.slane %v12427, %v12634
  %v12636 = vcombine.high %v12635, %v12635
  %v12638 = vunpack.c.l.s4 1966171168
  %v12639 = vunpack.c.0.s8 %v12638
  %v12640 = vlaneseq
  %v12641 = vshrl.u32 %v12640, 7
  %v12642 = vsub.s32 %v12639, %v12641
  %v12643 = vrot.slane %v12635, %v12642
  %v12645 = vunpack.c.l.s4 1966171168
  %v12646 = vunpack.c.0.s8 %v12645
  %v12647 = vlaneseq
  %v12648 = vshrl.u32 %v12647, 7
  %v12649 = vsub.s32 %v12646, %v12648
  %v12650 = vrot.slane %v12636, %v12649
  %v12651 = vcombine.high %v12643, %v12643
  %v12652 = vcombine.high %v12650, %v12650
  %v12653 = vunpack.i.l.s16 %v12456
  %v12654 = vunpack.i.h.s16 %v12456
  %v12655 = vunpack.i.l.s16 %v12470
  %v12656 = vunpack.i.h.s16 %v12470
  %v12657 = vunpack.i.l.s16 %v12478
  %v12658 = vunpack.i.h.s16 %v12478
  %v12659 = vunpack.i.l.s16 %v12480
  %v12660 = vunpack.i.h.s16 %v12480
  %v12661 = vunpack.i.l.s16 %v12463
  %v12662 = vunpack.i.h.s16 %v12463
  %v12663 = vunpack.i.l.s16 %v12477
  %v12664 = vunpack.i.h.s16 %v12477
  %v12665 = vunpack.i.l.s16 %v12479
  %v12666 = vunpack.i.h.s16 %v12479
  %v12667 = vunpack.i.l.s16 %v12481
  %v12668 = vunpack.i.h.s16 %v12481
  %v12669 = vunpack.i.l.s16 %v12505
  %v12670 = vunpack.i.h.s16 %v12505
  %v12671 = vunpack.i.l.s16 %v12519
  %v12672 = vunpack.i.h.s16 %v12519
  %v12673 = vunpack.i.l.s16 %v12527
  %v12674 = vunpack.i.h.s16 %v12527
  %v12675 = vunpack.i.l.s16 %v12529
  %v12676 = vunpack.i.h.s16 %v12529
  %v12677 = vunpack.i.l.s16 %v12512
  %v12678 = vunpack.i.h.s16 %v12512
  %v12679 = vunpack.i.l.s16 %v12526
  %v12680 = vunpack.i.h.s16 %v12526
  %v12681 = vunpack.i.l.s16 %v12528
  %v12682 = vunpack.i.h.s16 %v12528
  %v12683 = vunpack.i.l.s16 %v12530
  %v12684 = vunpack.i.h.s16 %v12530
  %v12685 = vunpack.i.l.s16 %v12554
  %v12686 = vunpack.i.h.s16 %v12554
  %v12687 = vunpack.i.l.s16 %v12568
  %v12688 = vunpack.i.h.s16 %v12568
  %v12689 = vunpack.i.l.s16 %v12576
  %v12690 = vunpack.i.h.s16 %v12576
  %v12691 = vunpack.i.l.s16 %v12578
  %v12692 = vunpack.i.h.s16 %v12578
  %v12693 = vunpack.i.l.s16 %v12561
  %v12694 = vunpack.i.h.s16 %v12561
  %v12695 = vunpack.i.l.s16 %v12575
  %v12696 = vunpack.i.h.s16 %v12575
  %v12697 = vunpack.i.l.s16 %v12577
  %v12698 = vunpack.i.h.s16 %v12577
  %v12699 = vunpack.i.l.s16 %v12579
  %v12700 = vunpack.i.h.s16 %v12579
  %v12701 = vunpack.i.l.s16 %v12603
  %v12702 = vunpack.i.h.s16 %v12603
  %v12703 = vunpack.i.l.s16 %v12617
  %v12704 = vunpack.i.h.s16 %v12617
  %v12705 = vunpack.i.l.s16 %v12625
  %v12706 = vunpack.i.h.s16 %v12625
  %v12707 = vunpack.i.l.s16 %v12627
  %v12708 = vunpack.i.h.s16 %v12627
  %v12709 = vunpack.i.l.s16 %v12610
  %v12710 = vunpack.i.h.s16 %v12610
  %v12711 = vunpack.i.l.s16 %v12624
  %v12712 = vunpack.i.h.s16 %v12624
  %v12713 = vunpack.i.l.s16 %v12626
  %v12714 = vunpack.i.h.s16 %v12626
  %v12715 = vunpack.i.l.s16 %v12628
  %v12716 = vunpack.i.h.s16 %v12628
  %v12717 = vunpack.i.l.s16 %v12643
  %v12718 = vunpack.i.h.s16 %v12643
  %v12719 = vunpack.i.l.s16 %v12650
  %v12720 = vunpack.i.h.s16 %v12650
  %v12721 = vunpack.i.l.s16 %v12651
  %v12722 = vunpack.i.h.s16 %v12651
  %v12723 = vunpack.i.l.s16 %v12652
  %v12724 = vunpack.i.h.s16 %v12652
  %v12725 = vpack.i.b16 %v12653, %v12653
  %v12726 = vpack.i.b16 %v12662, %v12662
  %v12727 = vpack.i.b16 %v12671, %v12671
  %v12728 = vpack.i.b16 %v12680, %v12680
  %v12729 = vpack.i.b16 %v12689, %v12689
  %v12730 = vpack.i.b16 %v12698, %v12698
  %v12731 = vpack.i.b16 %v12707, %v12707
  %v12732 = vpack.i.b16 %v12716, %v12716
  %v12733 = vlaneseq
  %v12734 = vshrl.u32 %v12733, 7
  %v12735 = vsub.s32 0, %v12734
  %v12736 = vrot.slane %v12725, %v12735
  %v12737 = vlaneseq
  %v12738 = vshrl.u32 %v12737, 7
  %v12739 = vsub.s32 0, %v12738
  %v12740 = vrot.slane %v12726, %v12739
  %v12741 = vlaneseq
  %v12742 = vshrl.u32 %v12741, 7
  %v12743 = vsub.s32 0, %v12742
  %v12744 = vrot.slane %v12727, %v12743
  %v12745 = vlaneseq
  %v12746 = vshrl.u32 %v12745, 7
  %v12747 = vsub.s32 0, %v12746
  %v12748 = vrot.slane %v12728, %v12747
  %v12749 = vlaneseq
  %v12750 = vshrl.u32 %v12749, 7
  %v12751 = vsub.s32 0, %v12750
  %v12752 = vrot.slane %v12729, %v12751
  %v12753 = vlaneseq
  %v12754 = vshrl.u32 %v12753, 7
  %v12755 = vsub.s32 0, %v12754
  %v12756 = vrot.slane %v12730, %v12755
  %v12757 = vlaneseq
  %v12758 = vshrl.u32 %v12757, 7
  %v12759 = vsub.s32 0, %v12758
  %v12760 = vrot.slane %v12731, %v12759
  %v12761 = vlaneseq
  %v12762 = vshrl.u32 %v12761, 7
  %v12763 = vsub.s32 0, %v12762
  %v12764 = vrot.slane %v12732, %v12763
  %v12765 = vpack.i.b16 %v12654, %v12654
  %v12766 = vpack.i.b16 %v12663, %v12663
  %v12767 = vpack.i.b16 %v12672, %v12672
  %v12768 = vpack.i.b16 %v12681, %v12681
  %v12769 = vpack.i.b16 %v12690, %v12690
  %v12770 = vpack.i.b16 %v12699, %v12699
  %v12771 = vpack.i.b16 %v12708, %v12708
  %v12772 = vpack.i.b16 %v12717, %v12717
  %v12773 = vlaneseq
  %v12774 = vshrl.u32 %v12773, 7
  %v12775 = vsub.s32 0, %v12774
  %v12776 = vrot.slane %v12765, %v12775
  %v12777 = vlaneseq
  %v12778 = vshrl.u32 %v12777, 7
  %v12779 = vsub.s32 0, %v12778
  %v12780 = vrot.slane %v12766, %v12779
  %v12781 = vlaneseq
  %v12782 = vshrl.u32 %v12781, 7
  %v12783 = vsub.s32 0, %v12782
  %v12784 = vrot.slane %v12767, %v12783
  %v12785 = vlaneseq
  %v12786 = vshrl.u32 %v12785, 7
  %v12787 = vsub.s32 0, %v12786
  %v12788 = vrot.slane %v12768, %v12787
  %v12789 = vlaneseq
  %v12790 = vshrl.u32 %v12789, 7
  %v12791 = vsub.s32 0, %v12790
  %v12792 = vrot.slane %v12769, %v12791
  %v12793 = vlaneseq
  %v12794 = vshrl.u32 %v12793, 7
  %v12795 = vsub.s32 0, %v12794
  %v12796 = vrot.slane %v12770, %v12795
  %v12797 = vlaneseq
  %v12798 = vshrl.u32 %v12797, 7
  %v12799 = vsub.s32 0, %v12798
  %v12800 = vrot.slane %v12771, %v12799
  %v12801 = vlaneseq
  %v12802 = vshrl.u32 %v12801, 7
  %v12803 = vsub.s32 0, %v12802
  %v12804 = vrot.slane %v12772, %v12803
  %12805 = vrot.lane.b32.xlu0 %v12776, 64
  %v12806 = vpop.permute.xlu0 %12805
  %12807 = vrot.lane.b32.xlu0 %v12780, 64
  %v12808 = vpop.permute.xlu0 %12807
  %12809 = vrot.lane.b32.xlu0 %v12784, 64
  %v12810 = vpop.permute.xlu0 %12809
  %12811 = vrot.lane.b32.xlu0 %v12788, 64
  %v12812 = vpop.permute.xlu0 %12811
  %12813 = vrot.lane.b32.xlu0 %v12792, 64
  %v12814 = vpop.permute.xlu0 %12813
  %12815 = vrot.lane.b32.xlu0 %v12796, 64
  %v12816 = vpop.permute.xlu0 %12815
  %12817 = vrot.lane.b32.xlu0 %v12800, 64
  %v12818 = vpop.permute.xlu0 %12817
  %12819 = vrot.lane.b32.xlu0 %v12804, 64
  %v12820 = vpop.permute.xlu0 %12819
  %v12821 = vpack.i.b16 %v12655, %v12655
  %v12822 = vpack.i.b16 %v12664, %v12664
  %v12823 = vpack.i.b16 %v12673, %v12673
  %v12824 = vpack.i.b16 %v12682, %v12682
  %v12825 = vpack.i.b16 %v12691, %v12691
  %v12826 = vpack.i.b16 %v12700, %v12700
  %v12827 = vpack.i.b16 %v12709, %v12709
  %v12828 = vpack.i.b16 %v12718, %v12718
  %v12829 = vlaneseq
  %v12830 = vshrl.u32 %v12829, 7
  %v12831 = vsub.s32 0, %v12830
  %v12832 = vrot.slane %v12821, %v12831
  %v12833 = vlaneseq
  %v12834 = vshrl.u32 %v12833, 7
  %v12835 = vsub.s32 0, %v12834
  %v12836 = vrot.slane %v12822, %v12835
  %v12837 = vlaneseq
  %v12838 = vshrl.u32 %v12837, 7
  %v12839 = vsub.s32 0, %v12838
  %v12840 = vrot.slane %v12823, %v12839
  %v12841 = vlaneseq
  %v12842 = vshrl.u32 %v12841, 7
  %v12843 = vsub.s32 0, %v12842
  %v12844 = vrot.slane %v12824, %v12843
  %v12845 = vlaneseq
  %v12846 = vshrl.u32 %v12845, 7
  %v12847 = vsub.s32 0, %v12846
  %v12848 = vrot.slane %v12825, %v12847
  %v12849 = vlaneseq
  %v12850 = vshrl.u32 %v12849, 7
  %v12851 = vsub.s32 0, %v12850
  %v12852 = vrot.slane %v12826, %v12851
  %v12853 = vlaneseq
  %v12854 = vshrl.u32 %v12853, 7
  %v12855 = vsub.s32 0, %v12854
  %v12856 = vrot.slane %v12827, %v12855
  %v12857 = vlaneseq
  %v12858 = vshrl.u32 %v12857, 7
  %v12859 = vsub.s32 0, %v12858
  %v12860 = vrot.slane %v12828, %v12859
  %v12861 = vpack.i.b16 %v12656, %v12656
  %v12862 = vpack.i.b16 %v12665, %v12665
  %v12863 = vpack.i.b16 %v12674, %v12674
  %v12864 = vpack.i.b16 %v12683, %v12683
  %v12865 = vpack.i.b16 %v12692, %v12692
  %v12866 = vpack.i.b16 %v12701, %v12701
  %v12867 = vpack.i.b16 %v12710, %v12710
  %v12868 = vpack.i.b16 %v12719, %v12719
  %v12869 = vlaneseq
  %v12870 = vshrl.u32 %v12869, 7
  %v12871 = vsub.s32 0, %v12870
  %v12872 = vrot.slane %v12861, %v12871
  %v12873 = vlaneseq
  %v12874 = vshrl.u32 %v12873, 7
  %v12875 = vsub.s32 0, %v12874
  %v12876 = vrot.slane %v12862, %v12875
  %v12877 = vlaneseq
  %v12878 = vshrl.u32 %v12877, 7
  %v12879 = vsub.s32 0, %v12878
  %v12880 = vrot.slane %v12863, %v12879
  %v12881 = vlaneseq
  %v12882 = vshrl.u32 %v12881, 7
  %v12883 = vsub.s32 0, %v12882
  %v12884 = vrot.slane %v12864, %v12883
  %v12885 = vlaneseq
  %v12886 = vshrl.u32 %v12885, 7
  %v12887 = vsub.s32 0, %v12886
  %v12888 = vrot.slane %v12865, %v12887
  %v12889 = vlaneseq
  %v12890 = vshrl.u32 %v12889, 7
  %v12891 = vsub.s32 0, %v12890
  %v12892 = vrot.slane %v12866, %v12891
  %v12893 = vlaneseq
  %v12894 = vshrl.u32 %v12893, 7
  %v12895 = vsub.s32 0, %v12894
  %v12896 = vrot.slane %v12867, %v12895
  %v12897 = vlaneseq
  %v12898 = vshrl.u32 %v12897, 7
  %v12899 = vsub.s32 0, %v12898
  %v12900 = vrot.slane %v12868, %v12899
  %12901 = vrot.lane.b32.xlu0 %v12872, 64
  %v12902 = vpop.permute.xlu0 %12901
  %12903 = vrot.lane.b32.xlu0 %v12876, 64
  %v12904 = vpop.permute.xlu0 %12903
  %12905 = vrot.lane.b32.xlu0 %v12880, 64
  %v12906 = vpop.permute.xlu0 %12905
  %12907 = vrot.lane.b32.xlu0 %v12884, 64
  %v12908 = vpop.permute.xlu0 %12907
  %12909 = vrot.lane.b32.xlu0 %v12888, 64
  %v12910 = vpop.permute.xlu0 %12909
  %12911 = vrot.lane.b32.xlu0 %v12892, 64
  %v12912 = vpop.permute.xlu0 %12911
  %12913 = vrot.lane.b32.xlu0 %v12896, 64
  %v12914 = vpop.permute.xlu0 %12913
  %12915 = vrot.lane.b32.xlu0 %v12900, 64
  %v12916 = vpop.permute.xlu0 %12915
  %v12917 = vpack.i.b16 %v12657, %v12657
  %v12918 = vpack.i.b16 %v12666, %v12666
  %v12919 = vpack.i.b16 %v12675, %v12675
  %v12920 = vpack.i.b16 %v12684, %v12684
  %v12921 = vpack.i.b16 %v12693, %v12693
  %v12922 = vpack.i.b16 %v12702, %v12702
  %v12923 = vpack.i.b16 %v12711, %v12711
  %v12924 = vpack.i.b16 %v12720, %v12720
  %v12925 = vlaneseq
  %v12926 = vshrl.u32 %v12925, 7
  %v12927 = vsub.s32 0, %v12926
  %v12928 = vrot.slane %v12917, %v12927
  %v12929 = vlaneseq
  %v12930 = vshrl.u32 %v12929, 7
  %v12931 = vsub.s32 0, %v12930
  %v12932 = vrot.slane %v12918, %v12931
  %v12933 = vlaneseq
  %v12934 = vshrl.u32 %v12933, 7
  %v12935 = vsub.s32 0, %v12934
  %v12936 = vrot.slane %v12919, %v12935
  %v12937 = vlaneseq
  %v12938 = vshrl.u32 %v12937, 7
  %v12939 = vsub.s32 0, %v12938
  %v12940 = vrot.slane %v12920, %v12939
  %v12941 = vlaneseq
  %v12942 = vshrl.u32 %v12941, 7
  %v12943 = vsub.s32 0, %v12942
  %v12944 = vrot.slane %v12921, %v12943
  %v12945 = vlaneseq
  %v12946 = vshrl.u32 %v12945, 7
  %v12947 = vsub.s32 0, %v12946
  %v12948 = vrot.slane %v12922, %v12947
  %v12949 = vlaneseq
  %v12950 = vshrl.u32 %v12949, 7
  %v12951 = vsub.s32 0, %v12950
  %v12952 = vrot.slane %v12923, %v12951
  %v12953 = vlaneseq
  %v12954 = vshrl.u32 %v12953, 7
  %v12955 = vsub.s32 0, %v12954
  %v12956 = vrot.slane %v12924, %v12955
  %v12957 = vpack.i.b16 %v12658, %v12658
  %v12958 = vpack.i.b16 %v12667, %v12667
  %v12959 = vpack.i.b16 %v12676, %v12676
  %v12960 = vpack.i.b16 %v12685, %v12685
  %v12961 = vpack.i.b16 %v12694, %v12694
  %v12962 = vpack.i.b16 %v12703, %v12703
  %v12963 = vpack.i.b16 %v12712, %v12712
  %v12964 = vpack.i.b16 %v12721, %v12721
  %v12965 = vlaneseq
  %v12966 = vshrl.u32 %v12965, 7
  %v12967 = vsub.s32 0, %v12966
  %v12968 = vrot.slane %v12957, %v12967
  %v12969 = vlaneseq
  %v12970 = vshrl.u32 %v12969, 7
  %v12971 = vsub.s32 0, %v12970
  %v12972 = vrot.slane %v12958, %v12971
  %v12973 = vlaneseq
  %v12974 = vshrl.u32 %v12973, 7
  %v12975 = vsub.s32 0, %v12974
  %v12976 = vrot.slane %v12959, %v12975
  %v12977 = vlaneseq
  %v12978 = vshrl.u32 %v12977, 7
  %v12979 = vsub.s32 0, %v12978
  %v12980 = vrot.slane %v12960, %v12979
  %v12981 = vlaneseq
  %v12982 = vshrl.u32 %v12981, 7
  %v12983 = vsub.s32 0, %v12982
  %v12984 = vrot.slane %v12961, %v12983
  %v12985 = vlaneseq
  %v12986 = vshrl.u32 %v12985, 7
  %v12987 = vsub.s32 0, %v12986
  %v12988 = vrot.slane %v12962, %v12987
  %v12989 = vlaneseq
  %v12990 = vshrl.u32 %v12989, 7
  %v12991 = vsub.s32 0, %v12990
  %v12992 = vrot.slane %v12963, %v12991
  %v12993 = vlaneseq
  %v12994 = vshrl.u32 %v12993, 7
  %v12995 = vsub.s32 0, %v12994
  %v12996 = vrot.slane %v12964, %v12995
  %12997 = vrot.lane.b32.xlu0 %v12968, 64
  %v12998 = vpop.permute.xlu0 %12997
  %12999 = vrot.lane.b32.xlu0 %v12972, 64
  %v13000 = vpop.permute.xlu0 %12999
  %13001 = vrot.lane.b32.xlu0 %v12976, 64
  %v13002 = vpop.permute.xlu0 %13001
  %13003 = vrot.lane.b32.xlu0 %v12980, 64
  %v13004 = vpop.permute.xlu0 %13003
  %13005 = vrot.lane.b32.xlu0 %v12984, 64
  %v13006 = vpop.permute.xlu0 %13005
  %13007 = vrot.lane.b32.xlu0 %v12988, 64
  %v13008 = vpop.permute.xlu0 %13007
  %13009 = vrot.lane.b32.xlu0 %v12992, 64
  %v13010 = vpop.permute.xlu0 %13009
  %13011 = vrot.lane.b32.xlu0 %v12996, 64
  %v13012 = vpop.permute.xlu0 %13011
  %v13013 = vpack.i.b16 %v12659, %v12659
  %v13014 = vpack.i.b16 %v12668, %v12668
  %v13015 = vpack.i.b16 %v12677, %v12677
  %v13016 = vpack.i.b16 %v12686, %v12686
  %v13017 = vpack.i.b16 %v12695, %v12695
  %v13018 = vpack.i.b16 %v12704, %v12704
  %v13019 = vpack.i.b16 %v12713, %v12713
  %v13020 = vpack.i.b16 %v12722, %v12722
  %v13021 = vlaneseq
  %v13022 = vshrl.u32 %v13021, 7
  %v13023 = vsub.s32 0, %v13022
  %v13024 = vrot.slane %v13013, %v13023
  %v13025 = vlaneseq
  %v13026 = vshrl.u32 %v13025, 7
  %v13027 = vsub.s32 0, %v13026
  %v13028 = vrot.slane %v13014, %v13027
  %v13029 = vlaneseq
  %v13030 = vshrl.u32 %v13029, 7
  %v13031 = vsub.s32 0, %v13030
  %v13032 = vrot.slane %v13015, %v13031
  %v13033 = vlaneseq
  %v13034 = vshrl.u32 %v13033, 7
  %v13035 = vsub.s32 0, %v13034
  %v13036 = vrot.slane %v13016, %v13035
  %v13037 = vlaneseq
  %v13038 = vshrl.u32 %v13037, 7
  %v13039 = vsub.s32 0, %v13038
  %v13040 = vrot.slane %v13017, %v13039
  %v13041 = vlaneseq
  %v13042 = vshrl.u32 %v13041, 7
  %v13043 = vsub.s32 0, %v13042
  %v13044 = vrot.slane %v13018, %v13043
  %v13045 = vlaneseq
  %v13046 = vshrl.u32 %v13045, 7
  %v13047 = vsub.s32 0, %v13046
  %v13048 = vrot.slane %v13019, %v13047
  %v13049 = vlaneseq
  %v13050 = vshrl.u32 %v13049, 7
  %v13051 = vsub.s32 0, %v13050
  %v13052 = vrot.slane %v13020, %v13051
  %v13053 = vpack.i.b16 %v12660, %v12660
  %v13054 = vpack.i.b16 %v12669, %v12669
  %v13055 = vpack.i.b16 %v12678, %v12678
  %v13056 = vpack.i.b16 %v12687, %v12687
  %v13057 = vpack.i.b16 %v12696, %v12696
  %v13058 = vpack.i.b16 %v12705, %v12705
  %v13059 = vpack.i.b16 %v12714, %v12714
  %v13060 = vpack.i.b16 %v12723, %v12723
  %v13061 = vlaneseq
  %v13062 = vshrl.u32 %v13061, 7
  %v13063 = vsub.s32 0, %v13062
  %v13064 = vrot.slane %v13053, %v13063
  %v13065 = vlaneseq
  %v13066 = vshrl.u32 %v13065, 7
  %v13067 = vsub.s32 0, %v13066
  %v13068 = vrot.slane %v13054, %v13067
  %v13069 = vlaneseq
  %v13070 = vshrl.u32 %v13069, 7
  %v13071 = vsub.s32 0, %v13070
  %v13072 = vrot.slane %v13055, %v13071
  %v13073 = vlaneseq
  %v13074 = vshrl.u32 %v13073, 7
  %v13075 = vsub.s32 0, %v13074
  %v13076 = vrot.slane %v13056, %v13075
  %v13077 = vlaneseq
  %v13078 = vshrl.u32 %v13077, 7
  %v13079 = vsub.s32 0, %v13078
  %v13080 = vrot.slane %v13057, %v13079
  %v13081 = vlaneseq
  %v13082 = vshrl.u32 %v13081, 7
  %v13083 = vsub.s32 0, %v13082
  %v13084 = vrot.slane %v13058, %v13083
  %v13085 = vlaneseq
  %v13086 = vshrl.u32 %v13085, 7
  %v13087 = vsub.s32 0, %v13086
  %v13088 = vrot.slane %v13059, %v13087
  %v13089 = vlaneseq
  %v13090 = vshrl.u32 %v13089, 7
  %v13091 = vsub.s32 0, %v13090
  %v13092 = vrot.slane %v13060, %v13091
  %13093 = vrot.lane.b32.xlu0 %v13064, 64
  %v13094 = vpop.permute.xlu0 %13093
  %13095 = vrot.lane.b32.xlu0 %v13068, 64
  %v13096 = vpop.permute.xlu0 %13095
  %13097 = vrot.lane.b32.xlu0 %v13072, 64
  %v13098 = vpop.permute.xlu0 %13097
  %13099 = vrot.lane.b32.xlu0 %v13076, 64
  %v13100 = vpop.permute.xlu0 %13099
  %13101 = vrot.lane.b32.xlu0 %v13080, 64
  %v13102 = vpop.permute.xlu0 %13101
  %13103 = vrot.lane.b32.xlu0 %v13084, 64
  %v13104 = vpop.permute.xlu0 %13103
  %13105 = vrot.lane.b32.xlu0 %v13088, 64
  %v13106 = vpop.permute.xlu0 %13105
  %13107 = vrot.lane.b32.xlu0 %v13092, 64
  %v13108 = vpop.permute.xlu0 %13107
  %v13109 = vpack.i.b16 %v12661, %v12661
  %v13110 = vpack.i.b16 %v12670, %v12670
  %v13111 = vpack.i.b16 %v12679, %v12679
  %v13112 = vpack.i.b16 %v12688, %v12688
  %v13113 = vpack.i.b16 %v12697, %v12697
  %v13114 = vpack.i.b16 %v12706, %v12706
  %v13115 = vpack.i.b16 %v12715, %v12715
  %v13116 = vpack.i.b16 %v12724, %v12724
  %v13117 = vlaneseq
  %v13118 = vshrl.u32 %v13117, 7
  %v13119 = vsub.s32 0, %v13118
  %v13120 = vrot.slane %v13109, %v13119
  %v13121 = vlaneseq
  %v13122 = vshrl.u32 %v13121, 7
  %v13123 = vsub.s32 0, %v13122
  %v13124 = vrot.slane %v13110, %v13123
  %v13125 = vlaneseq
  %v13126 = vshrl.u32 %v13125, 7
  %v13127 = vsub.s32 0, %v13126
  %v13128 = vrot.slane %v13111, %v13127
  %v13129 = vlaneseq
  %v13130 = vshrl.u32 %v13129, 7
  %v13131 = vsub.s32 0, %v13130
  %v13132 = vrot.slane %v13112, %v13131
  %v13133 = vlaneseq
  %v13134 = vshrl.u32 %v13133, 7
  %v13135 = vsub.s32 0, %v13134
  %v13136 = vrot.slane %v13113, %v13135
  %v13137 = vlaneseq
  %v13138 = vshrl.u32 %v13137, 7
  %v13139 = vsub.s32 0, %v13138
  %v13140 = vrot.slane %v13114, %v13139
  %v13141 = vlaneseq
  %v13142 = vshrl.u32 %v13141, 7
  %v13143 = vsub.s32 0, %v13142
  %v13144 = vrot.slane %v13115, %v13143
  %v13145 = vlaneseq
  %v13146 = vshrl.u32 %v13145, 7
  %v13147 = vsub.s32 0, %v13146
  %v13148 = vrot.slane %v13116, %v13147
  %v13151 = vsel %vm2088, %v12736, %v12806
  %v13154 = vsel %vm2088, %v12740, %v12808
  %v13157 = vsel %vm2088, %v12744, %v12810
  %v13160 = vsel %vm2088, %v12748, %v12812
  %v13163 = vsel %vm2088, %v12752, %v12814
  %v13166 = vsel %vm2088, %v12756, %v12816
  %v13169 = vsel %vm2088, %v12760, %v12818
  %v13172 = vsel %vm2088, %v12764, %v12820
  %v13175 = vsel %vm2088, %v12832, %v12902
  %v13178 = vsel %vm2088, %v12836, %v12904
  %v13181 = vsel %vm2088, %v12840, %v12906
  %v13184 = vsel %vm2088, %v12844, %v12908
  %v13187 = vsel %vm2088, %v12848, %v12910
  %v13190 = vsel %vm2088, %v12852, %v12912
  %v13193 = vsel %vm2088, %v12856, %v12914
  %v13196 = vsel %vm2088, %v12860, %v12916
  %v13199 = vsel %vm2088, %v12928, %v12998
  %v13202 = vsel %vm2088, %v12932, %v13000
  %v13205 = vsel %vm2088, %v12936, %v13002
  %v13208 = vsel %vm2088, %v12940, %v13004
  %v13211 = vsel %vm2088, %v12944, %v13006
  %v13214 = vsel %vm2088, %v12948, %v13008
  %v13217 = vsel %vm2088, %v12952, %v13010
  %v13220 = vsel %vm2088, %v12956, %v13012
  %v13223 = vsel %vm2088, %v13024, %v13094
  %v13226 = vsel %vm2088, %v13028, %v13096
  %v13229 = vsel %vm2088, %v13032, %v13098
  %v13232 = vsel %vm2088, %v13036, %v13100
  %v13235 = vsel %vm2088, %v13040, %v13102
  %v13238 = vsel %vm2088, %v13044, %v13104
  %v13241 = vsel %vm2088, %v13048, %v13106
  %v13244 = vsel %vm2088, %v13052, %v13108
  %v13245 = vld [vmem:[%s5] sm:$0xf]
  %v13246 = vld [vmem:[%s5 + $0x4] sm:$0xf]
  %v13247 = vld [vmem:[%s5 + $0x8] sm:$0xf]
  %v13248 = vld [vmem:[%s5 + $0xc] sm:$0xf]
  %v13249 = vld [vmem:[%s5 + $0x10] sm:$0xf]
  %v13250 = vld [vmem:[%s5 + $0x14] sm:$0xf]
  %v13251 = vld [vmem:[%s5 + $0x18] sm:$0xf]
  %v13252 = vld [vmem:[%s5 + $0x1c] sm:$0xf]
  %v13253 = vld [vmem:[%s5 + $0x20] sm:$0xf]
  %v13254 = vld [vmem:[%s5 + $0x24] sm:$0xf]
  %v13255 = vld [vmem:[%s5 + $0x28] sm:$0xf]
  %v13256 = vld [vmem:[%s5 + $0x2c] sm:$0xf]
  %v13257 = vld [vmem:[%s5 + $0x30] sm:$0xf]
  %v13258 = vld [vmem:[%s5 + $0x34] sm:$0xf]
  %v13259 = vld [vmem:[%s5 + $0x38] sm:$0xf]
  %v13260 = vld [vmem:[%s5 + $0x3c] sm:$0xf]
  %v13261 = vld [vmem:[%s5 + $0x40] sm:$0xf]
  %v13262 = vld [vmem:[%s5 + $0x44] sm:$0xf]
  %v13263 = vld [vmem:[%s5 + $0x48] sm:$0xf]
  %v13264 = vld [vmem:[%s5 + $0x4c] sm:$0xf]
  %v13265 = vld [vmem:[%s5 + $0x50] sm:$0xf]
  %v13266 = vld [vmem:[%s5 + $0x54] sm:$0xf]
  %v13267 = vld [vmem:[%s5 + $0x58] sm:$0xf]
  %v13268 = vld [vmem:[%s5 + $0x5c] sm:$0xf]
  %v13269 = vld [vmem:[%s5 + $0x60] sm:$0xf]
  %v13270 = vld [vmem:[%s5 + $0x64] sm:$0xf]
  %v13271 = vld [vmem:[%s5 + $0x68] sm:$0xf]
  %v13272 = vld [vmem:[%s5 + $0x6c] sm:$0xf]
  %v13273 = vld [vmem:[%s5 + $0x70] sm:$0xf]
  %v13274 = vld [vmem:[%s5 + $0x74] sm:$0xf]
  %v13275 = vld [vmem:[%s5 + $0x78] sm:$0xf]
  %v13276 = vld [vmem:[%s5 + $0x7c] sm:$0xf]
  %v13277 = vld [vmem:[%s5 + $0x80] sm:$0xf]
  %v13278 = vld [vmem:[%s5 + $0x84] sm:$0xf]
  %v13279 = vld [vmem:[%s5 + $0x88] sm:$0xf]
  %v13280 = vld [vmem:[%s5 + $0x8c] sm:$0xf]
  %v13281 = vld [vmem:[%s5 + $0x90] sm:$0xf]
  %v13282 = vld [vmem:[%s5 + $0x94] sm:$0xf]
  %v13283 = vld [vmem:[%s5 + $0x98] sm:$0xf]
  %v13284 = vld [vmem:[%s5 + $0x9c] sm:$0xf]
  %v13285 = vld [vmem:[%s5 + $0xa0] sm:$0xf]
  %v13286 = vld [vmem:[%s5 + $0xa4] sm:$0xf]
  %v13287 = vld [vmem:[%s5 + $0xa8] sm:$0xf]
  %v13288 = vld [vmem:[%s5 + $0xac] sm:$0xf]
  %v13289 = vld [vmem:[%s5 + $0xb0] sm:$0xf]
  %v13290 = vld [vmem:[%s5 + $0xb4] sm:$0xf]
  %v13291 = vld [vmem:[%s5 + $0xb8] sm:$0xf]
  %v13292 = vld [vmem:[%s5 + $0xbc] sm:$0xf]
  %v13293 = vld [vmem:[%s5 + $0xc0] sm:$0xf]
  %v13294 = vld [vmem:[%s5 + $0xc4] sm:$0xf]
  %v13295 = vld [vmem:[%s5 + $0xc8] sm:$0xf]
  %v13296 = vld [vmem:[%s5 + $0xcc] sm:$0xf]
  %v13297 = vld [vmem:[%s5 + $0xd0] sm:$0xf]
  %v13298 = vld [vmem:[%s5 + $0xd4] sm:$0xf]
  %v13299 = vld [vmem:[%s5 + $0xd8] sm:$0xf]
  %v13300 = vld [vmem:[%s5 + $0xdc] sm:$0xf]
  %v13301 = vld [vmem:[%s5 + $0xe0] sm:$0xf]
  %v13302 = vld [vmem:[%s5 + $0xe4] sm:$0xf]
  %v13303 = vld [vmem:[%s5 + $0xe8] sm:$0xf]
  %v13304 = vld [vmem:[%s5 + $0xec] sm:$0xf]
  %v13305 = vld [vmem:[%s5 + $0xf0] sm:$0xf]
  %v13306 = vld [vmem:[%s5 + $0xf4] sm:$0xf]
  %v13307 = vld [vmem:[%s5 + $0xf8] sm:$0xf]
  %v13308 = vld [vmem:[%s5 + $0xfc] sm:$0xf]
  %v13309 = vld [vmem:[%s5 + $0x100] sm:$0xf]
  %v13310 = vld [vmem:[%s5 + $0x104] sm:$0xf]
  %v13311 = vld [vmem:[%s5 + $0x108] sm:$0xf]
  %v13312 = vld [vmem:[%s5 + $0x10c] sm:$0xf]
  %v13313 = vld [vmem:[%s5 + $0x110] sm:$0xf]
  %v13314 = vld [vmem:[%s5 + $0x114] sm:$0xf]
  %v13315 = vld [vmem:[%s5 + $0x118] sm:$0xf]
  %v13316 = vld [vmem:[%s5 + $0x11c] sm:$0xf]
  %v13317 = vld [vmem:[%s6] sm:$0x1]
  %v13319 = vlaneseq
  %v13320 = vshrl.u32 %v13319, 7
  %v13321 = vsub.s32 0, %v13320
  %v13322 = vrot.slane %v13317, %v13321
  %v13356 = vunpack.c.l.b16 %v13151
  %v13357 = vunpack.c.l.b16 %v13175
  %v13358 = vunpack.c.l.b16 %v13199
  %v13359 = vunpack.c.l.b16 %v13223
  %v13360 = vunpack.c.l.b16 %v13120
  %v13361 = vunpack.c.l.b16 %v13154
  %v13362 = vunpack.c.l.b16 %v13178
  %v13363 = vunpack.c.l.b16 %v13202
  %v13364 = vunpack.c.l.b16 %v13226
  %v13365 = vunpack.c.l.b16 %v13124
  %v13366 = vunpack.c.l.b16 %v13157
  %v13367 = vunpack.c.l.b16 %v13181
  %v13368 = vunpack.c.l.b16 %v13205
  %v13369 = vunpack.c.l.b16 %v13229
  %v13370 = vunpack.c.l.b16 %v13128
  %v13371 = vunpack.c.l.b16 %v13160
  %v13372 = vunpack.c.l.b16 %v13184
  %v13373 = vunpack.c.l.b16 %v13208
  %v13374 = vunpack.c.l.b16 %v13232
  %v13375 = vunpack.c.l.b16 %v13132
  %v13376 = vunpack.c.l.b16 %v13163
  %v13377 = vunpack.c.l.b16 %v13187
  %v13378 = vunpack.c.l.b16 %v13211
  %v13379 = vunpack.c.l.b16 %v13235
  %v13380 = vunpack.c.l.b16 %v13136
  %v13381 = vunpack.c.l.b16 %v13166
  %v13382 = vunpack.c.l.b16 %v13190
  %v13383 = vunpack.c.l.b16 %v13214
  %v13384 = vunpack.c.l.b16 %v13238
  %v13385 = vunpack.c.l.b16 %v13140
  %v13386 = vunpack.c.l.b16 %v13169
  %v13387 = vunpack.c.l.b16 %v13193
  %v13388 = vunpack.c.l.b16 %v13217
  %v13389 = vunpack.c.l.b16 %v13241
  %v13390 = vunpack.c.l.b16 %v13144
  %v13391 = vunpack.c.l.b16 %v13172
  %v13392 = vunpack.c.l.b16 %v13196
  %v13393 = vunpack.c.l.b16 %v13220
  %v13394 = vunpack.c.l.b16 %v13244
  %v13395 = vunpack.c.l.b16 %v13148
  %v13396 = vrot.slane %v13361, 7
  %v13397 = vsel %vm6058, %v13396, %v13356
  %v13398 = vrot.slane %v13366, 6
  %v13399 = vsel %vm6061, %v13398, %v13397
  %v13400 = vrot.slane %v13371, 5
  %vm13401 = vcmask 1043459
  %v13402 = vsel %vm13401, %v13400, %v13399
  %v13403 = vrot.slane %v13376, 4
  %vm13404 = vcmask 1044484
  %v13405 = vsel %vm13404, %v13403, %v13402
  %v13406 = vrot.slane %v13381, 3
  %vm13407 = vcmask 1045509
  %v13408 = vsel %vm13407, %v13406, %v13405
  %v13409 = vrot.slane %v13386, 2
  %vm13410 = vcmask 1046534
  %v13411 = vsel %vm13410, %v13409, %v13408
  %v13412 = vrot.slane %v13391, 1
  %vm13413 = vcmask 1047559
  %v13414 = vsel %vm13413, %v13412, %v13411
  %v13415 = vrot.slane %v13362, 7
  %v13416 = vsel %vm6058, %v13415, %v13357
  %v13417 = vrot.slane %v13367, 6
  %v13418 = vsel %vm6061, %v13417, %v13416
  %v13419 = vrot.slane %v13372, 5
  %v13420 = vsel %vm13401, %v13419, %v13418
  %v13421 = vrot.slane %v13377, 4
  %v13422 = vsel %vm13404, %v13421, %v13420
  %v13423 = vrot.slane %v13382, 3
  %v13424 = vsel %vm13407, %v13423, %v13422
  %v13425 = vrot.slane %v13387, 2
  %v13426 = vsel %vm13410, %v13425, %v13424
  %v13427 = vrot.slane %v13392, 1
  %v13428 = vsel %vm13413, %v13427, %v13426
  %v13429 = vrot.slane %v13363, 7
  %v13430 = vsel %vm6058, %v13429, %v13358
  %v13431 = vrot.slane %v13368, 6
  %v13432 = vsel %vm6061, %v13431, %v13430
  %v13433 = vrot.slane %v13373, 5
  %v13434 = vsel %vm13401, %v13433, %v13432
  %v13435 = vrot.slane %v13378, 4
  %v13436 = vsel %vm13404, %v13435, %v13434
  %v13437 = vrot.slane %v13383, 3
  %v13438 = vsel %vm13407, %v13437, %v13436
  %v13439 = vrot.slane %v13388, 2
  %v13440 = vsel %vm13410, %v13439, %v13438
  %v13441 = vrot.slane %v13393, 1
  %v13442 = vsel %vm13413, %v13441, %v13440
  %v13443 = vrot.slane %v13364, 7
  %v13444 = vsel %vm6058, %v13443, %v13359
  %v13445 = vrot.slane %v13369, 6
  %v13446 = vsel %vm6061, %v13445, %v13444
  %v13447 = vrot.slane %v13374, 5
  %v13448 = vsel %vm13401, %v13447, %v13446
  %v13449 = vrot.slane %v13379, 4
  %v13450 = vsel %vm13404, %v13449, %v13448
  %v13451 = vrot.slane %v13384, 3
  %v13452 = vsel %vm13407, %v13451, %v13450
  %v13453 = vrot.slane %v13389, 2
  %v13454 = vsel %vm13410, %v13453, %v13452
  %v13455 = vrot.slane %v13394, 1
  %v13456 = vsel %vm13413, %v13455, %v13454
  %v13457 = vrot.slane %v13365, 7
  %v13458 = vsel %vm6058, %v13457, %v13360
  %v13459 = vrot.slane %v13370, 6
  %v13460 = vsel %vm6061, %v13459, %v13458
  %v13461 = vrot.slane %v13375, 5
  %v13462 = vsel %vm13401, %v13461, %v13460
  %v13463 = vrot.slane %v13380, 4
  %v13464 = vsel %vm13404, %v13463, %v13462
  %v13465 = vrot.slane %v13385, 3
  %v13466 = vsel %vm13407, %v13465, %v13464
  %v13467 = vrot.slane %v13390, 2
  %v13468 = vsel %vm13410, %v13467, %v13466
  %v13469 = vrot.slane %v13395, 1
  %v13470 = vsel %vm13413, %v13469, %v13468
  %v13471 = vpack.c.b16 %v13414, %v13414
  %v13472 = vpack.c.b16 %v13428, %v13428
  %v13473 = vpack.c.b16 %v13442, %v13442
  %v13474 = vpack.c.b16 %v13456, %v13456
  %v13475 = vpack.c.b16 %v13470, %v13470
  %v13552 = vunpack.c.l.b16 %v13245
  %v13553 = vunpack.c.l.b16 %v13246
  %v13554 = vunpack.c.l.b16 %v13247
  %v13555 = vunpack.c.l.b16 %v13248
  %v13556 = vunpack.c.l.b16 %v13249
  %v13557 = vunpack.c.l.b16 %v13250
  %v13558 = vunpack.c.l.b16 %v13251
  %v13559 = vunpack.c.l.b16 %v13252
  %v13560 = vunpack.c.l.b16 %v13253
  %v13561 = vunpack.c.l.b16 %v13254
  %v13562 = vunpack.c.l.b16 %v13255
  %v13563 = vunpack.c.l.b16 %v13256
  %v13564 = vunpack.c.l.b16 %v13257
  %v13565 = vunpack.c.l.b16 %v13258
  %v13566 = vunpack.c.l.b16 %v13259
  %v13567 = vunpack.c.l.b16 %v13260
  %v13568 = vunpack.c.l.b16 %v13261
  %v13569 = vunpack.c.l.b16 %v13262
  %v13570 = vunpack.c.l.b16 %v13263
  %v13571 = vunpack.c.l.b16 %v13264
  %v13572 = vunpack.c.l.b16 %v13265
  %v13573 = vunpack.c.l.b16 %v13266
  %v13574 = vunpack.c.l.b16 %v13267
  %v13575 = vunpack.c.l.b16 %v13268
  %v13576 = vunpack.c.l.b16 %v13269
  %v13577 = vunpack.c.l.b16 %v13270
  %v13578 = vunpack.c.l.b16 %v13271
  %v13579 = vunpack.c.l.b16 %v13272
  %v13580 = vunpack.c.l.b16 %v13273
  %v13581 = vunpack.c.l.b16 %v13274
  %v13582 = vunpack.c.l.b16 %v13275
  %v13583 = vunpack.c.l.b16 %v13276
  %v13584 = vunpack.c.l.b16 %v13277
  %v13585 = vunpack.c.l.b16 %v13278
  %v13586 = vunpack.c.l.b16 %v13279
  %v13587 = vunpack.c.l.b16 %v13280
  %v13588 = vunpack.c.l.b16 %v13281
  %v13589 = vunpack.c.l.b16 %v13282
  %v13590 = vunpack.c.l.b16 %v13283
  %v13591 = vunpack.c.l.b16 %v13284
  %v13592 = vunpack.c.l.b16 %v13285
  %v13593 = vunpack.c.l.b16 %v13286
  %v13594 = vunpack.c.l.b16 %v13287
  %v13595 = vunpack.c.l.b16 %v13288
  %v13596 = vunpack.c.l.b16 %v13289
  %v13597 = vunpack.c.l.b16 %v13290
  %v13598 = vunpack.c.l.b16 %v13291
  %v13599 = vunpack.c.l.b16 %v13292
  %v13600 = vunpack.c.l.b16 %v13293
  %v13601 = vunpack.c.l.b16 %v13294
  %v13602 = vunpack.c.l.b16 %v13295
  %v13603 = vunpack.c.l.b16 %v13296
  %v13604 = vunpack.c.l.b16 %v13297
  %v13605 = vunpack.c.l.b16 %v13298
  %v13606 = vunpack.c.l.b16 %v13299
  %v13607 = vunpack.c.l.b16 %v13300
  %v13608 = vunpack.c.l.b16 %v13301
  %v13609 = vunpack.c.l.b16 %v13302
  %v13610 = vunpack.c.l.b16 %v13303
  %v13611 = vunpack.c.l.b16 %v13304
  %v13612 = vunpack.c.l.b16 %v13305
  %v13613 = vunpack.c.l.b16 %v13306
  %v13614 = vunpack.c.l.b16 %v13307
  %v13615 = vunpack.c.l.b16 %v13308
  %v13616 = vunpack.c.l.b16 %v13309
  %v13617 = vunpack.c.l.b16 %v13310
  %v13618 = vunpack.c.l.b16 %v13311
  %v13619 = vunpack.c.l.b16 %v13312
  %v13620 = vunpack.c.l.b16 %v13313
  %v13621 = vunpack.c.l.b16 %v13314
  %v13622 = vunpack.c.l.b16 %v13315
  %v13623 = vunpack.c.l.b16 %v13316
  %v13624 = vpack.c.b16 %v13553, %v13552
  %v13625 = vpack.c.b16 %v13555, %v13554
  %v13626 = vpack.c.b16 %v13557, %v13556
  %v13627 = vpack.c.b16 %v13559, %v13558
  %v13628 = vpack.c.b16 %v13561, %v13560
  %v13629 = vpack.c.b16 %v13563, %v13562
  %v13630 = vpack.c.b16 %v13565, %v13564
  %v13631 = vpack.c.b16 %v13567, %v13566
  %v13632 = vpack.c.b16 %v13569, %v13568
  %v13633 = vpack.c.b16 %v13571, %v13570
  %v13634 = vpack.c.b16 %v13573, %v13572
  %v13635 = vpack.c.b16 %v13575, %v13574
  %v13636 = vpack.c.b16 %v13577, %v13576
  %v13637 = vpack.c.b16 %v13579, %v13578
  %v13638 = vpack.c.b16 %v13581, %v13580
  %v13639 = vpack.c.b16 %v13583, %v13582
  %v13640 = vpack.c.b16 %v13585, %v13584
  %v13641 = vpack.c.b16 %v13587, %v13586
  %v13642 = vpack.c.b16 %v13589, %v13588
  %v13643 = vpack.c.b16 %v13591, %v13590
  %v13644 = vpack.c.b16 %v13593, %v13592
  %v13645 = vpack.c.b16 %v13595, %v13594
  %v13646 = vpack.c.b16 %v13597, %v13596
  %v13647 = vpack.c.b16 %v13599, %v13598
  %v13648 = vpack.c.b16 %v13601, %v13600
  %v13649 = vpack.c.b16 %v13603, %v13602
  %v13650 = vpack.c.b16 %v13605, %v13604
  %v13651 = vpack.c.b16 %v13607, %v13606
  %v13652 = vpack.c.b16 %v13609, %v13608
  %v13653 = vpack.c.b16 %v13611, %v13610
  %v13654 = vpack.c.b16 %v13613, %v13612
  %v13655 = vpack.c.b16 %v13615, %v13614
  %v13656 = vpack.c.b16 %v13617, %v13616
  %v13657 = vpack.c.b16 %v13619, %v13618
  %v13658 = vpack.c.b16 %v13621, %v13620
  %v13659 = vpack.c.b16 %v13623, %v13622
  %v13697 = vsel %vm2088, %v13475, 0
  %13699 = vmatprep.subr.bf16.mxu0 0
  %13700 = vmatpush1.bf16.msra.mxu0 %v13631
  %13701 = vmatprep.subr.bf16.mxu0 0
  %13702 = vmatpush1.bf16.msra.mxu0 %v13630
  %13703 = vmatprep.subr.bf16.mxu0 0
  %13704 = vmatpush1.bf16.msra.mxu0 %v13629
  %13705 = vmatprep.subr.bf16.mxu0 0
  %13706 = vmatpush1.bf16.msra.mxu0 %v13628
  %13707 = vmatprep.subr.bf16.mxu0 0
  %13708 = vmatpush1.bf16.msra.mxu0 %v13627
  %13709 = vmatprep.subr.bf16.mxu0 0
  %13710 = vmatpush1.bf16.msra.mxu0 %v13626
  %13711 = vmatprep.subr.bf16.mxu0 0
  %13712 = vmatpush1.bf16.msra.mxu0 %v13625
  %13713 = vmatprep.subr.bf16.mxu0 0
  %13714 = vmatpush1.bf16.msra.mxu0 %v13624
  %13715 = vmatprep.subr.bf16.mxu0 0
  %13716 = vmatpush2.bf16.msra.mxu0 %v13639
  %13717 = vmatprep.subr.bf16.mxu0 0
  %13718 = vmatpush2.bf16.msra.mxu0 %v13638
  %13719 = vmatprep.subr.bf16.mxu0 0
  %13720 = vmatpush2.bf16.msra.mxu0 %v13637
  %13721 = vmatprep.subr.bf16.mxu0 0
  %13722 = vmatpush2.bf16.msra.mxu0 %v13636
  %13723 = vmatprep.subr.bf16.mxu0 0
  %13724 = vmatpush2.bf16.msra.mxu0 %v13635
  %13725 = vmatprep.subr.bf16.mxu0 0
  %13726 = vmatpush2.bf16.msra.mxu0 %v13634
  %13727 = vmatprep.subr.bf16.mxu0 0
  %13728 = vmatpush2.bf16.msra.mxu0 %v13633
  %13729 = vmatprep.subr.bf16.mxu0 0
  %13730 = vmatpush2.bf16.msra.mxu0 %v13632
  %13731 = vmatprep.mubr.bf16.mxu0 %v13472
  %13732 = vmatmul.mubr.bf16.gmra.mxu0 %v13471
  %v13733 = vpop.f32.mrf.mxu0
  %v13734 = vadd.f32 %v13322, %v13733
  %v13735 = vpop.f32.mrf.mxu0
  %v13736 = vpop.f32.mrf.mxu0
  %v13737 = vpop.f32.mrf.mxu0
  %13738 = vdwg.mxu0
  %13739 = vmatprep.subr.bf16.mxu0 0
  %13740 = vmatpush1.bf16.msra.mxu0 %v13647
  %13741 = vmatprep.subr.bf16.mxu0 0
  %13742 = vmatpush1.bf16.msra.mxu0 %v13646
  %13743 = vmatprep.subr.bf16.mxu0 0
  %13744 = vmatpush1.bf16.msra.mxu0 %v13645
  %13745 = vmatprep.subr.bf16.mxu0 0
  %13746 = vmatpush1.bf16.msra.mxu0 %v13644
  %13747 = vmatprep.subr.bf16.mxu0 0
  %13748 = vmatpush1.bf16.msra.mxu0 %v13643
  %13749 = vmatprep.subr.bf16.mxu0 0
  %13750 = vmatpush1.bf16.msra.mxu0 %v13642
  %13751 = vmatprep.subr.bf16.mxu0 0
  %13752 = vmatpush1.bf16.msra.mxu0 %v13641
  %13753 = vmatprep.subr.bf16.mxu0 0
  %13754 = vmatpush1.bf16.msra.mxu0 %v13640
  %13755 = vmatprep.subr.bf16.mxu0 0
  %13756 = vmatpush2.bf16.msra.mxu0 %v13655
  %13757 = vmatprep.subr.bf16.mxu0 0
  %13758 = vmatpush2.bf16.msra.mxu0 %v13654
  %13759 = vmatprep.subr.bf16.mxu0 0
  %13760 = vmatpush2.bf16.msra.mxu0 %v13653
  %13761 = vmatprep.subr.bf16.mxu0 0
  %13762 = vmatpush2.bf16.msra.mxu0 %v13652
  %13763 = vmatprep.subr.bf16.mxu0 0
  %13764 = vmatpush2.bf16.msra.mxu0 %v13651
  %13765 = vmatprep.subr.bf16.mxu0 0
  %13766 = vmatpush2.bf16.msra.mxu0 %v13650
  %13767 = vmatprep.subr.bf16.mxu0 0
  %13768 = vmatpush2.bf16.msra.mxu0 %v13649
  %13769 = vmatprep.subr.bf16.mxu0 0
  %13770 = vmatpush2.bf16.msra.mxu0 %v13648
  %13771 = vmatprep.mubr.bf16.mxu0 %v13474
  %13772 = vmatmul.mubr.bf16.gmra.mxu0 %v13473
  %v13773 = vpop.f32.mrf.mxu0
  %v13774 = vadd.f32 %v13734, %v13773
  %v13775 = vpop.f32.mrf.mxu0
  %v13776 = vpop.f32.mrf.mxu0
  %v13777 = vpop.f32.mrf.mxu0
  %13778 = vdwg.mxu0
  %13779 = vmatprep.subr.bf16.mxu0 0
  %13780 = vmatpush1.bf16.msra.mxu0 0
  %13781 = vmatprep.subr.bf16.mxu0 0
  %13782 = vmatpush1.bf16.msra.mxu0 0
  %13783 = vmatprep.subr.bf16.mxu0 0
  %13784 = vmatpush1.bf16.msra.mxu0 0
  %13785 = vmatprep.subr.bf16.mxu0 0
  %13786 = vmatpush1.bf16.msra.mxu0 0
  %13787 = vmatprep.subr.bf16.mxu0 0
  %13788 = vmatpush1.bf16.msra.mxu0 %v13659
  %13789 = vmatprep.subr.bf16.mxu0 0
  %13790 = vmatpush1.bf16.msra.mxu0 %v13658
  %13791 = vmatprep.subr.bf16.mxu0 0
  %13792 = vmatpush1.bf16.msra.mxu0 %v13657
  %13793 = vmatprep.subr.bf16.mxu0 0
  %13794 = vmatpush1.bf16.msra.mxu0 %v13656
  %13795 = vmatprep.subr.bf16.mxu0 0
  %13796 = vmatpush2.bf16.msra.mxu0 0
  %13797 = vmatprep.subr.bf16.mxu0 0
  %13798 = vmatpush2.bf16.msra.mxu0 0
  %13799 = vmatprep.subr.bf16.mxu0 0
  %13800 = vmatpush2.bf16.msra.mxu0 0
  %13801 = vmatprep.subr.bf16.mxu0 0
  %13802 = vmatpush2.bf16.msra.mxu0 0
  %13803 = vmatprep.subr.bf16.mxu0 0
  %13804 = vmatpush2.bf16.msra.mxu0 0
  %13805 = vmatprep.subr.bf16.mxu0 0
  %13806 = vmatpush2.bf16.msra.mxu0 0
  %13807 = vmatprep.subr.bf16.mxu0 0
  %13808 = vmatpush2.bf16.msra.mxu0 0
  %13809 = vmatprep.subr.bf16.mxu0 0
  %13810 = vmatpush2.bf16.msra.mxu0 0
  %13811 = vmatprep.mubr.bf16.mxu0 0
  %13812 = vmatmul.mubr.bf16.gmra.mxu0 %v13697
  %v13813 = vpop.f32.mrf.mxu0
  %v13814 = vadd.f32 %v13774, %v13813
  %v13815 = vpop.f32.mrf.mxu0
  %v13816 = vpop.f32.mrf.mxu0
  %v13817 = vpop.f32.mrf.mxu0
  %13818 = vdwg.mxu0
  %v13819 = vmax.f32 %v13814, 0.0
  %v13820 = vpack.c.bf16 %v13819, %v13819
  %v13821 = vld [vmem:[%s7] sm:$0xff]
  %v13822 = vld [vmem:[%s7 + $0x8] sm:$0xff]
  %v13823 = vld [vmem:[%s7 + $0x10] sm:$0xff]
  %v13824 = vld [vmem:[%s7 + $0x18] sm:$0xff]
  %v13825 = vld [vmem:[%s7 + $0x20] sm:$0xff]
  %v13826 = vld [vmem:[%s7 + $0x28] sm:$0xff]
  %v13827 = vld [vmem:[%s7 + $0x30] sm:$0xff]
  %v13828 = vld [vmem:[%s7 + $0x38] sm:$0xff]
  %v13829 = vld [vmem:[%s7 + $0x40] sm:$0xff]
  %v13830 = vld [vmem:[%s7 + $0x48] sm:$0xff]
  %v13831 = vld [vmem:[%s7 + $0x50] sm:$0xff]
  %v13832 = vld [vmem:[%s7 + $0x58] sm:$0xff]
  %v13833 = vld [vmem:[%s7 + $0x60] sm:$0xff]
  %v13834 = vld [vmem:[%s7 + $0x68] sm:$0xff]
  %v13835 = vld [vmem:[%s7 + $0x70] sm:$0xff]
  %v13836 = vld [vmem:[%s7 + $0x78] sm:$0xff]
  %v13837 = vld [vmem:[%s8] sm:$0xf]
  %v13839 = vlaneseq
  %v13840 = vshrl.u32 %v13839, 7
  %v13841 = vsub.s32 0, %v13840
  %v13842 = vrot.slane %v13837, %v13841
  %v13843 = vlaneseq
  %v13844 = vshrl.u32 %v13843, 7
  %v13845 = vsub.s32 1, %v13844
  %v13846 = vrot.slane %v13837, %v13845
  %v13847 = vlaneseq
  %v13848 = vshrl.u32 %v13847, 7
  %v13849 = vsub.s32 2, %v13848
  %v13850 = vrot.slane %v13837, %v13849
  %v13851 = vlaneseq
  %v13852 = vshrl.u32 %v13851, 7
  %v13853 = vsub.s32 3, %v13852
  %v13854 = vrot.slane %v13837, %v13853
  %v13875 = vunpack.c.l.b16 %v13821
  %v13876 = vunpack.c.h.b16 %v13821
  %v13877 = vunpack.c.l.b16 %v13822
  %v13878 = vunpack.c.h.b16 %v13822
  %v13879 = vunpack.c.l.b16 %v13823
  %v13880 = vunpack.c.h.b16 %v13823
  %v13881 = vunpack.c.l.b16 %v13824
  %v13882 = vunpack.c.h.b16 %v13824
  %v13883 = vunpack.c.l.b16 %v13825
  %v13884 = vunpack.c.h.b16 %v13825
  %v13885 = vunpack.c.l.b16 %v13826
  %v13886 = vunpack.c.h.b16 %v13826
  %v13887 = vunpack.c.l.b16 %v13827
  %v13888 = vunpack.c.h.b16 %v13827
  %v13889 = vunpack.c.l.b16 %v13828
  %v13890 = vunpack.c.h.b16 %v13828
  %v13891 = vunpack.c.l.b16 %v13829
  %v13892 = vunpack.c.h.b16 %v13829
  %v13893 = vunpack.c.l.b16 %v13830
  %v13894 = vunpack.c.h.b16 %v13830
  %v13895 = vunpack.c.l.b16 %v13831
  %v13896 = vunpack.c.h.b16 %v13831
  %v13897 = vunpack.c.l.b16 %v13832
  %v13898 = vunpack.c.h.b16 %v13832
  %v13899 = vunpack.c.l.b16 %v13833
  %v13900 = vunpack.c.h.b16 %v13833
  %v13901 = vunpack.c.l.b16 %v13834
  %v13902 = vunpack.c.h.b16 %v13834
  %v13903 = vunpack.c.l.b16 %v13835
  %v13904 = vunpack.c.h.b16 %v13835
  %v13905 = vunpack.c.l.b16 %v13836
  %v13906 = vunpack.c.h.b16 %v13836
  %v13907 = vpack.c.b16 %v13879, %v13875
  %v13908 = vpack.c.b16 %v13880, %v13876
  %v13909 = vpack.c.b16 %v13881, %v13877
  %v13910 = vpack.c.b16 %v13882, %v13878
  %v13911 = vpack.c.b16 %v13887, %v13883
  %v13912 = vpack.c.b16 %v13888, %v13884
  %v13913 = vpack.c.b16 %v13889, %v13885
  %v13914 = vpack.c.b16 %v13890, %v13886
  %v13915 = vpack.c.b16 %v13895, %v13891
  %v13916 = vpack.c.b16 %v13896, %v13892
  %v13917 = vpack.c.b16 %v13897, %v13893
  %v13918 = vpack.c.b16 %v13898, %v13894
  %v13919 = vpack.c.b16 %v13903, %v13899
  %v13920 = vpack.c.b16 %v13904, %v13900
  %v13921 = vpack.c.b16 %v13905, %v13901
  %v13922 = vpack.c.b16 %v13906, %v13902
  %v13940 = vsel %vm2088, %v13820, 0
  %13942 = vmatprep.subr.bf16.mxu0 0
  %13943 = vmatpush1.bf16.msra.mxu0 0
  %13944 = vmatprep.subr.bf16.mxu0 0
  %13945 = vmatpush1.bf16.msra.mxu0 0
  %13946 = vmatprep.subr.bf16.mxu0 0
  %13947 = vmatpush1.bf16.msra.mxu0 0
  %13948 = vmatprep.subr.bf16.mxu0 0
  %13949 = vmatpush1.bf16.msra.mxu0 0
  %13950 = vmatprep.subr.bf16.mxu0 %v13920
  %13951 = vmatpush1.bf16.msra.mxu0 %v13919
  %13952 = vmatprep.subr.bf16.mxu0 %v13916
  %13953 = vmatpush1.bf16.msra.mxu0 %v13915
  %13954 = vmatprep.subr.bf16.mxu0 %v13912
  %13955 = vmatpush1.bf16.msra.mxu0 %v13911
  %13956 = vmatprep.subr.bf16.mxu0 %v13908
  %13957 = vmatpush1.bf16.msra.mxu0 %v13907
  %13958 = vmatprep.subr.bf16.mxu0 0
  %13959 = vmatpush2.bf16.msra.mxu0 0
  %13960 = vmatprep.subr.bf16.mxu0 0
  %13961 = vmatpush2.bf16.msra.mxu0 0
  %13962 = vmatprep.subr.bf16.mxu0 0
  %13963 = vmatpush2.bf16.msra.mxu0 0
  %13964 = vmatprep.subr.bf16.mxu0 0
  %13965 = vmatpush2.bf16.msra.mxu0 0
  %13966 = vmatprep.subr.bf16.mxu0 0
  %13967 = vmatpush2.bf16.msra.mxu0 0
  %13968 = vmatprep.subr.bf16.mxu0 0
  %13969 = vmatpush2.bf16.msra.mxu0 0
  %13970 = vmatprep.subr.bf16.mxu0 0
  %13971 = vmatpush2.bf16.msra.mxu0 0
  %13972 = vmatprep.subr.bf16.mxu0 0
  %13973 = vmatpush2.bf16.msra.mxu0 0
  %13974 = vmatprep.mubr.bf16.mxu0 0
  %13975 = vmatmul.mubr.bf16.gmra.mxu0 %v13940
  %v13976 = vpop.f32.mrf.mxu0
  %v13977 = vadd.f32 %v13842, %v13976
  %v13978 = vpop.f32.mrf.mxu0
  %v13979 = vadd.f32 %v13846, %v13978
  %v13980 = vpop.f32.mrf.mxu0
  %v13981 = vpop.f32.mrf.mxu0
  %13982 = vdwg.mxu0
  %13983 = vmatprep.subr.bf16.mxu0 0
  %13984 = vmatpush1.bf16.msra.mxu0 0
  %13985 = vmatprep.subr.bf16.mxu0 0
  %13986 = vmatpush1.bf16.msra.mxu0 0
  %13987 = vmatprep.subr.bf16.mxu0 0
  %13988 = vmatpush1.bf16.msra.mxu0 0
  %13989 = vmatprep.subr.bf16.mxu0 0
  %13990 = vmatpush1.bf16.msra.mxu0 0
  %13991 = vmatprep.subr.bf16.mxu0 %v13922
  %13992 = vmatpush1.bf16.msra.mxu0 %v13921
  %13993 = vmatprep.subr.bf16.mxu0 %v13918
  %13994 = vmatpush1.bf16.msra.mxu0 %v13917
  %13995 = vmatprep.subr.bf16.mxu0 %v13914
  %13996 = vmatpush1.bf16.msra.mxu0 %v13913
  %13997 = vmatprep.subr.bf16.mxu0 %v13910
  %13998 = vmatpush1.bf16.msra.mxu0 %v13909
  %13999 = vmatprep.subr.bf16.mxu0 0
  %14000 = vmatpush2.bf16.msra.mxu0 0
  %14001 = vmatprep.subr.bf16.mxu0 0
  %14002 = vmatpush2.bf16.msra.mxu0 0
  %14003 = vmatprep.subr.bf16.mxu0 0
  %14004 = vmatpush2.bf16.msra.mxu0 0
  %14005 = vmatprep.subr.bf16.mxu0 0
  %14006 = vmatpush2.bf16.msra.mxu0 0
  %14007 = vmatprep.subr.bf16.mxu0 0
  %14008 = vmatpush2.bf16.msra.mxu0 0
  %14009 = vmatprep.subr.bf16.mxu0 0
  %14010 = vmatpush2.bf16.msra.mxu0 0
  %14011 = vmatprep.subr.bf16.mxu0 0
  %14012 = vmatpush2.bf16.msra.mxu0 0
  %14013 = vmatprep.subr.bf16.mxu0 0
  %14014 = vmatpush2.bf16.msra.mxu0 0
  %14015 = vmatprep.mubr.bf16.mxu0 0
  %14016 = vmatmul.mubr.bf16.gmra.mxu0 %v13940
  %v14017 = vpop.f32.mrf.mxu0
  %v14018 = vadd.f32 %v13850, %v14017
  %v14019 = vpop.f32.mrf.mxu0
  %v14020 = vadd.f32 %v13854, %v14019
  %v14021 = vpop.f32.mrf.mxu0
  %v14022 = vpop.f32.mrf.mxu0
  %14023 = vdwg.mxu0
  %v14024 = vmax.f32 %v13977, 0.0
  %v14025 = vmax.f32 %v13979, 0.0
  %v14026 = vmax.f32 %v14018, 0.0
  %v14027 = vmax.f32 %v14020, 0.0
  %v14028 = vpack.c.bf16 %v14024, %v14024
  %v14029 = vpack.c.bf16 %v14025, %v14025
  %v14030 = vpack.c.bf16 %v14026, %v14026
  %v14031 = vpack.c.bf16 %v14027, %v14027
  %v14032 = vld [vmem:[%s9] sm:$0xf]
  %v14033 = vld [vmem:[%s9 + $0x4] sm:$0xf]
  %v14034 = vld [vmem:[%s9 + $0x8] sm:$0xf]
  %v14035 = vld [vmem:[%s9 + $0xc] sm:$0xf]
  %v14036 = vld [vmem:[%s9 + $0x10] sm:$0xf]
  %v14037 = vld [vmem:[%s9 + $0x14] sm:$0xf]
  %v14038 = vld [vmem:[%s9 + $0x18] sm:$0xf]
  %v14039 = vld [vmem:[%s9 + $0x1c] sm:$0xf]
  %v14040 = vld [vmem:[%s9 + $0x20] sm:$0xf]
  %v14041 = vld [vmem:[%s9 + $0x24] sm:$0xf]
  %v14042 = vld [vmem:[%s9 + $0x28] sm:$0xf]
  %v14043 = vld [vmem:[%s9 + $0x2c] sm:$0xf]
  %v14044 = vld [vmem:[%s9 + $0x30] sm:$0xf]
  %v14045 = vld [vmem:[%s9 + $0x34] sm:$0xf]
  %v14046 = vld [vmem:[%s9 + $0x38] sm:$0xf]
  %v14047 = vld [vmem:[%s9 + $0x3c] sm:$0xf]
  %v14048 = vld [vmem:[%s9 + $0x40] sm:$0xf]
  %v14049 = vld [vmem:[%s9 + $0x44] sm:$0xf]
  %v14050 = vld [vmem:[%s9 + $0x48] sm:$0xf]
  %v14051 = vld [vmem:[%s9 + $0x4c] sm:$0xf]
  %v14052 = vld [vmem:[%s9 + $0x50] sm:$0xf]
  %v14053 = vld [vmem:[%s9 + $0x54] sm:$0xf]
  %v14054 = vld [vmem:[%s9 + $0x58] sm:$0xf]
  %v14055 = vld [vmem:[%s9 + $0x5c] sm:$0xf]
  %v14056 = vld [vmem:[%s9 + $0x60] sm:$0xf]
  %v14057 = vld [vmem:[%s9 + $0x64] sm:$0xf]
  %v14058 = vld [vmem:[%s9 + $0x68] sm:$0xf]
  %v14059 = vld [vmem:[%s9 + $0x6c] sm:$0xf]
  %v14060 = vld [vmem:[%s9 + $0x70] sm:$0xf]
  %v14061 = vld [vmem:[%s9 + $0x74] sm:$0xf]
  %v14062 = vld [vmem:[%s9 + $0x78] sm:$0xf]
  %v14063 = vld [vmem:[%s9 + $0x7c] sm:$0xf]
  %v14064 = vld [vmem:[%s9 + $0x80] sm:$0xf]
  %v14065 = vld [vmem:[%s9 + $0x84] sm:$0xf]
  %v14066 = vld [vmem:[%s9 + $0x88] sm:$0xf]
  %v14067 = vld [vmem:[%s9 + $0x8c] sm:$0xf]
  %v14068 = vld [vmem:[%s9 + $0x90] sm:$0xf]
  %v14069 = vld [vmem:[%s9 + $0x94] sm:$0xf]
  %v14070 = vld [vmem:[%s9 + $0x98] sm:$0xf]
  %v14071 = vld [vmem:[%s9 + $0x9c] sm:$0xf]
  %v14072 = vld [vmem:[%s9 + $0xa0] sm:$0xf]
  %v14073 = vld [vmem:[%s9 + $0xa4] sm:$0xf]
  %v14074 = vld [vmem:[%s9 + $0xa8] sm:$0xf]
  %v14075 = vld [vmem:[%s9 + $0xac] sm:$0xf]
  %v14076 = vld [vmem:[%s9 + $0xb0] sm:$0xf]
  %v14077 = vld [vmem:[%s9 + $0xb4] sm:$0xf]
  %v14078 = vld [vmem:[%s9 + $0xb8] sm:$0xf]
  %v14079 = vld [vmem:[%s9 + $0xbc] sm:$0xf]
  %v14080 = vld [vmem:[%s9 + $0xc0] sm:$0xf]
  %v14081 = vld [vmem:[%s9 + $0xc4] sm:$0xf]
  %v14082 = vld [vmem:[%s9 + $0xc8] sm:$0xf]
  %v14083 = vld [vmem:[%s9 + $0xcc] sm:$0xf]
  %v14084 = vld [vmem:[%s9 + $0xd0] sm:$0xf]
  %v14085 = vld [vmem:[%s9 + $0xd4] sm:$0xf]
  %v14086 = vld [vmem:[%s9 + $0xd8] sm:$0xf]
  %v14087 = vld [vmem:[%s9 + $0xdc] sm:$0xf]
  %v14088 = vld [vmem:[%s9 + $0xe0] sm:$0xf]
  %v14089 = vld [vmem:[%s9 + $0xe4] sm:$0xf]
  %v14090 = vld [vmem:[%s9 + $0xe8] sm:$0xf]
  %v14091 = vld [vmem:[%s9 + $0xec] sm:$0xf]
  %v14092 = vld [vmem:[%s9 + $0xf0] sm:$0xf]
  %v14093 = vld [vmem:[%s9 + $0xf4] sm:$0xf]
  %v14094 = vld [vmem:[%s9 + $0xf8] sm:$0xf]
  %v14095 = vld [vmem:[%s9 + $0xfc] sm:$0xf]
  %v14096 = vld [vmem:[%s10] sm:$0x1]
  %v14098 = vlaneseq
  %v14099 = vshrl.u32 %v14098, 7
  %v14100 = vsub.s32 0, %v14099
  %v14101 = vrot.slane %v14096, %v14100
  %v14167 = vunpack.c.l.b16 %v14032
  %v14168 = vunpack.c.l.b16 %v14033
  %v14169 = vunpack.c.l.b16 %v14034
  %v14170 = vunpack.c.l.b16 %v14035
  %v14171 = vunpack.c.l.b16 %v14036
  %v14172 = vunpack.c.l.b16 %v14037
  %v14173 = vunpack.c.l.b16 %v14038
  %v14174 = vunpack.c.l.b16 %v14039
  %v14175 = vunpack.c.l.b16 %v14040
  %v14176 = vunpack.c.l.b16 %v14041
  %v14177 = vunpack.c.l.b16 %v14042
  %v14178 = vunpack.c.l.b16 %v14043
  %v14179 = vunpack.c.l.b16 %v14044
  %v14180 = vunpack.c.l.b16 %v14045
  %v14181 = vunpack.c.l.b16 %v14046
  %v14182 = vunpack.c.l.b16 %v14047
  %v14183 = vunpack.c.l.b16 %v14048
  %v14184 = vunpack.c.l.b16 %v14049
  %v14185 = vunpack.c.l.b16 %v14050
  %v14186 = vunpack.c.l.b16 %v14051
  %v14187 = vunpack.c.l.b16 %v14052
  %v14188 = vunpack.c.l.b16 %v14053
  %v14189 = vunpack.c.l.b16 %v14054
  %v14190 = vunpack.c.l.b16 %v14055
  %v14191 = vunpack.c.l.b16 %v14056
  %v14192 = vunpack.c.l.b16 %v14057
  %v14193 = vunpack.c.l.b16 %v14058
  %v14194 = vunpack.c.l.b16 %v14059
  %v14195 = vunpack.c.l.b16 %v14060
  %v14196 = vunpack.c.l.b16 %v14061
  %v14197 = vunpack.c.l.b16 %v14062
  %v14198 = vunpack.c.l.b16 %v14063
  %v14199 = vunpack.c.l.b16 %v14064
  %v14200 = vunpack.c.l.b16 %v14065
  %v14201 = vunpack.c.l.b16 %v14066
  %v14202 = vunpack.c.l.b16 %v14067
  %v14203 = vunpack.c.l.b16 %v14068
  %v14204 = vunpack.c.l.b16 %v14069
  %v14205 = vunpack.c.l.b16 %v14070
  %v14206 = vunpack.c.l.b16 %v14071
  %v14207 = vunpack.c.l.b16 %v14072
  %v14208 = vunpack.c.l.b16 %v14073
  %v14209 = vunpack.c.l.b16 %v14074
  %v14210 = vunpack.c.l.b16 %v14075
  %v14211 = vunpack.c.l.b16 %v14076
  %v14212 = vunpack.c.l.b16 %v14077
  %v14213 = vunpack.c.l.b16 %v14078
  %v14214 = vunpack.c.l.b16 %v14079
  %v14215 = vunpack.c.l.b16 %v14080
  %v14216 = vunpack.c.l.b16 %v14081
  %v14217 = vunpack.c.l.b16 %v14082
  %v14218 = vunpack.c.l.b16 %v14083
  %v14219 = vunpack.c.l.b16 %v14084
  %v14220 = vunpack.c.l.b16 %v14085
  %v14221 = vunpack.c.l.b16 %v14086
  %v14222 = vunpack.c.l.b16 %v14087
  %v14223 = vunpack.c.l.b16 %v14088
  %v14224 = vunpack.c.l.b16 %v14089
  %v14225 = vunpack.c.l.b16 %v14090
  %v14226 = vunpack.c.l.b16 %v14091
  %v14227 = vunpack.c.l.b16 %v14092
  %v14228 = vunpack.c.l.b16 %v14093
  %v14229 = vunpack.c.l.b16 %v14094
  %v14230 = vunpack.c.l.b16 %v14095
  %v14231 = vpack.c.b16 %v14168, %v14167
  %v14232 = vpack.c.b16 %v14170, %v14169
  %v14233 = vpack.c.b16 %v14172, %v14171
  %v14234 = vpack.c.b16 %v14174, %v14173
  %v14235 = vpack.c.b16 %v14176, %v14175
  %v14236 = vpack.c.b16 %v14178, %v14177
  %v14237 = vpack.c.b16 %v14180, %v14179
  %v14238 = vpack.c.b16 %v14182, %v14181
  %v14239 = vpack.c.b16 %v14184, %v14183
  %v14240 = vpack.c.b16 %v14186, %v14185
  %v14241 = vpack.c.b16 %v14188, %v14187
  %v14242 = vpack.c.b16 %v14190, %v14189
  %v14243 = vpack.c.b16 %v14192, %v14191
  %v14244 = vpack.c.b16 %v14194, %v14193
  %v14245 = vpack.c.b16 %v14196, %v14195
  %v14246 = vpack.c.b16 %v14198, %v14197
  %v14247 = vpack.c.b16 %v14200, %v14199
  %v14248 = vpack.c.b16 %v14202, %v14201
  %v14249 = vpack.c.b16 %v14204, %v14203
  %v14250 = vpack.c.b16 %v14206, %v14205
  %v14251 = vpack.c.b16 %v14208, %v14207
  %v14252 = vpack.c.b16 %v14210, %v14209
  %v14253 = vpack.c.b16 %v14212, %v14211
  %v14254 = vpack.c.b16 %v14214, %v14213
  %v14255 = vpack.c.b16 %v14216, %v14215
  %v14256 = vpack.c.b16 %v14218, %v14217
  %v14257 = vpack.c.b16 %v14220, %v14219
  %v14258 = vpack.c.b16 %v14222, %v14221
  %v14259 = vpack.c.b16 %v14224, %v14223
  %v14260 = vpack.c.b16 %v14226, %v14225
  %v14261 = vpack.c.b16 %v14228, %v14227
  %v14262 = vpack.c.b16 %v14230, %v14229
  %14295 = vmatprep.subr.bf16.mxu0 0
  %14296 = vmatpush1.bf16.msra.mxu0 %v14238
  %14297 = vmatprep.subr.bf16.mxu0 0
  %14298 = vmatpush1.bf16.msra.mxu0 %v14237
  %14299 = vmatprep.subr.bf16.mxu0 0
  %14300 = vmatpush1.bf16.msra.mxu0 %v14236
  %14301 = vmatprep.subr.bf16.mxu0 0
  %14302 = vmatpush1.bf16.msra.mxu0 %v14235
  %14303 = vmatprep.subr.bf16.mxu0 0
  %14304 = vmatpush1.bf16.msra.mxu0 %v14234
  %14305 = vmatprep.subr.bf16.mxu0 0
  %14306 = vmatpush1.bf16.msra.mxu0 %v14233
  %14307 = vmatprep.subr.bf16.mxu0 0
  %14308 = vmatpush1.bf16.msra.mxu0 %v14232
  %14309 = vmatprep.subr.bf16.mxu0 0
  %14310 = vmatpush1.bf16.msra.mxu0 %v14231
  %14311 = vmatprep.subr.bf16.mxu0 0
  %14312 = vmatpush2.bf16.msra.mxu0 %v14246
  %14313 = vmatprep.subr.bf16.mxu0 0
  %14314 = vmatpush2.bf16.msra.mxu0 %v14245
  %14315 = vmatprep.subr.bf16.mxu0 0
  %14316 = vmatpush2.bf16.msra.mxu0 %v14244
  %14317 = vmatprep.subr.bf16.mxu0 0
  %14318 = vmatpush2.bf16.msra.mxu0 %v14243
  %14319 = vmatprep.subr.bf16.mxu0 0
  %14320 = vmatpush2.bf16.msra.mxu0 %v14242
  %14321 = vmatprep.subr.bf16.mxu0 0
  %14322 = vmatpush2.bf16.msra.mxu0 %v14241
  %14323 = vmatprep.subr.bf16.mxu0 0
  %14324 = vmatpush2.bf16.msra.mxu0 %v14240
  %14325 = vmatprep.subr.bf16.mxu0 0
  %14326 = vmatpush2.bf16.msra.mxu0 %v14239
  %14327 = vmatprep.mubr.bf16.mxu0 %v14029
  %14328 = vmatmul.mubr.bf16.gmra.mxu0 %v14028
  %v14329 = vpop.f32.mrf.mxu0
  %v14330 = vadd.f32 %v14101, %v14329
  %v14331 = vpop.f32.mrf.mxu0
  %v14332 = vpop.f32.mrf.mxu0
  %v14333 = vpop.f32.mrf.mxu0
  %14334 = vdwg.mxu0
  %14335 = vmatprep.subr.bf16.mxu0 0
  %14336 = vmatpush1.bf16.msra.mxu0 %v14254
  %14337 = vmatprep.subr.bf16.mxu0 0
  %14338 = vmatpush1.bf16.msra.mxu0 %v14253
  %14339 = vmatprep.subr.bf16.mxu0 0
  %14340 = vmatpush1.bf16.msra.mxu0 %v14252
  %14341 = vmatprep.subr.bf16.mxu0 0
  %14342 = vmatpush1.bf16.msra.mxu0 %v14251
  %14343 = vmatprep.subr.bf16.mxu0 0
  %14344 = vmatpush1.bf16.msra.mxu0 %v14250
  %14345 = vmatprep.subr.bf16.mxu0 0
  %14346 = vmatpush1.bf16.msra.mxu0 %v14249
  %14347 = vmatprep.subr.bf16.mxu0 0
  %14348 = vmatpush1.bf16.msra.mxu0 %v14248
  %14349 = vmatprep.subr.bf16.mxu0 0
  %14350 = vmatpush1.bf16.msra.mxu0 %v14247
  %14351 = vmatprep.subr.bf16.mxu0 0
  %14352 = vmatpush2.bf16.msra.mxu0 %v14262
  %14353 = vmatprep.subr.bf16.mxu0 0
  %14354 = vmatpush2.bf16.msra.mxu0 %v14261
  %14355 = vmatprep.subr.bf16.mxu0 0
  %14356 = vmatpush2.bf16.msra.mxu0 %v14260
  %14357 = vmatprep.subr.bf16.mxu0 0
  %14358 = vmatpush2.bf16.msra.mxu0 %v14259
  %14359 = vmatprep.subr.bf16.mxu0 0
  %14360 = vmatpush2.bf16.msra.mxu0 %v14258
  %14361 = vmatprep.subr.bf16.mxu0 0
  %14362 = vmatpush2.bf16.msra.mxu0 %v14257
  %14363 = vmatprep.subr.bf16.mxu0 0
  %14364 = vmatpush2.bf16.msra.mxu0 %v14256
  %14365 = vmatprep.subr.bf16.mxu0 0
  %14366 = vmatpush2.bf16.msra.mxu0 %v14255
  %14367 = vmatprep.mubr.bf16.mxu0 %v14031
  %14368 = vmatmul.mubr.bf16.gmra.mxu0 %v14030
  %v14369 = vpop.f32.mrf.mxu0
  %v14370 = vadd.f32 %v14330, %v14369
  %v14371 = vpop.f32.mrf.mxu0
  %v14372 = vpop.f32.mrf.mxu0
  %v14373 = vpop.f32.mrf.mxu0
  %14374 = vdwg.mxu0
  %14375 = vst [vmem:[%s11] sm:$0xff] %v14370
  // Predicated region
  $region46: #{dqn_forward.1} parent=0 // pred_check
    _
  $region47: #{dqn_forward.1} parent=0 // pred_check_branch
    %14377 = sbr.rel (0) target = $region49
  $region48: #{dqn_forward.1} parent=0 // pred_region
    _
  $region49: #{dqn_forward.1} parent=0 // pred_fallthru
    _
  // Predicated region
  $region50: #{dqn_forward.1} parent=0 // pred_check
    _
  $region51: #{dqn_forward.1} parent=0 // pred_check_branch
    %14379 = sbr.rel (0) target = $region53
  $region52: #{dqn_forward.1} parent=0 // pred_region
    _
  $region53: #{dqn_forward.1} parent=0 // pred_fallthru
    _

</llo_original>
